<compile_context>
chip_gen: v7x
topology: tpu7x:2x2x1
jax: 0.10.0
libtpu: 0.0.40
codegen_flags: <defaults>
</compile_context>

<pallas_src>
import functools

import jax
import jax.numpy as jnp
from jax.experimental import pallas as pl
from jax.experimental.pallas import tpu as pltpu

_BN_EPS = 1e-5
_KERNEL_SIZES = (8, 5, 3)   # per ResNetBlock, as in the PyTorch module
_OFF = 8                    # sublane-aligned start row of valid data in the halo buffer
_HALO = 16                  # total extra rows (left halo = _OFF, right = _HALO - _OFF)


def _round_up(x, m):
    return ((x + m - 1) // m) * m


def _bf16_dot(a, b):
    """MXU matmul: bf16 operands, f32 accumulation (used by the reference)."""
    return jnp.dot(a.astype(jnp.bfloat16), b.astype(jnp.bfloat16),
                   preferred_element_type=jnp.float32)


# ---------------------------------------------------------------------------
# Fused whole-network kernel: one batch tile per grid step, activations stay
# in VMEM/vregs, only the (bt, NCpad) logits block is written back.
# ---------------------------------------------------------------------------
def _fused_resnet_kernel(*args, BT, L, Cpad, blocks):
    """Ref order: x, then per block [per conv (w, scale, bias)] followed by the
    optional residual (w, scale, bias), then final_w, final_b, then the output
    ref, then the bf16 conv halo scratch buffer."""
    BL = BT * L
    n_conv = sum(len(ks) for ks, _ in blocks)
    n_res = sum(1 for _, has_res in blocks if has_res)
    n_in = 1 + 3 * (n_conv + n_res) + 2
    out_ref = args[n_in]
    buf_ref = args[n_in + 1]                       # (BT, L + _HALO, Cpad) bf16
    it = iter(args[:n_in])
    x_ref = next(it)

    # Zero only the halo rows; the valid rows [_OFF, _OFF+L) are overwritten by
    # every conv layer, the halo provides the "same" padding for all of them.
    buf_ref[:, :_OFF, :] = jnp.zeros((BT, _OFF, Cpad), jnp.bfloat16)
    buf_ref[:, _OFF + L:, :] = jnp.zeros((BT, _HALO - _OFF, Cpad), jnp.bfloat16)

    def conv_bn_relu(h, w_ref, s_ref, b_ref, K):
        # Conv1dSamePadding(stride=1) + folded BatchNorm + ReLU as K per-tap
        # MXU matmuls accumulated in f32 (same order as the JAX reference).
        # h: (BT*L, Cpad); w_ref: (K, Cpad, Cpad) bf16.
        pad_l = (K - 1) // 2                       # TF/PyTorch "same" left pad
        buf_ref[:, _OFF:_OFF + L, :] = h.astype(jnp.bfloat16).reshape(BT, L, Cpad)
        acc = None
        for t in range(K):                         # statically unrolled
            start = _OFF - pad_l + t
            tap = buf_ref[:, start:start + L, :].reshape(BL, Cpad)
            d = jnp.dot(tap, w_ref[t], preferred_element_type=jnp.float32)
            acc = d if acc is None else acc + d
        y = acc * s_ref[...] + b_ref[...]          # folded BN (+ conv bias), f32
        return jnp.maximum(y, 0.0)                 # ReLU

    h = x_ref[...]                                 # (BT*L, Cpad) bf16
    for kernel_sizes, has_residual in blocks:      # statically unrolled network
        block_in = h
        for K in kernel_sizes:
            w_ref, s_ref, b_ref = next(it), next(it), next(it)
            h = conv_bn_relu(h, w_ref, s_ref, b_ref, K)
        if has_residual:                           # 1x1 conv + BN shortcut (no ReLU)
            w_ref, s_ref, b_ref = next(it), next(it), next(it)
            short = jnp.dot(block_in.astype(jnp.bfloat16), w_ref[0],
                            preferred_element_type=jnp.float32)
            h = h + (short * s_ref[...] + b_ref[...])

    # Head: mean over L as an f32 sum * (1/L) (no pooling matrix), then Linear.
    wf_ref, bf_ref = next(it), next(it)
    pooled = h.reshape(BT, L, Cpad).sum(axis=1) * (1.0 / L)      # (BT, Cpad) f32
    logits = jnp.dot(pooled.astype(jnp.bfloat16), wf_ref[...],
                     preferred_element_type=jnp.float32) + bf_ref[...]
    out_ref[...] = logits.astype(out_ref.dtype)


# ---------------------------------------------------------------------------
# Wrapper
# ---------------------------------------------------------------------------
def _const_spec(arr):
    zeros = (0,) * arr.ndim
    return pl.BlockSpec(arr.shape, lambda i, _z=zeros: _z)


def resnet_forward(x_ncl, params, batch_tile=None):
    """x_ncl: (B, Cin, L) in PyTorch layout.  Returns (B, num_classes) logits."""
    B, Cin, L = x_ncl.shape
    assert L % 8 == 0, "kernel assumes L is a multiple of 8 sublanes"
    cpad, nc, ncpad = params["cpad"], params["num_classes"], params["ncpad"]
    blocks_cfg = params["blocks_cfg"]

    # Static check: halo must cover the largest "same" padding.
    max_k = max(max(ks) for ks, _ in blocks_cfg)
    assert (max_k - 1) // 2 <= _OFF and (max_k - 1) - (max_k - 1) // 2 <= _HALO - _OFF

    if batch_tile is None:
        batch_tile = B if B <= 8 else next(d for d in (8, 4, 2, 1) if B % d == 0)
    bt = batch_tile
    assert B % bt == 0, "batch tile must divide the batch"

    # Single layout change + channel zero-pad + bf16 cast of the tiny input
    # (halves input DMA); all per-layer "same" padding happens inside the kernel.
    x = jnp.transpose(x_ncl, (0, 2, 1))                         # NCL -> NLC
    x = jnp.pad(x, ((0, 0), (0, 0), (0, cpad - Cin)))
    x = x.reshape(B * L, cpad).astype(jnp.bfloat16)

    flat = params["flat"]
    in_specs = [pl.BlockSpec((bt * L, cpad), lambda i: (i, 0))]
    in_specs += [_const_spec(w) for w in flat]
    out_specs = pl.BlockSpec((bt, ncpad), lambda i: (i, 0))

    # Explicit scoped-VMEM budget sized from the real footprint (with headroom).
    w_bytes = sum(int(w.size) * w.dtype.itemsize for w in flat)
    act_f32 = bt * L * cpad * 4
    est = (2 * (bt * L * cpad * 2)            # double-buffered x block (bf16)
           + 2 * (bt * ncpad * 4)             # double-buffered logits block
           + 2 * w_bytes                      # weight residency
           + bt * (L + _HALO) * cpad * 2      # bf16 halo scratch
           + 6 * act_f32)                     # live f32 activation temporaries
    vmem_limit = int(min(100 * 1024 * 1024, max(32 * 1024 * 1024, 2 * est)))

    kernel = functools.partial(_fused_resnet_kernel, BT=bt, L=L, Cpad=cpad,
                               blocks=blocks_cfg)
    out = pl.pallas_call(
        kernel,
        out_shape=jax.ShapeDtypeStruct((B, ncpad), jnp.float32),
        grid=(B // bt,),
        in_specs=in_specs,
        out_specs=out_specs,
        scratch_shapes=[pltpu.VMEM((bt, L + _HALO, cpad), jnp.bfloat16)],
        compiler_params=pltpu.CompilerParams(
            dimension_semantics=("parallel",),
            vmem_limit_bytes=vmem_limit),
    )(x, *flat)
    return out[:, :nc]


# ---------------------------------------------------------------------------
# Parameters (inference BN folded into scale/bias; kernel copies are packed
# lane-dense once at init: channels zero-padded to Cpad, weights in bf16,
# per-tap (K, Cpad, Cpad) layout).
# ---------------------------------------------------------------------------
def _fold_bn(key, cout, conv_bias):
    kg, kb, km, kv = jax.random.split(key, 4)
    gamma = 1.0 + 0.1 * jax.random.normal(kg, (cout,), jnp.float32)
    beta = 0.1 * jax.random.normal(kb, (cout,), jnp.float32)
    mean = 0.1 * jax.random.normal(km, (cout,), jnp.float32)
    var = jax.random.uniform(kv, (cout,), jnp.float32, minval=0.5, maxval=1.5)
    s = gamma / jnp.sqrt(var + _BN_EPS)
    b = s * (conv_bias - mean) + beta
    return s, b


def init_params(key, in_channels, mid_channels, num_classes):
    cpad = _round_up(max(in_channels, 2 * mid_channels, 128), 128)
    ncpad = _round_up(max(num_classes, 128), 128)
    block_io = [(in_channels, mid_channels),
                (mid_channels, 2 * mid_channels),
                (2 * mid_channels, 2 * mid_channels)]

    ref = {"blocks": []}
    flat, blocks_cfg = [], []

    def pack_conv(w, s, b, cin, cout):
        wp = jnp.pad(w, ((0, 0), (0, cpad - cin), (0, cpad - cout)))
        flat.append(wp.astype(jnp.bfloat16))                       # (K, Cpad, Cpad)
        flat.append(jnp.pad(s, (0, cpad - cout)).reshape(1, cpad))
        flat.append(jnp.pad(b, (0, cpad - cout)).reshape(1, cpad))

    for cin, cout in block_io:
        blk = {"convs": [], "residual": None}
        chans = [cin, cout, cout, cout]
        for i, k in enumerate(_KERNEL_SIZES):
            key, kw, kb, kbn = jax.random.split(key, 4)
            w = 0.1 * jax.random.normal(kw, (k, chans[i], chans[i + 1]), jnp.float32)
            cb = 0.1 * jax.random.normal(kb, (chans[i + 1],), jnp.float32)
            s, b = _fold_bn(kbn, chans[i + 1], cb)
            blk["convs"].append({"w": w, "scale": s, "bias": b})
            pack_conv(w, s, b, chans[i], chans[i + 1])
        has_res = cin != cout
        if has_res:
            key, kw, kb, kbn = jax.random.split(key, 4)
            w = 0.1 * jax.random.normal(kw, (1, cin, cout), jnp.float32)
            cb = 0.1 * jax.random.normal(kb, (cout,), jnp.float32)
            s, b = _fold_bn(kbn, cout, cb)
            blk["residual"] = {"w": w, "scale": s, "bias": b}
            pack_conv(w, s, b, cin, cout)
        ref["blocks"].append(blk)
        blocks_cfg.append((tuple(_KERNEL_SIZES), has_res))

    key, kw, kb = jax.random.split(key, 3)
    wf = 0.1 * jax.random.normal(kw, (2 * mid_channels, num_classes), jnp.float32)
    bf = 0.1 * jax.random.normal(kb, (num_classes,), jnp.float32)
    ref["final_w"], ref["final_b"] = wf, bf
    flat.append(jnp.pad(wf, ((0, cpad - 2 * mid_channels),
                             (0, ncpad - num_classes))).astype(jnp.bfloat16))
    flat.append(jnp.pad(bf, (0, ncpad - num_classes)).reshape(1, ncpad))

    return {"flat": flat, "blocks_cfg": tuple(blocks_cfg), "cpad": cpad,
            "ncpad": ncpad, "num_classes": num_classes, "ref": ref}


# ---------------------------------------------------------------------------
# Pure-JAX reference (same math / same bf16 MXU casts, no Pallas).
# ---------------------------------------------------------------------------
def _conv_bn_ref(x, w, s, b, relu):
    K = w.shape[0]
    L = x.shape[1]
    pad_l = (K - 1) // 2
    xp = jnp.pad(x, ((0, 0), (pad_l, (K - 1) - pad_l), (0, 0)))
    acc = sum(_bf16_dot(xp[:, t:t + L, :], w[t]) for t in range(K))
    y = acc * s + b
    return jnp.maximum(y, 0.0) if relu else y


def resnet_forward_ref(x_ncl, ref_params):
    x = jnp.transpose(x_ncl, (0, 2, 1))
    for blk in ref_params["blocks"]:
        y = x
        for cb in blk["convs"]:
            y = _conv_bn_ref(y, cb["w"], cb["scale"], cb["bias"], True)
        if blk["residual"] is not None:
            r = blk["residual"]
            y = y + _conv_bn_ref(x, r["w"], r["scale"], r["bias"], False)
        x = y
    m = jnp.mean(x, axis=1)                                    # f32 mean over L
    return _bf16_dot(m, ref_params["final_w"]) + ref_params["final_b"]


# ---------------------------------------------------------------------------
if __name__ == "__main__":
    B, IN_CH, L = 2, 4, 16
    MID, NUM_CLASSES = 8, 3

    key = jax.random.PRNGKey(0)
    kx, kp = jax.random.split(key)
    x = jax.random.normal(kx, (B, IN_CH, L), jnp.float32)      # PyTorch NCL input
    params = init_params(kp, IN_CH, MID, NUM_CLASSES)

    out = jax.block_until_ready(resnet_forward(x, params))
    ref = jax.block_until_ready(resnet_forward_ref(x, params["ref"]))

    assert out.shape == (B, NUM_CLASSES)
    assert jnp.allclose(out, ref, atol=2e-3, rtol=2e-3), (out, ref)
    print("KERNEL_OK")
</pallas_src>

<mosaic_0001>
module attributes {stable_mosaic.version = 11 : i64} {
  func.func @_fused_resnet_kernel(%arg0: i32, %arg1: memref<32x128xbf16, #tpu.memory_space<vmem>>, %arg2: memref<8x128x128xbf16, #tpu.memory_space<vmem>>, %arg3: memref<1x128xf32, #tpu.memory_space<vmem>>, %arg4: memref<1x128xf32, #tpu.memory_space<vmem>>, %arg5: memref<5x128x128xbf16, #tpu.memory_space<vmem>>, %arg6: memref<1x128xf32, #tpu.memory_space<vmem>>, %arg7: memref<1x128xf32, #tpu.memory_space<vmem>>, %arg8: memref<3x128x128xbf16, #tpu.memory_space<vmem>>, %arg9: memref<1x128xf32, #tpu.memory_space<vmem>>, %arg10: memref<1x128xf32, #tpu.memory_space<vmem>>, %arg11: memref<1x128x128xbf16, #tpu.memory_space<vmem>>, %arg12: memref<1x128xf32, #tpu.memory_space<vmem>>, %arg13: memref<1x128xf32, #tpu.memory_space<vmem>>, %arg14: memref<8x128x128xbf16, #tpu.memory_space<vmem>>, %arg15: memref<1x128xf32, #tpu.memory_space<vmem>>, %arg16: memref<1x128xf32, #tpu.memory_space<vmem>>, %arg17: memref<5x128x128xbf16, #tpu.memory_space<vmem>>, %arg18: memref<1x128xf32, #tpu.memory_space<vmem>>, %arg19: memref<1x128xf32, #tpu.memory_space<vmem>>, %arg20: memref<3x128x128xbf16, #tpu.memory_space<vmem>>, %arg21: memref<1x128xf32, #tpu.memory_space<vmem>>, %arg22: memref<1x128xf32, #tpu.memory_space<vmem>>, %arg23: memref<1x128x128xbf16, #tpu.memory_space<vmem>>, %arg24: memref<1x128xf32, #tpu.memory_space<vmem>>, %arg25: memref<1x128xf32, #tpu.memory_space<vmem>>, %arg26: memref<8x128x128xbf16, #tpu.memory_space<vmem>>, %arg27: memref<1x128xf32, #tpu.memory_space<vmem>>, %arg28: memref<1x128xf32, #tpu.memory_space<vmem>>, %arg29: memref<5x128x128xbf16, #tpu.memory_space<vmem>>, %arg30: memref<1x128xf32, #tpu.memory_space<vmem>>, %arg31: memref<1x128xf32, #tpu.memory_space<vmem>>, %arg32: memref<3x128x128xbf16, #tpu.memory_space<vmem>>, %arg33: memref<1x128xf32, #tpu.memory_space<vmem>>, %arg34: memref<1x128xf32, #tpu.memory_space<vmem>>, %arg35: memref<128x128xbf16, #tpu.memory_space<vmem>>, %arg36: memref<1x128xf32, #tpu.memory_space<vmem>>, %arg37: memref<2x128xf32, #tpu.memory_space<vmem>>, %arg38: memref<2x32x128xbf16, #tpu.memory_space<vmem>>) attributes {dimension_semantics = [#tpu.dimension_semantics<parallel>], iteration_bounds = array<i64: 1>, scalar_prefetch = 0 : i64, scratch_operands = 1 : i64, tpu.core_type = #tpu.core_type<tc>, window_params = [{transform_indices = @transform_0, window_bounds = array<i64: 32, 128>}, {pipeline_mode = #tpu.pipeline_mode<synchronous>, transform_indices = @transform_1, window_bounds = array<i64: 8, 128, 128>}, {pipeline_mode = #tpu.pipeline_mode<synchronous>, transform_indices = @transform_2, window_bounds = array<i64: 1, 128>}, {pipeline_mode = #tpu.pipeline_mode<synchronous>, transform_indices = @transform_3, window_bounds = array<i64: 1, 128>}, {pipeline_mode = #tpu.pipeline_mode<synchronous>, transform_indices = @transform_4, window_bounds = array<i64: 5, 128, 128>}, {pipeline_mode = #tpu.pipeline_mode<synchronous>, transform_indices = @transform_5, window_bounds = array<i64: 1, 128>}, {pipeline_mode = #tpu.pipeline_mode<synchronous>, transform_indices = @transform_6, window_bounds = array<i64: 1, 128>}, {pipeline_mode = #tpu.pipeline_mode<synchronous>, transform_indices = @transform_7, window_bounds = array<i64: 3, 128, 128>}, {pipeline_mode = #tpu.pipeline_mode<synchronous>, transform_indices = @transform_8, window_bounds = array<i64: 1, 128>}, {pipeline_mode = #tpu.pipeline_mode<synchronous>, transform_indices = @transform_9, window_bounds = array<i64: 1, 128>}, {pipeline_mode = #tpu.pipeline_mode<synchronous>, transform_indices = @transform_10, window_bounds = array<i64: 1, 128, 128>}, {pipeline_mode = #tpu.pipeline_mode<synchronous>, transform_indices = @transform_11, window_bounds = array<i64: 1, 128>}, {pipeline_mode = #tpu.pipeline_mode<synchronous>, transform_indices = @transform_12, window_bounds = array<i64: 1, 128>}, {pipeline_mode = #tpu.pipeline_mode<synchronous>, transform_indices = @transform_13, window_bounds = array<i64: 8, 128, 128>}, {pipeline_mode = #tpu.pipeline_mode<synchronous>, transform_indices = @transform_14, window_bounds = array<i64: 1, 128>}, {pipeline_mode = #tpu.pipeline_mode<synchronous>, transform_indices = @transform_15, window_bounds = array<i64: 1, 128>}, {pipeline_mode = #tpu.pipeline_mode<synchronous>, transform_indices = @transform_16, window_bounds = array<i64: 5, 128, 128>}, {pipeline_mode = #tpu.pipeline_mode<synchronous>, transform_indices = @transform_17, window_bounds = array<i64: 1, 128>}, {pipeline_mode = #tpu.pipeline_mode<synchronous>, transform_indices = @transform_18, window_bounds = array<i64: 1, 128>}, {pipeline_mode = #tpu.pipeline_mode<synchronous>, transform_indices = @transform_19, window_bounds = array<i64: 3, 128, 128>}, {pipeline_mode = #tpu.pipeline_mode<synchronous>, transform_indices = @transform_20, window_bounds = array<i64: 1, 128>}, {pipeline_mode = #tpu.pipeline_mode<synchronous>, transform_indices = @transform_21, window_bounds = array<i64: 1, 128>}, {pipeline_mode = #tpu.pipeline_mode<synchronous>, transform_indices = @transform_22, window_bounds = array<i64: 1, 128, 128>}, {pipeline_mode = #tpu.pipeline_mode<synchronous>, transform_indices = @transform_23, window_bounds = array<i64: 1, 128>}, {pipeline_mode = #tpu.pipeline_mode<synchronous>, transform_indices = @transform_24, window_bounds = array<i64: 1, 128>}, {pipeline_mode = #tpu.pipeline_mode<synchronous>, transform_indices = @transform_25, window_bounds = array<i64: 8, 128, 128>}, {pipeline_mode = #tpu.pipeline_mode<synchronous>, transform_indices = @transform_26, window_bounds = array<i64: 1, 128>}, {pipeline_mode = #tpu.pipeline_mode<synchronous>, transform_indices = @transform_27, window_bounds = array<i64: 1, 128>}, {pipeline_mode = #tpu.pipeline_mode<synchronous>, transform_indices = @transform_28, window_bounds = array<i64: 5, 128, 128>}, {pipeline_mode = #tpu.pipeline_mode<synchronous>, transform_indices = @transform_29, window_bounds = array<i64: 1, 128>}, {pipeline_mode = #tpu.pipeline_mode<synchronous>, transform_indices = @transform_30, window_bounds = array<i64: 1, 128>}, {pipeline_mode = #tpu.pipeline_mode<synchronous>, transform_indices = @transform_31, window_bounds = array<i64: 3, 128, 128>}, {pipeline_mode = #tpu.pipeline_mode<synchronous>, transform_indices = @transform_32, window_bounds = array<i64: 1, 128>}, {pipeline_mode = #tpu.pipeline_mode<synchronous>, transform_indices = @transform_33, window_bounds = array<i64: 1, 128>}, {pipeline_mode = #tpu.pipeline_mode<synchronous>, transform_indices = @transform_34, window_bounds = array<i64: 128, 128>}, {pipeline_mode = #tpu.pipeline_mode<synchronous>, transform_indices = @transform_35, window_bounds = array<i64: 1, 128>}, {transform_indices = @transform_36, window_bounds = array<i64: 2, 128>}]} {
    %cst = arith.constant 0.000000e+00 : bf16
    %0 = vector.broadcast %cst : bf16 to vector<2x8x128xbf16>
    %c0 = arith.constant 0 : index
    %c0_0 = arith.constant 0 : index
    %c0_1 = arith.constant 0 : index
    %1 = vector.load %arg38[%c0, %c0_0, %c0_1] : memref<2x32x128xbf16, #tpu.memory_space<vmem>>, vector<2x8x128xbf16>
    tpu.vector_store %arg38[%c0, %c0_0, %c0_1], %0 {strides = array<i32>} : memref<2x32x128xbf16, #tpu.memory_space<vmem>>, vector<2x8x128xbf16>,
    %cst_2 = arith.constant 0.000000e+00 : bf16
    %2 = vector.broadcast %cst_2 : bf16 to vector<2x8x128xbf16>
    %c0_3 = arith.constant 0 : index
    %c24 = arith.constant 24 : index
    %c0_4 = arith.constant 0 : index
    %3 = vector.load %arg38[%c0_3, %c24, %c0_4] : memref<2x32x128xbf16, #tpu.memory_space<vmem>>, vector<2x8x128xbf16>
    tpu.vector_store %arg38[%c0_3, %c24, %c0_4], %2 {strides = array<i32>} : memref<2x32x128xbf16, #tpu.memory_space<vmem>>, vector<2x8x128xbf16>,
    %c0_5 = arith.constant 0 : index
    %c0_6 = arith.constant 0 : index
    %4 = vector.load %arg1[%c0_5, %c0_6] : memref<32x128xbf16, #tpu.memory_space<vmem>>, vector<32x128xbf16>
    %5 = vector.shape_cast %4 : vector<32x128xbf16> to vector<2x16x128xbf16>
    %c0_7 = arith.constant 0 : index
    %c8 = arith.constant 8 : index
    %c0_8 = arith.constant 0 : index
    %6 = vector.load %arg38[%c0_7, %c8, %c0_8] : memref<2x32x128xbf16, #tpu.memory_space<vmem>>, vector<2x16x128xbf16>
    tpu.vector_store %arg38[%c0_7, %c8, %c0_8], %5 {strides = array<i32>} : memref<2x32x128xbf16, #tpu.memory_space<vmem>>, vector<2x16x128xbf16>,
    %c0_9 = arith.constant 0 : index
    %c5 = arith.constant 5 : index
    %c0_10 = arith.constant 0 : index
    %7 = vector.load %arg38[%c0_9, %c5, %c0_10] : memref<2x32x128xbf16, #tpu.memory_space<vmem>>, vector<2x16x128xbf16>
    %8 = vector.shape_cast %7 : vector<2x16x128xbf16> to vector<32x128xbf16>
    %c0_11 = arith.constant 0 : index
    %c0_12 = arith.constant 0 : index
    %c0_13 = arith.constant 0 : index
    %9 = vector.load %arg2[%c0_11, %c0_12, %c0_13] : memref<8x128x128xbf16, #tpu.memory_space<vmem>>, vector<1x128x128xbf16>
    %10 = vector.shape_cast %9 : vector<1x128x128xbf16> to vector<128x128xbf16>
    %cst_14 = arith.constant dense<0.000000e+00> : vector<32x128xf32>
    %11 = tpu.matmul %8, %10, %cst_14 {dimension_numbers = #tpu.dot_dimension_numbers<[1], [0], [0], [1], [0, 0, 1, 1], [], []>} : vector<32x128xbf16>, vector<128x128xbf16>, vector<32x128xf32> -> vector<32x128xf32>
    %c0_15 = arith.constant 0 : index
    %c6 = arith.constant 6 : index
    %c0_16 = arith.constant 0 : index
    %12 = vector.load %arg38[%c0_15, %c6, %c0_16] : memref<2x32x128xbf16, #tpu.memory_space<vmem>>, vector<2x16x128xbf16>
    %13 = vector.shape_cast %12 : vector<2x16x128xbf16> to vector<32x128xbf16>
    %c1 = arith.constant 1 : index
    %c0_17 = arith.constant 0 : index
    %c0_18 = arith.constant 0 : index
    %14 = vector.load %arg2[%c1, %c0_17, %c0_18] : memref<8x128x128xbf16, #tpu.memory_space<vmem>>, vector<1x128x128xbf16>
    %15 = vector.shape_cast %14 : vector<1x128x128xbf16> to vector<128x128xbf16>
    %cst_19 = arith.constant dense<0.000000e+00> : vector<32x128xf32>
    %16 = tpu.matmul %13, %15, %cst_19 {dimension_numbers = #tpu.dot_dimension_numbers<[1], [0], [0], [1], [0, 0, 1, 1], [], []>} : vector<32x128xbf16>, vector<128x128xbf16>, vector<32x128xf32> -> vector<32x128xf32>
    %17 = arith.addf %11, %16 : vector<32x128xf32>
    %c0_20 = arith.constant 0 : index
    %c7 = arith.constant 7 : index
    %c0_21 = arith.constant 0 : index
    %18 = vector.load %arg38[%c0_20, %c7, %c0_21] : memref<2x32x128xbf16, #tpu.memory_space<vmem>>, vector<2x16x128xbf16>
    %19 = vector.shape_cast %18 : vector<2x16x128xbf16> to vector<32x128xbf16>
    %c2 = arith.constant 2 : index
    %c0_22 = arith.constant 0 : index
    %c0_23 = arith.constant 0 : index
    %20 = vector.load %arg2[%c2, %c0_22, %c0_23] : memref<8x128x128xbf16, #tpu.memory_space<vmem>>, vector<1x128x128xbf16>
    %21 = vector.shape_cast %20 : vector<1x128x128xbf16> to vector<128x128xbf16>
    %cst_24 = arith.constant dense<0.000000e+00> : vector<32x128xf32>
    %22 = tpu.matmul %19, %21, %cst_24 {dimension_numbers = #tpu.dot_dimension_numbers<[1], [0], [0], [1], [0, 0, 1, 1], [], []>} : vector<32x128xbf16>, vector<128x128xbf16>, vector<32x128xf32> -> vector<32x128xf32>
    %23 = arith.addf %17, %22 : vector<32x128xf32>
    %c0_25 = arith.constant 0 : index
    %c8_26 = arith.constant 8 : index
    %c0_27 = arith.constant 0 : index
    %24 = vector.load %arg38[%c0_25, %c8_26, %c0_27] : memref<2x32x128xbf16, #tpu.memory_space<vmem>>, vector<2x16x128xbf16>
    %25 = vector.shape_cast %24 : vector<2x16x128xbf16> to vector<32x128xbf16>
    %c3 = arith.constant 3 : index
    %c0_28 = arith.constant 0 : index
    %c0_29 = arith.constant 0 : index
    %26 = vector.load %arg2[%c3, %c0_28, %c0_29] : memref<8x128x128xbf16, #tpu.memory_space<vmem>>, vector<1x128x128xbf16>
    %27 = vector.shape_cast %26 : vector<1x128x128xbf16> to vector<128x128xbf16>
    %cst_30 = arith.constant dense<0.000000e+00> : vector<32x128xf32>
    %28 = tpu.matmul %25, %27, %cst_30 {dimension_numbers = #tpu.dot_dimension_numbers<[1], [0], [0], [1], [0, 0, 1, 1], [], []>} : vector<32x128xbf16>, vector<128x128xbf16>, vector<32x128xf32> -> vector<32x128xf32>
    %29 = arith.addf %23, %28 : vector<32x128xf32>
    %c0_31 = arith.constant 0 : index
    %c9 = arith.constant 9 : index
    %c0_32 = arith.constant 0 : index
    %30 = vector.load %arg38[%c0_31, %c9, %c0_32] : memref<2x32x128xbf16, #tpu.memory_space<vmem>>, vector<2x16x128xbf16>
    %31 = vector.shape_cast %30 : vector<2x16x128xbf16> to vector<32x128xbf16>
    %c4 = arith.constant 4 : index
    %c0_33 = arith.constant 0 : index
    %c0_34 = arith.constant 0 : index
    %32 = vector.load %arg2[%c4, %c0_33, %c0_34] : memref<8x128x128xbf16, #tpu.memory_space<vmem>>, vector<1x128x128xbf16>
    %33 = vector.shape_cast %32 : vector<1x128x128xbf16> to vector<128x128xbf16>
    %cst_35 = arith.constant dense<0.000000e+00> : vector<32x128xf32>
    %34 = tpu.matmul %31, %33, %cst_35 {dimension_numbers = #tpu.dot_dimension_numbers<[1], [0], [0], [1], [0, 0, 1, 1], [], []>} : vector<32x128xbf16>, vector<128x128xbf16>, vector<32x128xf32> -> vector<32x128xf32>
    %35 = arith.addf %29, %34 : vector<32x128xf32>
    %c0_36 = arith.constant 0 : index
    %c10 = arith.constant 10 : index
    %c0_37 = arith.constant 0 : index
    %36 = vector.load %arg38[%c0_36, %c10, %c0_37] : memref<2x32x128xbf16, #tpu.memory_space<vmem>>, vector<2x16x128xbf16>
    %37 = vector.shape_cast %36 : vector<2x16x128xbf16> to vector<32x128xbf16>
    %c5_38 = arith.constant 5 : index
    %c0_39 = arith.constant 0 : index
    %c0_40 = arith.constant 0 : index
    %38 = vector.load %arg2[%c5_38, %c0_39, %c0_40] : memref<8x128x128xbf16, #tpu.memory_space<vmem>>, vector<1x128x128xbf16>
    %39 = vector.shape_cast %38 : vector<1x128x128xbf16> to vector<128x128xbf16>
    %cst_41 = arith.constant dense<0.000000e+00> : vector<32x128xf32>
    %40 = tpu.matmul %37, %39, %cst_41 {dimension_numbers = #tpu.dot_dimension_numbers<[1], [0], [0], [1], [0, 0, 1, 1], [], []>} : vector<32x128xbf16>, vector<128x128xbf16>, vector<32x128xf32> -> vector<32x128xf32>
    %41 = arith.addf %35, %40 : vector<32x128xf32>
    %c0_42 = arith.constant 0 : index
    %c11 = arith.constant 11 : index
    %c0_43 = arith.constant 0 : index
    %42 = vector.load %arg38[%c0_42, %c11, %c0_43] : memref<2x32x128xbf16, #tpu.memory_space<vmem>>, vector<2x16x128xbf16>
    %43 = vector.shape_cast %42 : vector<2x16x128xbf16> to vector<32x128xbf16>
    %c6_44 = arith.constant 6 : index
    %c0_45 = arith.constant 0 : index
    %c0_46 = arith.constant 0 : index
    %44 = vector.load %arg2[%c6_44, %c0_45, %c0_46] : memref<8x128x128xbf16, #tpu.memory_space<vmem>>, vector<1x128x128xbf16>
    %45 = vector.shape_cast %44 : vector<1x128x128xbf16> to vector<128x128xbf16>
    %cst_47 = arith.constant dense<0.000000e+00> : vector<32x128xf32>
    %46 = tpu.matmul %43, %45, %cst_47 {dimension_numbers = #tpu.dot_dimension_numbers<[1], [0], [0], [1], [0, 0, 1, 1], [], []>} : vector<32x128xbf16>, vector<128x128xbf16>, vector<32x128xf32> -> vector<32x128xf32>
    %47 = arith.addf %41, %46 : vector<32x128xf32>
    %c0_48 = arith.constant 0 : index
    %c12 = arith.constant 12 : index
    %c0_49 = arith.constant 0 : index
    %48 = vector.load %arg38[%c0_48, %c12, %c0_49] : memref<2x32x128xbf16, #tpu.memory_space<vmem>>, vector<2x16x128xbf16>
    %49 = vector.shape_cast %48 : vector<2x16x128xbf16> to vector<32x128xbf16>
    %c7_50 = arith.constant 7 : index
    %c0_51 = arith.constant 0 : index
    %c0_52 = arith.constant 0 : index
    %50 = vector.load %arg2[%c7_50, %c0_51, %c0_52] : memref<8x128x128xbf16, #tpu.memory_space<vmem>>, vector<1x128x128xbf16>
    %51 = vector.shape_cast %50 : vector<1x128x128xbf16> to vector<128x128xbf16>
    %cst_53 = arith.constant dense<0.000000e+00> : vector<32x128xf32>
    %52 = tpu.matmul %49, %51, %cst_53 {dimension_numbers = #tpu.dot_dimension_numbers<[1], [0], [0], [1], [0, 0, 1, 1], [], []>} : vector<32x128xbf16>, vector<128x128xbf16>, vector<32x128xf32> -> vector<32x128xf32>
    %53 = arith.addf %47, %52 : vector<32x128xf32>
    %c0_54 = arith.constant 0 : index
    %c0_55 = arith.constant 0 : index
    %54 = vector.load %arg3[%c0_54, %c0_55] : memref<1x128xf32, #tpu.memory_space<vmem>>, vector<1x128xf32>
    %55 = vector.broadcast %54 : vector<1x128xf32> to vector<32x128xf32>
    %56 = arith.mulf %53, %55 : vector<32x128xf32>
    %c0_56 = arith.constant 0 : index
    %c0_57 = arith.constant 0 : index
    %57 = vector.load %arg4[%c0_56, %c0_57] : memref<1x128xf32, #tpu.memory_space<vmem>>, vector<1x128xf32>
    %58 = vector.broadcast %57 : vector<1x128xf32> to vector<32x128xf32>
    %59 = arith.addf %56, %58 : vector<32x128xf32>
    %cst_58 = arith.constant 0.000000e+00 : f32
    %60 = vector.broadcast %cst_58 : f32 to vector<32x128xf32>
    %61 = arith.maximumf %59, %60 : vector<32x128xf32>
    %62 = arith.truncf %61 : vector<32x128xf32> to vector<32x128xbf16>
    %63 = vector.shape_cast %62 : vector<32x128xbf16> to vector<2x16x128xbf16>
    %c0_59 = arith.constant 0 : index
    %c8_60 = arith.constant 8 : index
    %c0_61 = arith.constant 0 : index
    %64 = vector.load %arg38[%c0_59, %c8_60, %c0_61] : memref<2x32x128xbf16, #tpu.memory_space<vmem>>, vector<2x16x128xbf16>
    tpu.vector_store %arg38[%c0_59, %c8_60, %c0_61], %63 {strides = array<i32>} : memref<2x32x128xbf16, #tpu.memory_space<vmem>>, vector<2x16x128xbf16>,
    %c0_62 = arith.constant 0 : index
    %c6_63 = arith.constant 6 : index
    %c0_64 = arith.constant 0 : index
    %65 = vector.load %arg38[%c0_62, %c6_63, %c0_64] : memref<2x32x128xbf16, #tpu.memory_space<vmem>>, vector<2x16x128xbf16>
    %66 = vector.shape_cast %65 : vector<2x16x128xbf16> to vector<32x128xbf16>
    %c0_65 = arith.constant 0 : index
    %c0_66 = arith.constant 0 : index
    %c0_67 = arith.constant 0 : index
    %67 = vector.load %arg5[%c0_65, %c0_66, %c0_67] : memref<5x128x128xbf16, #tpu.memory_space<vmem>>, vector<1x128x128xbf16>
    %68 = vector.shape_cast %67 : vector<1x128x128xbf16> to vector<128x128xbf16>
    %cst_68 = arith.constant dense<0.000000e+00> : vector<32x128xf32>
    %69 = tpu.matmul %66, %68, %cst_68 {dimension_numbers = #tpu.dot_dimension_numbers<[1], [0], [0], [1], [0, 0, 1, 1], [], []>} : vector<32x128xbf16>, vector<128x128xbf16>, vector<32x128xf32> -> vector<32x128xf32>
    %c0_69 = arith.constant 0 : index
    %c7_70 = arith.constant 7 : index
    %c0_71 = arith.constant 0 : index
    %70 = vector.load %arg38[%c0_69, %c7_70, %c0_71] : memref<2x32x128xbf16, #tpu.memory_space<vmem>>, vector<2x16x128xbf16>
    %71 = vector.shape_cast %70 : vector<2x16x128xbf16> to vector<32x128xbf16>
    %c1_72 = arith.constant 1 : index
    %c0_73 = arith.constant 0 : index
    %c0_74 = arith.constant 0 : index
    %72 = vector.load %arg5[%c1_72, %c0_73, %c0_74] : memref<5x128x128xbf16, #tpu.memory_space<vmem>>, vector<1x128x128xbf16>
    %73 = vector.shape_cast %72 : vector<1x128x128xbf16> to vector<128x128xbf16>
    %cst_75 = arith.constant dense<0.000000e+00> : vector<32x128xf32>
    %74 = tpu.matmul %71, %73, %cst_75 {dimension_numbers = #tpu.dot_dimension_numbers<[1], [0], [0], [1], [0, 0, 1, 1], [], []>} : vector<32x128xbf16>, vector<128x128xbf16>, vector<32x128xf32> -> vector<32x128xf32>
    %75 = arith.addf %69, %74 : vector<32x128xf32>
    %c0_76 = arith.constant 0 : index
    %c8_77 = arith.constant 8 : index
    %c0_78 = arith.constant 0 : index
    %76 = vector.load %arg38[%c0_76, %c8_77, %c0_78] : memref<2x32x128xbf16, #tpu.memory_space<vmem>>, vector<2x16x128xbf16>
    %77 = vector.shape_cast %76 : vector<2x16x128xbf16> to vector<32x128xbf16>
    %c2_79 = arith.constant 2 : index
    %c0_80 = arith.constant 0 : index
    %c0_81 = arith.constant 0 : index
    %78 = vector.load %arg5[%c2_79, %c0_80, %c0_81] : memref<5x128x128xbf16, #tpu.memory_space<vmem>>, vector<1x128x128xbf16>
    %79 = vector.shape_cast %78 : vector<1x128x128xbf16> to vector<128x128xbf16>
    %cst_82 = arith.constant dense<0.000000e+00> : vector<32x128xf32>
    %80 = tpu.matmul %77, %79, %cst_82 {dimension_numbers = #tpu.dot_dimension_numbers<[1], [0], [0], [1], [0, 0, 1, 1], [], []>} : vector<32x128xbf16>, vector<128x128xbf16>, vector<32x128xf32> -> vector<32x128xf32>
    %81 = arith.addf %75, %80 : vector<32x128xf32>
    %c0_83 = arith.constant 0 : index
    %c9_84 = arith.constant 9 : index
    %c0_85 = arith.constant 0 : index
    %82 = vector.load %arg38[%c0_83, %c9_84, %c0_85] : memref<2x32x128xbf16, #tpu.memory_space<vmem>>, vector<2x16x128xbf16>
    %83 = vector.shape_cast %82 : vector<2x16x128xbf16> to vector<32x128xbf16>
    %c3_86 = arith.constant 3 : index
    %c0_87 = arith.constant 0 : index
    %c0_88 = arith.constant 0 : index
    %84 = vector.load %arg5[%c3_86, %c0_87, %c0_88] : memref<5x128x128xbf16, #tpu.memory_space<vmem>>, vector<1x128x128xbf16>
    %85 = vector.shape_cast %84 : vector<1x128x128xbf16> to vector<128x128xbf16>
    %cst_89 = arith.constant dense<0.000000e+00> : vector<32x128xf32>
    %86 = tpu.matmul %83, %85, %cst_89 {dimension_numbers = #tpu.dot_dimension_numbers<[1], [0], [0], [1], [0, 0, 1, 1], [], []>} : vector<32x128xbf16>, vector<128x128xbf16>, vector<32x128xf32> -> vector<32x128xf32>
    %87 = arith.addf %81, %86 : vector<32x128xf32>
    %c0_90 = arith.constant 0 : index
    %c10_91 = arith.constant 10 : index
    %c0_92 = arith.constant 0 : index
    %88 = vector.load %arg38[%c0_90, %c10_91, %c0_92] : memref<2x32x128xbf16, #tpu.memory_space<vmem>>, vector<2x16x128xbf16>
    %89 = vector.shape_cast %88 : vector<2x16x128xbf16> to vector<32x128xbf16>
    %c4_93 = arith.constant 4 : index
    %c0_94 = arith.constant 0 : index
    %c0_95 = arith.constant 0 : index
    %90 = vector.load %arg5[%c4_93, %c0_94, %c0_95] : memref<5x128x128xbf16, #tpu.memory_space<vmem>>, vector<1x128x128xbf16>
    %91 = vector.shape_cast %90 : vector<1x128x128xbf16> to vector<128x128xbf16>
    %cst_96 = arith.constant dense<0.000000e+00> : vector<32x128xf32>
    %92 = tpu.matmul %89, %91, %cst_96 {dimension_numbers = #tpu.dot_dimension_numbers<[1], [0], [0], [1], [0, 0, 1, 1], [], []>} : vector<32x128xbf16>, vector<128x128xbf16>, vector<32x128xf32> -> vector<32x128xf32>
    %93 = arith.addf %87, %92 : vector<32x128xf32>
    %c0_97 = arith.constant 0 : index
    %c0_98 = arith.constant 0 : index
    %94 = vector.load %arg6[%c0_97, %c0_98] : memref<1x128xf32, #tpu.memory_space<vmem>>, vector<1x128xf32>
    %95 = vector.broadcast %94 : vector<1x128xf32> to vector<32x128xf32>
    %96 = arith.mulf %93, %95 : vector<32x128xf32>
    %c0_99 = arith.constant 0 : index
    %c0_100 = arith.constant 0 : index
    %97 = vector.load %arg7[%c0_99, %c0_100] : memref<1x128xf32, #tpu.memory_space<vmem>>, vector<1x128xf32>
    %98 = vector.broadcast %97 : vector<1x128xf32> to vector<32x128xf32>
    %99 = arith.addf %96, %98 : vector<32x128xf32>
    %cst_101 = arith.constant 0.000000e+00 : f32
    %100 = vector.broadcast %cst_101 : f32 to vector<32x128xf32>
    %101 = arith.maximumf %99, %100 : vector<32x128xf32>
    %102 = arith.truncf %101 : vector<32x128xf32> to vector<32x128xbf16>
    %103 = vector.shape_cast %102 : vector<32x128xbf16> to vector<2x16x128xbf16>
    %c0_102 = arith.constant 0 : index
    %c8_103 = arith.constant 8 : index
    %c0_104 = arith.constant 0 : index
    %104 = vector.load %arg38[%c0_102, %c8_103, %c0_104] : memref<2x32x128xbf16, #tpu.memory_space<vmem>>, vector<2x16x128xbf16>
    tpu.vector_store %arg38[%c0_102, %c8_103, %c0_104], %103 {strides = array<i32>} : memref<2x32x128xbf16, #tpu.memory_space<vmem>>, vector<2x16x128xbf16>,
    %c0_105 = arith.constant 0 : index
    %c7_106 = arith.constant 7 : index
    %c0_107 = arith.constant 0 : index
    %105 = vector.load %arg38[%c0_105, %c7_106, %c0_107] : memref<2x32x128xbf16, #tpu.memory_space<vmem>>, vector<2x16x128xbf16>
    %106 = vector.shape_cast %105 : vector<2x16x128xbf16> to vector<32x128xbf16>
    %c0_108 = arith.constant 0 : index
    %c0_109 = arith.constant 0 : index
    %c0_110 = arith.constant 0 : index
    %107 = vector.load %arg8[%c0_108, %c0_109, %c0_110] : memref<3x128x128xbf16, #tpu.memory_space<vmem>>, vector<1x128x128xbf16>
    %108 = vector.shape_cast %107 : vector<1x128x128xbf16> to vector<128x128xbf16>
    %cst_111 = arith.constant dense<0.000000e+00> : vector<32x128xf32>
    %109 = tpu.matmul %106, %108, %cst_111 {dimension_numbers = #tpu.dot_dimension_numbers<[1], [0], [0], [1], [0, 0, 1, 1], [], []>} : vector<32x128xbf16>, vector<128x128xbf16>, vector<32x128xf32> -> vector<32x128xf32>
    %c0_112 = arith.constant 0 : index
    %c8_113 = arith.constant 8 : index
    %c0_114 = arith.constant 0 : index
    %110 = vector.load %arg38[%c0_112, %c8_113, %c0_114] : memref<2x32x128xbf16, #tpu.memory_space<vmem>>, vector<2x16x128xbf16>
    %111 = vector.shape_cast %110 : vector<2x16x128xbf16> to vector<32x128xbf16>
    %c1_115 = arith.constant 1 : index
    %c0_116 = arith.constant 0 : index
    %c0_117 = arith.constant 0 : index
    %112 = vector.load %arg8[%c1_115, %c0_116, %c0_117] : memref<3x128x128xbf16, #tpu.memory_space<vmem>>, vector<1x128x128xbf16>
    %113 = vector.shape_cast %112 : vector<1x128x128xbf16> to vector<128x128xbf16>
    %cst_118 = arith.constant dense<0.000000e+00> : vector<32x128xf32>
    %114 = tpu.matmul %111, %113, %cst_118 {dimension_numbers = #tpu.dot_dimension_numbers<[1], [0], [0], [1], [0, 0, 1, 1], [], []>} : vector<32x128xbf16>, vector<128x128xbf16>, vector<32x128xf32> -> vector<32x128xf32>
    %115 = arith.addf %109, %114 : vector<32x128xf32>
    %c0_119 = arith.constant 0 : index
    %c9_120 = arith.constant 9 : index
    %c0_121 = arith.constant 0 : index
    %116 = vector.load %arg38[%c0_119, %c9_120, %c0_121] : memref<2x32x128xbf16, #tpu.memory_space<vmem>>, vector<2x16x128xbf16>
    %117 = vector.shape_cast %116 : vector<2x16x128xbf16> to vector<32x128xbf16>
    %c2_122 = arith.constant 2 : index
    %c0_123 = arith.constant 0 : index
    %c0_124 = arith.constant 0 : index
    %118 = vector.load %arg8[%c2_122, %c0_123, %c0_124] : memref<3x128x128xbf16, #tpu.memory_space<vmem>>, vector<1x128x128xbf16>
    %119 = vector.shape_cast %118 : vector<1x128x128xbf16> to vector<128x128xbf16>
    %cst_125 = arith.constant dense<0.000000e+00> : vector<32x128xf32>
    %120 = tpu.matmul %117, %119, %cst_125 {dimension_numbers = #tpu.dot_dimension_numbers<[1], [0], [0], [1], [0, 0, 1, 1], [], []>} : vector<32x128xbf16>, vector<128x128xbf16>, vector<32x128xf32> -> vector<32x128xf32>
    %121 = arith.addf %115, %120 : vector<32x128xf32>
    %c0_126 = arith.constant 0 : index
    %c0_127 = arith.constant 0 : index
    %122 = vector.load %arg9[%c0_126, %c0_127] : memref<1x128xf32, #tpu.memory_space<vmem>>, vector<1x128xf32>
    %123 = vector.broadcast %122 : vector<1x128xf32> to vector<32x128xf32>
    %124 = arith.mulf %121, %123 : vector<32x128xf32>
    %c0_128 = arith.constant 0 : index
    %c0_129 = arith.constant 0 : index
    %125 = vector.load %arg10[%c0_128, %c0_129] : memref<1x128xf32, #tpu.memory_space<vmem>>, vector<1x128xf32>
    %126 = vector.broadcast %125 : vector<1x128xf32> to vector<32x128xf32>
    %127 = arith.addf %124, %126 : vector<32x128xf32>
    %cst_130 = arith.constant 0.000000e+00 : f32
    %128 = vector.broadcast %cst_130 : f32 to vector<32x128xf32>
    %129 = arith.maximumf %127, %128 : vector<32x128xf32>
    %c0_131 = arith.constant 0 : index
    %c0_132 = arith.constant 0 : index
    %c0_133 = arith.constant 0 : index
    %130 = vector.load %arg11[%c0_131, %c0_132, %c0_133] : memref<1x128x128xbf16, #tpu.memory_space<vmem>>, vector<1x128x128xbf16>
    %131 = vector.shape_cast %130 : vector<1x128x128xbf16> to vector<128x128xbf16>
    %cst_134 = arith.constant dense<0.000000e+00> : vector<32x128xf32>
    %132 = tpu.matmul %4, %131, %cst_134 {dimension_numbers = #tpu.dot_dimension_numbers<[1], [0], [0], [1], [0, 0, 1, 1], [], []>} : vector<32x128xbf16>, vector<128x128xbf16>, vector<32x128xf32> -> vector<32x128xf32>
    %c0_135 = arith.constant 0 : index
    %c0_136 = arith.constant 0 : index
    %133 = vector.load %arg12[%c0_135, %c0_136] : memref<1x128xf32, #tpu.memory_space<vmem>>, vector<1x128xf32>
    %134 = vector.broadcast %133 : vector<1x128xf32> to vector<32x128xf32>
    %135 = arith.mulf %132, %134 : vector<32x128xf32>
    %c0_137 = arith.constant 0 : index
    %c0_138 = arith.constant 0 : index
    %136 = vector.load %arg13[%c0_137, %c0_138] : memref<1x128xf32, #tpu.memory_space<vmem>>, vector<1x128xf32>
    %137 = vector.broadcast %136 : vector<1x128xf32> to vector<32x128xf32>
    %138 = arith.addf %135, %137 : vector<32x128xf32>
    %139 = arith.addf %129, %138 : vector<32x128xf32>
    %140 = arith.truncf %139 : vector<32x128xf32> to vector<32x128xbf16>
    %141 = vector.shape_cast %140 : vector<32x128xbf16> to vector<2x16x128xbf16>
    %c0_139 = arith.constant 0 : index
    %c8_140 = arith.constant 8 : index
    %c0_141 = arith.constant 0 : index
    %142 = vector.load %arg38[%c0_139, %c8_140, %c0_141] : memref<2x32x128xbf16, #tpu.memory_space<vmem>>, vector<2x16x128xbf16>
    tpu.vector_store %arg38[%c0_139, %c8_140, %c0_141], %141 {strides = array<i32>} : memref<2x32x128xbf16, #tpu.memory_space<vmem>>, vector<2x16x128xbf16>,
    %c0_142 = arith.constant 0 : index
    %c5_143 = arith.constant 5 : index
    %c0_144 = arith.constant 0 : index
    %143 = vector.load %arg38[%c0_142, %c5_143, %c0_144] : memref<2x32x128xbf16, #tpu.memory_space<vmem>>, vector<2x16x128xbf16>
    %144 = vector.shape_cast %143 : vector<2x16x128xbf16> to vector<32x128xbf16>
    %c0_145 = arith.constant 0 : index
    %c0_146 = arith.constant 0 : index
    %c0_147 = arith.constant 0 : index
    %145 = vector.load %arg14[%c0_145, %c0_146, %c0_147] : memref<8x128x128xbf16, #tpu.memory_space<vmem>>, vector<1x128x128xbf16>
    %146 = vector.shape_cast %145 : vector<1x128x128xbf16> to vector<128x128xbf16>
    %cst_148 = arith.constant dense<0.000000e+00> : vector<32x128xf32>
    %147 = tpu.matmul %144, %146, %cst_148 {dimension_numbers = #tpu.dot_dimension_numbers<[1], [0], [0], [1], [0, 0, 1, 1], [], []>} : vector<32x128xbf16>, vector<128x128xbf16>, vector<32x128xf32> -> vector<32x128xf32>
    %c0_149 = arith.constant 0 : index
    %c6_150 = arith.constant 6 : index
    %c0_151 = arith.constant 0 : index
    %148 = vector.load %arg38[%c0_149, %c6_150, %c0_151] : memref<2x32x128xbf16, #tpu.memory_space<vmem>>, vector<2x16x128xbf16>
    %149 = vector.shape_cast %148 : vector<2x16x128xbf16> to vector<32x128xbf16>
    %c1_152 = arith.constant 1 : index
    %c0_153 = arith.constant 0 : index
    %c0_154 = arith.constant 0 : index
    %150 = vector.load %arg14[%c1_152, %c0_153, %c0_154] : memref<8x128x128xbf16, #tpu.memory_space<vmem>>, vector<1x128x128xbf16>
    %151 = vector.shape_cast %150 : vector<1x128x128xbf16> to vector<128x128xbf16>
    %cst_155 = arith.constant dense<0.000000e+00> : vector<32x128xf32>
    %152 = tpu.matmul %149, %151, %cst_155 {dimension_numbers = #tpu.dot_dimension_numbers<[1], [0], [0], [1], [0, 0, 1, 1], [], []>} : vector<32x128xbf16>, vector<128x128xbf16>, vector<32x128xf32> -> vector<32x128xf32>
    %153 = arith.addf %147, %152 : vector<32x128xf32>
    %c0_156 = arith.constant 0 : index
    %c7_157 = arith.constant 7 : index
    %c0_158 = arith.constant 0 : index
    %154 = vector.load %arg38[%c0_156, %c7_157, %c0_158] : memref<2x32x128xbf16, #tpu.memory_space<vmem>>, vector<2x16x128xbf16>
    %155 = vector.shape_cast %154 : vector<2x16x128xbf16> to vector<32x128xbf16>
    %c2_159 = arith.constant 2 : index
    %c0_160 = arith.constant 0 : index
    %c0_161 = arith.constant 0 : index
    %156 = vector.load %arg14[%c2_159, %c0_160, %c0_161] : memref<8x128x128xbf16, #tpu.memory_space<vmem>>, vector<1x128x128xbf16>
    %157 = vector.shape_cast %156 : vector<1x128x128xbf16> to vector<128x128xbf16>
    %cst_162 = arith.constant dense<0.000000e+00> : vector<32x128xf32>
    %158 = tpu.matmul %155, %157, %cst_162 {dimension_numbers = #tpu.dot_dimension_numbers<[1], [0], [0], [1], [0, 0, 1, 1], [], []>} : vector<32x128xbf16>, vector<128x128xbf16>, vector<32x128xf32> -> vector<32x128xf32>
    %159 = arith.addf %153, %158 : vector<32x128xf32>
    %c0_163 = arith.constant 0 : index
    %c8_164 = arith.constant 8 : index
    %c0_165 = arith.constant 0 : index
    %160 = vector.load %arg38[%c0_163, %c8_164, %c0_165] : memref<2x32x128xbf16, #tpu.memory_space<vmem>>, vector<2x16x128xbf16>
    %161 = vector.shape_cast %160 : vector<2x16x128xbf16> to vector<32x128xbf16>
    %c3_166 = arith.constant 3 : index
    %c0_167 = arith.constant 0 : index
    %c0_168 = arith.constant 0 : index
    %162 = vector.load %arg14[%c3_166, %c0_167, %c0_168] : memref<8x128x128xbf16, #tpu.memory_space<vmem>>, vector<1x128x128xbf16>
    %163 = vector.shape_cast %162 : vector<1x128x128xbf16> to vector<128x128xbf16>
    %cst_169 = arith.constant dense<0.000000e+00> : vector<32x128xf32>
    %164 = tpu.matmul %161, %163, %cst_169 {dimension_numbers = #tpu.dot_dimension_numbers<[1], [0], [0], [1], [0, 0, 1, 1], [], []>} : vector<32x128xbf16>, vector<128x128xbf16>, vector<32x128xf32> -> vector<32x128xf32>
    %165 = arith.addf %159, %164 : vector<32x128xf32>
    %c0_170 = arith.constant 0 : index
    %c9_171 = arith.constant 9 : index
    %c0_172 = arith.constant 0 : index
    %166 = vector.load %arg38[%c0_170, %c9_171, %c0_172] : memref<2x32x128xbf16, #tpu.memory_space<vmem>>, vector<2x16x128xbf16>
    %167 = vector.shape_cast %166 : vector<2x16x128xbf16> to vector<32x128xbf16>
    %c4_173 = arith.constant 4 : index
    %c0_174 = arith.constant 0 : index
    %c0_175 = arith.constant 0 : index
    %168 = vector.load %arg14[%c4_173, %c0_174, %c0_175] : memref<8x128x128xbf16, #tpu.memory_space<vmem>>, vector<1x128x128xbf16>
    %169 = vector.shape_cast %168 : vector<1x128x128xbf16> to vector<128x128xbf16>
    %cst_176 = arith.constant dense<0.000000e+00> : vector<32x128xf32>
    %170 = tpu.matmul %167, %169, %cst_176 {dimension_numbers = #tpu.dot_dimension_numbers<[1], [0], [0], [1], [0, 0, 1, 1], [], []>} : vector<32x128xbf16>, vector<128x128xbf16>, vector<32x128xf32> -> vector<32x128xf32>
    %171 = arith.addf %165, %170 : vector<32x128xf32>
    %c0_177 = arith.constant 0 : index
    %c10_178 = arith.constant 10 : index
    %c0_179 = arith.constant 0 : index
    %172 = vector.load %arg38[%c0_177, %c10_178, %c0_179] : memref<2x32x128xbf16, #tpu.memory_space<vmem>>, vector<2x16x128xbf16>
    %173 = vector.shape_cast %172 : vector<2x16x128xbf16> to vector<32x128xbf16>
    %c5_180 = arith.constant 5 : index
    %c0_181 = arith.constant 0 : index
    %c0_182 = arith.constant 0 : index
    %174 = vector.load %arg14[%c5_180, %c0_181, %c0_182] : memref<8x128x128xbf16, #tpu.memory_space<vmem>>, vector<1x128x128xbf16>
    %175 = vector.shape_cast %174 : vector<1x128x128xbf16> to vector<128x128xbf16>
    %cst_183 = arith.constant dense<0.000000e+00> : vector<32x128xf32>
    %176 = tpu.matmul %173, %175, %cst_183 {dimension_numbers = #tpu.dot_dimension_numbers<[1], [0], [0], [1], [0, 0, 1, 1], [], []>} : vector<32x128xbf16>, vector<128x128xbf16>, vector<32x128xf32> -> vector<32x128xf32>
    %177 = arith.addf %171, %176 : vector<32x128xf32>
    %c0_184 = arith.constant 0 : index
    %c11_185 = arith.constant 11 : index
    %c0_186 = arith.constant 0 : index
    %178 = vector.load %arg38[%c0_184, %c11_185, %c0_186] : memref<2x32x128xbf16, #tpu.memory_space<vmem>>, vector<2x16x128xbf16>
    %179 = vector.shape_cast %178 : vector<2x16x128xbf16> to vector<32x128xbf16>
    %c6_187 = arith.constant 6 : index
    %c0_188 = arith.constant 0 : index
    %c0_189 = arith.constant 0 : index
    %180 = vector.load %arg14[%c6_187, %c0_188, %c0_189] : memref<8x128x128xbf16, #tpu.memory_space<vmem>>, vector<1x128x128xbf16>
    %181 = vector.shape_cast %180 : vector<1x128x128xbf16> to vector<128x128xbf16>
    %cst_190 = arith.constant dense<0.000000e+00> : vector<32x128xf32>
    %182 = tpu.matmul %179, %181, %cst_190 {dimension_numbers = #tpu.dot_dimension_numbers<[1], [0], [0], [1], [0, 0, 1, 1], [], []>} : vector<32x128xbf16>, vector<128x128xbf16>, vector<32x128xf32> -> vector<32x128xf32>
    %183 = arith.addf %177, %182 : vector<32x128xf32>
    %c0_191 = arith.constant 0 : index
    %c12_192 = arith.constant 12 : index
    %c0_193 = arith.constant 0 : index
    %184 = vector.load %arg38[%c0_191, %c12_192, %c0_193] : memref<2x32x128xbf16, #tpu.memory_space<vmem>>, vector<2x16x128xbf16>
    %185 = vector.shape_cast %184 : vector<2x16x128xbf16> to vector<32x128xbf16>
    %c7_194 = arith.constant 7 : index
    %c0_195 = arith.constant 0 : index
    %c0_196 = arith.constant 0 : index
    %186 = vector.load %arg14[%c7_194, %c0_195, %c0_196] : memref<8x128x128xbf16, #tpu.memory_space<vmem>>, vector<1x128x128xbf16>
    %187 = vector.shape_cast %186 : vector<1x128x128xbf16> to vector<128x128xbf16>
    %cst_197 = arith.constant dense<0.000000e+00> : vector<32x128xf32>
    %188 = tpu.matmul %185, %187, %cst_197 {dimension_numbers = #tpu.dot_dimension_numbers<[1], [0], [0], [1], [0, 0, 1, 1], [], []>} : vector<32x128xbf16>, vector<128x128xbf16>, vector<32x128xf32> -> vector<32x128xf32>
    %189 = arith.addf %183, %188 : vector<32x128xf32>
    %c0_198 = arith.constant 0 : index
    %c0_199 = arith.constant 0 : index
    %190 = vector.load %arg15[%c0_198, %c0_199] : memref<1x128xf32, #tpu.memory_space<vmem>>, vector<1x128xf32>
    %191 = vector.broadcast %190 : vector<1x128xf32> to vector<32x128xf32>
    %192 = arith.mulf %189, %191 : vector<32x128xf32>
    %c0_200 = arith.constant 0 : index
    %c0_201 = arith.constant 0 : index
    %193 = vector.load %arg16[%c0_200, %c0_201] : memref<1x128xf32, #tpu.memory_space<vmem>>, vector<1x128xf32>
    %194 = vector.broadcast %193 : vector<1x128xf32> to vector<32x128xf32>
    %195 = arith.addf %192, %194 : vector<32x128xf32>
    %cst_202 = arith.constant 0.000000e+00 : f32
    %196 = vector.broadcast %cst_202 : f32 to vector<32x128xf32>
    %197 = arith.maximumf %195, %196 : vector<32x128xf32>
    %198 = arith.truncf %197 : vector<32x128xf32> to vector<32x128xbf16>
    %199 = vector.shape_cast %198 : vector<32x128xbf16> to vector<2x16x128xbf16>
    %c0_203 = arith.constant 0 : index
    %c8_204 = arith.constant 8 : index
    %c0_205 = arith.constant 0 : index
    %200 = vector.load %arg38[%c0_203, %c8_204, %c0_205] : memref<2x32x128xbf16, #tpu.memory_space<vmem>>, vector<2x16x128xbf16>
    tpu.vector_store %arg38[%c0_203, %c8_204, %c0_205], %199 {strides = array<i32>} : memref<2x32x128xbf16, #tpu.memory_space<vmem>>, vector<2x16x128xbf16>,
    %c0_206 = arith.constant 0 : index
    %c6_207 = arith.constant 6 : index
    %c0_208 = arith.constant 0 : index
    %201 = vector.load %arg38[%c0_206, %c6_207, %c0_208] : memref<2x32x128xbf16, #tpu.memory_space<vmem>>, vector<2x16x128xbf16>
    %202 = vector.shape_cast %201 : vector<2x16x128xbf16> to vector<32x128xbf16>
    %c0_209 = arith.constant 0 : index
    %c0_210 = arith.constant 0 : index
    %c0_211 = arith.constant 0 : index
    %203 = vector.load %arg17[%c0_209, %c0_210, %c0_211] : memref<5x128x128xbf16, #tpu.memory_space<vmem>>, vector<1x128x128xbf16>
    %204 = vector.shape_cast %203 : vector<1x128x128xbf16> to vector<128x128xbf16>
    %cst_212 = arith.constant dense<0.000000e+00> : vector<32x128xf32>
    %205 = tpu.matmul %202, %204, %cst_212 {dimension_numbers = #tpu.dot_dimension_numbers<[1], [0], [0], [1], [0, 0, 1, 1], [], []>} : vector<32x128xbf16>, vector<128x128xbf16>, vector<32x128xf32> -> vector<32x128xf32>
    %c0_213 = arith.constant 0 : index
    %c7_214 = arith.constant 7 : index
    %c0_215 = arith.constant 0 : index
    %206 = vector.load %arg38[%c0_213, %c7_214, %c0_215] : memref<2x32x128xbf16, #tpu.memory_space<vmem>>, vector<2x16x128xbf16>
    %207 = vector.shape_cast %206 : vector<2x16x128xbf16> to vector<32x128xbf16>
    %c1_216 = arith.constant 1 : index
    %c0_217 = arith.constant 0 : index
    %c0_218 = arith.constant 0 : index
    %208 = vector.load %arg17[%c1_216, %c0_217, %c0_218] : memref<5x128x128xbf16, #tpu.memory_space<vmem>>, vector<1x128x128xbf16>
    %209 = vector.shape_cast %208 : vector<1x128x128xbf16> to vector<128x128xbf16>
    %cst_219 = arith.constant dense<0.000000e+00> : vector<32x128xf32>
    %210 = tpu.matmul %207, %209, %cst_219 {dimension_numbers = #tpu.dot_dimension_numbers<[1], [0], [0], [1], [0, 0, 1, 1], [], []>} : vector<32x128xbf16>, vector<128x128xbf16>, vector<32x128xf32> -> vector<32x128xf32>
    %211 = arith.addf %205, %210 : vector<32x128xf32>
    %c0_220 = arith.constant 0 : index
    %c8_221 = arith.constant 8 : index
    %c0_222 = arith.constant 0 : index
    %212 = vector.load %arg38[%c0_220, %c8_221, %c0_222] : memref<2x32x128xbf16, #tpu.memory_space<vmem>>, vector<2x16x128xbf16>
    %213 = vector.shape_cast %212 : vector<2x16x128xbf16> to vector<32x128xbf16>
    %c2_223 = arith.constant 2 : index
    %c0_224 = arith.constant 0 : index
    %c0_225 = arith.constant 0 : index
    %214 = vector.load %arg17[%c2_223, %c0_224, %c0_225] : memref<5x128x128xbf16, #tpu.memory_space<vmem>>, vector<1x128x128xbf16>
    %215 = vector.shape_cast %214 : vector<1x128x128xbf16> to vector<128x128xbf16>
    %cst_226 = arith.constant dense<0.000000e+00> : vector<32x128xf32>
    %216 = tpu.matmul %213, %215, %cst_226 {dimension_numbers = #tpu.dot_dimension_numbers<[1], [0], [0], [1], [0, 0, 1, 1], [], []>} : vector<32x128xbf16>, vector<128x128xbf16>, vector<32x128xf32> -> vector<32x128xf32>
    %217 = arith.addf %211, %216 : vector<32x128xf32>
    %c0_227 = arith.constant 0 : index
    %c9_228 = arith.constant 9 : index
    %c0_229 = arith.constant 0 : index
    %218 = vector.load %arg38[%c0_227, %c9_228, %c0_229] : memref<2x32x128xbf16, #tpu.memory_space<vmem>>, vector<2x16x128xbf16>
    %219 = vector.shape_cast %218 : vector<2x16x128xbf16> to vector<32x128xbf16>
    %c3_230 = arith.constant 3 : index
    %c0_231 = arith.constant 0 : index
    %c0_232 = arith.constant 0 : index
    %220 = vector.load %arg17[%c3_230, %c0_231, %c0_232] : memref<5x128x128xbf16, #tpu.memory_space<vmem>>, vector<1x128x128xbf16>
    %221 = vector.shape_cast %220 : vector<1x128x128xbf16> to vector<128x128xbf16>
    %cst_233 = arith.constant dense<0.000000e+00> : vector<32x128xf32>
    %222 = tpu.matmul %219, %221, %cst_233 {dimension_numbers = #tpu.dot_dimension_numbers<[1], [0], [0], [1], [0, 0, 1, 1], [], []>} : vector<32x128xbf16>, vector<128x128xbf16>, vector<32x128xf32> -> vector<32x128xf32>
    %223 = arith.addf %217, %222 : vector<32x128xf32>
    %c0_234 = arith.constant 0 : index
    %c10_235 = arith.constant 10 : index
    %c0_236 = arith.constant 0 : index
    %224 = vector.load %arg38[%c0_234, %c10_235, %c0_236] : memref<2x32x128xbf16, #tpu.memory_space<vmem>>, vector<2x16x128xbf16>
    %225 = vector.shape_cast %224 : vector<2x16x128xbf16> to vector<32x128xbf16>
    %c4_237 = arith.constant 4 : index
    %c0_238 = arith.constant 0 : index
    %c0_239 = arith.constant 0 : index
    %226 = vector.load %arg17[%c4_237, %c0_238, %c0_239] : memref<5x128x128xbf16, #tpu.memory_space<vmem>>, vector<1x128x128xbf16>
    %227 = vector.shape_cast %226 : vector<1x128x128xbf16> to vector<128x128xbf16>
    %cst_240 = arith.constant dense<0.000000e+00> : vector<32x128xf32>
    %228 = tpu.matmul %225, %227, %cst_240 {dimension_numbers = #tpu.dot_dimension_numbers<[1], [0], [0], [1], [0, 0, 1, 1], [], []>} : vector<32x128xbf16>, vector<128x128xbf16>, vector<32x128xf32> -> vector<32x128xf32>
    %229 = arith.addf %223, %228 : vector<32x128xf32>
    %c0_241 = arith.constant 0 : index
    %c0_242 = arith.constant 0 : index
    %230 = vector.load %arg18[%c0_241, %c0_242] : memref<1x128xf32, #tpu.memory_space<vmem>>, vector<1x128xf32>
    %231 = vector.broadcast %230 : vector<1x128xf32> to vector<32x128xf32>
    %232 = arith.mulf %229, %231 : vector<32x128xf32>
    %c0_243 = arith.constant 0 : index
    %c0_244 = arith.constant 0 : index
    %233 = vector.load %arg19[%c0_243, %c0_244] : memref<1x128xf32, #tpu.memory_space<vmem>>, vector<1x128xf32>
    %234 = vector.broadcast %233 : vector<1x128xf32> to vector<32x128xf32>
    %235 = arith.addf %232, %234 : vector<32x128xf32>
    %cst_245 = arith.constant 0.000000e+00 : f32
    %236 = vector.broadcast %cst_245 : f32 to vector<32x128xf32>
    %237 = arith.maximumf %235, %236 : vector<32x128xf32>
    %238 = arith.truncf %237 : vector<32x128xf32> to vector<32x128xbf16>
    %239 = vector.shape_cast %238 : vector<32x128xbf16> to vector<2x16x128xbf16>
    %c0_246 = arith.constant 0 : index
    %c8_247 = arith.constant 8 : index
    %c0_248 = arith.constant 0 : index
    %240 = vector.load %arg38[%c0_246, %c8_247, %c0_248] : memref<2x32x128xbf16, #tpu.memory_space<vmem>>, vector<2x16x128xbf16>
    tpu.vector_store %arg38[%c0_246, %c8_247, %c0_248], %239 {strides = array<i32>} : memref<2x32x128xbf16, #tpu.memory_space<vmem>>, vector<2x16x128xbf16>,
    %c0_249 = arith.constant 0 : index
    %c7_250 = arith.constant 7 : index
    %c0_251 = arith.constant 0 : index
    %241 = vector.load %arg38[%c0_249, %c7_250, %c0_251] : memref<2x32x128xbf16, #tpu.memory_space<vmem>>, vector<2x16x128xbf16>
    %242 = vector.shape_cast %241 : vector<2x16x128xbf16> to vector<32x128xbf16>
    %c0_252 = arith.constant 0 : index
    %c0_253 = arith.constant 0 : index
    %c0_254 = arith.constant 0 : index
    %243 = vector.load %arg20[%c0_252, %c0_253, %c0_254] : memref<3x128x128xbf16, #tpu.memory_space<vmem>>, vector<1x128x128xbf16>
    %244 = vector.shape_cast %243 : vector<1x128x128xbf16> to vector<128x128xbf16>
    %cst_255 = arith.constant dense<0.000000e+00> : vector<32x128xf32>
    %245 = tpu.matmul %242, %244, %cst_255 {dimension_numbers = #tpu.dot_dimension_numbers<[1], [0], [0], [1], [0, 0, 1, 1], [], []>} : vector<32x128xbf16>, vector<128x128xbf16>, vector<32x128xf32> -> vector<32x128xf32>
    %c0_256 = arith.constant 0 : index
    %c8_257 = arith.constant 8 : index
    %c0_258 = arith.constant 0 : index
    %246 = vector.load %arg38[%c0_256, %c8_257, %c0_258] : memref<2x32x128xbf16, #tpu.memory_space<vmem>>, vector<2x16x128xbf16>
    %247 = vector.shape_cast %246 : vector<2x16x128xbf16> to vector<32x128xbf16>
    %c1_259 = arith.constant 1 : index
    %c0_260 = arith.constant 0 : index
    %c0_261 = arith.constant 0 : index
    %248 = vector.load %arg20[%c1_259, %c0_260, %c0_261] : memref<3x128x128xbf16, #tpu.memory_space<vmem>>, vector<1x128x128xbf16>
    %249 = vector.shape_cast %248 : vector<1x128x128xbf16> to vector<128x128xbf16>
    %cst_262 = arith.constant dense<0.000000e+00> : vector<32x128xf32>
    %250 = tpu.matmul %247, %249, %cst_262 {dimension_numbers = #tpu.dot_dimension_numbers<[1], [0], [0], [1], [0, 0, 1, 1], [], []>} : vector<32x128xbf16>, vector<128x128xbf16>, vector<32x128xf32> -> vector<32x128xf32>
    %251 = arith.addf %245, %250 : vector<32x128xf32>
    %c0_263 = arith.constant 0 : index
    %c9_264 = arith.constant 9 : index
    %c0_265 = arith.constant 0 : index
    %252 = vector.load %arg38[%c0_263, %c9_264, %c0_265] : memref<2x32x128xbf16, #tpu.memory_space<vmem>>, vector<2x16x128xbf16>
    %253 = vector.shape_cast %252 : vector<2x16x128xbf16> to vector<32x128xbf16>
    %c2_266 = arith.constant 2 : index
    %c0_267 = arith.constant 0 : index
    %c0_268 = arith.constant 0 : index
    %254 = vector.load %arg20[%c2_266, %c0_267, %c0_268] : memref<3x128x128xbf16, #tpu.memory_space<vmem>>, vector<1x128x128xbf16>
    %255 = vector.shape_cast %254 : vector<1x128x128xbf16> to vector<128x128xbf16>
    %cst_269 = arith.constant dense<0.000000e+00> : vector<32x128xf32>
    %256 = tpu.matmul %253, %255, %cst_269 {dimension_numbers = #tpu.dot_dimension_numbers<[1], [0], [0], [1], [0, 0, 1, 1], [], []>} : vector<32x128xbf16>, vector<128x128xbf16>, vector<32x128xf32> -> vector<32x128xf32>
    %257 = arith.addf %251, %256 : vector<32x128xf32>
    %c0_270 = arith.constant 0 : index
    %c0_271 = arith.constant 0 : index
    %258 = vector.load %arg21[%c0_270, %c0_271] : memref<1x128xf32, #tpu.memory_space<vmem>>, vector<1x128xf32>
    %259 = vector.broadcast %258 : vector<1x128xf32> to vector<32x128xf32>
    %260 = arith.mulf %257, %259 : vector<32x128xf32>
    %c0_272 = arith.constant 0 : index
    %c0_273 = arith.constant 0 : index
    %261 = vector.load %arg22[%c0_272, %c0_273] : memref<1x128xf32, #tpu.memory_space<vmem>>, vector<1x128xf32>
    %262 = vector.broadcast %261 : vector<1x128xf32> to vector<32x128xf32>
    %263 = arith.addf %260, %262 : vector<32x128xf32>
    %cst_274 = arith.constant 0.000000e+00 : f32
    %264 = vector.broadcast %cst_274 : f32 to vector<32x128xf32>
    %265 = arith.maximumf %263, %264 : vector<32x128xf32>
    %266 = arith.truncf %139 : vector<32x128xf32> to vector<32x128xbf16>
    %c0_275 = arith.constant 0 : index
    %c0_276 = arith.constant 0 : index
    %c0_277 = arith.constant 0 : index
    %267 = vector.load %arg23[%c0_275, %c0_276, %c0_277] : memref<1x128x128xbf16, #tpu.memory_space<vmem>>, vector<1x128x128xbf16>
    %268 = vector.shape_cast %267 : vector<1x128x128xbf16> to vector<128x128xbf16>
    %cst_278 = arith.constant dense<0.000000e+00> : vector<32x128xf32>
    %269 = tpu.matmul %266, %268, %cst_278 {dimension_numbers = #tpu.dot_dimension_numbers<[1], [0], [0], [1], [0, 0, 1, 1], [], []>} : vector<32x128xbf16>, vector<128x128xbf16>, vector<32x128xf32> -> vector<32x128xf32>
    %c0_279 = arith.constant 0 : index
    %c0_280 = arith.constant 0 : index
    %270 = vector.load %arg24[%c0_279, %c0_280] : memref<1x128xf32, #tpu.memory_space<vmem>>, vector<1x128xf32>
    %271 = vector.broadcast %270 : vector<1x128xf32> to vector<32x128xf32>
    %272 = arith.mulf %269, %271 : vector<32x128xf32>
    %c0_281 = arith.constant 0 : index
    %c0_282 = arith.constant 0 : index
    %273 = vector.load %arg25[%c0_281, %c0_282] : memref<1x128xf32, #tpu.memory_space<vmem>>, vector<1x128xf32>
    %274 = vector.broadcast %273 : vector<1x128xf32> to vector<32x128xf32>
    %275 = arith.addf %272, %274 : vector<32x128xf32>
    %276 = arith.addf %265, %275 : vector<32x128xf32>
    %277 = arith.truncf %276 : vector<32x128xf32> to vector<32x128xbf16>
    %278 = vector.shape_cast %277 : vector<32x128xbf16> to vector<2x16x128xbf16>
    %c0_283 = arith.constant 0 : index
    %c8_284 = arith.constant 8 : index
    %c0_285 = arith.constant 0 : index
    %279 = vector.load %arg38[%c0_283, %c8_284, %c0_285] : memref<2x32x128xbf16, #tpu.memory_space<vmem>>, vector<2x16x128xbf16>
    tpu.vector_store %arg38[%c0_283, %c8_284, %c0_285], %278 {strides = array<i32>} : memref<2x32x128xbf16, #tpu.memory_space<vmem>>, vector<2x16x128xbf16>,
    %c0_286 = arith.constant 0 : index
    %c5_287 = arith.constant 5 : index
    %c0_288 = arith.constant 0 : index
    %280 = vector.load %arg38[%c0_286, %c5_287, %c0_288] : memref<2x32x128xbf16, #tpu.memory_space<vmem>>, vector<2x16x128xbf16>
    %281 = vector.shape_cast %280 : vector<2x16x128xbf16> to vector<32x128xbf16>
    %c0_289 = arith.constant 0 : index
    %c0_290 = arith.constant 0 : index
    %c0_291 = arith.constant 0 : index
    %282 = vector.load %arg26[%c0_289, %c0_290, %c0_291] : memref<8x128x128xbf16, #tpu.memory_space<vmem>>, vector<1x128x128xbf16>
    %283 = vector.shape_cast %282 : vector<1x128x128xbf16> to vector<128x128xbf16>
    %cst_292 = arith.constant dense<0.000000e+00> : vector<32x128xf32>
    %284 = tpu.matmul %281, %283, %cst_292 {dimension_numbers = #tpu.dot_dimension_numbers<[1], [0], [0], [1], [0, 0, 1, 1], [], []>} : vector<32x128xbf16>, vector<128x128xbf16>, vector<32x128xf32> -> vector<32x128xf32>
    %c0_293 = arith.constant 0 : index
    %c6_294 = arith.constant 6 : index
    %c0_295 = arith.constant 0 : index
    %285 = vector.load %arg38[%c0_293, %c6_294, %c0_295] : memref<2x32x128xbf16, #tpu.memory_space<vmem>>, vector<2x16x128xbf16>
    %286 = vector.shape_cast %285 : vector<2x16x128xbf16> to vector<32x128xbf16>
    %c1_296 = arith.constant 1 : index
    %c0_297 = arith.constant 0 : index
    %c0_298 = arith.constant 0 : index
    %287 = vector.load %arg26[%c1_296, %c0_297, %c0_298] : memref<8x128x128xbf16, #tpu.memory_space<vmem>>, vector<1x128x128xbf16>
    %288 = vector.shape_cast %287 : vector<1x128x128xbf16> to vector<128x128xbf16>
    %cst_299 = arith.constant dense<0.000000e+00> : vector<32x128xf32>
    %289 = tpu.matmul %286, %288, %cst_299 {dimension_numbers = #tpu.dot_dimension_numbers<[1], [0], [0], [1], [0, 0, 1, 1], [], []>} : vector<32x128xbf16>, vector<128x128xbf16>, vector<32x128xf32> -> vector<32x128xf32>
    %290 = arith.addf %284, %289 : vector<32x128xf32>
    %c0_300 = arith.constant 0 : index
    %c7_301 = arith.constant 7 : index
    %c0_302 = arith.constant 0 : index
    %291 = vector.load %arg38[%c0_300, %c7_301, %c0_302] : memref<2x32x128xbf16, #tpu.memory_space<vmem>>, vector<2x16x128xbf16>
    %292 = vector.shape_cast %291 : vector<2x16x128xbf16> to vector<32x128xbf16>
    %c2_303 = arith.constant 2 : index
    %c0_304 = arith.constant 0 : index
    %c0_305 = arith.constant 0 : index
    %293 = vector.load %arg26[%c2_303, %c0_304, %c0_305] : memref<8x128x128xbf16, #tpu.memory_space<vmem>>, vector<1x128x128xbf16>
    %294 = vector.shape_cast %293 : vector<1x128x128xbf16> to vector<128x128xbf16>
    %cst_306 = arith.constant dense<0.000000e+00> : vector<32x128xf32>
    %295 = tpu.matmul %292, %294, %cst_306 {dimension_numbers = #tpu.dot_dimension_numbers<[1], [0], [0], [1], [0, 0, 1, 1], [], []>} : vector<32x128xbf16>, vector<128x128xbf16>, vector<32x128xf32> -> vector<32x128xf32>
    %296 = arith.addf %290, %295 : vector<32x128xf32>
    %c0_307 = arith.constant 0 : index
    %c8_308 = arith.constant 8 : index
    %c0_309 = arith.constant 0 : index
    %297 = vector.load %arg38[%c0_307, %c8_308, %c0_309] : memref<2x32x128xbf16, #tpu.memory_space<vmem>>, vector<2x16x128xbf16>
    %298 = vector.shape_cast %297 : vector<2x16x128xbf16> to vector<32x128xbf16>
    %c3_310 = arith.constant 3 : index
    %c0_311 = arith.constant 0 : index
    %c0_312 = arith.constant 0 : index
    %299 = vector.load %arg26[%c3_310, %c0_311, %c0_312] : memref<8x128x128xbf16, #tpu.memory_space<vmem>>, vector<1x128x128xbf16>
    %300 = vector.shape_cast %299 : vector<1x128x128xbf16> to vector<128x128xbf16>
    %cst_313 = arith.constant dense<0.000000e+00> : vector<32x128xf32>
    %301 = tpu.matmul %298, %300, %cst_313 {dimension_numbers = #tpu.dot_dimension_numbers<[1], [0], [0], [1], [0, 0, 1, 1], [], []>} : vector<32x128xbf16>, vector<128x128xbf16>, vector<32x128xf32> -> vector<32x128xf32>
    %302 = arith.addf %296, %301 : vector<32x128xf32>
    %c0_314 = arith.constant 0 : index
    %c9_315 = arith.constant 9 : index
    %c0_316 = arith.constant 0 : index
    %303 = vector.load %arg38[%c0_314, %c9_315, %c0_316] : memref<2x32x128xbf16, #tpu.memory_space<vmem>>, vector<2x16x128xbf16>
    %304 = vector.shape_cast %303 : vector<2x16x128xbf16> to vector<32x128xbf16>
    %c4_317 = arith.constant 4 : index
    %c0_318 = arith.constant 0 : index
    %c0_319 = arith.constant 0 : index
    %305 = vector.load %arg26[%c4_317, %c0_318, %c0_319] : memref<8x128x128xbf16, #tpu.memory_space<vmem>>, vector<1x128x128xbf16>
    %306 = vector.shape_cast %305 : vector<1x128x128xbf16> to vector<128x128xbf16>
    %cst_320 = arith.constant dense<0.000000e+00> : vector<32x128xf32>
    %307 = tpu.matmul %304, %306, %cst_320 {dimension_numbers = #tpu.dot_dimension_numbers<[1], [0], [0], [1], [0, 0, 1, 1], [], []>} : vector<32x128xbf16>, vector<128x128xbf16>, vector<32x128xf32> -> vector<32x128xf32>
    %308 = arith.addf %302, %307 : vector<32x128xf32>
    %c0_321 = arith.constant 0 : index
    %c10_322 = arith.constant 10 : index
    %c0_323 = arith.constant 0 : index
    %309 = vector.load %arg38[%c0_321, %c10_322, %c0_323] : memref<2x32x128xbf16, #tpu.memory_space<vmem>>, vector<2x16x128xbf16>
    %310 = vector.shape_cast %309 : vector<2x16x128xbf16> to vector<32x128xbf16>
    %c5_324 = arith.constant 5 : index
    %c0_325 = arith.constant 0 : index
    %c0_326 = arith.constant 0 : index
    %311 = vector.load %arg26[%c5_324, %c0_325, %c0_326] : memref<8x128x128xbf16, #tpu.memory_space<vmem>>, vector<1x128x128xbf16>
    %312 = vector.shape_cast %311 : vector<1x128x128xbf16> to vector<128x128xbf16>
    %cst_327 = arith.constant dense<0.000000e+00> : vector<32x128xf32>
    %313 = tpu.matmul %310, %312, %cst_327 {dimension_numbers = #tpu.dot_dimension_numbers<[1], [0], [0], [1], [0, 0, 1, 1], [], []>} : vector<32x128xbf16>, vector<128x128xbf16>, vector<32x128xf32> -> vector<32x128xf32>
    %314 = arith.addf %308, %313 : vector<32x128xf32>
    %c0_328 = arith.constant 0 : index
    %c11_329 = arith.constant 11 : index
    %c0_330 = arith.constant 0 : index
    %315 = vector.load %arg38[%c0_328, %c11_329, %c0_330] : memref<2x32x128xbf16, #tpu.memory_space<vmem>>, vector<2x16x128xbf16>
    %316 = vector.shape_cast %315 : vector<2x16x128xbf16> to vector<32x128xbf16>
    %c6_331 = arith.constant 6 : index
    %c0_332 = arith.constant 0 : index
    %c0_333 = arith.constant 0 : index
    %317 = vector.load %arg26[%c6_331, %c0_332, %c0_333] : memref<8x128x128xbf16, #tpu.memory_space<vmem>>, vector<1x128x128xbf16>
    %318 = vector.shape_cast %317 : vector<1x128x128xbf16> to vector<128x128xbf16>
    %cst_334 = arith.constant dense<0.000000e+00> : vector<32x128xf32>
    %319 = tpu.matmul %316, %318, %cst_334 {dimension_numbers = #tpu.dot_dimension_numbers<[1], [0], [0], [1], [0, 0, 1, 1], [], []>} : vector<32x128xbf16>, vector<128x128xbf16>, vector<32x128xf32> -> vector<32x128xf32>
    %320 = arith.addf %314, %319 : vector<32x128xf32>
    %c0_335 = arith.constant 0 : index
    %c12_336 = arith.constant 12 : index
    %c0_337 = arith.constant 0 : index
    %321 = vector.load %arg38[%c0_335, %c12_336, %c0_337] : memref<2x32x128xbf16, #tpu.memory_space<vmem>>, vector<2x16x128xbf16>
    %322 = vector.shape_cast %321 : vector<2x16x128xbf16> to vector<32x128xbf16>
    %c7_338 = arith.constant 7 : index
    %c0_339 = arith.constant 0 : index
    %c0_340 = arith.constant 0 : index
    %323 = vector.load %arg26[%c7_338, %c0_339, %c0_340] : memref<8x128x128xbf16, #tpu.memory_space<vmem>>, vector<1x128x128xbf16>
    %324 = vector.shape_cast %323 : vector<1x128x128xbf16> to vector<128x128xbf16>
    %cst_341 = arith.constant dense<0.000000e+00> : vector<32x128xf32>
    %325 = tpu.matmul %322, %324, %cst_341 {dimension_numbers = #tpu.dot_dimension_numbers<[1], [0], [0], [1], [0, 0, 1, 1], [], []>} : vector<32x128xbf16>, vector<128x128xbf16>, vector<32x128xf32> -> vector<32x128xf32>
    %326 = arith.addf %320, %325 : vector<32x128xf32>
    %c0_342 = arith.constant 0 : index
    %c0_343 = arith.constant 0 : index
    %327 = vector.load %arg27[%c0_342, %c0_343] : memref<1x128xf32, #tpu.memory_space<vmem>>, vector<1x128xf32>
    %328 = vector.broadcast %327 : vector<1x128xf32> to vector<32x128xf32>
    %329 = arith.mulf %326, %328 : vector<32x128xf32>
    %c0_344 = arith.constant 0 : index
    %c0_345 = arith.constant 0 : index
    %330 = vector.load %arg28[%c0_344, %c0_345] : memref<1x128xf32, #tpu.memory_space<vmem>>, vector<1x128xf32>
    %331 = vector.broadcast %330 : vector<1x128xf32> to vector<32x128xf32>
    %332 = arith.addf %329, %331 : vector<32x128xf32>
    %cst_346 = arith.constant 0.000000e+00 : f32
    %333 = vector.broadcast %cst_346 : f32 to vector<32x128xf32>
    %334 = arith.maximumf %332, %333 : vector<32x128xf32>
    %335 = arith.truncf %334 : vector<32x128xf32> to vector<32x128xbf16>
    %336 = vector.shape_cast %335 : vector<32x128xbf16> to vector<2x16x128xbf16>
    %c0_347 = arith.constant 0 : index
    %c8_348 = arith.constant 8 : index
    %c0_349 = arith.constant 0 : index
    %337 = vector.load %arg38[%c0_347, %c8_348, %c0_349] : memref<2x32x128xbf16, #tpu.memory_space<vmem>>, vector<2x16x128xbf16>
    tpu.vector_store %arg38[%c0_347, %c8_348, %c0_349], %336 {strides = array<i32>} : memref<2x32x128xbf16, #tpu.memory_space<vmem>>, vector<2x16x128xbf16>,
    %c0_350 = arith.constant 0 : index
    %c6_351 = arith.constant 6 : index
    %c0_352 = arith.constant 0 : index
    %338 = vector.load %arg38[%c0_350, %c6_351, %c0_352] : memref<2x32x128xbf16, #tpu.memory_space<vmem>>, vector<2x16x128xbf16>
    %339 = vector.shape_cast %338 : vector<2x16x128xbf16> to vector<32x128xbf16>
    %c0_353 = arith.constant 0 : index
    %c0_354 = arith.constant 0 : index
    %c0_355 = arith.constant 0 : index
    %340 = vector.load %arg29[%c0_353, %c0_354, %c0_355] : memref<5x128x128xbf16, #tpu.memory_space<vmem>>, vector<1x128x128xbf16>
    %341 = vector.shape_cast %340 : vector<1x128x128xbf16> to vector<128x128xbf16>
    %cst_356 = arith.constant dense<0.000000e+00> : vector<32x128xf32>
    %342 = tpu.matmul %339, %341, %cst_356 {dimension_numbers = #tpu.dot_dimension_numbers<[1], [0], [0], [1], [0, 0, 1, 1], [], []>} : vector<32x128xbf16>, vector<128x128xbf16>, vector<32x128xf32> -> vector<32x128xf32>
    %c0_357 = arith.constant 0 : index
    %c7_358 = arith.constant 7 : index
    %c0_359 = arith.constant 0 : index
    %343 = vector.load %arg38[%c0_357, %c7_358, %c0_359] : memref<2x32x128xbf16, #tpu.memory_space<vmem>>, vector<2x16x128xbf16>
    %344 = vector.shape_cast %343 : vector<2x16x128xbf16> to vector<32x128xbf16>
    %c1_360 = arith.constant 1 : index
    %c0_361 = arith.constant 0 : index
    %c0_362 = arith.constant 0 : index
    %345 = vector.load %arg29[%c1_360, %c0_361, %c0_362] : memref<5x128x128xbf16, #tpu.memory_space<vmem>>, vector<1x128x128xbf16>
    %346 = vector.shape_cast %345 : vector<1x128x128xbf16> to vector<128x128xbf16>
    %cst_363 = arith.constant dense<0.000000e+00> : vector<32x128xf32>
    %347 = tpu.matmul %344, %346, %cst_363 {dimension_numbers = #tpu.dot_dimension_numbers<[1], [0], [0], [1], [0, 0, 1, 1], [], []>} : vector<32x128xbf16>, vector<128x128xbf16>, vector<32x128xf32> -> vector<32x128xf32>
    %348 = arith.addf %342, %347 : vector<32x128xf32>
    %c0_364 = arith.constant 0 : index
    %c8_365 = arith.constant 8 : index
    %c0_366 = arith.constant 0 : index
    %349 = vector.load %arg38[%c0_364, %c8_365, %c0_366] : memref<2x32x128xbf16, #tpu.memory_space<vmem>>, vector<2x16x128xbf16>
    %350 = vector.shape_cast %349 : vector<2x16x128xbf16> to vector<32x128xbf16>
    %c2_367 = arith.constant 2 : index
    %c0_368 = arith.constant 0 : index
    %c0_369 = arith.constant 0 : index
    %351 = vector.load %arg29[%c2_367, %c0_368, %c0_369] : memref<5x128x128xbf16, #tpu.memory_space<vmem>>, vector<1x128x128xbf16>
    %352 = vector.shape_cast %351 : vector<1x128x128xbf16> to vector<128x128xbf16>
    %cst_370 = arith.constant dense<0.000000e+00> : vector<32x128xf32>
    %353 = tpu.matmul %350, %352, %cst_370 {dimension_numbers = #tpu.dot_dimension_numbers<[1], [0], [0], [1], [0, 0, 1, 1], [], []>} : vector<32x128xbf16>, vector<128x128xbf16>, vector<32x128xf32> -> vector<32x128xf32>
    %354 = arith.addf %348, %353 : vector<32x128xf32>
    %c0_371 = arith.constant 0 : index
    %c9_372 = arith.constant 9 : index
    %c0_373 = arith.constant 0 : index
    %355 = vector.load %arg38[%c0_371, %c9_372, %c0_373] : memref<2x32x128xbf16, #tpu.memory_space<vmem>>, vector<2x16x128xbf16>
    %356 = vector.shape_cast %355 : vector<2x16x128xbf16> to vector<32x128xbf16>
    %c3_374 = arith.constant 3 : index
    %c0_375 = arith.constant 0 : index
    %c0_376 = arith.constant 0 : index
    %357 = vector.load %arg29[%c3_374, %c0_375, %c0_376] : memref<5x128x128xbf16, #tpu.memory_space<vmem>>, vector<1x128x128xbf16>
    %358 = vector.shape_cast %357 : vector<1x128x128xbf16> to vector<128x128xbf16>
    %cst_377 = arith.constant dense<0.000000e+00> : vector<32x128xf32>
    %359 = tpu.matmul %356, %358, %cst_377 {dimension_numbers = #tpu.dot_dimension_numbers<[1], [0], [0], [1], [0, 0, 1, 1], [], []>} : vector<32x128xbf16>, vector<128x128xbf16>, vector<32x128xf32> -> vector<32x128xf32>
    %360 = arith.addf %354, %359 : vector<32x128xf32>
    %c0_378 = arith.constant 0 : index
    %c10_379 = arith.constant 10 : index
    %c0_380 = arith.constant 0 : index
    %361 = vector.load %arg38[%c0_378, %c10_379, %c0_380] : memref<2x32x128xbf16, #tpu.memory_space<vmem>>, vector<2x16x128xbf16>
    %362 = vector.shape_cast %361 : vector<2x16x128xbf16> to vector<32x128xbf16>
    %c4_381 = arith.constant 4 : index
    %c0_382 = arith.constant 0 : index
    %c0_383 = arith.constant 0 : index
    %363 = vector.load %arg29[%c4_381, %c0_382, %c0_383] : memref<5x128x128xbf16, #tpu.memory_space<vmem>>, vector<1x128x128xbf16>
    %364 = vector.shape_cast %363 : vector<1x128x128xbf16> to vector<128x128xbf16>
    %cst_384 = arith.constant dense<0.000000e+00> : vector<32x128xf32>
    %365 = tpu.matmul %362, %364, %cst_384 {dimension_numbers = #tpu.dot_dimension_numbers<[1], [0], [0], [1], [0, 0, 1, 1], [], []>} : vector<32x128xbf16>, vector<128x128xbf16>, vector<32x128xf32> -> vector<32x128xf32>
    %366 = arith.addf %360, %365 : vector<32x128xf32>
    %c0_385 = arith.constant 0 : index
    %c0_386 = arith.constant 0 : index
    %367 = vector.load %arg30[%c0_385, %c0_386] : memref<1x128xf32, #tpu.memory_space<vmem>>, vector<1x128xf32>
    %368 = vector.broadcast %367 : vector<1x128xf32> to vector<32x128xf32>
    %369 = arith.mulf %366, %368 : vector<32x128xf32>
    %c0_387 = arith.constant 0 : index
    %c0_388 = arith.constant 0 : index
    %370 = vector.load %arg31[%c0_387, %c0_388] : memref<1x128xf32, #tpu.memory_space<vmem>>, vector<1x128xf32>
    %371 = vector.broadcast %370 : vector<1x128xf32> to vector<32x128xf32>
    %372 = arith.addf %369, %371 : vector<32x128xf32>
    %cst_389 = arith.constant 0.000000e+00 : f32
    %373 = vector.broadcast %cst_389 : f32 to vector<32x128xf32>
    %374 = arith.maximumf %372, %373 : vector<32x128xf32>
    %375 = arith.truncf %374 : vector<32x128xf32> to vector<32x128xbf16>
    %376 = vector.shape_cast %375 : vector<32x128xbf16> to vector<2x16x128xbf16>
    %c0_390 = arith.constant 0 : index
    %c8_391 = arith.constant 8 : index
    %c0_392 = arith.constant 0 : index
    %377 = vector.load %arg38[%c0_390, %c8_391, %c0_392] : memref<2x32x128xbf16, #tpu.memory_space<vmem>>, vector<2x16x128xbf16>
    tpu.vector_store %arg38[%c0_390, %c8_391, %c0_392], %376 {strides = array<i32>} : memref<2x32x128xbf16, #tpu.memory_space<vmem>>, vector<2x16x128xbf16>,
    %c0_393 = arith.constant 0 : index
    %c7_394 = arith.constant 7 : index
    %c0_395 = arith.constant 0 : index
    %378 = vector.load %arg38[%c0_393, %c7_394, %c0_395] : memref<2x32x128xbf16, #tpu.memory_space<vmem>>, vector<2x16x128xbf16>
    %379 = vector.shape_cast %378 : vector<2x16x128xbf16> to vector<32x128xbf16>
    %c0_396 = arith.constant 0 : index
    %c0_397 = arith.constant 0 : index
    %c0_398 = arith.constant 0 : index
    %380 = vector.load %arg32[%c0_396, %c0_397, %c0_398] : memref<3x128x128xbf16, #tpu.memory_space<vmem>>, vector<1x128x128xbf16>
    %381 = vector.shape_cast %380 : vector<1x128x128xbf16> to vector<128x128xbf16>
    %cst_399 = arith.constant dense<0.000000e+00> : vector<32x128xf32>
    %382 = tpu.matmul %379, %381, %cst_399 {dimension_numbers = #tpu.dot_dimension_numbers<[1], [0], [0], [1], [0, 0, 1, 1], [], []>} : vector<32x128xbf16>, vector<128x128xbf16>, vector<32x128xf32> -> vector<32x128xf32>
    %c0_400 = arith.constant 0 : index
    %c8_401 = arith.constant 8 : index
    %c0_402 = arith.constant 0 : index
    %383 = vector.load %arg38[%c0_400, %c8_401, %c0_402] : memref<2x32x128xbf16, #tpu.memory_space<vmem>>, vector<2x16x128xbf16>
    %384 = vector.shape_cast %383 : vector<2x16x128xbf16> to vector<32x128xbf16>
    %c1_403 = arith.constant 1 : index
    %c0_404 = arith.constant 0 : index
    %c0_405 = arith.constant 0 : index
    %385 = vector.load %arg32[%c1_403, %c0_404, %c0_405] : memref<3x128x128xbf16, #tpu.memory_space<vmem>>, vector<1x128x128xbf16>
    %386 = vector.shape_cast %385 : vector<1x128x128xbf16> to vector<128x128xbf16>
    %cst_406 = arith.constant dense<0.000000e+00> : vector<32x128xf32>
    %387 = tpu.matmul %384, %386, %cst_406 {dimension_numbers = #tpu.dot_dimension_numbers<[1], [0], [0], [1], [0, 0, 1, 1], [], []>} : vector<32x128xbf16>, vector<128x128xbf16>, vector<32x128xf32> -> vector<32x128xf32>
    %388 = arith.addf %382, %387 : vector<32x128xf32>
    %c0_407 = arith.constant 0 : index
    %c9_408 = arith.constant 9 : index
    %c0_409 = arith.constant 0 : index
    %389 = vector.load %arg38[%c0_407, %c9_408, %c0_409] : memref<2x32x128xbf16, #tpu.memory_space<vmem>>, vector<2x16x128xbf16>
    %390 = vector.shape_cast %389 : vector<2x16x128xbf16> to vector<32x128xbf16>
    %c2_410 = arith.constant 2 : index
    %c0_411 = arith.constant 0 : index
    %c0_412 = arith.constant 0 : index
    %391 = vector.load %arg32[%c2_410, %c0_411, %c0_412] : memref<3x128x128xbf16, #tpu.memory_space<vmem>>, vector<1x128x128xbf16>
    %392 = vector.shape_cast %391 : vector<1x128x128xbf16> to vector<128x128xbf16>
    %cst_413 = arith.constant dense<0.000000e+00> : vector<32x128xf32>
    %393 = tpu.matmul %390, %392, %cst_413 {dimension_numbers = #tpu.dot_dimension_numbers<[1], [0], [0], [1], [0, 0, 1, 1], [], []>} : vector<32x128xbf16>, vector<128x128xbf16>, vector<32x128xf32> -> vector<32x128xf32>
    %394 = arith.addf %388, %393 : vector<32x128xf32>
    %c0_414 = arith.constant 0 : index
    %c0_415 = arith.constant 0 : index
    %395 = vector.load %arg33[%c0_414, %c0_415] : memref<1x128xf32, #tpu.memory_space<vmem>>, vector<1x128xf32>
    %396 = vector.broadcast %395 : vector<1x128xf32> to vector<32x128xf32>
    %397 = arith.mulf %394, %396 : vector<32x128xf32>
    %c0_416 = arith.constant 0 : index
    %c0_417 = arith.constant 0 : index
    %398 = vector.load %arg34[%c0_416, %c0_417] : memref<1x128xf32, #tpu.memory_space<vmem>>, vector<1x128xf32>
    %399 = vector.broadcast %398 : vector<1x128xf32> to vector<32x128xf32>
    %400 = arith.addf %397, %399 : vector<32x128xf32>
    %cst_418 = arith.constant 0.000000e+00 : f32
    %401 = vector.broadcast %cst_418 : f32 to vector<32x128xf32>
    %402 = arith.maximumf %400, %401 : vector<32x128xf32>
    %403 = vector.shape_cast %402 : vector<32x128xf32> to vector<2x16x128xf32>
    %cst_419 = arith.constant dense<0.000000e+00> : vector<2x128xf32>
    %404 = vector.multi_reduction <add>, %403, %cst_419 [1] : vector<2x16x128xf32> to vector<2x128xf32>
    %cst_420 = arith.constant 6.250000e-02 : f32
    %405 = vector.broadcast %cst_420 : f32 to vector<2x128xf32>
    %406 = arith.mulf %404, %405 : vector<2x128xf32>
    %407 = arith.truncf %406 : vector<2x128xf32> to vector<2x128xbf16>
    %c0_421 = arith.constant 0 : index
    %c0_422 = arith.constant 0 : index
    %408 = vector.load %arg35[%c0_421, %c0_422] : memref<128x128xbf16, #tpu.memory_space<vmem>>, vector<128x128xbf16>
    %cst_423 = arith.constant dense<0.000000e+00> : vector<2x128xf32>
    %409 = tpu.matmul %407, %408, %cst_423 {dimension_numbers = #tpu.dot_dimension_numbers<[1], [0], [0], [1], [0, 0, 1, 1], [], []>} : vector<2x128xbf16>, vector<128x128xbf16>, vector<2x128xf32> -> vector<2x128xf32>
    %c0_424 = arith.constant 0 : index
    %c0_425 = arith.constant 0 : index
    %410 = vector.load %arg36[%c0_424, %c0_425] : memref<1x128xf32, #tpu.memory_space<vmem>>, vector<1x128xf32>
    %411 = vector.broadcast %410 : vector<1x128xf32> to vector<2x128xf32>
    %412 = arith.addf %409, %411 : vector<2x128xf32>
    %c0_426 = arith.constant 0 : index
    %c0_427 = arith.constant 0 : index
    %413 = vector.load %arg37[%c0_426, %c0_427] : memref<2x128xf32, #tpu.memory_space<vmem>>, vector<2x128xf32>
    tpu.vector_store %arg37[%c0_426, %c0_427], %412 {strides = array<i32>} : memref<2x128xf32, #tpu.memory_space<vmem>>, vector<2x128xf32>,
    return
  }
  func.func @transform_0(%arg0: i32) -> (i32, i32) {
    %c0_i32 = arith.constant 0 : i32
    %c0_i32_0 = arith.constant 0 : i32
    return %arg0, %c0_i32 : i32, i32
  }
  func.func @transform_1(%arg0: i32) -> (i32, i32, i32) {
    %c0_i32 = arith.constant 0 : i32
    %c0_i32_0 = arith.constant 0 : i32
    %c0_i32_1 = arith.constant 0 : i32
    %c0_i32_2 = arith.constant 0 : i32
    return %c0_i32, %c0_i32_0, %c0_i32_1 : i32, i32, i32
  }
  func.func @transform_2(%arg0: i32) -> (i32, i32) {
    %c0_i32 = arith.constant 0 : i32
    %c0_i32_0 = arith.constant 0 : i32
    %c0_i32_1 = arith.constant 0 : i32
    return %c0_i32, %c0_i32_0 : i32, i32
  }
  func.func @transform_3(%arg0: i32) -> (i32, i32) {
    %c0_i32 = arith.constant 0 : i32
    %c0_i32_0 = arith.constant 0 : i32
    %c0_i32_1 = arith.constant 0 : i32
    return %c0_i32, %c0_i32_0 : i32, i32
  }
  func.func @transform_4(%arg0: i32) -> (i32, i32, i32) {
    %c0_i32 = arith.constant 0 : i32
    %c0_i32_0 = arith.constant 0 : i32
    %c0_i32_1 = arith.constant 0 : i32
    %c0_i32_2 = arith.constant 0 : i32
    return %c0_i32, %c0_i32_0, %c0_i32_1 : i32, i32, i32
  }
  func.func @transform_5(%arg0: i32) -> (i32, i32) {
    %c0_i32 = arith.constant 0 : i32
    %c0_i32_0 = arith.constant 0 : i32
    %c0_i32_1 = arith.constant 0 : i32
    return %c0_i32, %c0_i32_0 : i32, i32
  }
  func.func @transform_6(%arg0: i32) -> (i32, i32) {
    %c0_i32 = arith.constant 0 : i32
    %c0_i32_0 = arith.constant 0 : i32
    %c0_i32_1 = arith.constant 0 : i32
    return %c0_i32, %c0_i32_0 : i32, i32
  }
  func.func @transform_7(%arg0: i32) -> (i32, i32, i32) {
    %c0_i32 = arith.constant 0 : i32
    %c0_i32_0 = arith.constant 0 : i32
    %c0_i32_1 = arith.constant 0 : i32
    %c0_i32_2 = arith.constant 0 : i32
    return %c0_i32, %c0_i32_0, %c0_i32_1 : i32, i32, i32
  }
  func.func @transform_8(%arg0: i32) -> (i32, i32) {
    %c0_i32 = arith.constant 0 : i32
    %c0_i32_0 = arith.constant 0 : i32
    %c0_i32_1 = arith.constant 0 : i32
    return %c0_i32, %c0_i32_0 : i32, i32
  }
  func.func @transform_9(%arg0: i32) -> (i32, i32) {
    %c0_i32 = arith.constant 0 : i32
    %c0_i32_0 = arith.constant 0 : i32
    %c0_i32_1 = arith.constant 0 : i32
    return %c0_i32, %c0_i32_0 : i32, i32
  }
  func.func @transform_10(%arg0: i32) -> (i32, i32, i32) {
    %c0_i32 = arith.constant 0 : i32
    %c0_i32_0 = arith.constant 0 : i32
    %c0_i32_1 = arith.constant 0 : i32
    %c0_i32_2 = arith.constant 0 : i32
    return %c0_i32, %c0_i32_0, %c0_i32_1 : i32, i32, i32
  }
  func.func @transform_11(%arg0: i32) -> (i32, i32) {
    %c0_i32 = arith.constant 0 : i32
    %c0_i32_0 = arith.constant 0 : i32
    %c0_i32_1 = arith.constant 0 : i32
    return %c0_i32, %c0_i32_0 : i32, i32
  }
  func.func @transform_12(%arg0: i32) -> (i32, i32) {
    %c0_i32 = arith.constant 0 : i32
    %c0_i32_0 = arith.constant 0 : i32
    %c0_i32_1 = arith.constant 0 : i32
    return %c0_i32, %c0_i32_0 : i32, i32
  }
  func.func @transform_13(%arg0: i32) -> (i32, i32, i32) {
    %c0_i32 = arith.constant 0 : i32
    %c0_i32_0 = arith.constant 0 : i32
    %c0_i32_1 = arith.constant 0 : i32
    %c0_i32_2 = arith.constant 0 : i32
    return %c0_i32, %c0_i32_0, %c0_i32_1 : i32, i32, i32
  }
  func.func @transform_14(%arg0: i32) -> (i32, i32) {
    %c0_i32 = arith.constant 0 : i32
    %c0_i32_0 = arith.constant 0 : i32
    %c0_i32_1 = arith.constant 0 : i32
    return %c0_i32, %c0_i32_0 : i32, i32
  }
  func.func @transform_15(%arg0: i32) -> (i32, i32) {
    %c0_i32 = arith.constant 0 : i32
    %c0_i32_0 = arith.constant 0 : i32
    %c0_i32_1 = arith.constant 0 : i32
    return %c0_i32, %c0_i32_0 : i32, i32
  }
  func.func @transform_16(%arg0: i32) -> (i32, i32, i32) {
    %c0_i32 = arith.constant 0 : i32
    %c0_i32_0 = arith.constant 0 : i32
    %c0_i32_1 = arith.constant 0 : i32
    %c0_i32_2 = arith.constant 0 : i32
    return %c0_i32, %c0_i32_0, %c0_i32_1 : i32, i32, i32
  }
  func.func @transform_17(%arg0: i32) -> (i32, i32) {
    %c0_i32 = arith.constant 0 : i32
    %c0_i32_0 = arith.constant 0 : i32
    %c0_i32_1 = arith.constant 0 : i32
    return %c0_i32, %c0_i32_0 : i32, i32
  }
  func.func @transform_18(%arg0: i32) -> (i32, i32) {
    %c0_i32 = arith.constant 0 : i32
    %c0_i32_0 = arith.constant 0 : i32
    %c0_i32_1 = arith.constant 0 : i32
    return %c0_i32, %c0_i32_0 : i32, i32
  }
  func.func @transform_19(%arg0: i32) -> (i32, i32, i32) {
    %c0_i32 = arith.constant 0 : i32
    %c0_i32_0 = arith.constant 0 : i32
    %c0_i32_1 = arith.constant 0 : i32
    %c0_i32_2 = arith.constant 0 : i32
    return %c0_i32, %c0_i32_0, %c0_i32_1 : i32, i32, i32
  }
  func.func @transform_20(%arg0: i32) -> (i32, i32) {
    %c0_i32 = arith.constant 0 : i32
    %c0_i32_0 = arith.constant 0 : i32
    %c0_i32_1 = arith.constant 0 : i32
    return %c0_i32, %c0_i32_0 : i32, i32
  }
  func.func @transform_21(%arg0: i32) -> (i32, i32) {
    %c0_i32 = arith.constant 0 : i32
    %c0_i32_0 = arith.constant 0 : i32
    %c0_i32_1 = arith.constant 0 : i32
    return %c0_i32, %c0_i32_0 : i32, i32
  }
  func.func @transform_22(%arg0: i32) -> (i32, i32, i32) {
    %c0_i32 = arith.constant 0 : i32
    %c0_i32_0 = arith.constant 0 : i32
    %c0_i32_1 = arith.constant 0 : i32
    %c0_i32_2 = arith.constant 0 : i32
    return %c0_i32, %c0_i32_0, %c0_i32_1 : i32, i32, i32
  }
  func.func @transform_23(%arg0: i32) -> (i32, i32) {
    %c0_i32 = arith.constant 0 : i32
    %c0_i32_0 = arith.constant 0 : i32
    %c0_i32_1 = arith.constant 0 : i32
    return %c0_i32, %c0_i32_0 : i32, i32
  }
  func.func @transform_24(%arg0: i32) -> (i32, i32) {
    %c0_i32 = arith.constant 0 : i32
    %c0_i32_0 = arith.constant 0 : i32
    %c0_i32_1 = arith.constant 0 : i32
    return %c0_i32, %c0_i32_0 : i32, i32
  }
  func.func @transform_25(%arg0: i32) -> (i32, i32, i32) {
    %c0_i32 = arith.constant 0 : i32
    %c0_i32_0 = arith.constant 0 : i32
    %c0_i32_1 = arith.constant 0 : i32
    %c0_i32_2 = arith.constant 0 : i32
    return %c0_i32, %c0_i32_0, %c0_i32_1 : i32, i32, i32
  }
  func.func @transform_26(%arg0: i32) -> (i32, i32) {
    %c0_i32 = arith.constant 0 : i32
    %c0_i32_0 = arith.constant 0 : i32
    %c0_i32_1 = arith.constant 0 : i32
    return %c0_i32, %c0_i32_0 : i32, i32
  }
  func.func @transform_27(%arg0: i32) -> (i32, i32) {
    %c0_i32 = arith.constant 0 : i32
    %c0_i32_0 = arith.constant 0 : i32
    %c0_i32_1 = arith.constant 0 : i32
    return %c0_i32, %c0_i32_0 : i32, i32
  }
  func.func @transform_28(%arg0: i32) -> (i32, i32, i32) {
    %c0_i32 = arith.constant 0 : i32
    %c0_i32_0 = arith.constant 0 : i32
    %c0_i32_1 = arith.constant 0 : i32
    %c0_i32_2 = arith.constant 0 : i32
    return %c0_i32, %c0_i32_0, %c0_i32_1 : i32, i32, i32
  }
  func.func @transform_29(%arg0: i32) -> (i32, i32) {
    %c0_i32 = arith.constant 0 : i32
    %c0_i32_0 = arith.constant 0 : i32
    %c0_i32_1 = arith.constant 0 : i32
    return %c0_i32, %c0_i32_0 : i32, i32
  }
  func.func @transform_30(%arg0: i32) -> (i32, i32) {
    %c0_i32 = arith.constant 0 : i32
    %c0_i32_0 = arith.constant 0 : i32
    %c0_i32_1 = arith.constant 0 : i32
    return %c0_i32, %c0_i32_0 : i32, i32
  }
  func.func @transform_31(%arg0: i32) -> (i32, i32, i32) {
    %c0_i32 = arith.constant 0 : i32
    %c0_i32_0 = arith.constant 0 : i32
    %c0_i32_1 = arith.constant 0 : i32
    %c0_i32_2 = arith.constant 0 : i32
    return %c0_i32, %c0_i32_0, %c0_i32_1 : i32, i32, i32
  }
  func.func @transform_32(%arg0: i32) -> (i32, i32) {
    %c0_i32 = arith.constant 0 : i32
    %c0_i32_0 = arith.constant 0 : i32
    %c0_i32_1 = arith.constant 0 : i32
    return %c0_i32, %c0_i32_0 : i32, i32
  }
  func.func @transform_33(%arg0: i32) -> (i32, i32) {
    %c0_i32 = arith.constant 0 : i32
    %c0_i32_0 = arith.constant 0 : i32
    %c0_i32_1 = arith.constant 0 : i32
    return %c0_i32, %c0_i32_0 : i32, i32
  }
  func.func @transform_34(%arg0: i32) -> (i32, i32) {
    %c0_i32 = arith.constant 0 : i32
    %c0_i32_0 = arith.constant 0 : i32
    %c0_i32_1 = arith.constant 0 : i32
    return %c0_i32, %c0_i32_0 : i32, i32
  }
  func.func @transform_35(%arg0: i32) -> (i32, i32) {
    %c0_i32 = arith.constant 0 : i32
    %c0_i32_0 = arith.constant 0 : i32
    %c0_i32_1 = arith.constant 0 : i32
    return %c0_i32, %c0_i32_0 : i32, i32
  }
  func.func @transform_36(%arg0: i32) -> (i32, i32) {
    %c0_i32 = arith.constant 0 : i32
    %c0_i32_0 = arith.constant 0 : i32
    return %arg0, %c0_i32 : i32, i32
  }
}

</mosaic_0001>

<llo_original>
// kernel: tpu_custom_call.1
$region0: #{tpu_custom_call.1}
  #allocation0 [shape = 'u32[]', space=smem, size = 0x4, offset = 0x4, fixed_abs, tag = 'smem constant byte address 0x4 - core index']
  #allocation1 [shape = 'u32[144,128]{1,0:T(1,128)}', space=vmem, size = 0x12000, scoped, tag = 'internal scratch']
  #allocation2 [shape = 'bf16[2,32,128]{2,1,0:T(16,128)(2,1)}', space=vmem, size = 0x4000, scoped, tag = 'scratch operand']
  %s0 = inlined_call_operand.smem [shape: u32[37], index: -1, kind: input, shape index: {}]
  %s1 = sld [smem:[%s0]]
  %s2 = scalar_lea.smem %s0, 1
  %s3 = sld [smem:[%s2]]
  %s4 = scalar_lea.smem %s0, 2
  %s5 = sld [smem:[%s4]]
  %s6 = scalar_lea.smem %s0, 3
  %s7 = sld [smem:[%s6]]
  %s8 = scalar_lea.smem %s0, 4
  %s9 = sld [smem:[%s8]]
  %s10 = scalar_lea.smem %s0, 5
  %s11 = sld [smem:[%s10]]
  %s12 = scalar_lea.smem %s0, 6
  %s13 = sld [smem:[%s12]]
  %s14 = scalar_lea.smem %s0, 7
  %s15 = sld [smem:[%s14]]
  %s16 = scalar_lea.smem %s0, 8
  %s17 = sld [smem:[%s16]]
  %s18 = scalar_lea.smem %s0, 9
  %s19 = sld [smem:[%s18]]
  %s20 = scalar_lea.smem %s0, 10
  %s21 = sld [smem:[%s20]]
  %s22 = scalar_lea.smem %s0, 11
  %s23 = sld [smem:[%s22]]
  %s24 = scalar_lea.smem %s0, 12
  %s25 = sld [smem:[%s24]]
  %s26 = scalar_lea.smem %s0, 13
  %s27 = sld [smem:[%s26]]
  %s28 = scalar_lea.smem %s0, 14
  %s29 = sld [smem:[%s28]]
  %s30 = scalar_lea.smem %s0, 15
  %s31 = sld [smem:[%s30]]
  %s32 = scalar_lea.smem %s0, 16
  %s33 = sld [smem:[%s32]]
  %s34 = scalar_lea.smem %s0, 17
  %s35 = sld [smem:[%s34]]
  %s36 = scalar_lea.smem %s0, 18
  %s37 = sld [smem:[%s36]]
  %s38 = scalar_lea.smem %s0, 19
  %s39 = sld [smem:[%s38]]
  %s40 = scalar_lea.smem %s0, 20
  %s41 = sld [smem:[%s40]]
  %s42 = scalar_lea.smem %s0, 21
  %s43 = sld [smem:[%s42]]
  %s44 = scalar_lea.smem %s0, 22
  %s45 = sld [smem:[%s44]]
  %s46 = scalar_lea.smem %s0, 23
  %s47 = sld [smem:[%s46]]
  %s48 = scalar_lea.smem %s0, 24
  %s49 = sld [smem:[%s48]]
  %s50 = scalar_lea.smem %s0, 25
  %s51 = sld [smem:[%s50]]
  %s52 = scalar_lea.smem %s0, 26
  %s53 = sld [smem:[%s52]]
  %s54 = scalar_lea.smem %s0, 27
  %s55 = sld [smem:[%s54]]
  %s56 = scalar_lea.smem %s0, 28
  %s57 = sld [smem:[%s56]]
  %s58 = scalar_lea.smem %s0, 29
  %s59 = sld [smem:[%s58]]
  %s60 = scalar_lea.smem %s0, 30
  %s61 = sld [smem:[%s60]]
  %s62 = scalar_lea.smem %s0, 31
  %s63 = sld [smem:[%s62]]
  %s64 = scalar_lea.smem %s0, 32
  %s65 = sld [smem:[%s64]]
  %s66 = scalar_lea.smem %s0, 33
  %s67 = sld [smem:[%s66]]
  %s68 = scalar_lea.smem %s0, 34
  %s69 = sld [smem:[%s68]]
  %s70 = scalar_lea.smem %s0, 35
  %s71 = sld [smem:[%s70]]
  %s72 = scalar_lea.smem %s0, 36
  %s73 = sld [smem:[%s72]]
  %s74 = sld [smem:[#allocation0]]
  $region286: #{tpu_custom_call.1} parent=0
    _
  %s76 = ssub.s32 1, %s74
  %s77 = scalar_select 0, %s76, %s74
  $region1: #{tpu_custom_call.1} parent=0
    #allocation3 [shape = 'u8[8192]{0}', space=vmem, size = 0x2000, scoped, tag = 'input window, operand 0, single buffered']
    #allocation4 [shape = 's32[1]{0}', space=sflag, size = 0x4, scoped, tag = 'scoped memory for tpu_custom_call.1']
    #allocation5 [shape = 's32[1]{0}', space=sflag, size = 0x4, scoped, tag = 'scoped memory for tpu_custom_call.1']
    #allocation6 [shape = 'u8[262144]{0}', space=vmem, size = 0x40000, scoped, tag = 'input window, operand 1, single buffered']
    #allocation7 [shape = 's32[1]{0}', space=sflag, size = 0x4, scoped, tag = 'scoped memory for tpu_custom_call.1']
    #allocation8 [shape = 'u8[512]{0}', space=vmem, size = 0x400, scoped, tag = 'input window, operand 2, single buffered']
    #allocation9 [shape = 'u8[512]{0}', space=vmem, size = 0x400, scoped, tag = 'input window, operand 3, single buffered']
    #allocation10 [shape = 's32[1]{0}', space=sflag, size = 0x4, scoped, tag = 'scoped memory for tpu_custom_call.1']
    #allocation11 [shape = 'u8[163840]{0}', space=vmem, size = 0x28000, scoped, tag = 'input window, operand 4, single buffered']
    #allocation12 [shape = 'u8[512]{0}', space=vmem, size = 0x400, scoped, tag = 'input window, operand 5, single buffered']
    #allocation13 [shape = 's32[1]{0}', space=sflag, size = 0x4, scoped, tag = 'scoped memory for tpu_custom_call.1']
    #allocation14 [shape = 'u8[512]{0}', space=vmem, size = 0x400, scoped, tag = 'input window, operand 6, single buffered']
    #allocation15 [shape = 'u8[98304]{0}', space=vmem, size = 0x18000, scoped, tag = 'input window, operand 7, single buffered']
    #allocation16 [shape = 's32[1]{0}', space=sflag, size = 0x4, scoped, tag = 'scoped memory for tpu_custom_call.1']
    #allocation17 [shape = 'u8[512]{0}', space=vmem, size = 0x400, scoped, tag = 'input window, operand 8, single buffered']
    #allocation18 [shape = 'u8[512]{0}', space=vmem, size = 0x400, scoped, tag = 'input window, operand 9, single buffered']
    #allocation19 [shape = 's32[1]{0}', space=sflag, size = 0x4, scoped, tag = 'scoped memory for tpu_custom_call.1']
    #allocation20 [shape = 'u8[32768]{0}', space=vmem, size = 0x8000, scoped, tag = 'input window, operand 10, single buffered']
    #allocation21 [shape = 'u8[512]{0}', space=vmem, size = 0x400, scoped, tag = 'input window, operand 11, single buffered']
    #allocation22 [shape = 's32[1]{0}', space=sflag, size = 0x4, scoped, tag = 'scoped memory for tpu_custom_call.1']
    #allocation23 [shape = 'u8[512]{0}', space=vmem, size = 0x400, scoped, tag = 'input window, operand 12, single buffered']
    #allocation24 [shape = 'u8[262144]{0}', space=vmem, size = 0x40000, scoped, tag = 'input window, operand 13, single buffered']
    #allocation25 [shape = 's32[1]{0}', space=sflag, size = 0x4, scoped, tag = 'scoped memory for tpu_custom_call.1']
    #allocation26 [shape = 'u8[512]{0}', space=vmem, size = 0x400, scoped, tag = 'input window, operand 14, single buffered']
    #allocation27 [shape = 'u8[512]{0}', space=vmem, size = 0x400, scoped, tag = 'input window, operand 15, single buffered']
    #allocation28 [shape = 's32[1]{0}', space=sflag, size = 0x4, scoped, tag = 'scoped memory for tpu_custom_call.1']
    #allocation29 [shape = 'u8[163840]{0}', space=vmem, size = 0x28000, scoped, tag = 'input window, operand 16, single buffered']
    #allocation30 [shape = 'u8[512]{0}', space=vmem, size = 0x400, scoped, tag = 'input window, operand 17, single buffered']
    #allocation31 [shape = 's32[1]{0}', space=sflag, size = 0x4, scoped, tag = 'scoped memory for tpu_custom_call.1']
    #allocation32 [shape = 'u8[512]{0}', space=vmem, size = 0x400, scoped, tag = 'input window, operand 18, single buffered']
    #allocation33 [shape = 'u8[98304]{0}', space=vmem, size = 0x18000, scoped, tag = 'input window, operand 19, single buffered']
    #allocation34 [shape = 's32[1]{0}', space=sflag, size = 0x4, scoped, tag = 'scoped memory for tpu_custom_call.1']
    #allocation35 [shape = 'u8[512]{0}', space=vmem, size = 0x400, scoped, tag = 'input window, operand 20, single buffered']
    #allocation36 [shape = 'u8[512]{0}', space=vmem, size = 0x400, scoped, tag = 'input window, operand 21, single buffered']
    #allocation37 [shape = 's32[1]{0}', space=sflag, size = 0x4, scoped, tag = 'scoped memory for tpu_custom_call.1']
    #allocation38 [shape = 'u8[512]{0}', space=vmem, size = 0x400, scoped, tag = 'input window, operand 23, single buffered']
    #allocation39 [shape = 'u8[512]{0}', space=vmem, size = 0x400, scoped, tag = 'input window, operand 24, single buffered']
    #allocation40 [shape = 's32[1]{0}', space=sflag, size = 0x4, scoped, tag = 'scoped memory for tpu_custom_call.1']
    #allocation41 [shape = 'u8[262144]{0}', space=vmem, size = 0x40000, scoped, tag = 'input window, operand 25, single buffered']
    #allocation42 [shape = 'u8[512]{0}', space=vmem, size = 0x400, scoped, tag = 'input window, operand 26, single buffered']
    #allocation43 [shape = 's32[1]{0}', space=sflag, size = 0x4, scoped, tag = 'scoped memory for tpu_custom_call.1']
    #allocation44 [shape = 'u8[512]{0}', space=vmem, size = 0x400, scoped, tag = 'input window, operand 27, single buffered']
    #allocation45 [shape = 'u8[163840]{0}', space=vmem, size = 0x28000, scoped, tag = 'input window, operand 28, single buffered']
    #allocation46 [shape = 's32[1]{0}', space=sflag, size = 0x4, scoped, tag = 'scoped memory for tpu_custom_call.1']
    #allocation47 [shape = 'u8[512]{0}', space=vmem, size = 0x400, scoped, tag = 'input window, operand 29, single buffered']
    #allocation48 [shape = 'u8[512]{0}', space=vmem, size = 0x400, scoped, tag = 'input window, operand 30, single buffered']
    #allocation49 [shape = 's32[1]{0}', space=sflag, size = 0x4, scoped, tag = 'scoped memory for tpu_custom_call.1']
    #allocation50 [shape = 'u8[98304]{0}', space=vmem, size = 0x18000, scoped, tag = 'input window, operand 31, single buffered']
    #allocation51 [shape = 'u8[512]{0}', space=vmem, size = 0x400, scoped, tag = 'input window, operand 32, single buffered']
    #allocation52 [shape = 's32[1]{0}', space=sflag, size = 0x4, scoped, tag = 'scoped memory for tpu_custom_call.1']
    #allocation53 [shape = 'u8[512]{0}', space=vmem, size = 0x400, scoped, tag = 'input window, operand 33, single buffered']
    #allocation54 [shape = 'u8[1024]{0}', space=vmem, size = 0x400, scoped, tag = 'output window, operand 0, single buffered']
    %78 = vsyncpa [#allocation4], 0
    %79 = vsyncpa [#allocation7], 0
    %80 = vsyncpa [#allocation10], 0
    %81 = vsyncpa [#allocation13], 0
    %82 = vsyncpa [#allocation16], 0
    %83 = vsyncpa [#allocation19], 0
    %84 = vsyncpa [#allocation22], 0
    %85 = vsyncpa [#allocation25], 0
    %86 = vsyncpa [#allocation28], 0
    %87 = vsyncpa [#allocation31], 0
    %88 = vsyncpa [#allocation34], 0
    %89 = vsyncpa [#allocation37], 0
    %90 = vsyncpa [#allocation40], 0
    %91 = vsyncpa [#allocation43], 0
    %92 = vsyncpa [#allocation46], 0
    %93 = vsyncpa [#allocation49], 0
    %94 = vsyncpa [#allocation52], 0
    %95 = vsyncpa [#allocation5], 0
    // Predicated region
    $region2: #{tpu_custom_call.1} parent=1 // pred_check
      _
    $region3: #{tpu_custom_call.1} parent=1 // pred_check_branch
      %97 = sbr.rel (0) target = $region5
    $region4: #{tpu_custom_call.1} parent=1 // pred_region
      %s99 = ssub.s32 256, 256
      %100 = vsyncadd [#allocation4], %s99
      %s101 = sshll.u32 [#allocation3], 4
      %s102 = int_to_ptr.vmem [resolvable:$true] %s101
      %107 = dma.hbm_to_vmem [thread:$0]  %s1, 256, %s102, [#allocation4], 64, 64, 4
    $region5: #{tpu_custom_call.1} parent=1 // pred_fallthru
      _
    // Predicated region
    $region6: #{tpu_custom_call.1} parent=1 // pred_check
      _
    $region7: #{tpu_custom_call.1} parent=1 // pred_check_branch
      %109 = sbr.rel (0) target = $region9
    $region8: #{tpu_custom_call.1} parent=1 // pred_region
      %s111 = ssub.s32 8192, 8192
      %112 = vsyncadd [#allocation7], %s111
      %s113 = sshll.u32 [#allocation6], 4
      %s114 = int_to_ptr.vmem [resolvable:$true] %s113
      %119 = dma.hbm_to_vmem [thread:$0]  %s3, 8192, %s114, [#allocation7], 64, 64, 4
    $region9: #{tpu_custom_call.1} parent=1 // pred_fallthru
      _
    // Predicated region
    $region10: #{tpu_custom_call.1} parent=1 // pred_check
      _
    $region11: #{tpu_custom_call.1} parent=1 // pred_check_branch
      %121 = sbr.rel (0) target = $region13
    $region12: #{tpu_custom_call.1} parent=1 // pred_region
      %s123 = ssub.s32 16, 16
      %124 = vsyncadd [#allocation7], %s123
      %s126 = sshll.u32 [#allocation8], 4
      %s127 = int_to_ptr.vmem [resolvable:$true] %s126
      %129 = dma.hbm_to_vmem [thread:$0]  %s5, 16, %s127, [#allocation7]
    $region13: #{tpu_custom_call.1} parent=1 // pred_fallthru
      _
    // Predicated region
    $region14: #{tpu_custom_call.1} parent=1 // pred_check
      _
    $region15: #{tpu_custom_call.1} parent=1 // pred_check_branch
      %131 = sbr.rel (0) target = $region17
    $region16: #{tpu_custom_call.1} parent=1 // pred_region
      %s133 = ssub.s32 16, 16
      %134 = vsyncadd [#allocation10], %s133
      %s136 = sshll.u32 [#allocation9], 4
      %s137 = int_to_ptr.vmem [resolvable:$true] %s136
      %139 = dma.hbm_to_vmem [thread:$0]  %s7, 16, %s137, [#allocation10]
    $region17: #{tpu_custom_call.1} parent=1 // pred_fallthru
      _
    // Predicated region
    $region18: #{tpu_custom_call.1} parent=1 // pred_check
      _
    $region19: #{tpu_custom_call.1} parent=1 // pred_check_branch
      %141 = sbr.rel (0) target = $region21
    $region20: #{tpu_custom_call.1} parent=1 // pred_region
      %s143 = ssub.s32 5120, 5120
      %144 = vsyncadd [#allocation10], %s143
      %s145 = sshll.u32 [#allocation11], 4
      %s146 = int_to_ptr.vmem [resolvable:$true] %s145
      %151 = dma.hbm_to_vmem [thread:$0]  %s9, 5120, %s146, [#allocation10], 64, 64, 4
    $region21: #{tpu_custom_call.1} parent=1 // pred_fallthru
      _
    // Predicated region
    $region22: #{tpu_custom_call.1} parent=1 // pred_check
      _
    $region23: #{tpu_custom_call.1} parent=1 // pred_check_branch
      %153 = sbr.rel (0) target = $region25
    $region24: #{tpu_custom_call.1} parent=1 // pred_region
      %s155 = ssub.s32 16, 16
      %156 = vsyncadd [#allocation13], %s155
      %s158 = sshll.u32 [#allocation12], 4
      %s159 = int_to_ptr.vmem [resolvable:$true] %s158
      %161 = dma.hbm_to_vmem [thread:$0]  %s11, 16, %s159, [#allocation13]
    $region25: #{tpu_custom_call.1} parent=1 // pred_fallthru
      _
    // Predicated region
    $region26: #{tpu_custom_call.1} parent=1 // pred_check
      _
    $region27: #{tpu_custom_call.1} parent=1 // pred_check_branch
      %163 = sbr.rel (0) target = $region29
    $region28: #{tpu_custom_call.1} parent=1 // pred_region
      %s165 = ssub.s32 16, 16
      %166 = vsyncadd [#allocation13], %s165
      %s168 = sshll.u32 [#allocation14], 4
      %s169 = int_to_ptr.vmem [resolvable:$true] %s168
      %171 = dma.hbm_to_vmem [thread:$0]  %s13, 16, %s169, [#allocation13]
    $region29: #{tpu_custom_call.1} parent=1 // pred_fallthru
      _
    // Predicated region
    $region30: #{tpu_custom_call.1} parent=1 // pred_check
      _
    $region31: #{tpu_custom_call.1} parent=1 // pred_check_branch
      %173 = sbr.rel (0) target = $region33
    $region32: #{tpu_custom_call.1} parent=1 // pred_region
      %s175 = ssub.s32 3072, 3072
      %176 = vsyncadd [#allocation16], %s175
      %s177 = sshll.u32 [#allocation15], 4
      %s178 = int_to_ptr.vmem [resolvable:$true] %s177
      %183 = dma.hbm_to_vmem [thread:$0]  %s15, 3072, %s178, [#allocation16], 64, 64, 4
    $region33: #{tpu_custom_call.1} parent=1 // pred_fallthru
      _
    // Predicated region
    $region34: #{tpu_custom_call.1} parent=1 // pred_check
      _
    $region35: #{tpu_custom_call.1} parent=1 // pred_check_branch
      %185 = sbr.rel (0) target = $region37
    $region36: #{tpu_custom_call.1} parent=1 // pred_region
      %s187 = ssub.s32 16, 16
      %188 = vsyncadd [#allocation16], %s187
      %s190 = sshll.u32 [#allocation17], 4
      %s191 = int_to_ptr.vmem [resolvable:$true] %s190
      %193 = dma.hbm_to_vmem [thread:$0]  %s17, 16, %s191, [#allocation16]
    $region37: #{tpu_custom_call.1} parent=1 // pred_fallthru
      _
    // Predicated region
    $region38: #{tpu_custom_call.1} parent=1 // pred_check
      _
    $region39: #{tpu_custom_call.1} parent=1 // pred_check_branch
      %195 = sbr.rel (0) target = $region41
    $region40: #{tpu_custom_call.1} parent=1 // pred_region
      %s197 = ssub.s32 16, 16
      %198 = vsyncadd [#allocation19], %s197
      %s200 = sshll.u32 [#allocation18], 4
      %s201 = int_to_ptr.vmem [resolvable:$true] %s200
      %203 = dma.hbm_to_vmem [thread:$0]  %s19, 16, %s201, [#allocation19]
    $region41: #{tpu_custom_call.1} parent=1 // pred_fallthru
      _
    // Predicated region
    $region42: #{tpu_custom_call.1} parent=1 // pred_check
      _
    $region43: #{tpu_custom_call.1} parent=1 // pred_check_branch
      %205 = sbr.rel (0) target = $region45
    $region44: #{tpu_custom_call.1} parent=1 // pred_region
      %s207 = ssub.s32 1024, 1024
      %208 = vsyncadd [#allocation19], %s207
      %s209 = sshll.u32 [#allocation20], 4
      %s210 = int_to_ptr.vmem [resolvable:$true] %s209
      %215 = dma.hbm_to_vmem [thread:$0]  %s21, 1024, %s210, [#allocation19], 64, 64, 4
    $region45: #{tpu_custom_call.1} parent=1 // pred_fallthru
      _
    // Predicated region
    $region46: #{tpu_custom_call.1} parent=1 // pred_check
      _
    $region47: #{tpu_custom_call.1} parent=1 // pred_check_branch
      %217 = sbr.rel (0) target = $region49
    $region48: #{tpu_custom_call.1} parent=1 // pred_region
      %s219 = ssub.s32 16, 16
      %220 = vsyncadd [#allocation22], %s219
      %s222 = sshll.u32 [#allocation21], 4
      %s223 = int_to_ptr.vmem [resolvable:$true] %s222
      %225 = dma.hbm_to_vmem [thread:$0]  %s23, 16, %s223, [#allocation22]
    $region49: #{tpu_custom_call.1} parent=1 // pred_fallthru
      _
    // Predicated region
    $region50: #{tpu_custom_call.1} parent=1 // pred_check
      _
    $region51: #{tpu_custom_call.1} parent=1 // pred_check_branch
      %227 = sbr.rel (0) target = $region53
    $region52: #{tpu_custom_call.1} parent=1 // pred_region
      %s229 = ssub.s32 16, 16
      %230 = vsyncadd [#allocation22], %s229
      %s232 = sshll.u32 [#allocation23], 4
      %s233 = int_to_ptr.vmem [resolvable:$true] %s232
      %235 = dma.hbm_to_vmem [thread:$0]  %s25, 16, %s233, [#allocation22]
    $region53: #{tpu_custom_call.1} parent=1 // pred_fallthru
      _
    // Predicated region
    $region54: #{tpu_custom_call.1} parent=1 // pred_check
      _
    $region55: #{tpu_custom_call.1} parent=1 // pred_check_branch
      %237 = sbr.rel (0) target = $region57
    $region56: #{tpu_custom_call.1} parent=1 // pred_region
      %s239 = ssub.s32 8192, 8192
      %240 = vsyncadd [#allocation25], %s239
      %s241 = sshll.u32 [#allocation24], 4
      %s242 = int_to_ptr.vmem [resolvable:$true] %s241
      %247 = dma.hbm_to_vmem [thread:$0]  %s27, 8192, %s242, [#allocation25], 64, 64, 4
    $region57: #{tpu_custom_call.1} parent=1 // pred_fallthru
      _
    // Predicated region
    $region58: #{tpu_custom_call.1} parent=1 // pred_check
      _
    $region59: #{tpu_custom_call.1} parent=1 // pred_check_branch
      %249 = sbr.rel (0) target = $region61
    $region60: #{tpu_custom_call.1} parent=1 // pred_region
      %s251 = ssub.s32 16, 16
      %252 = vsyncadd [#allocation25], %s251
      %s254 = sshll.u32 [#allocation26], 4
      %s255 = int_to_ptr.vmem [resolvable:$true] %s254
      %257 = dma.hbm_to_vmem [thread:$0]  %s29, 16, %s255, [#allocation25]
    $region61: #{tpu_custom_call.1} parent=1 // pred_fallthru
      _
    // Predicated region
    $region62: #{tpu_custom_call.1} parent=1 // pred_check
      _
    $region63: #{tpu_custom_call.1} parent=1 // pred_check_branch
      %259 = sbr.rel (0) target = $region65
    $region64: #{tpu_custom_call.1} parent=1 // pred_region
      %s261 = ssub.s32 16, 16
      %262 = vsyncadd [#allocation28], %s261
      %s264 = sshll.u32 [#allocation27], 4
      %s265 = int_to_ptr.vmem [resolvable:$true] %s264
      %267 = dma.hbm_to_vmem [thread:$0]  %s31, 16, %s265, [#allocation28]
    $region65: #{tpu_custom_call.1} parent=1 // pred_fallthru
      _
    // Predicated region
    $region66: #{tpu_custom_call.1} parent=1 // pred_check
      _
    $region67: #{tpu_custom_call.1} parent=1 // pred_check_branch
      %269 = sbr.rel (0) target = $region69
    $region68: #{tpu_custom_call.1} parent=1 // pred_region
      %s271 = ssub.s32 5120, 5120
      %272 = vsyncadd [#allocation28], %s271
      %s273 = sshll.u32 [#allocation29], 4
      %s274 = int_to_ptr.vmem [resolvable:$true] %s273
      %279 = dma.hbm_to_vmem [thread:$0]  %s33, 5120, %s274, [#allocation28], 64, 64, 4
    $region69: #{tpu_custom_call.1} parent=1 // pred_fallthru
      _
    // Predicated region
    $region70: #{tpu_custom_call.1} parent=1 // pred_check
      _
    $region71: #{tpu_custom_call.1} parent=1 // pred_check_branch
      %281 = sbr.rel (0) target = $region73
    $region72: #{tpu_custom_call.1} parent=1 // pred_region
      %s283 = ssub.s32 16, 16
      %284 = vsyncadd [#allocation31], %s283
      %s286 = sshll.u32 [#allocation30], 4
      %s287 = int_to_ptr.vmem [resolvable:$true] %s286
      %289 = dma.hbm_to_vmem [thread:$0]  %s35, 16, %s287, [#allocation31]
    $region73: #{tpu_custom_call.1} parent=1 // pred_fallthru
      _
    // Predicated region
    $region74: #{tpu_custom_call.1} parent=1 // pred_check
      _
    $region75: #{tpu_custom_call.1} parent=1 // pred_check_branch
      %291 = sbr.rel (0) target = $region77
    $region76: #{tpu_custom_call.1} parent=1 // pred_region
      %s293 = ssub.s32 16, 16
      %294 = vsyncadd [#allocation31], %s293
      %s296 = sshll.u32 [#allocation32], 4
      %s297 = int_to_ptr.vmem [resolvable:$true] %s296
      %299 = dma.hbm_to_vmem [thread:$0]  %s37, 16, %s297, [#allocation31]
    $region77: #{tpu_custom_call.1} parent=1 // pred_fallthru
      _
    // Predicated region
    $region78: #{tpu_custom_call.1} parent=1 // pred_check
      _
    $region79: #{tpu_custom_call.1} parent=1 // pred_check_branch
      %301 = sbr.rel (0) target = $region81
    $region80: #{tpu_custom_call.1} parent=1 // pred_region
      %s303 = ssub.s32 3072, 3072
      %304 = vsyncadd [#allocation34], %s303
      %s305 = sshll.u32 [#allocation33], 4
      %s306 = int_to_ptr.vmem [resolvable:$true] %s305
      %311 = dma.hbm_to_vmem [thread:$0]  %s39, 3072, %s306, [#allocation34], 64, 64, 4
    $region81: #{tpu_custom_call.1} parent=1 // pred_fallthru
      _
    // Predicated region
    $region82: #{tpu_custom_call.1} parent=1 // pred_check
      _
    $region83: #{tpu_custom_call.1} parent=1 // pred_check_branch
      %313 = sbr.rel (0) target = $region85
    $region84: #{tpu_custom_call.1} parent=1 // pred_region
      %s315 = ssub.s32 16, 16
      %316 = vsyncadd [#allocation34], %s315
      %s318 = sshll.u32 [#allocation35], 4
      %s319 = int_to_ptr.vmem [resolvable:$true] %s318
      %321 = dma.hbm_to_vmem [thread:$0]  %s41, 16, %s319, [#allocation34]
    $region85: #{tpu_custom_call.1} parent=1 // pred_fallthru
      _
    // Predicated region
    $region86: #{tpu_custom_call.1} parent=1 // pred_check
      _
    $region87: #{tpu_custom_call.1} parent=1 // pred_check_branch
      %323 = sbr.rel (0) target = $region89
    $region88: #{tpu_custom_call.1} parent=1 // pred_region
      %s325 = ssub.s32 16, 16
      %326 = vsyncadd [#allocation37], %s325
      %s328 = sshll.u32 [#allocation36], 4
      %s329 = int_to_ptr.vmem [resolvable:$true] %s328
      %331 = dma.hbm_to_vmem [thread:$0]  %s43, 16, %s329, [#allocation37]
    $region89: #{tpu_custom_call.1} parent=1 // pred_fallthru
      _
    // Predicated region
    $region90: #{tpu_custom_call.1} parent=1 // pred_check
      _
    $region91: #{tpu_custom_call.1} parent=1 // pred_check_branch
      %333 = sbr.rel (0) target = $region93
    $region92: #{tpu_custom_call.1} parent=1 // pred_region
      _
    $region93: #{tpu_custom_call.1} parent=1 // pred_fallthru
      _
    // Predicated region
    $region94: #{tpu_custom_call.1} parent=1 // pred_check
      _
    $region95: #{tpu_custom_call.1} parent=1 // pred_check_branch
      %335 = sbr.rel (0) target = $region97
    $region96: #{tpu_custom_call.1} parent=1 // pred_region
      %s337 = ssub.s32 16, 16
      %338 = vsyncadd [#allocation37], %s337
      %s340 = sshll.u32 [#allocation38], 4
      %s341 = int_to_ptr.vmem [resolvable:$true] %s340
      %343 = dma.hbm_to_vmem [thread:$0]  %s47, 16, %s341, [#allocation37]
    $region97: #{tpu_custom_call.1} parent=1 // pred_fallthru
      _
    // Predicated region
    $region98: #{tpu_custom_call.1} parent=1 // pred_check
      _
    $region99: #{tpu_custom_call.1} parent=1 // pred_check_branch
      %345 = sbr.rel (0) target = $region101
    $region100: #{tpu_custom_call.1} parent=1 // pred_region
      %s347 = ssub.s32 16, 16
      %348 = vsyncadd [#allocation40], %s347
      %s350 = sshll.u32 [#allocation39], 4
      %s351 = int_to_ptr.vmem [resolvable:$true] %s350
      %353 = dma.hbm_to_vmem [thread:$0]  %s49, 16, %s351, [#allocation40]
    $region101: #{tpu_custom_call.1} parent=1 // pred_fallthru
      _
    // Predicated region
    $region102: #{tpu_custom_call.1} parent=1 // pred_check
      _
    $region103: #{tpu_custom_call.1} parent=1 // pred_check_branch
      %355 = sbr.rel (0) target = $region105
    $region104: #{tpu_custom_call.1} parent=1 // pred_region
      %s357 = ssub.s32 8192, 8192
      %358 = vsyncadd [#allocation40], %s357
      %s359 = sshll.u32 [#allocation41], 4
      %s360 = int_to_ptr.vmem [resolvable:$true] %s359
      %365 = dma.hbm_to_vmem [thread:$0]  %s51, 8192, %s360, [#allocation40], 64, 64, 4
    $region105: #{tpu_custom_call.1} parent=1 // pred_fallthru
      _
    // Predicated region
    $region106: #{tpu_custom_call.1} parent=1 // pred_check
      _
    $region107: #{tpu_custom_call.1} parent=1 // pred_check_branch
      %367 = sbr.rel (0) target = $region109
    $region108: #{tpu_custom_call.1} parent=1 // pred_region
      %s369 = ssub.s32 16, 16
      %370 = vsyncadd [#allocation43], %s369
      %s372 = sshll.u32 [#allocation42], 4
      %s373 = int_to_ptr.vmem [resolvable:$true] %s372
      %375 = dma.hbm_to_vmem [thread:$0]  %s53, 16, %s373, [#allocation43]
    $region109: #{tpu_custom_call.1} parent=1 // pred_fallthru
      _
    // Predicated region
    $region110: #{tpu_custom_call.1} parent=1 // pred_check
      _
    $region111: #{tpu_custom_call.1} parent=1 // pred_check_branch
      %377 = sbr.rel (0) target = $region113
    $region112: #{tpu_custom_call.1} parent=1 // pred_region
      %s379 = ssub.s32 16, 16
      %380 = vsyncadd [#allocation43], %s379
      %s382 = sshll.u32 [#allocation44], 4
      %s383 = int_to_ptr.vmem [resolvable:$true] %s382
      %385 = dma.hbm_to_vmem [thread:$0]  %s55, 16, %s383, [#allocation43]
    $region113: #{tpu_custom_call.1} parent=1 // pred_fallthru
      _
    // Predicated region
    $region114: #{tpu_custom_call.1} parent=1 // pred_check
      _
    $region115: #{tpu_custom_call.1} parent=1 // pred_check_branch
      %387 = sbr.rel (0) target = $region117
    $region116: #{tpu_custom_call.1} parent=1 // pred_region
      %s389 = ssub.s32 5120, 5120
      %390 = vsyncadd [#allocation46], %s389
      %s391 = sshll.u32 [#allocation45], 4
      %s392 = int_to_ptr.vmem [resolvable:$true] %s391
      %397 = dma.hbm_to_vmem [thread:$0]  %s57, 5120, %s392, [#allocation46], 64, 64, 4
    $region117: #{tpu_custom_call.1} parent=1 // pred_fallthru
      _
    // Predicated region
    $region118: #{tpu_custom_call.1} parent=1 // pred_check
      _
    $region119: #{tpu_custom_call.1} parent=1 // pred_check_branch
      %399 = sbr.rel (0) target = $region121
    $region120: #{tpu_custom_call.1} parent=1 // pred_region
      %s401 = ssub.s32 16, 16
      %402 = vsyncadd [#allocation46], %s401
      %s404 = sshll.u32 [#allocation47], 4
      %s405 = int_to_ptr.vmem [resolvable:$true] %s404
      %407 = dma.hbm_to_vmem [thread:$0]  %s59, 16, %s405, [#allocation46]
    $region121: #{tpu_custom_call.1} parent=1 // pred_fallthru
      _
    // Predicated region
    $region122: #{tpu_custom_call.1} parent=1 // pred_check
      _
    $region123: #{tpu_custom_call.1} parent=1 // pred_check_branch
      %409 = sbr.rel (0) target = $region125
    $region124: #{tpu_custom_call.1} parent=1 // pred_region
      %s411 = ssub.s32 16, 16
      %412 = vsyncadd [#allocation49], %s411
      %s414 = sshll.u32 [#allocation48], 4
      %s415 = int_to_ptr.vmem [resolvable:$true] %s414
      %417 = dma.hbm_to_vmem [thread:$0]  %s61, 16, %s415, [#allocation49]
    $region125: #{tpu_custom_call.1} parent=1 // pred_fallthru
      _
    // Predicated region
    $region126: #{tpu_custom_call.1} parent=1 // pred_check
      _
    $region127: #{tpu_custom_call.1} parent=1 // pred_check_branch
      %419 = sbr.rel (0) target = $region129
    $region128: #{tpu_custom_call.1} parent=1 // pred_region
      %s421 = ssub.s32 3072, 3072
      %422 = vsyncadd [#allocation49], %s421
      %s423 = sshll.u32 [#allocation50], 4
      %s424 = int_to_ptr.vmem [resolvable:$true] %s423
      %429 = dma.hbm_to_vmem [thread:$0]  %s63, 3072, %s424, [#allocation49], 64, 64, 4
    $region129: #{tpu_custom_call.1} parent=1 // pred_fallthru
      _
    // Predicated region
    $region130: #{tpu_custom_call.1} parent=1 // pred_check
      _
    $region131: #{tpu_custom_call.1} parent=1 // pred_check_branch
      %431 = sbr.rel (0) target = $region133
    $region132: #{tpu_custom_call.1} parent=1 // pred_region
      %s433 = ssub.s32 16, 16
      %434 = vsyncadd [#allocation52], %s433
      %s436 = sshll.u32 [#allocation51], 4
      %s437 = int_to_ptr.vmem [resolvable:$true] %s436
      %439 = dma.hbm_to_vmem [thread:$0]  %s65, 16, %s437, [#allocation52]
    $region133: #{tpu_custom_call.1} parent=1 // pred_fallthru
      _
    // Predicated region
    $region134: #{tpu_custom_call.1} parent=1 // pred_check
      _
    $region135: #{tpu_custom_call.1} parent=1 // pred_check_branch
      %441 = sbr.rel (0) target = $region137
    $region136: #{tpu_custom_call.1} parent=1 // pred_region
      %s443 = ssub.s32 16, 16
      %444 = vsyncadd [#allocation52], %s443
      %s446 = sshll.u32 [#allocation53], 4
      %s447 = int_to_ptr.vmem [resolvable:$true] %s446
      %449 = dma.hbm_to_vmem [thread:$0]  %s67, 16, %s447, [#allocation52]
    $region137: #{tpu_custom_call.1} parent=1 // pred_fallthru
      _
    // Predicated region
    $region138: #{tpu_custom_call.1} parent=1 // pred_check
      _
    $region139: #{tpu_custom_call.1} parent=1 // pred_check_branch
      %451 = sbr.rel (0) target = $region141
    $region140: #{tpu_custom_call.1} parent=1 // pred_region
      _
    $region141: #{tpu_custom_call.1} parent=1 // pred_fallthru
      _
    // Predicated region
    $region142: #{tpu_custom_call.1} parent=1 // pred_check
      _
    $region143: #{tpu_custom_call.1} parent=1 // pred_check_branch
      %453 = sbr.rel (0) target = $region145
    $region144: #{tpu_custom_call.1} parent=1 // pred_region
      _
    $region145: #{tpu_custom_call.1} parent=1 // pred_fallthru
      _
    // Predicated region
    $region146: #{tpu_custom_call.1} parent=1 // pred_check
      _
    $region147: #{tpu_custom_call.1} parent=1 // pred_check_branch
      %455 = sbr.rel (0) target = $region149
    $region148: #{tpu_custom_call.1} parent=1 // pred_region
      %456 = dma.done [#allocation4], 256
    $region149: #{tpu_custom_call.1} parent=1 // pred_fallthru
      _
    // Predicated region
    $region150: #{tpu_custom_call.1} parent=1 // pred_check
      _
    $region151: #{tpu_custom_call.1} parent=1 // pred_check_branch
      %458 = sbr.rel (0) target = $region153
    $region152: #{tpu_custom_call.1} parent=1 // pred_region
      %459 = dma.done [#allocation7], 8192
    $region153: #{tpu_custom_call.1} parent=1 // pred_fallthru
      _
    // Predicated region
    $region154: #{tpu_custom_call.1} parent=1 // pred_check
      _
    $region155: #{tpu_custom_call.1} parent=1 // pred_check_branch
      %461 = sbr.rel (0) target = $region157
    $region156: #{tpu_custom_call.1} parent=1 // pred_region
      %462 = dma.done [#allocation7], 16
    $region157: #{tpu_custom_call.1} parent=1 // pred_fallthru
      _
    // Predicated region
    $region158: #{tpu_custom_call.1} parent=1 // pred_check
      _
    $region159: #{tpu_custom_call.1} parent=1 // pred_check_branch
      %464 = sbr.rel (0) target = $region161
    $region160: #{tpu_custom_call.1} parent=1 // pred_region
      %465 = dma.done [#allocation10], 16
    $region161: #{tpu_custom_call.1} parent=1 // pred_fallthru
      _
    // Predicated region
    $region162: #{tpu_custom_call.1} parent=1 // pred_check
      _
    $region163: #{tpu_custom_call.1} parent=1 // pred_check_branch
      %467 = sbr.rel (0) target = $region165
    $region164: #{tpu_custom_call.1} parent=1 // pred_region
      %468 = dma.done [#allocation10], 5120
    $region165: #{tpu_custom_call.1} parent=1 // pred_fallthru
      _
    // Predicated region
    $region166: #{tpu_custom_call.1} parent=1 // pred_check
      _
    $region167: #{tpu_custom_call.1} parent=1 // pred_check_branch
      %470 = sbr.rel (0) target = $region169
    $region168: #{tpu_custom_call.1} parent=1 // pred_region
      %471 = dma.done [#allocation13], 16
    $region169: #{tpu_custom_call.1} parent=1 // pred_fallthru
      _
    // Predicated region
    $region170: #{tpu_custom_call.1} parent=1 // pred_check
      _
    $region171: #{tpu_custom_call.1} parent=1 // pred_check_branch
      %473 = sbr.rel (0) target = $region173
    $region172: #{tpu_custom_call.1} parent=1 // pred_region
      %474 = dma.done [#allocation13], 16
    $region173: #{tpu_custom_call.1} parent=1 // pred_fallthru
      _
    // Predicated region
    $region174: #{tpu_custom_call.1} parent=1 // pred_check
      _
    $region175: #{tpu_custom_call.1} parent=1 // pred_check_branch
      %476 = sbr.rel (0) target = $region177
    $region176: #{tpu_custom_call.1} parent=1 // pred_region
      %477 = dma.done [#allocation16], 3072
    $region177: #{tpu_custom_call.1} parent=1 // pred_fallthru
      _
    // Predicated region
    $region178: #{tpu_custom_call.1} parent=1 // pred_check
      _
    $region179: #{tpu_custom_call.1} parent=1 // pred_check_branch
      %479 = sbr.rel (0) target = $region181
    $region180: #{tpu_custom_call.1} parent=1 // pred_region
      %480 = dma.done [#allocation16], 16
    $region181: #{tpu_custom_call.1} parent=1 // pred_fallthru
      _
    // Predicated region
    $region182: #{tpu_custom_call.1} parent=1 // pred_check
      _
    $region183: #{tpu_custom_call.1} parent=1 // pred_check_branch
      %482 = sbr.rel (0) target = $region185
    $region184: #{tpu_custom_call.1} parent=1 // pred_region
      %483 = dma.done [#allocation19], 16
    $region185: #{tpu_custom_call.1} parent=1 // pred_fallthru
      _
    // Predicated region
    $region186: #{tpu_custom_call.1} parent=1 // pred_check
      _
    $region187: #{tpu_custom_call.1} parent=1 // pred_check_branch
      %485 = sbr.rel (0) target = $region189
    $region188: #{tpu_custom_call.1} parent=1 // pred_region
      %486 = dma.done [#allocation19], 1024
    $region189: #{tpu_custom_call.1} parent=1 // pred_fallthru
      _
    // Predicated region
    $region190: #{tpu_custom_call.1} parent=1 // pred_check
      _
    $region191: #{tpu_custom_call.1} parent=1 // pred_check_branch
      %488 = sbr.rel (0) target = $region193
    $region192: #{tpu_custom_call.1} parent=1 // pred_region
      %489 = dma.done [#allocation22], 16
    $region193: #{tpu_custom_call.1} parent=1 // pred_fallthru
      _
    // Predicated region
    $region194: #{tpu_custom_call.1} parent=1 // pred_check
      _
    $region195: #{tpu_custom_call.1} parent=1 // pred_check_branch
      %491 = sbr.rel (0) target = $region197
    $region196: #{tpu_custom_call.1} parent=1 // pred_region
      %492 = dma.done [#allocation22], 16
    $region197: #{tpu_custom_call.1} parent=1 // pred_fallthru
      _
    // Predicated region
    $region198: #{tpu_custom_call.1} parent=1 // pred_check
      _
    $region199: #{tpu_custom_call.1} parent=1 // pred_check_branch
      %494 = sbr.rel (0) target = $region201
    $region200: #{tpu_custom_call.1} parent=1 // pred_region
      %495 = dma.done [#allocation25], 8192
    $region201: #{tpu_custom_call.1} parent=1 // pred_fallthru
      _
    // Predicated region
    $region202: #{tpu_custom_call.1} parent=1 // pred_check
      _
    $region203: #{tpu_custom_call.1} parent=1 // pred_check_branch
      %497 = sbr.rel (0) target = $region205
    $region204: #{tpu_custom_call.1} parent=1 // pred_region
      %498 = dma.done [#allocation25], 16
    $region205: #{tpu_custom_call.1} parent=1 // pred_fallthru
      _
    // Predicated region
    $region206: #{tpu_custom_call.1} parent=1 // pred_check
      _
    $region207: #{tpu_custom_call.1} parent=1 // pred_check_branch
      %500 = sbr.rel (0) target = $region209
    $region208: #{tpu_custom_call.1} parent=1 // pred_region
      %501 = dma.done [#allocation28], 16
    $region209: #{tpu_custom_call.1} parent=1 // pred_fallthru
      _
    // Predicated region
    $region210: #{tpu_custom_call.1} parent=1 // pred_check
      _
    $region211: #{tpu_custom_call.1} parent=1 // pred_check_branch
      %503 = sbr.rel (0) target = $region213
    $region212: #{tpu_custom_call.1} parent=1 // pred_region
      %504 = dma.done [#allocation28], 5120
    $region213: #{tpu_custom_call.1} parent=1 // pred_fallthru
      _
    // Predicated region
    $region214: #{tpu_custom_call.1} parent=1 // pred_check
      _
    $region215: #{tpu_custom_call.1} parent=1 // pred_check_branch
      %506 = sbr.rel (0) target = $region217
    $region216: #{tpu_custom_call.1} parent=1 // pred_region
      %507 = dma.done [#allocation31], 16
    $region217: #{tpu_custom_call.1} parent=1 // pred_fallthru
      _
    // Predicated region
    $region218: #{tpu_custom_call.1} parent=1 // pred_check
      _
    $region219: #{tpu_custom_call.1} parent=1 // pred_check_branch
      %509 = sbr.rel (0) target = $region221
    $region220: #{tpu_custom_call.1} parent=1 // pred_region
      %510 = dma.done [#allocation31], 16
    $region221: #{tpu_custom_call.1} parent=1 // pred_fallthru
      _
    // Predicated region
    $region222: #{tpu_custom_call.1} parent=1 // pred_check
      _
    $region223: #{tpu_custom_call.1} parent=1 // pred_check_branch
      %512 = sbr.rel (0) target = $region225
    $region224: #{tpu_custom_call.1} parent=1 // pred_region
      %513 = dma.done [#allocation34], 3072
    $region225: #{tpu_custom_call.1} parent=1 // pred_fallthru
      _
    // Predicated region
    $region226: #{tpu_custom_call.1} parent=1 // pred_check
      _
    $region227: #{tpu_custom_call.1} parent=1 // pred_check_branch
      %515 = sbr.rel (0) target = $region229
    $region228: #{tpu_custom_call.1} parent=1 // pred_region
      %516 = dma.done [#allocation34], 16
    $region229: #{tpu_custom_call.1} parent=1 // pred_fallthru
      _
    // Predicated region
    $region230: #{tpu_custom_call.1} parent=1 // pred_check
      _
    $region231: #{tpu_custom_call.1} parent=1 // pred_check_branch
      %518 = sbr.rel (0) target = $region233
    $region232: #{tpu_custom_call.1} parent=1 // pred_region
      %519 = dma.done [#allocation37], 16
    $region233: #{tpu_custom_call.1} parent=1 // pred_fallthru
      _
    // Predicated region
    $region234: #{tpu_custom_call.1} parent=1 // pred_check
      _
    $region235: #{tpu_custom_call.1} parent=1 // pred_check_branch
      %521 = sbr.rel (0) target = $region237
    $region236: #{tpu_custom_call.1} parent=1 // pred_region
      %522 = dma.done [#allocation37], 16
    $region237: #{tpu_custom_call.1} parent=1 // pred_fallthru
      _
    // Predicated region
    $region238: #{tpu_custom_call.1} parent=1 // pred_check
      _
    $region239: #{tpu_custom_call.1} parent=1 // pred_check_branch
      %524 = sbr.rel (0) target = $region241
    $region240: #{tpu_custom_call.1} parent=1 // pred_region
      %525 = dma.done [#allocation40], 16
    $region241: #{tpu_custom_call.1} parent=1 // pred_fallthru
      _
    // Predicated region
    $region242: #{tpu_custom_call.1} parent=1 // pred_check
      _
    $region243: #{tpu_custom_call.1} parent=1 // pred_check_branch
      %527 = sbr.rel (0) target = $region245
    $region244: #{tpu_custom_call.1} parent=1 // pred_region
      %528 = dma.done [#allocation40], 8192
    $region245: #{tpu_custom_call.1} parent=1 // pred_fallthru
      _
    // Predicated region
    $region246: #{tpu_custom_call.1} parent=1 // pred_check
      _
    $region247: #{tpu_custom_call.1} parent=1 // pred_check_branch
      %530 = sbr.rel (0) target = $region249
    $region248: #{tpu_custom_call.1} parent=1 // pred_region
      %531 = dma.done [#allocation43], 16
    $region249: #{tpu_custom_call.1} parent=1 // pred_fallthru
      _
    // Predicated region
    $region250: #{tpu_custom_call.1} parent=1 // pred_check
      _
    $region251: #{tpu_custom_call.1} parent=1 // pred_check_branch
      %533 = sbr.rel (0) target = $region253
    $region252: #{tpu_custom_call.1} parent=1 // pred_region
      %534 = dma.done [#allocation43], 16
    $region253: #{tpu_custom_call.1} parent=1 // pred_fallthru
      _
    // Predicated region
    $region254: #{tpu_custom_call.1} parent=1 // pred_check
      _
    $region255: #{tpu_custom_call.1} parent=1 // pred_check_branch
      %536 = sbr.rel (0) target = $region257
    $region256: #{tpu_custom_call.1} parent=1 // pred_region
      %537 = dma.done [#allocation46], 5120
    $region257: #{tpu_custom_call.1} parent=1 // pred_fallthru
      _
    // Predicated region
    $region258: #{tpu_custom_call.1} parent=1 // pred_check
      _
    $region259: #{tpu_custom_call.1} parent=1 // pred_check_branch
      %539 = sbr.rel (0) target = $region261
    $region260: #{tpu_custom_call.1} parent=1 // pred_region
      %540 = dma.done [#allocation46], 16
    $region261: #{tpu_custom_call.1} parent=1 // pred_fallthru
      _
    // Predicated region
    $region262: #{tpu_custom_call.1} parent=1 // pred_check
      _
    $region263: #{tpu_custom_call.1} parent=1 // pred_check_branch
      %542 = sbr.rel (0) target = $region265
    $region264: #{tpu_custom_call.1} parent=1 // pred_region
      %543 = dma.done [#allocation49], 16
    $region265: #{tpu_custom_call.1} parent=1 // pred_fallthru
      _
    // Predicated region
    $region266: #{tpu_custom_call.1} parent=1 // pred_check
      _
    $region267: #{tpu_custom_call.1} parent=1 // pred_check_branch
      %545 = sbr.rel (0) target = $region269
    $region268: #{tpu_custom_call.1} parent=1 // pred_region
      %546 = dma.done [#allocation49], 3072
    $region269: #{tpu_custom_call.1} parent=1 // pred_fallthru
      _
    // Predicated region
    $region270: #{tpu_custom_call.1} parent=1 // pred_check
      _
    $region271: #{tpu_custom_call.1} parent=1 // pred_check_branch
      %548 = sbr.rel (0) target = $region273
    $region272: #{tpu_custom_call.1} parent=1 // pred_region
      %549 = dma.done [#allocation52], 16
    $region273: #{tpu_custom_call.1} parent=1 // pred_fallthru
      _
    // Predicated region
    $region274: #{tpu_custom_call.1} parent=1 // pred_check
      _
    $region275: #{tpu_custom_call.1} parent=1 // pred_check_branch
      %551 = sbr.rel (0) target = $region277
    $region276: #{tpu_custom_call.1} parent=1 // pred_region
      %552 = dma.done [#allocation52], 16
    $region277: #{tpu_custom_call.1} parent=1 // pred_fallthru
      _
    %554 = vst [vmem:[#allocation2] sm:$0xf] 0
    %555 = vst [vmem:[#allocation2 + $0x10] sm:$0xf] 0
    %556 = vst [vmem:[#allocation2 + $0x8] sm:$0xf0] 0
    %557 = vst [vmem:[#allocation2 + $0x18] sm:$0xf0] 0
    %v558 = vld [vmem:[#allocation3] sm:$0xf]
    %v559 = vld [vmem:[#allocation3 + $0x4] sm:$0xf]
    %v560 = vld [vmem:[#allocation3 + $0x8] sm:$0xf]
    %v561 = vld [vmem:[#allocation3 + $0xc] sm:$0xf]
    %v566 = vunpack.c.l.b16 %v558
    %v567 = vunpack.c.l.b16 %v559
    %v568 = vunpack.c.l.b16 %v560
    %v569 = vunpack.c.l.b16 %v561
    %v570 = vpack.c.b16 %v566, %v566
    %v571 = vpack.c.b16 %v567, %v567
    %v572 = vpack.c.b16 %v568, %v568
    %v573 = vpack.c.b16 %v569, %v569
    %578 = vst [vmem:[#allocation2] sm:$0xf0] %v570
    %579 = vst [vmem:[#allocation2 + $0x8] sm:$0xf] %v571
    %580 = vst [vmem:[#allocation2 + $0x10] sm:$0xf0] %v572
    %581 = vst [vmem:[#allocation2 + $0x18] sm:$0xf] %v573
    %v582 = vld [vmem:[#allocation2] sm:$0xfc]
    %v583 = vld [vmem:[#allocation2 + $0x8] sm:$0x7]
    %v584 = vld [vmem:[#allocation2 + $0x10] sm:$0xfc]
    %v585 = vld [vmem:[#allocation2 + $0x18] sm:$0x7]
    %vm586 = vsmask.f32 5376
    %v588 = vshrl.u32 %v582, 16
    %v590 = vrot.slane %v588, 2
    %v591 = vshll.u32 %v582, 16
    %v593 = vrot.slane %v591, 3
    %v594 = vor.u32 %v590, %v593
    %v596 = vshrl.u32 %v583, 16
    %v598 = vrot.slane %v596, 2
    %v599 = vshll.u32 %v583, 16
    %v601 = vrot.slane %v599, 3
    %v602 = vor.u32 %v598, %v601
    %v603 = vsel %vm586, %v594, %v602
    %v605 = vshrl.u32 %v584, 16
    %v607 = vrot.slane %v605, 2
    %v608 = vshll.u32 %v584, 16
    %v610 = vrot.slane %v608, 3
    %v611 = vor.u32 %v607, %v610
    %v613 = vshrl.u32 %v585, 16
    %v615 = vrot.slane %v613, 2
    %v616 = vshll.u32 %v585, 16
    %v618 = vrot.slane %v616, 3
    %v619 = vor.u32 %v615, %v618
    %v620 = vsel %vm586, %v611, %v619
    %v623 = vld [vmem:[#allocation6] sm:$0xf]
    %v624 = vld [vmem:[#allocation6 + $0x4] sm:$0xf]
    %v625 = vld [vmem:[#allocation6 + $0x8] sm:$0xf]
    %v626 = vld [vmem:[#allocation6 + $0xc] sm:$0xf]
    %v627 = vld [vmem:[#allocation6 + $0x10] sm:$0xf]
    %v628 = vld [vmem:[#allocation6 + $0x14] sm:$0xf]
    %v629 = vld [vmem:[#allocation6 + $0x18] sm:$0xf]
    %v630 = vld [vmem:[#allocation6 + $0x1c] sm:$0xf]
    %v631 = vld [vmem:[#allocation6 + $0x20] sm:$0xf]
    %v632 = vld [vmem:[#allocation6 + $0x24] sm:$0xf]
    %v633 = vld [vmem:[#allocation6 + $0x28] sm:$0xf]
    %v634 = vld [vmem:[#allocation6 + $0x2c] sm:$0xf]
    %v635 = vld [vmem:[#allocation6 + $0x30] sm:$0xf]
    %v636 = vld [vmem:[#allocation6 + $0x34] sm:$0xf]
    %v637 = vld [vmem:[#allocation6 + $0x38] sm:$0xf]
    %v638 = vld [vmem:[#allocation6 + $0x3c] sm:$0xf]
    %v639 = vld [vmem:[#allocation2] sm:$0xf8]
    %v640 = vld [vmem:[#allocation2 + $0x10] sm:$0xf8]
    %vm645 = vcmask 1044480
    %v646 = vrot.slane %v639, 3
    %v647 = vrot.slane %v583, 3
    %v648 = vsel %vm645, %v646, %v647
    %v649 = vrot.slane %v640, 3
    %v650 = vrot.slane %v585, 3
    %v651 = vsel %vm645, %v649, %v650
    %s654 = scalar_lea.vmem [#allocation6], 64
    %v655 = vld [vmem:[%s654] sm:$0xf]
    %v656 = vld [vmem:[%s654 + $0x4] sm:$0xf]
    %v657 = vld [vmem:[%s654 + $0x8] sm:$0xf]
    %v658 = vld [vmem:[%s654 + $0xc] sm:$0xf]
    %v659 = vld [vmem:[%s654 + $0x10] sm:$0xf]
    %v660 = vld [vmem:[%s654 + $0x14] sm:$0xf]
    %v661 = vld [vmem:[%s654 + $0x18] sm:$0xf]
    %v662 = vld [vmem:[%s654 + $0x1c] sm:$0xf]
    %v663 = vld [vmem:[%s654 + $0x20] sm:$0xf]
    %v664 = vld [vmem:[%s654 + $0x24] sm:$0xf]
    %v665 = vld [vmem:[%s654 + $0x28] sm:$0xf]
    %v666 = vld [vmem:[%s654 + $0x2c] sm:$0xf]
    %v667 = vld [vmem:[%s654 + $0x30] sm:$0xf]
    %v668 = vld [vmem:[%s654 + $0x34] sm:$0xf]
    %v669 = vld [vmem:[%s654 + $0x38] sm:$0xf]
    %v670 = vld [vmem:[%s654 + $0x3c] sm:$0xf]
    %v687 = vunpack.c.l.b16 %v655
    %v688 = vunpack.c.l.b16 %v656
    %v689 = vunpack.c.l.b16 %v657
    %v690 = vunpack.c.l.b16 %v658
    %v691 = vunpack.c.l.b16 %v659
    %v692 = vunpack.c.l.b16 %v660
    %v693 = vunpack.c.l.b16 %v661
    %v694 = vunpack.c.l.b16 %v662
    %v695 = vunpack.c.l.b16 %v663
    %v696 = vunpack.c.l.b16 %v664
    %v697 = vunpack.c.l.b16 %v665
    %v698 = vunpack.c.l.b16 %v666
    %v699 = vunpack.c.l.b16 %v667
    %v700 = vunpack.c.l.b16 %v668
    %v701 = vunpack.c.l.b16 %v669
    %v702 = vunpack.c.l.b16 %v670
    %v703 = vpack.c.b16 %v688, %v687
    %v704 = vpack.c.b16 %v690, %v689
    %v705 = vpack.c.b16 %v692, %v691
    %v706 = vpack.c.b16 %v694, %v693
    %v707 = vpack.c.b16 %v696, %v695
    %v708 = vpack.c.b16 %v698, %v697
    %v709 = vpack.c.b16 %v700, %v699
    %v710 = vpack.c.b16 %v702, %v701
    %719 = vmatprep.subr.bf16.mxu0 0
    %720 = vmatpush1.bf16.msra.mxu0 %v703
    %721 = vmatprep.subr.bf16.mxu0 0
    %722 = vmatpush1.bf16.msra.mxu0 %v704
    %723 = vmatprep.subr.bf16.mxu0 0
    %724 = vmatpush1.bf16.msra.mxu0 %v705
    %725 = vmatprep.subr.bf16.mxu0 0
    %726 = vmatpush1.bf16.msra.mxu0 %v706
    %727 = vmatprep.subr.bf16.mxu0 0
    %728 = vmatpush1.bf16.msra.mxu0 %v707
    %729 = vmatprep.subr.bf16.mxu0 0
    %730 = vmatpush1.bf16.msra.mxu0 %v708
    %731 = vmatprep.subr.bf16.mxu0 0
    %732 = vmatpush1.bf16.msra.mxu0 %v709
    %733 = vmatprep.subr.bf16.mxu0 0
    %734 = vmatpush1.bf16.msra.mxu0 %v710
    %735 = vmatprep.subr.bf16.mxu0 0
    %736 = vmatpush1.bf16.msra.mxu0 0
    %737 = vmatprep.subr.bf16.mxu0 0
    %738 = vmatpush1.bf16.msra.mxu0 0
    %739 = vmatprep.subr.bf16.mxu0 0
    %740 = vmatpush1.bf16.msra.mxu0 0
    %741 = vmatprep.subr.bf16.mxu0 0
    %742 = vmatpush1.bf16.msra.mxu0 0
    %743 = vmatprep.subr.bf16.mxu0 0
    %744 = vmatpush1.bf16.msra.mxu0 0
    %745 = vmatprep.subr.bf16.mxu0 0
    %746 = vmatpush1.bf16.msra.mxu0 0
    %747 = vmatprep.subr.bf16.mxu0 0
    %748 = vmatpush1.bf16.msra.mxu0 0
    %749 = vmatprep.subr.bf16.mxu0 0
    %750 = vmatpush1.bf16.msra.mxu0 0
    %751 = vmatprep.mubr.bf16.mxu0 0
    %752 = vmatmul.mubr.bf16.gmra.mrb[0].mxu0 %v648
    %v753 = vpop.f32.mrb[0].mxu0
    %v754 = vadd.f32 0.0, %v753
    %v755 = vpop.f32.mrb[0].mxu0
    %v756 = vpop.f32.mrb[0].mxu0
    %v757 = vadd.f32 0.0, %v756
    %v758 = vpop.f32.mrb[0].mxu0
    %759 = vmatprep.mubr.bf16.mxu0 0
    %760 = vmatmul.mubr.bf16.gmra.mrb[0].mxu0 %v651
    %v761 = vpop.f32.mrb[0].mxu0
    %v762 = vadd.f32 0.0, %v761
    %v763 = vpop.f32.mrb[0].mxu0
    %v764 = vpop.f32.mrb[0].mxu0
    %v765 = vadd.f32 0.0, %v764
    %v766 = vpop.f32.mrb[0].mxu0
    %767 = vdwg.mxu0
    %v784 = vunpack.c.l.b16 %v623
    %v785 = vunpack.c.l.b16 %v624
    %v786 = vunpack.c.l.b16 %v625
    %v787 = vunpack.c.l.b16 %v626
    %v788 = vunpack.c.l.b16 %v627
    %v789 = vunpack.c.l.b16 %v628
    %v790 = vunpack.c.l.b16 %v629
    %v791 = vunpack.c.l.b16 %v630
    %v792 = vunpack.c.l.b16 %v631
    %v793 = vunpack.c.l.b16 %v632
    %v794 = vunpack.c.l.b16 %v633
    %v795 = vunpack.c.l.b16 %v634
    %v796 = vunpack.c.l.b16 %v635
    %v797 = vunpack.c.l.b16 %v636
    %v798 = vunpack.c.l.b16 %v637
    %v799 = vunpack.c.l.b16 %v638
    %v800 = vpack.c.b16 %v785, %v784
    %v801 = vpack.c.b16 %v787, %v786
    %v802 = vpack.c.b16 %v789, %v788
    %v803 = vpack.c.b16 %v791, %v790
    %v804 = vpack.c.b16 %v793, %v792
    %v805 = vpack.c.b16 %v795, %v794
    %v806 = vpack.c.b16 %v797, %v796
    %v807 = vpack.c.b16 %v799, %v798
    %816 = vmatprep.subr.bf16.mxu0 0
    %817 = vmatpush1.bf16.msra.mxu0 %v800
    %818 = vmatprep.subr.bf16.mxu0 0
    %819 = vmatpush1.bf16.msra.mxu0 %v801
    %820 = vmatprep.subr.bf16.mxu0 0
    %821 = vmatpush1.bf16.msra.mxu0 %v802
    %822 = vmatprep.subr.bf16.mxu0 0
    %823 = vmatpush1.bf16.msra.mxu0 %v803
    %824 = vmatprep.subr.bf16.mxu0 0
    %825 = vmatpush1.bf16.msra.mxu0 %v804
    %826 = vmatprep.subr.bf16.mxu0 0
    %827 = vmatpush1.bf16.msra.mxu0 %v805
    %828 = vmatprep.subr.bf16.mxu0 0
    %829 = vmatpush1.bf16.msra.mxu0 %v806
    %830 = vmatprep.subr.bf16.mxu0 0
    %831 = vmatpush1.bf16.msra.mxu0 %v807
    %832 = vmatprep.subr.bf16.mxu0 0
    %833 = vmatpush1.bf16.msra.mxu0 0
    %834 = vmatprep.subr.bf16.mxu0 0
    %835 = vmatpush1.bf16.msra.mxu0 0
    %836 = vmatprep.subr.bf16.mxu0 0
    %837 = vmatpush1.bf16.msra.mxu0 0
    %838 = vmatprep.subr.bf16.mxu0 0
    %839 = vmatpush1.bf16.msra.mxu0 0
    %840 = vmatprep.subr.bf16.mxu0 0
    %841 = vmatpush1.bf16.msra.mxu0 0
    %842 = vmatprep.subr.bf16.mxu0 0
    %843 = vmatpush1.bf16.msra.mxu0 0
    %844 = vmatprep.subr.bf16.mxu0 0
    %845 = vmatpush1.bf16.msra.mxu0 0
    %846 = vmatprep.subr.bf16.mxu0 0
    %847 = vmatpush1.bf16.msra.mxu0 0
    %848 = vmatprep.mubr.bf16.mxu0 0
    %849 = vmatmul.mubr.bf16.gmra.mrb[0].mxu0 %v603
    %v850 = vpop.f32.mrb[0].mxu0
    %v851 = vadd.f32 %v754, %v850
    %v852 = vpop.f32.mrb[0].mxu0
    %v853 = vpop.f32.mrb[0].mxu0
    %v854 = vadd.f32 %v757, %v853
    %v855 = vpop.f32.mrb[0].mxu0
    %856 = vmatprep.mubr.bf16.mxu0 0
    %857 = vmatmul.mubr.bf16.gmra.mrb[0].mxu0 %v620
    %v858 = vpop.f32.mrb[0].mxu0
    %v859 = vadd.f32 %v762, %v858
    %v860 = vpop.f32.mrb[0].mxu0
    %v861 = vpop.f32.mrb[0].mxu0
    %v862 = vadd.f32 %v765, %v861
    %v863 = vpop.f32.mrb[0].mxu0
    %864 = vdwg.mxu0
    %v865 = vld [vmem:[#allocation2 + $0x8] sm:$0xf]
    %v866 = vld [vmem:[#allocation2 + $0x18] sm:$0xf]
    %vm867 = vsmask.f32 4352
    %v869 = vshrl.u32 %v639, 16
    %v871 = vrot.slane %v869, 3
    %v872 = vshll.u32 %v639, 16
    %v874 = vrot.slane %v872, 4
    %v875 = vor.u32 %v871, %v874
    %v877 = vshrl.u32 %v865, 16
    %v879 = vrot.slane %v877, 3
    %v880 = vshll.u32 %v865, 16
    %v882 = vrot.slane %v880, 4
    %v883 = vor.u32 %v879, %v882
    %v884 = vsel %vm867, %v875, %v883
    %v886 = vshrl.u32 %v640, 16
    %v888 = vrot.slane %v886, 3
    %v889 = vshll.u32 %v640, 16
    %v891 = vrot.slane %v889, 4
    %v892 = vor.u32 %v888, %v891
    %v894 = vshrl.u32 %v866, 16
    %v896 = vrot.slane %v894, 3
    %v897 = vshll.u32 %v866, 16
    %v899 = vrot.slane %v897, 4
    %v900 = vor.u32 %v896, %v899
    %v901 = vsel %vm867, %v892, %v900
    %s904 = scalar_lea.vmem [#allocation6], 128
    %v905 = vld [vmem:[%s904] sm:$0xf]
    %v906 = vld [vmem:[%s904 + $0x4] sm:$0xf]
    %v907 = vld [vmem:[%s904 + $0x8] sm:$0xf]
    %v908 = vld [vmem:[%s904 + $0xc] sm:$0xf]
    %v909 = vld [vmem:[%s904 + $0x10] sm:$0xf]
    %v910 = vld [vmem:[%s904 + $0x14] sm:$0xf]
    %v911 = vld [vmem:[%s904 + $0x18] sm:$0xf]
    %v912 = vld [vmem:[%s904 + $0x1c] sm:$0xf]
    %v913 = vld [vmem:[%s904 + $0x20] sm:$0xf]
    %v914 = vld [vmem:[%s904 + $0x24] sm:$0xf]
    %v915 = vld [vmem:[%s904 + $0x28] sm:$0xf]
    %v916 = vld [vmem:[%s904 + $0x2c] sm:$0xf]
    %v917 = vld [vmem:[%s904 + $0x30] sm:$0xf]
    %v918 = vld [vmem:[%s904 + $0x34] sm:$0xf]
    %v919 = vld [vmem:[%s904 + $0x38] sm:$0xf]
    %v920 = vld [vmem:[%s904 + $0x3c] sm:$0xf]
    %v937 = vunpack.c.l.b16 %v905
    %v938 = vunpack.c.l.b16 %v906
    %v939 = vunpack.c.l.b16 %v907
    %v940 = vunpack.c.l.b16 %v908
    %v941 = vunpack.c.l.b16 %v909
    %v942 = vunpack.c.l.b16 %v910
    %v943 = vunpack.c.l.b16 %v911
    %v944 = vunpack.c.l.b16 %v912
    %v945 = vunpack.c.l.b16 %v913
    %v946 = vunpack.c.l.b16 %v914
    %v947 = vunpack.c.l.b16 %v915
    %v948 = vunpack.c.l.b16 %v916
    %v949 = vunpack.c.l.b16 %v917
    %v950 = vunpack.c.l.b16 %v918
    %v951 = vunpack.c.l.b16 %v919
    %v952 = vunpack.c.l.b16 %v920
    %v953 = vpack.c.b16 %v938, %v937
    %v954 = vpack.c.b16 %v940, %v939
    %v955 = vpack.c.b16 %v942, %v941
    %v956 = vpack.c.b16 %v944, %v943
    %v957 = vpack.c.b16 %v946, %v945
    %v958 = vpack.c.b16 %v948, %v947
    %v959 = vpack.c.b16 %v950, %v949
    %v960 = vpack.c.b16 %v952, %v951
    %969 = vmatprep.subr.bf16.mxu0 0
    %970 = vmatpush1.bf16.msra.mxu0 %v953
    %971 = vmatprep.subr.bf16.mxu0 0
    %972 = vmatpush1.bf16.msra.mxu0 %v954
    %973 = vmatprep.subr.bf16.mxu0 0
    %974 = vmatpush1.bf16.msra.mxu0 %v955
    %975 = vmatprep.subr.bf16.mxu0 0
    %976 = vmatpush1.bf16.msra.mxu0 %v956
    %977 = vmatprep.subr.bf16.mxu0 0
    %978 = vmatpush1.bf16.msra.mxu0 %v957
    %979 = vmatprep.subr.bf16.mxu0 0
    %980 = vmatpush1.bf16.msra.mxu0 %v958
    %981 = vmatprep.subr.bf16.mxu0 0
    %982 = vmatpush1.bf16.msra.mxu0 %v959
    %983 = vmatprep.subr.bf16.mxu0 0
    %984 = vmatpush1.bf16.msra.mxu0 %v960
    %985 = vmatprep.subr.bf16.mxu0 0
    %986 = vmatpush1.bf16.msra.mxu0 0
    %987 = vmatprep.subr.bf16.mxu0 0
    %988 = vmatpush1.bf16.msra.mxu0 0
    %989 = vmatprep.subr.bf16.mxu0 0
    %990 = vmatpush1.bf16.msra.mxu0 0
    %991 = vmatprep.subr.bf16.mxu0 0
    %992 = vmatpush1.bf16.msra.mxu0 0
    %993 = vmatprep.subr.bf16.mxu0 0
    %994 = vmatpush1.bf16.msra.mxu0 0
    %995 = vmatprep.subr.bf16.mxu0 0
    %996 = vmatpush1.bf16.msra.mxu0 0
    %997 = vmatprep.subr.bf16.mxu0 0
    %998 = vmatpush1.bf16.msra.mxu0 0
    %999 = vmatprep.subr.bf16.mxu0 0
    %1000 = vmatpush1.bf16.msra.mxu0 0
    %1001 = vmatprep.mubr.bf16.mxu0 0
    %1002 = vmatmul.mubr.bf16.gmra.mrb[0].mxu0 %v884
    %v1003 = vpop.f32.mrb[0].mxu0
    %v1004 = vadd.f32 0.0, %v1003
    %v1005 = vpop.f32.mrb[0].mxu0
    %v1006 = vpop.f32.mrb[0].mxu0
    %v1007 = vadd.f32 0.0, %v1006
    %v1008 = vpop.f32.mrb[0].mxu0
    %1009 = vmatprep.mubr.bf16.mxu0 0
    %1010 = vmatmul.mubr.bf16.gmra.mrb[0].mxu0 %v901
    %v1011 = vpop.f32.mrb[0].mxu0
    %v1012 = vadd.f32 0.0, %v1011
    %v1013 = vpop.f32.mrb[0].mxu0
    %v1014 = vpop.f32.mrb[0].mxu0
    %v1015 = vadd.f32 0.0, %v1014
    %v1016 = vpop.f32.mrb[0].mxu0
    %1017 = vdwg.mxu0
    %v1018 = vadd.f32 %v851, %v1004
    %v1019 = vadd.f32 %v854, %v1007
    %v1020 = vadd.f32 %v859, %v1012
    %v1021 = vadd.f32 %v862, %v1015
    %v1022 = vld [vmem:[#allocation2] sm:$0xf0]
    %v1023 = vld [vmem:[#allocation2 + $0x10] sm:$0xf0]
    %vm1028 = vcmask 1043456
    %v1029 = vrot.slane %v1022, 4
    %v1030 = vrot.slane %v865, 4
    %v1031 = vsel %vm1028, %v1029, %v1030
    %v1032 = vrot.slane %v1023, 4
    %v1033 = vrot.slane %v866, 4
    %v1034 = vsel %vm1028, %v1032, %v1033
    %s1037 = scalar_lea.vmem [#allocation6], 192
    %v1038 = vld [vmem:[%s1037] sm:$0xf]
    %v1039 = vld [vmem:[%s1037 + $0x4] sm:$0xf]
    %v1040 = vld [vmem:[%s1037 + $0x8] sm:$0xf]
    %v1041 = vld [vmem:[%s1037 + $0xc] sm:$0xf]
    %v1042 = vld [vmem:[%s1037 + $0x10] sm:$0xf]
    %v1043 = vld [vmem:[%s1037 + $0x14] sm:$0xf]
    %v1044 = vld [vmem:[%s1037 + $0x18] sm:$0xf]
    %v1045 = vld [vmem:[%s1037 + $0x1c] sm:$0xf]
    %v1046 = vld [vmem:[%s1037 + $0x20] sm:$0xf]
    %v1047 = vld [vmem:[%s1037 + $0x24] sm:$0xf]
    %v1048 = vld [vmem:[%s1037 + $0x28] sm:$0xf]
    %v1049 = vld [vmem:[%s1037 + $0x2c] sm:$0xf]
    %v1050 = vld [vmem:[%s1037 + $0x30] sm:$0xf]
    %v1051 = vld [vmem:[%s1037 + $0x34] sm:$0xf]
    %v1052 = vld [vmem:[%s1037 + $0x38] sm:$0xf]
    %v1053 = vld [vmem:[%s1037 + $0x3c] sm:$0xf]
    %v1070 = vunpack.c.l.b16 %v1038
    %v1071 = vunpack.c.l.b16 %v1039
    %v1072 = vunpack.c.l.b16 %v1040
    %v1073 = vunpack.c.l.b16 %v1041
    %v1074 = vunpack.c.l.b16 %v1042
    %v1075 = vunpack.c.l.b16 %v1043
    %v1076 = vunpack.c.l.b16 %v1044
    %v1077 = vunpack.c.l.b16 %v1045
    %v1078 = vunpack.c.l.b16 %v1046
    %v1079 = vunpack.c.l.b16 %v1047
    %v1080 = vunpack.c.l.b16 %v1048
    %v1081 = vunpack.c.l.b16 %v1049
    %v1082 = vunpack.c.l.b16 %v1050
    %v1083 = vunpack.c.l.b16 %v1051
    %v1084 = vunpack.c.l.b16 %v1052
    %v1085 = vunpack.c.l.b16 %v1053
    %v1086 = vpack.c.b16 %v1071, %v1070
    %v1087 = vpack.c.b16 %v1073, %v1072
    %v1088 = vpack.c.b16 %v1075, %v1074
    %v1089 = vpack.c.b16 %v1077, %v1076
    %v1090 = vpack.c.b16 %v1079, %v1078
    %v1091 = vpack.c.b16 %v1081, %v1080
    %v1092 = vpack.c.b16 %v1083, %v1082
    %v1093 = vpack.c.b16 %v1085, %v1084
    %1102 = vmatprep.subr.bf16.mxu0 0
    %1103 = vmatpush1.bf16.msra.mxu0 %v1086
    %1104 = vmatprep.subr.bf16.mxu0 0
    %1105 = vmatpush1.bf16.msra.mxu0 %v1087
    %1106 = vmatprep.subr.bf16.mxu0 0
    %1107 = vmatpush1.bf16.msra.mxu0 %v1088
    %1108 = vmatprep.subr.bf16.mxu0 0
    %1109 = vmatpush1.bf16.msra.mxu0 %v1089
    %1110 = vmatprep.subr.bf16.mxu0 0
    %1111 = vmatpush1.bf16.msra.mxu0 %v1090
    %1112 = vmatprep.subr.bf16.mxu0 0
    %1113 = vmatpush1.bf16.msra.mxu0 %v1091
    %1114 = vmatprep.subr.bf16.mxu0 0
    %1115 = vmatpush1.bf16.msra.mxu0 %v1092
    %1116 = vmatprep.subr.bf16.mxu0 0
    %1117 = vmatpush1.bf16.msra.mxu0 %v1093
    %1118 = vmatprep.subr.bf16.mxu0 0
    %1119 = vmatpush1.bf16.msra.mxu0 0
    %1120 = vmatprep.subr.bf16.mxu0 0
    %1121 = vmatpush1.bf16.msra.mxu0 0
    %1122 = vmatprep.subr.bf16.mxu0 0
    %1123 = vmatpush1.bf16.msra.mxu0 0
    %1124 = vmatprep.subr.bf16.mxu0 0
    %1125 = vmatpush1.bf16.msra.mxu0 0
    %1126 = vmatprep.subr.bf16.mxu0 0
    %1127 = vmatpush1.bf16.msra.mxu0 0
    %1128 = vmatprep.subr.bf16.mxu0 0
    %1129 = vmatpush1.bf16.msra.mxu0 0
    %1130 = vmatprep.subr.bf16.mxu0 0
    %1131 = vmatpush1.bf16.msra.mxu0 0
    %1132 = vmatprep.subr.bf16.mxu0 0
    %1133 = vmatpush1.bf16.msra.mxu0 0
    %1134 = vmatprep.mubr.bf16.mxu0 0
    %1135 = vmatmul.mubr.bf16.gmra.mrb[0].mxu0 %v1031
    %v1136 = vpop.f32.mrb[0].mxu0
    %v1137 = vadd.f32 0.0, %v1136
    %v1138 = vpop.f32.mrb[0].mxu0
    %v1139 = vpop.f32.mrb[0].mxu0
    %v1140 = vadd.f32 0.0, %v1139
    %v1141 = vpop.f32.mrb[0].mxu0
    %1142 = vmatprep.mubr.bf16.mxu0 0
    %1143 = vmatmul.mubr.bf16.gmra.mrb[0].mxu0 %v1034
    %v1144 = vpop.f32.mrb[0].mxu0
    %v1145 = vadd.f32 0.0, %v1144
    %v1146 = vpop.f32.mrb[0].mxu0
    %v1147 = vpop.f32.mrb[0].mxu0
    %v1148 = vadd.f32 0.0, %v1147
    %v1149 = vpop.f32.mrb[0].mxu0
    %1150 = vdwg.mxu0
    %v1151 = vadd.f32 %v1018, %v1137
    %v1152 = vadd.f32 %v1019, %v1140
    %v1153 = vadd.f32 %v1020, %v1145
    %v1154 = vadd.f32 %v1021, %v1148
    %v1155 = vld [vmem:[#allocation2 + $0x8] sm:$0x1f]
    %v1156 = vld [vmem:[#allocation2 + $0x18] sm:$0x1f]
    %vm1157 = vsmask.f32 3328
    %v1159 = vshrl.u32 %v1022, 16
    %v1161 = vrot.slane %v1159, 4
    %v1162 = vshll.u32 %v1022, 16
    %v1164 = vrot.slane %v1162, 5
    %v1165 = vor.u32 %v1161, %v1164
    %v1167 = vshrl.u32 %v1155, 16
    %v1169 = vrot.slane %v1167, 4
    %v1170 = vshll.u32 %v1155, 16
    %v1172 = vrot.slane %v1170, 5
    %v1173 = vor.u32 %v1169, %v1172
    %v1174 = vsel %vm1157, %v1165, %v1173
    %v1176 = vshrl.u32 %v1023, 16
    %v1178 = vrot.slane %v1176, 4
    %v1179 = vshll.u32 %v1023, 16
    %v1181 = vrot.slane %v1179, 5
    %v1182 = vor.u32 %v1178, %v1181
    %v1184 = vshrl.u32 %v1156, 16
    %v1186 = vrot.slane %v1184, 4
    %v1187 = vshll.u32 %v1156, 16
    %v1189 = vrot.slane %v1187, 5
    %v1190 = vor.u32 %v1186, %v1189
    %v1191 = vsel %vm1157, %v1182, %v1190
    %s1194 = scalar_lea.vmem [#allocation6], 256
    %v1195 = vld [vmem:[%s1194] sm:$0xf]
    %v1196 = vld [vmem:[%s1194 + $0x4] sm:$0xf]
    %v1197 = vld [vmem:[%s1194 + $0x8] sm:$0xf]
    %v1198 = vld [vmem:[%s1194 + $0xc] sm:$0xf]
    %v1199 = vld [vmem:[%s1194 + $0x10] sm:$0xf]
    %v1200 = vld [vmem:[%s1194 + $0x14] sm:$0xf]
    %v1201 = vld [vmem:[%s1194 + $0x18] sm:$0xf]
    %v1202 = vld [vmem:[%s1194 + $0x1c] sm:$0xf]
    %v1203 = vld [vmem:[%s1194 + $0x20] sm:$0xf]
    %v1204 = vld [vmem:[%s1194 + $0x24] sm:$0xf]
    %v1205 = vld [vmem:[%s1194 + $0x28] sm:$0xf]
    %v1206 = vld [vmem:[%s1194 + $0x2c] sm:$0xf]
    %v1207 = vld [vmem:[%s1194 + $0x30] sm:$0xf]
    %v1208 = vld [vmem:[%s1194 + $0x34] sm:$0xf]
    %v1209 = vld [vmem:[%s1194 + $0x38] sm:$0xf]
    %v1210 = vld [vmem:[%s1194 + $0x3c] sm:$0xf]
    %v1227 = vunpack.c.l.b16 %v1195
    %v1228 = vunpack.c.l.b16 %v1196
    %v1229 = vunpack.c.l.b16 %v1197
    %v1230 = vunpack.c.l.b16 %v1198
    %v1231 = vunpack.c.l.b16 %v1199
    %v1232 = vunpack.c.l.b16 %v1200
    %v1233 = vunpack.c.l.b16 %v1201
    %v1234 = vunpack.c.l.b16 %v1202
    %v1235 = vunpack.c.l.b16 %v1203
    %v1236 = vunpack.c.l.b16 %v1204
    %v1237 = vunpack.c.l.b16 %v1205
    %v1238 = vunpack.c.l.b16 %v1206
    %v1239 = vunpack.c.l.b16 %v1207
    %v1240 = vunpack.c.l.b16 %v1208
    %v1241 = vunpack.c.l.b16 %v1209
    %v1242 = vunpack.c.l.b16 %v1210
    %v1243 = vpack.c.b16 %v1228, %v1227
    %v1244 = vpack.c.b16 %v1230, %v1229
    %v1245 = vpack.c.b16 %v1232, %v1231
    %v1246 = vpack.c.b16 %v1234, %v1233
    %v1247 = vpack.c.b16 %v1236, %v1235
    %v1248 = vpack.c.b16 %v1238, %v1237
    %v1249 = vpack.c.b16 %v1240, %v1239
    %v1250 = vpack.c.b16 %v1242, %v1241
    %1259 = vmatprep.subr.bf16.mxu0 0
    %1260 = vmatpush1.bf16.msra.mxu0 %v1243
    %1261 = vmatprep.subr.bf16.mxu0 0
    %1262 = vmatpush1.bf16.msra.mxu0 %v1244
    %1263 = vmatprep.subr.bf16.mxu0 0
    %1264 = vmatpush1.bf16.msra.mxu0 %v1245
    %1265 = vmatprep.subr.bf16.mxu0 0
    %1266 = vmatpush1.bf16.msra.mxu0 %v1246
    %1267 = vmatprep.subr.bf16.mxu0 0
    %1268 = vmatpush1.bf16.msra.mxu0 %v1247
    %1269 = vmatprep.subr.bf16.mxu0 0
    %1270 = vmatpush1.bf16.msra.mxu0 %v1248
    %1271 = vmatprep.subr.bf16.mxu0 0
    %1272 = vmatpush1.bf16.msra.mxu0 %v1249
    %1273 = vmatprep.subr.bf16.mxu0 0
    %1274 = vmatpush1.bf16.msra.mxu0 %v1250
    %1275 = vmatprep.subr.bf16.mxu0 0
    %1276 = vmatpush1.bf16.msra.mxu0 0
    %1277 = vmatprep.subr.bf16.mxu0 0
    %1278 = vmatpush1.bf16.msra.mxu0 0
    %1279 = vmatprep.subr.bf16.mxu0 0
    %1280 = vmatpush1.bf16.msra.mxu0 0
    %1281 = vmatprep.subr.bf16.mxu0 0
    %1282 = vmatpush1.bf16.msra.mxu0 0
    %1283 = vmatprep.subr.bf16.mxu0 0
    %1284 = vmatpush1.bf16.msra.mxu0 0
    %1285 = vmatprep.subr.bf16.mxu0 0
    %1286 = vmatpush1.bf16.msra.mxu0 0
    %1287 = vmatprep.subr.bf16.mxu0 0
    %1288 = vmatpush1.bf16.msra.mxu0 0
    %1289 = vmatprep.subr.bf16.mxu0 0
    %1290 = vmatpush1.bf16.msra.mxu0 0
    %1291 = vmatprep.mubr.bf16.mxu0 0
    %1292 = vmatmul.mubr.bf16.gmra.mrb[0].mxu0 %v1174
    %v1293 = vpop.f32.mrb[0].mxu0
    %v1294 = vadd.f32 0.0, %v1293
    %v1295 = vpop.f32.mrb[0].mxu0
    %v1296 = vpop.f32.mrb[0].mxu0
    %v1297 = vadd.f32 0.0, %v1296
    %v1298 = vpop.f32.mrb[0].mxu0
    %1299 = vmatprep.mubr.bf16.mxu0 0
    %1300 = vmatmul.mubr.bf16.gmra.mrb[0].mxu0 %v1191
    %v1301 = vpop.f32.mrb[0].mxu0
    %v1302 = vadd.f32 0.0, %v1301
    %v1303 = vpop.f32.mrb[0].mxu0
    %v1304 = vpop.f32.mrb[0].mxu0
    %v1305 = vadd.f32 0.0, %v1304
    %v1306 = vpop.f32.mrb[0].mxu0
    %1307 = vdwg.mxu0
    %v1308 = vadd.f32 %v1151, %v1294
    %v1309 = vadd.f32 %v1152, %v1297
    %v1310 = vadd.f32 %v1153, %v1302
    %v1311 = vadd.f32 %v1154, %v1305
    %v1312 = vld [vmem:[#allocation2] sm:$0xe0]
    %v1313 = vld [vmem:[#allocation2 + $0x10] sm:$0xe0]
    %vm1318 = vcmask 1042432
    %v1319 = vrot.slane %v1312, 5
    %v1320 = vrot.slane %v1155, 5
    %v1321 = vsel %vm1318, %v1319, %v1320
    %v1322 = vrot.slane %v1313, 5
    %v1323 = vrot.slane %v1156, 5
    %v1324 = vsel %vm1318, %v1322, %v1323
    %s1327 = scalar_lea.vmem [#allocation6], 320
    %v1328 = vld [vmem:[%s1327] sm:$0xf]
    %v1329 = vld [vmem:[%s1327 + $0x4] sm:$0xf]
    %v1330 = vld [vmem:[%s1327 + $0x8] sm:$0xf]
    %v1331 = vld [vmem:[%s1327 + $0xc] sm:$0xf]
    %v1332 = vld [vmem:[%s1327 + $0x10] sm:$0xf]
    %v1333 = vld [vmem:[%s1327 + $0x14] sm:$0xf]
    %v1334 = vld [vmem:[%s1327 + $0x18] sm:$0xf]
    %v1335 = vld [vmem:[%s1327 + $0x1c] sm:$0xf]
    %v1336 = vld [vmem:[%s1327 + $0x20] sm:$0xf]
    %v1337 = vld [vmem:[%s1327 + $0x24] sm:$0xf]
    %v1338 = vld [vmem:[%s1327 + $0x28] sm:$0xf]
    %v1339 = vld [vmem:[%s1327 + $0x2c] sm:$0xf]
    %v1340 = vld [vmem:[%s1327 + $0x30] sm:$0xf]
    %v1341 = vld [vmem:[%s1327 + $0x34] sm:$0xf]
    %v1342 = vld [vmem:[%s1327 + $0x38] sm:$0xf]
    %v1343 = vld [vmem:[%s1327 + $0x3c] sm:$0xf]
    %v1360 = vunpack.c.l.b16 %v1328
    %v1361 = vunpack.c.l.b16 %v1329
    %v1362 = vunpack.c.l.b16 %v1330
    %v1363 = vunpack.c.l.b16 %v1331
    %v1364 = vunpack.c.l.b16 %v1332
    %v1365 = vunpack.c.l.b16 %v1333
    %v1366 = vunpack.c.l.b16 %v1334
    %v1367 = vunpack.c.l.b16 %v1335
    %v1368 = vunpack.c.l.b16 %v1336
    %v1369 = vunpack.c.l.b16 %v1337
    %v1370 = vunpack.c.l.b16 %v1338
    %v1371 = vunpack.c.l.b16 %v1339
    %v1372 = vunpack.c.l.b16 %v1340
    %v1373 = vunpack.c.l.b16 %v1341
    %v1374 = vunpack.c.l.b16 %v1342
    %v1375 = vunpack.c.l.b16 %v1343
    %v1376 = vpack.c.b16 %v1361, %v1360
    %v1377 = vpack.c.b16 %v1363, %v1362
    %v1378 = vpack.c.b16 %v1365, %v1364
    %v1379 = vpack.c.b16 %v1367, %v1366
    %v1380 = vpack.c.b16 %v1369, %v1368
    %v1381 = vpack.c.b16 %v1371, %v1370
    %v1382 = vpack.c.b16 %v1373, %v1372
    %v1383 = vpack.c.b16 %v1375, %v1374
    %1392 = vmatprep.subr.bf16.mxu0 0
    %1393 = vmatpush1.bf16.msra.mxu0 %v1376
    %1394 = vmatprep.subr.bf16.mxu0 0
    %1395 = vmatpush1.bf16.msra.mxu0 %v1377
    %1396 = vmatprep.subr.bf16.mxu0 0
    %1397 = vmatpush1.bf16.msra.mxu0 %v1378
    %1398 = vmatprep.subr.bf16.mxu0 0
    %1399 = vmatpush1.bf16.msra.mxu0 %v1379
    %1400 = vmatprep.subr.bf16.mxu0 0
    %1401 = vmatpush1.bf16.msra.mxu0 %v1380
    %1402 = vmatprep.subr.bf16.mxu0 0
    %1403 = vmatpush1.bf16.msra.mxu0 %v1381
    %1404 = vmatprep.subr.bf16.mxu0 0
    %1405 = vmatpush1.bf16.msra.mxu0 %v1382
    %1406 = vmatprep.subr.bf16.mxu0 0
    %1407 = vmatpush1.bf16.msra.mxu0 %v1383
    %1408 = vmatprep.subr.bf16.mxu0 0
    %1409 = vmatpush1.bf16.msra.mxu0 0
    %1410 = vmatprep.subr.bf16.mxu0 0
    %1411 = vmatpush1.bf16.msra.mxu0 0
    %1412 = vmatprep.subr.bf16.mxu0 0
    %1413 = vmatpush1.bf16.msra.mxu0 0
    %1414 = vmatprep.subr.bf16.mxu0 0
    %1415 = vmatpush1.bf16.msra.mxu0 0
    %1416 = vmatprep.subr.bf16.mxu0 0
    %1417 = vmatpush1.bf16.msra.mxu0 0
    %1418 = vmatprep.subr.bf16.mxu0 0
    %1419 = vmatpush1.bf16.msra.mxu0 0
    %1420 = vmatprep.subr.bf16.mxu0 0
    %1421 = vmatpush1.bf16.msra.mxu0 0
    %1422 = vmatprep.subr.bf16.mxu0 0
    %1423 = vmatpush1.bf16.msra.mxu0 0
    %1424 = vmatprep.mubr.bf16.mxu0 0
    %1425 = vmatmul.mubr.bf16.gmra.mrb[0].mxu0 %v1321
    %v1426 = vpop.f32.mrb[0].mxu0
    %v1427 = vadd.f32 0.0, %v1426
    %v1428 = vpop.f32.mrb[0].mxu0
    %v1429 = vpop.f32.mrb[0].mxu0
    %v1430 = vadd.f32 0.0, %v1429
    %v1431 = vpop.f32.mrb[0].mxu0
    %1432 = vmatprep.mubr.bf16.mxu0 0
    %1433 = vmatmul.mubr.bf16.gmra.mrb[0].mxu0 %v1324
    %v1434 = vpop.f32.mrb[0].mxu0
    %v1435 = vadd.f32 0.0, %v1434
    %v1436 = vpop.f32.mrb[0].mxu0
    %v1437 = vpop.f32.mrb[0].mxu0
    %v1438 = vadd.f32 0.0, %v1437
    %v1439 = vpop.f32.mrb[0].mxu0
    %1440 = vdwg.mxu0
    %v1441 = vadd.f32 %v1308, %v1427
    %v1442 = vadd.f32 %v1309, %v1430
    %v1443 = vadd.f32 %v1310, %v1435
    %v1444 = vadd.f32 %v1311, %v1438
    %v1445 = vld [vmem:[#allocation2 + $0x8] sm:$0x3f]
    %v1446 = vld [vmem:[#allocation2 + $0x18] sm:$0x3f]
    %vm1447 = vsmask.f32 2304
    %v1449 = vshrl.u32 %v1312, 16
    %v1451 = vrot.slane %v1449, 5
    %v1452 = vshll.u32 %v1312, 16
    %v1454 = vrot.slane %v1452, 6
    %v1455 = vor.u32 %v1451, %v1454
    %v1457 = vshrl.u32 %v1445, 16
    %v1459 = vrot.slane %v1457, 5
    %v1460 = vshll.u32 %v1445, 16
    %v1462 = vrot.slane %v1460, 6
    %v1463 = vor.u32 %v1459, %v1462
    %v1464 = vsel %vm1447, %v1455, %v1463
    %v1466 = vshrl.u32 %v1313, 16
    %v1468 = vrot.slane %v1466, 5
    %v1469 = vshll.u32 %v1313, 16
    %v1471 = vrot.slane %v1469, 6
    %v1472 = vor.u32 %v1468, %v1471
    %v1474 = vshrl.u32 %v1446, 16
    %v1476 = vrot.slane %v1474, 5
    %v1477 = vshll.u32 %v1446, 16
    %v1479 = vrot.slane %v1477, 6
    %v1480 = vor.u32 %v1476, %v1479
    %v1481 = vsel %vm1447, %v1472, %v1480
    %s1484 = scalar_lea.vmem [#allocation6], 384
    %v1485 = vld [vmem:[%s1484] sm:$0xf]
    %v1486 = vld [vmem:[%s1484 + $0x4] sm:$0xf]
    %v1487 = vld [vmem:[%s1484 + $0x8] sm:$0xf]
    %v1488 = vld [vmem:[%s1484 + $0xc] sm:$0xf]
    %v1489 = vld [vmem:[%s1484 + $0x10] sm:$0xf]
    %v1490 = vld [vmem:[%s1484 + $0x14] sm:$0xf]
    %v1491 = vld [vmem:[%s1484 + $0x18] sm:$0xf]
    %v1492 = vld [vmem:[%s1484 + $0x1c] sm:$0xf]
    %v1493 = vld [vmem:[%s1484 + $0x20] sm:$0xf]
    %v1494 = vld [vmem:[%s1484 + $0x24] sm:$0xf]
    %v1495 = vld [vmem:[%s1484 + $0x28] sm:$0xf]
    %v1496 = vld [vmem:[%s1484 + $0x2c] sm:$0xf]
    %v1497 = vld [vmem:[%s1484 + $0x30] sm:$0xf]
    %v1498 = vld [vmem:[%s1484 + $0x34] sm:$0xf]
    %v1499 = vld [vmem:[%s1484 + $0x38] sm:$0xf]
    %v1500 = vld [vmem:[%s1484 + $0x3c] sm:$0xf]
    %v1517 = vunpack.c.l.b16 %v1485
    %v1518 = vunpack.c.l.b16 %v1486
    %v1519 = vunpack.c.l.b16 %v1487
    %v1520 = vunpack.c.l.b16 %v1488
    %v1521 = vunpack.c.l.b16 %v1489
    %v1522 = vunpack.c.l.b16 %v1490
    %v1523 = vunpack.c.l.b16 %v1491
    %v1524 = vunpack.c.l.b16 %v1492
    %v1525 = vunpack.c.l.b16 %v1493
    %v1526 = vunpack.c.l.b16 %v1494
    %v1527 = vunpack.c.l.b16 %v1495
    %v1528 = vunpack.c.l.b16 %v1496
    %v1529 = vunpack.c.l.b16 %v1497
    %v1530 = vunpack.c.l.b16 %v1498
    %v1531 = vunpack.c.l.b16 %v1499
    %v1532 = vunpack.c.l.b16 %v1500
    %v1533 = vpack.c.b16 %v1518, %v1517
    %v1534 = vpack.c.b16 %v1520, %v1519
    %v1535 = vpack.c.b16 %v1522, %v1521
    %v1536 = vpack.c.b16 %v1524, %v1523
    %v1537 = vpack.c.b16 %v1526, %v1525
    %v1538 = vpack.c.b16 %v1528, %v1527
    %v1539 = vpack.c.b16 %v1530, %v1529
    %v1540 = vpack.c.b16 %v1532, %v1531
    %1549 = vmatprep.subr.bf16.mxu0 0
    %1550 = vmatpush1.bf16.msra.mxu0 %v1533
    %1551 = vmatprep.subr.bf16.mxu0 0
    %1552 = vmatpush1.bf16.msra.mxu0 %v1534
    %1553 = vmatprep.subr.bf16.mxu0 0
    %1554 = vmatpush1.bf16.msra.mxu0 %v1535
    %1555 = vmatprep.subr.bf16.mxu0 0
    %1556 = vmatpush1.bf16.msra.mxu0 %v1536
    %1557 = vmatprep.subr.bf16.mxu0 0
    %1558 = vmatpush1.bf16.msra.mxu0 %v1537
    %1559 = vmatprep.subr.bf16.mxu0 0
    %1560 = vmatpush1.bf16.msra.mxu0 %v1538
    %1561 = vmatprep.subr.bf16.mxu0 0
    %1562 = vmatpush1.bf16.msra.mxu0 %v1539
    %1563 = vmatprep.subr.bf16.mxu0 0
    %1564 = vmatpush1.bf16.msra.mxu0 %v1540
    %1565 = vmatprep.subr.bf16.mxu0 0
    %1566 = vmatpush1.bf16.msra.mxu0 0
    %1567 = vmatprep.subr.bf16.mxu0 0
    %1568 = vmatpush1.bf16.msra.mxu0 0
    %1569 = vmatprep.subr.bf16.mxu0 0
    %1570 = vmatpush1.bf16.msra.mxu0 0
    %1571 = vmatprep.subr.bf16.mxu0 0
    %1572 = vmatpush1.bf16.msra.mxu0 0
    %1573 = vmatprep.subr.bf16.mxu0 0
    %1574 = vmatpush1.bf16.msra.mxu0 0
    %1575 = vmatprep.subr.bf16.mxu0 0
    %1576 = vmatpush1.bf16.msra.mxu0 0
    %1577 = vmatprep.subr.bf16.mxu0 0
    %1578 = vmatpush1.bf16.msra.mxu0 0
    %1579 = vmatprep.subr.bf16.mxu0 0
    %1580 = vmatpush1.bf16.msra.mxu0 0
    %1581 = vmatprep.mubr.bf16.mxu0 0
    %1582 = vmatmul.mubr.bf16.gmra.mrb[0].mxu0 %v1464
    %v1583 = vpop.f32.mrb[0].mxu0
    %v1584 = vadd.f32 0.0, %v1583
    %v1585 = vpop.f32.mrb[0].mxu0
    %v1586 = vpop.f32.mrb[0].mxu0
    %v1587 = vadd.f32 0.0, %v1586
    %v1588 = vpop.f32.mrb[0].mxu0
    %1589 = vmatprep.mubr.bf16.mxu0 0
    %1590 = vmatmul.mubr.bf16.gmra.mrb[0].mxu0 %v1481
    %v1591 = vpop.f32.mrb[0].mxu0
    %v1592 = vadd.f32 0.0, %v1591
    %v1593 = vpop.f32.mrb[0].mxu0
    %v1594 = vpop.f32.mrb[0].mxu0
    %v1595 = vadd.f32 0.0, %v1594
    %v1596 = vpop.f32.mrb[0].mxu0
    %1597 = vdwg.mxu0
    %v1598 = vadd.f32 %v1441, %v1584
    %v1599 = vadd.f32 %v1442, %v1587
    %v1600 = vadd.f32 %v1443, %v1592
    %v1601 = vadd.f32 %v1444, %v1595
    %v1602 = vld [vmem:[#allocation2] sm:$0xc0]
    %v1603 = vld [vmem:[#allocation2 + $0x10] sm:$0xc0]
    %vm1608 = vcmask 1041408
    %v1609 = vrot.slane %v1602, 6
    %v1610 = vrot.slane %v1445, 6
    %v1611 = vsel %vm1608, %v1609, %v1610
    %v1612 = vrot.slane %v1603, 6
    %v1613 = vrot.slane %v1446, 6
    %v1614 = vsel %vm1608, %v1612, %v1613
    %s1617 = scalar_lea.vmem [#allocation6], 448
    %v1618 = vld [vmem:[%s1617] sm:$0xf]
    %v1619 = vld [vmem:[%s1617 + $0x4] sm:$0xf]
    %v1620 = vld [vmem:[%s1617 + $0x8] sm:$0xf]
    %v1621 = vld [vmem:[%s1617 + $0xc] sm:$0xf]
    %v1622 = vld [vmem:[%s1617 + $0x10] sm:$0xf]
    %v1623 = vld [vmem:[%s1617 + $0x14] sm:$0xf]
    %v1624 = vld [vmem:[%s1617 + $0x18] sm:$0xf]
    %v1625 = vld [vmem:[%s1617 + $0x1c] sm:$0xf]
    %v1626 = vld [vmem:[%s1617 + $0x20] sm:$0xf]
    %v1627 = vld [vmem:[%s1617 + $0x24] sm:$0xf]
    %v1628 = vld [vmem:[%s1617 + $0x28] sm:$0xf]
    %v1629 = vld [vmem:[%s1617 + $0x2c] sm:$0xf]
    %v1630 = vld [vmem:[%s1617 + $0x30] sm:$0xf]
    %v1631 = vld [vmem:[%s1617 + $0x34] sm:$0xf]
    %v1632 = vld [vmem:[%s1617 + $0x38] sm:$0xf]
    %v1633 = vld [vmem:[%s1617 + $0x3c] sm:$0xf]
    %v1650 = vunpack.c.l.b16 %v1618
    %v1651 = vunpack.c.l.b16 %v1619
    %v1652 = vunpack.c.l.b16 %v1620
    %v1653 = vunpack.c.l.b16 %v1621
    %v1654 = vunpack.c.l.b16 %v1622
    %v1655 = vunpack.c.l.b16 %v1623
    %v1656 = vunpack.c.l.b16 %v1624
    %v1657 = vunpack.c.l.b16 %v1625
    %v1658 = vunpack.c.l.b16 %v1626
    %v1659 = vunpack.c.l.b16 %v1627
    %v1660 = vunpack.c.l.b16 %v1628
    %v1661 = vunpack.c.l.b16 %v1629
    %v1662 = vunpack.c.l.b16 %v1630
    %v1663 = vunpack.c.l.b16 %v1631
    %v1664 = vunpack.c.l.b16 %v1632
    %v1665 = vunpack.c.l.b16 %v1633
    %v1666 = vpack.c.b16 %v1651, %v1650
    %v1667 = vpack.c.b16 %v1653, %v1652
    %v1668 = vpack.c.b16 %v1655, %v1654
    %v1669 = vpack.c.b16 %v1657, %v1656
    %v1670 = vpack.c.b16 %v1659, %v1658
    %v1671 = vpack.c.b16 %v1661, %v1660
    %v1672 = vpack.c.b16 %v1663, %v1662
    %v1673 = vpack.c.b16 %v1665, %v1664
    %1682 = vmatprep.subr.bf16.mxu0 0
    %1683 = vmatpush1.bf16.msra.mxu0 %v1666
    %1684 = vmatprep.subr.bf16.mxu0 0
    %1685 = vmatpush1.bf16.msra.mxu0 %v1667
    %1686 = vmatprep.subr.bf16.mxu0 0
    %1687 = vmatpush1.bf16.msra.mxu0 %v1668
    %1688 = vmatprep.subr.bf16.mxu0 0
    %1689 = vmatpush1.bf16.msra.mxu0 %v1669
    %1690 = vmatprep.subr.bf16.mxu0 0
    %1691 = vmatpush1.bf16.msra.mxu0 %v1670
    %1692 = vmatprep.subr.bf16.mxu0 0
    %1693 = vmatpush1.bf16.msra.mxu0 %v1671
    %1694 = vmatprep.subr.bf16.mxu0 0
    %1695 = vmatpush1.bf16.msra.mxu0 %v1672
    %1696 = vmatprep.subr.bf16.mxu0 0
    %1697 = vmatpush1.bf16.msra.mxu0 %v1673
    %1698 = vmatprep.subr.bf16.mxu0 0
    %1699 = vmatpush1.bf16.msra.mxu0 0
    %1700 = vmatprep.subr.bf16.mxu0 0
    %1701 = vmatpush1.bf16.msra.mxu0 0
    %1702 = vmatprep.subr.bf16.mxu0 0
    %1703 = vmatpush1.bf16.msra.mxu0 0
    %1704 = vmatprep.subr.bf16.mxu0 0
    %1705 = vmatpush1.bf16.msra.mxu0 0
    %1706 = vmatprep.subr.bf16.mxu0 0
    %1707 = vmatpush1.bf16.msra.mxu0 0
    %1708 = vmatprep.subr.bf16.mxu0 0
    %1709 = vmatpush1.bf16.msra.mxu0 0
    %1710 = vmatprep.subr.bf16.mxu0 0
    %1711 = vmatpush1.bf16.msra.mxu0 0
    %1712 = vmatprep.subr.bf16.mxu0 0
    %1713 = vmatpush1.bf16.msra.mxu0 0
    %1714 = vmatprep.mubr.bf16.mxu0 0
    %1715 = vmatmul.mubr.bf16.gmra.mrb[0].mxu0 %v1611
    %v1716 = vpop.f32.mrb[0].mxu0
    %v1717 = vadd.f32 0.0, %v1716
    %v1718 = vpop.f32.mrb[0].mxu0
    %v1719 = vpop.f32.mrb[0].mxu0
    %v1720 = vadd.f32 0.0, %v1719
    %v1721 = vpop.f32.mrb[0].mxu0
    %1722 = vmatprep.mubr.bf16.mxu0 0
    %1723 = vmatmul.mubr.bf16.gmra.mrb[0].mxu0 %v1614
    %v1724 = vpop.f32.mrb[0].mxu0
    %v1725 = vadd.f32 0.0, %v1724
    %v1726 = vpop.f32.mrb[0].mxu0
    %v1727 = vpop.f32.mrb[0].mxu0
    %v1728 = vadd.f32 0.0, %v1727
    %v1729 = vpop.f32.mrb[0].mxu0
    %1730 = vdwg.mxu0
    %v1731 = vadd.f32 %v1598, %v1717
    %v1732 = vadd.f32 %v1599, %v1720
    %v1733 = vadd.f32 %v1600, %v1725
    %v1734 = vadd.f32 %v1601, %v1728
    %v1735 = vld [vmem:[#allocation8] sm:$0x1]
    %v1737 = vlaneseq
    %v1738 = vshrl.u32 %v1737, 7
    %v1739 = vsub.s32 0, %v1738
    %v1740 = vrot.slane %v1735, %v1739
    %v1742 = vmul.f32 %v1731, %v1740
    %v1743 = vmul.f32 %v1732, %v1740
    %v1744 = vmul.f32 %v1733, %v1740
    %v1745 = vmul.f32 %v1734, %v1740
    %v1746 = vld [vmem:[#allocation9] sm:$0x1]
    %v1748 = vlaneseq
    %v1749 = vshrl.u32 %v1748, 7
    %v1750 = vsub.s32 0, %v1749
    %v1751 = vrot.slane %v1746, %v1750
    %v1753 = vadd.f32 %v1742, %v1751
    %v1754 = vadd.f32 %v1743, %v1751
    %v1755 = vadd.f32 %v1744, %v1751
    %v1756 = vadd.f32 %v1745, %v1751
    %v1757 = vmax.f32 %v1753, 0.0
    %v1758 = vmax.f32 %v1754, 0.0
    %v1759 = vmax.f32 %v1755, 0.0
    %v1760 = vmax.f32 %v1756, 0.0
    %v1761 = vpack.c.bf16 %v1758, %v1757
    %v1762 = vpack.c.bf16 %v1760, %v1759
    %v1765 = vrot.slane %v1761, 4
    %v1766 = vrot.slane %v1762, 4
    %1769 = vst [vmem:[#allocation2] sm:$0xf0] %v1765
    %1770 = vst [vmem:[#allocation2 + $0x8] sm:$0xf] %v1765
    %1771 = vst [vmem:[#allocation2 + $0x10] sm:$0xf0] %v1766
    %1772 = vst [vmem:[#allocation2 + $0x18] sm:$0xf] %v1766
    %v1773 = vld [vmem:[#allocation2] sm:$0xf8]
    %v1774 = vld [vmem:[#allocation2 + $0x8] sm:$0x7]
    %v1775 = vld [vmem:[#allocation2 + $0x10] sm:$0xf8]
    %v1776 = vld [vmem:[#allocation2 + $0x18] sm:$0x7]
    %v1781 = vrot.slane %v1773, 3
    %v1782 = vrot.slane %v1774, 3
    %v1783 = vsel %vm645, %v1781, %v1782
    %v1784 = vrot.slane %v1775, 3
    %v1785 = vrot.slane %v1776, 3
    %v1786 = vsel %vm645, %v1784, %v1785
    %v1789 = vld [vmem:[#allocation11] sm:$0xf]
    %v1790 = vld [vmem:[#allocation11 + $0x4] sm:$0xf]
    %v1791 = vld [vmem:[#allocation11 + $0x8] sm:$0xf]
    %v1792 = vld [vmem:[#allocation11 + $0xc] sm:$0xf]
    %v1793 = vld [vmem:[#allocation11 + $0x10] sm:$0xf]
    %v1794 = vld [vmem:[#allocation11 + $0x14] sm:$0xf]
    %v1795 = vld [vmem:[#allocation11 + $0x18] sm:$0xf]
    %v1796 = vld [vmem:[#allocation11 + $0x1c] sm:$0xf]
    %v1797 = vld [vmem:[#allocation11 + $0x20] sm:$0xf]
    %v1798 = vld [vmem:[#allocation11 + $0x24] sm:$0xf]
    %v1799 = vld [vmem:[#allocation11 + $0x28] sm:$0xf]
    %v1800 = vld [vmem:[#allocation11 + $0x2c] sm:$0xf]
    %v1801 = vld [vmem:[#allocation11 + $0x30] sm:$0xf]
    %v1802 = vld [vmem:[#allocation11 + $0x34] sm:$0xf]
    %v1803 = vld [vmem:[#allocation11 + $0x38] sm:$0xf]
    %v1804 = vld [vmem:[#allocation11 + $0x3c] sm:$0xf]
    %v1805 = vld [vmem:[#allocation2 + $0x8] sm:$0xf]
    %v1806 = vld [vmem:[#allocation2 + $0x18] sm:$0xf]
    %v1808 = vshrl.u32 %v1773, 16
    %v1810 = vrot.slane %v1808, 3
    %v1811 = vshll.u32 %v1773, 16
    %v1813 = vrot.slane %v1811, 4
    %v1814 = vor.u32 %v1810, %v1813
    %v1816 = vshrl.u32 %v1805, 16
    %v1818 = vrot.slane %v1816, 3
    %v1819 = vshll.u32 %v1805, 16
    %v1821 = vrot.slane %v1819, 4
    %v1822 = vor.u32 %v1818, %v1821
    %v1823 = vsel %vm867, %v1814, %v1822
    %v1825 = vshrl.u32 %v1775, 16
    %v1827 = vrot.slane %v1825, 3
    %v1828 = vshll.u32 %v1775, 16
    %v1830 = vrot.slane %v1828, 4
    %v1831 = vor.u32 %v1827, %v1830
    %v1833 = vshrl.u32 %v1806, 16
    %v1835 = vrot.slane %v1833, 3
    %v1836 = vshll.u32 %v1806, 16
    %v1838 = vrot.slane %v1836, 4
    %v1839 = vor.u32 %v1835, %v1838
    %v1840 = vsel %vm867, %v1831, %v1839
    %s1843 = scalar_lea.vmem [#allocation11], 64
    %v1844 = vld [vmem:[%s1843] sm:$0xf]
    %v1845 = vld [vmem:[%s1843 + $0x4] sm:$0xf]
    %v1846 = vld [vmem:[%s1843 + $0x8] sm:$0xf]
    %v1847 = vld [vmem:[%s1843 + $0xc] sm:$0xf]
    %v1848 = vld [vmem:[%s1843 + $0x10] sm:$0xf]
    %v1849 = vld [vmem:[%s1843 + $0x14] sm:$0xf]
    %v1850 = vld [vmem:[%s1843 + $0x18] sm:$0xf]
    %v1851 = vld [vmem:[%s1843 + $0x1c] sm:$0xf]
    %v1852 = vld [vmem:[%s1843 + $0x20] sm:$0xf]
    %v1853 = vld [vmem:[%s1843 + $0x24] sm:$0xf]
    %v1854 = vld [vmem:[%s1843 + $0x28] sm:$0xf]
    %v1855 = vld [vmem:[%s1843 + $0x2c] sm:$0xf]
    %v1856 = vld [vmem:[%s1843 + $0x30] sm:$0xf]
    %v1857 = vld [vmem:[%s1843 + $0x34] sm:$0xf]
    %v1858 = vld [vmem:[%s1843 + $0x38] sm:$0xf]
    %v1859 = vld [vmem:[%s1843 + $0x3c] sm:$0xf]
    %v1876 = vunpack.c.l.b16 %v1844
    %v1877 = vunpack.c.l.b16 %v1845
    %v1878 = vunpack.c.l.b16 %v1846
    %v1879 = vunpack.c.l.b16 %v1847
    %v1880 = vunpack.c.l.b16 %v1848
    %v1881 = vunpack.c.l.b16 %v1849
    %v1882 = vunpack.c.l.b16 %v1850
    %v1883 = vunpack.c.l.b16 %v1851
    %v1884 = vunpack.c.l.b16 %v1852
    %v1885 = vunpack.c.l.b16 %v1853
    %v1886 = vunpack.c.l.b16 %v1854
    %v1887 = vunpack.c.l.b16 %v1855
    %v1888 = vunpack.c.l.b16 %v1856
    %v1889 = vunpack.c.l.b16 %v1857
    %v1890 = vunpack.c.l.b16 %v1858
    %v1891 = vunpack.c.l.b16 %v1859
    %v1892 = vpack.c.b16 %v1877, %v1876
    %v1893 = vpack.c.b16 %v1879, %v1878
    %v1894 = vpack.c.b16 %v1881, %v1880
    %v1895 = vpack.c.b16 %v1883, %v1882
    %v1896 = vpack.c.b16 %v1885, %v1884
    %v1897 = vpack.c.b16 %v1887, %v1886
    %v1898 = vpack.c.b16 %v1889, %v1888
    %v1899 = vpack.c.b16 %v1891, %v1890
    %1908 = vmatprep.subr.bf16.mxu0 0
    %1909 = vmatpush1.bf16.msra.mxu0 %v1892
    %1910 = vmatprep.subr.bf16.mxu0 0
    %1911 = vmatpush1.bf16.msra.mxu0 %v1893
    %1912 = vmatprep.subr.bf16.mxu0 0
    %1913 = vmatpush1.bf16.msra.mxu0 %v1894
    %1914 = vmatprep.subr.bf16.mxu0 0
    %1915 = vmatpush1.bf16.msra.mxu0 %v1895
    %1916 = vmatprep.subr.bf16.mxu0 0
    %1917 = vmatpush1.bf16.msra.mxu0 %v1896
    %1918 = vmatprep.subr.bf16.mxu0 0
    %1919 = vmatpush1.bf16.msra.mxu0 %v1897
    %1920 = vmatprep.subr.bf16.mxu0 0
    %1921 = vmatpush1.bf16.msra.mxu0 %v1898
    %1922 = vmatprep.subr.bf16.mxu0 0
    %1923 = vmatpush1.bf16.msra.mxu0 %v1899
    %1924 = vmatprep.subr.bf16.mxu0 0
    %1925 = vmatpush1.bf16.msra.mxu0 0
    %1926 = vmatprep.subr.bf16.mxu0 0
    %1927 = vmatpush1.bf16.msra.mxu0 0
    %1928 = vmatprep.subr.bf16.mxu0 0
    %1929 = vmatpush1.bf16.msra.mxu0 0
    %1930 = vmatprep.subr.bf16.mxu0 0
    %1931 = vmatpush1.bf16.msra.mxu0 0
    %1932 = vmatprep.subr.bf16.mxu0 0
    %1933 = vmatpush1.bf16.msra.mxu0 0
    %1934 = vmatprep.subr.bf16.mxu0 0
    %1935 = vmatpush1.bf16.msra.mxu0 0
    %1936 = vmatprep.subr.bf16.mxu0 0
    %1937 = vmatpush1.bf16.msra.mxu0 0
    %1938 = vmatprep.subr.bf16.mxu0 0
    %1939 = vmatpush1.bf16.msra.mxu0 0
    %1940 = vmatprep.mubr.bf16.mxu0 0
    %1941 = vmatmul.mubr.bf16.gmra.mrb[0].mxu0 %v1823
    %v1942 = vpop.f32.mrb[0].mxu0
    %v1943 = vadd.f32 0.0, %v1942
    %v1944 = vpop.f32.mrb[0].mxu0
    %v1945 = vpop.f32.mrb[0].mxu0
    %v1946 = vadd.f32 0.0, %v1945
    %v1947 = vpop.f32.mrb[0].mxu0
    %1948 = vmatprep.mubr.bf16.mxu0 0
    %1949 = vmatmul.mubr.bf16.gmra.mrb[0].mxu0 %v1840
    %v1950 = vpop.f32.mrb[0].mxu0
    %v1951 = vadd.f32 0.0, %v1950
    %v1952 = vpop.f32.mrb[0].mxu0
    %v1953 = vpop.f32.mrb[0].mxu0
    %v1954 = vadd.f32 0.0, %v1953
    %v1955 = vpop.f32.mrb[0].mxu0
    %1956 = vdwg.mxu0
    %v1973 = vunpack.c.l.b16 %v1789
    %v1974 = vunpack.c.l.b16 %v1790
    %v1975 = vunpack.c.l.b16 %v1791
    %v1976 = vunpack.c.l.b16 %v1792
    %v1977 = vunpack.c.l.b16 %v1793
    %v1978 = vunpack.c.l.b16 %v1794
    %v1979 = vunpack.c.l.b16 %v1795
    %v1980 = vunpack.c.l.b16 %v1796
    %v1981 = vunpack.c.l.b16 %v1797
    %v1982 = vunpack.c.l.b16 %v1798
    %v1983 = vunpack.c.l.b16 %v1799
    %v1984 = vunpack.c.l.b16 %v1800
    %v1985 = vunpack.c.l.b16 %v1801
    %v1986 = vunpack.c.l.b16 %v1802
    %v1987 = vunpack.c.l.b16 %v1803
    %v1988 = vunpack.c.l.b16 %v1804
    %v1989 = vpack.c.b16 %v1974, %v1973
    %v1990 = vpack.c.b16 %v1976, %v1975
    %v1991 = vpack.c.b16 %v1978, %v1977
    %v1992 = vpack.c.b16 %v1980, %v1979
    %v1993 = vpack.c.b16 %v1982, %v1981
    %v1994 = vpack.c.b16 %v1984, %v1983
    %v1995 = vpack.c.b16 %v1986, %v1985
    %v1996 = vpack.c.b16 %v1988, %v1987
    %2005 = vmatprep.subr.bf16.mxu0 0
    %2006 = vmatpush1.bf16.msra.mxu0 %v1989
    %2007 = vmatprep.subr.bf16.mxu0 0
    %2008 = vmatpush1.bf16.msra.mxu0 %v1990
    %2009 = vmatprep.subr.bf16.mxu0 0
    %2010 = vmatpush1.bf16.msra.mxu0 %v1991
    %2011 = vmatprep.subr.bf16.mxu0 0
    %2012 = vmatpush1.bf16.msra.mxu0 %v1992
    %2013 = vmatprep.subr.bf16.mxu0 0
    %2014 = vmatpush1.bf16.msra.mxu0 %v1993
    %2015 = vmatprep.subr.bf16.mxu0 0
    %2016 = vmatpush1.bf16.msra.mxu0 %v1994
    %2017 = vmatprep.subr.bf16.mxu0 0
    %2018 = vmatpush1.bf16.msra.mxu0 %v1995
    %2019 = vmatprep.subr.bf16.mxu0 0
    %2020 = vmatpush1.bf16.msra.mxu0 %v1996
    %2021 = vmatprep.subr.bf16.mxu0 0
    %2022 = vmatpush1.bf16.msra.mxu0 0
    %2023 = vmatprep.subr.bf16.mxu0 0
    %2024 = vmatpush1.bf16.msra.mxu0 0
    %2025 = vmatprep.subr.bf16.mxu0 0
    %2026 = vmatpush1.bf16.msra.mxu0 0
    %2027 = vmatprep.subr.bf16.mxu0 0
    %2028 = vmatpush1.bf16.msra.mxu0 0
    %2029 = vmatprep.subr.bf16.mxu0 0
    %2030 = vmatpush1.bf16.msra.mxu0 0
    %2031 = vmatprep.subr.bf16.mxu0 0
    %2032 = vmatpush1.bf16.msra.mxu0 0
    %2033 = vmatprep.subr.bf16.mxu0 0
    %2034 = vmatpush1.bf16.msra.mxu0 0
    %2035 = vmatprep.subr.bf16.mxu0 0
    %2036 = vmatpush1.bf16.msra.mxu0 0
    %2037 = vmatprep.mubr.bf16.mxu0 0
    %2038 = vmatmul.mubr.bf16.gmra.mrb[0].mxu0 %v1783
    %v2039 = vpop.f32.mrb[0].mxu0
    %v2040 = vadd.f32 %v1943, %v2039
    %v2041 = vpop.f32.mrb[0].mxu0
    %v2042 = vpop.f32.mrb[0].mxu0
    %v2043 = vadd.f32 %v1946, %v2042
    %v2044 = vpop.f32.mrb[0].mxu0
    %2045 = vmatprep.mubr.bf16.mxu0 0
    %2046 = vmatmul.mubr.bf16.gmra.mrb[0].mxu0 %v1786
    %v2047 = vpop.f32.mrb[0].mxu0
    %v2048 = vadd.f32 %v1951, %v2047
    %v2049 = vpop.f32.mrb[0].mxu0
    %v2050 = vpop.f32.mrb[0].mxu0
    %v2051 = vadd.f32 %v1954, %v2050
    %v2052 = vpop.f32.mrb[0].mxu0
    %2053 = vdwg.mxu0
    %v2054 = vld [vmem:[#allocation2] sm:$0xf0]
    %v2055 = vld [vmem:[#allocation2 + $0x10] sm:$0xf0]
    %v2060 = vrot.slane %v2054, 4
    %v2061 = vrot.slane %v1805, 4
    %v2062 = vsel %vm1028, %v2060, %v2061
    %v2063 = vrot.slane %v2055, 4
    %v2064 = vrot.slane %v1806, 4
    %v2065 = vsel %vm1028, %v2063, %v2064
    %s2068 = scalar_lea.vmem [#allocation11], 128
    %v2069 = vld [vmem:[%s2068] sm:$0xf]
    %v2070 = vld [vmem:[%s2068 + $0x4] sm:$0xf]
    %v2071 = vld [vmem:[%s2068 + $0x8] sm:$0xf]
    %v2072 = vld [vmem:[%s2068 + $0xc] sm:$0xf]
    %v2073 = vld [vmem:[%s2068 + $0x10] sm:$0xf]
    %v2074 = vld [vmem:[%s2068 + $0x14] sm:$0xf]
    %v2075 = vld [vmem:[%s2068 + $0x18] sm:$0xf]
    %v2076 = vld [vmem:[%s2068 + $0x1c] sm:$0xf]
    %v2077 = vld [vmem:[%s2068 + $0x20] sm:$0xf]
    %v2078 = vld [vmem:[%s2068 + $0x24] sm:$0xf]
    %v2079 = vld [vmem:[%s2068 + $0x28] sm:$0xf]
    %v2080 = vld [vmem:[%s2068 + $0x2c] sm:$0xf]
    %v2081 = vld [vmem:[%s2068 + $0x30] sm:$0xf]
    %v2082 = vld [vmem:[%s2068 + $0x34] sm:$0xf]
    %v2083 = vld [vmem:[%s2068 + $0x38] sm:$0xf]
    %v2084 = vld [vmem:[%s2068 + $0x3c] sm:$0xf]
    %v2101 = vunpack.c.l.b16 %v2069
    %v2102 = vunpack.c.l.b16 %v2070
    %v2103 = vunpack.c.l.b16 %v2071
    %v2104 = vunpack.c.l.b16 %v2072
    %v2105 = vunpack.c.l.b16 %v2073
    %v2106 = vunpack.c.l.b16 %v2074
    %v2107 = vunpack.c.l.b16 %v2075
    %v2108 = vunpack.c.l.b16 %v2076
    %v2109 = vunpack.c.l.b16 %v2077
    %v2110 = vunpack.c.l.b16 %v2078
    %v2111 = vunpack.c.l.b16 %v2079
    %v2112 = vunpack.c.l.b16 %v2080
    %v2113 = vunpack.c.l.b16 %v2081
    %v2114 = vunpack.c.l.b16 %v2082
    %v2115 = vunpack.c.l.b16 %v2083
    %v2116 = vunpack.c.l.b16 %v2084
    %v2117 = vpack.c.b16 %v2102, %v2101
    %v2118 = vpack.c.b16 %v2104, %v2103
    %v2119 = vpack.c.b16 %v2106, %v2105
    %v2120 = vpack.c.b16 %v2108, %v2107
    %v2121 = vpack.c.b16 %v2110, %v2109
    %v2122 = vpack.c.b16 %v2112, %v2111
    %v2123 = vpack.c.b16 %v2114, %v2113
    %v2124 = vpack.c.b16 %v2116, %v2115
    %2133 = vmatprep.subr.bf16.mxu0 0
    %2134 = vmatpush1.bf16.msra.mxu0 %v2117
    %2135 = vmatprep.subr.bf16.mxu0 0
    %2136 = vmatpush1.bf16.msra.mxu0 %v2118
    %2137 = vmatprep.subr.bf16.mxu0 0
    %2138 = vmatpush1.bf16.msra.mxu0 %v2119
    %2139 = vmatprep.subr.bf16.mxu0 0
    %2140 = vmatpush1.bf16.msra.mxu0 %v2120
    %2141 = vmatprep.subr.bf16.mxu0 0
    %2142 = vmatpush1.bf16.msra.mxu0 %v2121
    %2143 = vmatprep.subr.bf16.mxu0 0
    %2144 = vmatpush1.bf16.msra.mxu0 %v2122
    %2145 = vmatprep.subr.bf16.mxu0 0
    %2146 = vmatpush1.bf16.msra.mxu0 %v2123
    %2147 = vmatprep.subr.bf16.mxu0 0
    %2148 = vmatpush1.bf16.msra.mxu0 %v2124
    %2149 = vmatprep.subr.bf16.mxu0 0
    %2150 = vmatpush1.bf16.msra.mxu0 0
    %2151 = vmatprep.subr.bf16.mxu0 0
    %2152 = vmatpush1.bf16.msra.mxu0 0
    %2153 = vmatprep.subr.bf16.mxu0 0
    %2154 = vmatpush1.bf16.msra.mxu0 0
    %2155 = vmatprep.subr.bf16.mxu0 0
    %2156 = vmatpush1.bf16.msra.mxu0 0
    %2157 = vmatprep.subr.bf16.mxu0 0
    %2158 = vmatpush1.bf16.msra.mxu0 0
    %2159 = vmatprep.subr.bf16.mxu0 0
    %2160 = vmatpush1.bf16.msra.mxu0 0
    %2161 = vmatprep.subr.bf16.mxu0 0
    %2162 = vmatpush1.bf16.msra.mxu0 0
    %2163 = vmatprep.subr.bf16.mxu0 0
    %2164 = vmatpush1.bf16.msra.mxu0 0
    %2165 = vmatprep.mubr.bf16.mxu0 0
    %2166 = vmatmul.mubr.bf16.gmra.mrb[0].mxu0 %v2062
    %v2167 = vpop.f32.mrb[0].mxu0
    %v2168 = vadd.f32 0.0, %v2167
    %v2169 = vpop.f32.mrb[0].mxu0
    %v2170 = vpop.f32.mrb[0].mxu0
    %v2171 = vadd.f32 0.0, %v2170
    %v2172 = vpop.f32.mrb[0].mxu0
    %2173 = vmatprep.mubr.bf16.mxu0 0
    %2174 = vmatmul.mubr.bf16.gmra.mrb[0].mxu0 %v2065
    %v2175 = vpop.f32.mrb[0].mxu0
    %v2176 = vadd.f32 0.0, %v2175
    %v2177 = vpop.f32.mrb[0].mxu0
    %v2178 = vpop.f32.mrb[0].mxu0
    %v2179 = vadd.f32 0.0, %v2178
    %v2180 = vpop.f32.mrb[0].mxu0
    %2181 = vdwg.mxu0
    %v2182 = vadd.f32 %v2040, %v2168
    %v2183 = vadd.f32 %v2043, %v2171
    %v2184 = vadd.f32 %v2048, %v2176
    %v2185 = vadd.f32 %v2051, %v2179
    %v2186 = vld [vmem:[#allocation2 + $0x8] sm:$0x1f]
    %v2187 = vld [vmem:[#allocation2 + $0x18] sm:$0x1f]
    %v2189 = vshrl.u32 %v2054, 16
    %v2191 = vrot.slane %v2189, 4
    %v2192 = vshll.u32 %v2054, 16
    %v2194 = vrot.slane %v2192, 5
    %v2195 = vor.u32 %v2191, %v2194
    %v2197 = vshrl.u32 %v2186, 16
    %v2199 = vrot.slane %v2197, 4
    %v2200 = vshll.u32 %v2186, 16
    %v2202 = vrot.slane %v2200, 5
    %v2203 = vor.u32 %v2199, %v2202
    %v2204 = vsel %vm1157, %v2195, %v2203
    %v2206 = vshrl.u32 %v2055, 16
    %v2208 = vrot.slane %v2206, 4
    %v2209 = vshll.u32 %v2055, 16
    %v2211 = vrot.slane %v2209, 5
    %v2212 = vor.u32 %v2208, %v2211
    %v2214 = vshrl.u32 %v2187, 16
    %v2216 = vrot.slane %v2214, 4
    %v2217 = vshll.u32 %v2187, 16
    %v2219 = vrot.slane %v2217, 5
    %v2220 = vor.u32 %v2216, %v2219
    %v2221 = vsel %vm1157, %v2212, %v2220
    %s2224 = scalar_lea.vmem [#allocation11], 192
    %v2225 = vld [vmem:[%s2224] sm:$0xf]
    %v2226 = vld [vmem:[%s2224 + $0x4] sm:$0xf]
    %v2227 = vld [vmem:[%s2224 + $0x8] sm:$0xf]
    %v2228 = vld [vmem:[%s2224 + $0xc] sm:$0xf]
    %v2229 = vld [vmem:[%s2224 + $0x10] sm:$0xf]
    %v2230 = vld [vmem:[%s2224 + $0x14] sm:$0xf]
    %v2231 = vld [vmem:[%s2224 + $0x18] sm:$0xf]
    %v2232 = vld [vmem:[%s2224 + $0x1c] sm:$0xf]
    %v2233 = vld [vmem:[%s2224 + $0x20] sm:$0xf]
    %v2234 = vld [vmem:[%s2224 + $0x24] sm:$0xf]
    %v2235 = vld [vmem:[%s2224 + $0x28] sm:$0xf]
    %v2236 = vld [vmem:[%s2224 + $0x2c] sm:$0xf]
    %v2237 = vld [vmem:[%s2224 + $0x30] sm:$0xf]
    %v2238 = vld [vmem:[%s2224 + $0x34] sm:$0xf]
    %v2239 = vld [vmem:[%s2224 + $0x38] sm:$0xf]
    %v2240 = vld [vmem:[%s2224 + $0x3c] sm:$0xf]
    %v2257 = vunpack.c.l.b16 %v2225
    %v2258 = vunpack.c.l.b16 %v2226
    %v2259 = vunpack.c.l.b16 %v2227
    %v2260 = vunpack.c.l.b16 %v2228
    %v2261 = vunpack.c.l.b16 %v2229
    %v2262 = vunpack.c.l.b16 %v2230
    %v2263 = vunpack.c.l.b16 %v2231
    %v2264 = vunpack.c.l.b16 %v2232
    %v2265 = vunpack.c.l.b16 %v2233
    %v2266 = vunpack.c.l.b16 %v2234
    %v2267 = vunpack.c.l.b16 %v2235
    %v2268 = vunpack.c.l.b16 %v2236
    %v2269 = vunpack.c.l.b16 %v2237
    %v2270 = vunpack.c.l.b16 %v2238
    %v2271 = vunpack.c.l.b16 %v2239
    %v2272 = vunpack.c.l.b16 %v2240
    %v2273 = vpack.c.b16 %v2258, %v2257
    %v2274 = vpack.c.b16 %v2260, %v2259
    %v2275 = vpack.c.b16 %v2262, %v2261
    %v2276 = vpack.c.b16 %v2264, %v2263
    %v2277 = vpack.c.b16 %v2266, %v2265
    %v2278 = vpack.c.b16 %v2268, %v2267
    %v2279 = vpack.c.b16 %v2270, %v2269
    %v2280 = vpack.c.b16 %v2272, %v2271
    %2289 = vmatprep.subr.bf16.mxu0 0
    %2290 = vmatpush1.bf16.msra.mxu0 %v2273
    %2291 = vmatprep.subr.bf16.mxu0 0
    %2292 = vmatpush1.bf16.msra.mxu0 %v2274
    %2293 = vmatprep.subr.bf16.mxu0 0
    %2294 = vmatpush1.bf16.msra.mxu0 %v2275
    %2295 = vmatprep.subr.bf16.mxu0 0
    %2296 = vmatpush1.bf16.msra.mxu0 %v2276
    %2297 = vmatprep.subr.bf16.mxu0 0
    %2298 = vmatpush1.bf16.msra.mxu0 %v2277
    %2299 = vmatprep.subr.bf16.mxu0 0
    %2300 = vmatpush1.bf16.msra.mxu0 %v2278
    %2301 = vmatprep.subr.bf16.mxu0 0
    %2302 = vmatpush1.bf16.msra.mxu0 %v2279
    %2303 = vmatprep.subr.bf16.mxu0 0
    %2304 = vmatpush1.bf16.msra.mxu0 %v2280
    %2305 = vmatprep.subr.bf16.mxu0 0
    %2306 = vmatpush1.bf16.msra.mxu0 0
    %2307 = vmatprep.subr.bf16.mxu0 0
    %2308 = vmatpush1.bf16.msra.mxu0 0
    %2309 = vmatprep.subr.bf16.mxu0 0
    %2310 = vmatpush1.bf16.msra.mxu0 0
    %2311 = vmatprep.subr.bf16.mxu0 0
    %2312 = vmatpush1.bf16.msra.mxu0 0
    %2313 = vmatprep.subr.bf16.mxu0 0
    %2314 = vmatpush1.bf16.msra.mxu0 0
    %2315 = vmatprep.subr.bf16.mxu0 0
    %2316 = vmatpush1.bf16.msra.mxu0 0
    %2317 = vmatprep.subr.bf16.mxu0 0
    %2318 = vmatpush1.bf16.msra.mxu0 0
    %2319 = vmatprep.subr.bf16.mxu0 0
    %2320 = vmatpush1.bf16.msra.mxu0 0
    %2321 = vmatprep.mubr.bf16.mxu0 0
    %2322 = vmatmul.mubr.bf16.gmra.mrb[0].mxu0 %v2204
    %v2323 = vpop.f32.mrb[0].mxu0
    %v2324 = vadd.f32 0.0, %v2323
    %v2325 = vpop.f32.mrb[0].mxu0
    %v2326 = vpop.f32.mrb[0].mxu0
    %v2327 = vadd.f32 0.0, %v2326
    %v2328 = vpop.f32.mrb[0].mxu0
    %2329 = vmatprep.mubr.bf16.mxu0 0
    %2330 = vmatmul.mubr.bf16.gmra.mrb[0].mxu0 %v2221
    %v2331 = vpop.f32.mrb[0].mxu0
    %v2332 = vadd.f32 0.0, %v2331
    %v2333 = vpop.f32.mrb[0].mxu0
    %v2334 = vpop.f32.mrb[0].mxu0
    %v2335 = vadd.f32 0.0, %v2334
    %v2336 = vpop.f32.mrb[0].mxu0
    %2337 = vdwg.mxu0
    %v2338 = vadd.f32 %v2182, %v2324
    %v2339 = vadd.f32 %v2183, %v2327
    %v2340 = vadd.f32 %v2184, %v2332
    %v2341 = vadd.f32 %v2185, %v2335
    %v2342 = vld [vmem:[#allocation2] sm:$0xe0]
    %v2343 = vld [vmem:[#allocation2 + $0x10] sm:$0xe0]
    %v2348 = vrot.slane %v2342, 5
    %v2349 = vrot.slane %v2186, 5
    %v2350 = vsel %vm1318, %v2348, %v2349
    %v2351 = vrot.slane %v2343, 5
    %v2352 = vrot.slane %v2187, 5
    %v2353 = vsel %vm1318, %v2351, %v2352
    %s2356 = scalar_lea.vmem [#allocation11], 256
    %v2357 = vld [vmem:[%s2356] sm:$0xf]
    %v2358 = vld [vmem:[%s2356 + $0x4] sm:$0xf]
    %v2359 = vld [vmem:[%s2356 + $0x8] sm:$0xf]
    %v2360 = vld [vmem:[%s2356 + $0xc] sm:$0xf]
    %v2361 = vld [vmem:[%s2356 + $0x10] sm:$0xf]
    %v2362 = vld [vmem:[%s2356 + $0x14] sm:$0xf]
    %v2363 = vld [vmem:[%s2356 + $0x18] sm:$0xf]
    %v2364 = vld [vmem:[%s2356 + $0x1c] sm:$0xf]
    %v2365 = vld [vmem:[%s2356 + $0x20] sm:$0xf]
    %v2366 = vld [vmem:[%s2356 + $0x24] sm:$0xf]
    %v2367 = vld [vmem:[%s2356 + $0x28] sm:$0xf]
    %v2368 = vld [vmem:[%s2356 + $0x2c] sm:$0xf]
    %v2369 = vld [vmem:[%s2356 + $0x30] sm:$0xf]
    %v2370 = vld [vmem:[%s2356 + $0x34] sm:$0xf]
    %v2371 = vld [vmem:[%s2356 + $0x38] sm:$0xf]
    %v2372 = vld [vmem:[%s2356 + $0x3c] sm:$0xf]
    %v2389 = vunpack.c.l.b16 %v2357
    %v2390 = vunpack.c.l.b16 %v2358
    %v2391 = vunpack.c.l.b16 %v2359
    %v2392 = vunpack.c.l.b16 %v2360
    %v2393 = vunpack.c.l.b16 %v2361
    %v2394 = vunpack.c.l.b16 %v2362
    %v2395 = vunpack.c.l.b16 %v2363
    %v2396 = vunpack.c.l.b16 %v2364
    %v2397 = vunpack.c.l.b16 %v2365
    %v2398 = vunpack.c.l.b16 %v2366
    %v2399 = vunpack.c.l.b16 %v2367
    %v2400 = vunpack.c.l.b16 %v2368
    %v2401 = vunpack.c.l.b16 %v2369
    %v2402 = vunpack.c.l.b16 %v2370
    %v2403 = vunpack.c.l.b16 %v2371
    %v2404 = vunpack.c.l.b16 %v2372
    %v2405 = vpack.c.b16 %v2390, %v2389
    %v2406 = vpack.c.b16 %v2392, %v2391
    %v2407 = vpack.c.b16 %v2394, %v2393
    %v2408 = vpack.c.b16 %v2396, %v2395
    %v2409 = vpack.c.b16 %v2398, %v2397
    %v2410 = vpack.c.b16 %v2400, %v2399
    %v2411 = vpack.c.b16 %v2402, %v2401
    %v2412 = vpack.c.b16 %v2404, %v2403
    %2421 = vmatprep.subr.bf16.mxu0 0
    %2422 = vmatpush1.bf16.msra.mxu0 %v2405
    %2423 = vmatprep.subr.bf16.mxu0 0
    %2424 = vmatpush1.bf16.msra.mxu0 %v2406
    %2425 = vmatprep.subr.bf16.mxu0 0
    %2426 = vmatpush1.bf16.msra.mxu0 %v2407
    %2427 = vmatprep.subr.bf16.mxu0 0
    %2428 = vmatpush1.bf16.msra.mxu0 %v2408
    %2429 = vmatprep.subr.bf16.mxu0 0
    %2430 = vmatpush1.bf16.msra.mxu0 %v2409
    %2431 = vmatprep.subr.bf16.mxu0 0
    %2432 = vmatpush1.bf16.msra.mxu0 %v2410
    %2433 = vmatprep.subr.bf16.mxu0 0
    %2434 = vmatpush1.bf16.msra.mxu0 %v2411
    %2435 = vmatprep.subr.bf16.mxu0 0
    %2436 = vmatpush1.bf16.msra.mxu0 %v2412
    %2437 = vmatprep.subr.bf16.mxu0 0
    %2438 = vmatpush1.bf16.msra.mxu0 0
    %2439 = vmatprep.subr.bf16.mxu0 0
    %2440 = vmatpush1.bf16.msra.mxu0 0
    %2441 = vmatprep.subr.bf16.mxu0 0
    %2442 = vmatpush1.bf16.msra.mxu0 0
    %2443 = vmatprep.subr.bf16.mxu0 0
    %2444 = vmatpush1.bf16.msra.mxu0 0
    %2445 = vmatprep.subr.bf16.mxu0 0
    %2446 = vmatpush1.bf16.msra.mxu0 0
    %2447 = vmatprep.subr.bf16.mxu0 0
    %2448 = vmatpush1.bf16.msra.mxu0 0
    %2449 = vmatprep.subr.bf16.mxu0 0
    %2450 = vmatpush1.bf16.msra.mxu0 0
    %2451 = vmatprep.subr.bf16.mxu0 0
    %2452 = vmatpush1.bf16.msra.mxu0 0
    %2453 = vmatprep.mubr.bf16.mxu0 0
    %2454 = vmatmul.mubr.bf16.gmra.mrb[0].mxu0 %v2350
    %v2455 = vpop.f32.mrb[0].mxu0
    %v2456 = vadd.f32 0.0, %v2455
    %v2457 = vpop.f32.mrb[0].mxu0
    %v2458 = vpop.f32.mrb[0].mxu0
    %v2459 = vadd.f32 0.0, %v2458
    %v2460 = vpop.f32.mrb[0].mxu0
    %2461 = vmatprep.mubr.bf16.mxu0 0
    %2462 = vmatmul.mubr.bf16.gmra.mrb[0].mxu0 %v2353
    %v2463 = vpop.f32.mrb[0].mxu0
    %v2464 = vadd.f32 0.0, %v2463
    %v2465 = vpop.f32.mrb[0].mxu0
    %v2466 = vpop.f32.mrb[0].mxu0
    %v2467 = vadd.f32 0.0, %v2466
    %v2468 = vpop.f32.mrb[0].mxu0
    %2469 = vdwg.mxu0
    %v2470 = vadd.f32 %v2338, %v2456
    %v2471 = vadd.f32 %v2339, %v2459
    %v2472 = vadd.f32 %v2340, %v2464
    %v2473 = vadd.f32 %v2341, %v2467
    %v2474 = vld [vmem:[#allocation12] sm:$0x1]
    %v2476 = vlaneseq
    %v2477 = vshrl.u32 %v2476, 7
    %v2478 = vsub.s32 0, %v2477
    %v2479 = vrot.slane %v2474, %v2478
    %v2481 = vmul.f32 %v2470, %v2479
    %v2482 = vmul.f32 %v2471, %v2479
    %v2483 = vmul.f32 %v2472, %v2479
    %v2484 = vmul.f32 %v2473, %v2479
    %v2485 = vld [vmem:[#allocation14] sm:$0x1]
    %v2487 = vlaneseq
    %v2488 = vshrl.u32 %v2487, 7
    %v2489 = vsub.s32 0, %v2488
    %v2490 = vrot.slane %v2485, %v2489
    %v2492 = vadd.f32 %v2481, %v2490
    %v2493 = vadd.f32 %v2482, %v2490
    %v2494 = vadd.f32 %v2483, %v2490
    %v2495 = vadd.f32 %v2484, %v2490
    %v2496 = vmax.f32 %v2492, 0.0
    %v2497 = vmax.f32 %v2493, 0.0
    %v2498 = vmax.f32 %v2494, 0.0
    %v2499 = vmax.f32 %v2495, 0.0
    %v2500 = vpack.c.bf16 %v2497, %v2496
    %v2501 = vpack.c.bf16 %v2499, %v2498
    %v2504 = vrot.slane %v2500, 4
    %v2505 = vrot.slane %v2501, 4
    %2508 = vst [vmem:[#allocation2] sm:$0xf0] %v2504
    %2509 = vst [vmem:[#allocation2 + $0x8] sm:$0xf] %v2504
    %2510 = vst [vmem:[#allocation2 + $0x10] sm:$0xf0] %v2505
    %2511 = vst [vmem:[#allocation2 + $0x18] sm:$0xf] %v2505
    %v2512 = vld [vmem:[#allocation2] sm:$0xf8]
    %v2513 = vld [vmem:[#allocation2 + $0x8] sm:$0xf]
    %v2514 = vld [vmem:[#allocation2 + $0x10] sm:$0xf8]
    %v2515 = vld [vmem:[#allocation2 + $0x18] sm:$0xf]
    %v2517 = vshrl.u32 %v2512, 16
    %v2519 = vrot.slane %v2517, 3
    %v2520 = vshll.u32 %v2512, 16
    %v2522 = vrot.slane %v2520, 4
    %v2523 = vor.u32 %v2519, %v2522
    %v2525 = vshrl.u32 %v2513, 16
    %v2527 = vrot.slane %v2525, 3
    %v2528 = vshll.u32 %v2513, 16
    %v2530 = vrot.slane %v2528, 4
    %v2531 = vor.u32 %v2527, %v2530
    %v2532 = vsel %vm867, %v2523, %v2531
    %v2534 = vshrl.u32 %v2514, 16
    %v2536 = vrot.slane %v2534, 3
    %v2537 = vshll.u32 %v2514, 16
    %v2539 = vrot.slane %v2537, 4
    %v2540 = vor.u32 %v2536, %v2539
    %v2542 = vshrl.u32 %v2515, 16
    %v2544 = vrot.slane %v2542, 3
    %v2545 = vshll.u32 %v2515, 16
    %v2547 = vrot.slane %v2545, 4
    %v2548 = vor.u32 %v2544, %v2547
    %v2549 = vsel %vm867, %v2540, %v2548
    %v2552 = vld [vmem:[#allocation15] sm:$0xf]
    %v2553 = vld [vmem:[#allocation15 + $0x4] sm:$0xf]
    %v2554 = vld [vmem:[#allocation15 + $0x8] sm:$0xf]
    %v2555 = vld [vmem:[#allocation15 + $0xc] sm:$0xf]
    %v2556 = vld [vmem:[#allocation15 + $0x10] sm:$0xf]
    %v2557 = vld [vmem:[#allocation15 + $0x14] sm:$0xf]
    %v2558 = vld [vmem:[#allocation15 + $0x18] sm:$0xf]
    %v2559 = vld [vmem:[#allocation15 + $0x1c] sm:$0xf]
    %v2560 = vld [vmem:[#allocation15 + $0x20] sm:$0xf]
    %v2561 = vld [vmem:[#allocation15 + $0x24] sm:$0xf]
    %v2562 = vld [vmem:[#allocation15 + $0x28] sm:$0xf]
    %v2563 = vld [vmem:[#allocation15 + $0x2c] sm:$0xf]
    %v2564 = vld [vmem:[#allocation15 + $0x30] sm:$0xf]
    %v2565 = vld [vmem:[#allocation15 + $0x34] sm:$0xf]
    %v2566 = vld [vmem:[#allocation15 + $0x38] sm:$0xf]
    %v2567 = vld [vmem:[#allocation15 + $0x3c] sm:$0xf]
    %v2568 = vld [vmem:[#allocation2] sm:$0xf0]
    %v2569 = vld [vmem:[#allocation2 + $0x10] sm:$0xf0]
    %v2574 = vrot.slane %v2568, 4
    %v2575 = vrot.slane %v2513, 4
    %v2576 = vsel %vm1028, %v2574, %v2575
    %v2577 = vrot.slane %v2569, 4
    %v2578 = vrot.slane %v2515, 4
    %v2579 = vsel %vm1028, %v2577, %v2578
    %s2582 = scalar_lea.vmem [#allocation15], 64
    %v2583 = vld [vmem:[%s2582] sm:$0xf]
    %v2584 = vld [vmem:[%s2582 + $0x4] sm:$0xf]
    %v2585 = vld [vmem:[%s2582 + $0x8] sm:$0xf]
    %v2586 = vld [vmem:[%s2582 + $0xc] sm:$0xf]
    %v2587 = vld [vmem:[%s2582 + $0x10] sm:$0xf]
    %v2588 = vld [vmem:[%s2582 + $0x14] sm:$0xf]
    %v2589 = vld [vmem:[%s2582 + $0x18] sm:$0xf]
    %v2590 = vld [vmem:[%s2582 + $0x1c] sm:$0xf]
    %v2591 = vld [vmem:[%s2582 + $0x20] sm:$0xf]
    %v2592 = vld [vmem:[%s2582 + $0x24] sm:$0xf]
    %v2593 = vld [vmem:[%s2582 + $0x28] sm:$0xf]
    %v2594 = vld [vmem:[%s2582 + $0x2c] sm:$0xf]
    %v2595 = vld [vmem:[%s2582 + $0x30] sm:$0xf]
    %v2596 = vld [vmem:[%s2582 + $0x34] sm:$0xf]
    %v2597 = vld [vmem:[%s2582 + $0x38] sm:$0xf]
    %v2598 = vld [vmem:[%s2582 + $0x3c] sm:$0xf]
    %v2615 = vunpack.c.l.b16 %v2583
    %v2616 = vunpack.c.l.b16 %v2584
    %v2617 = vunpack.c.l.b16 %v2585
    %v2618 = vunpack.c.l.b16 %v2586
    %v2619 = vunpack.c.l.b16 %v2587
    %v2620 = vunpack.c.l.b16 %v2588
    %v2621 = vunpack.c.l.b16 %v2589
    %v2622 = vunpack.c.l.b16 %v2590
    %v2623 = vunpack.c.l.b16 %v2591
    %v2624 = vunpack.c.l.b16 %v2592
    %v2625 = vunpack.c.l.b16 %v2593
    %v2626 = vunpack.c.l.b16 %v2594
    %v2627 = vunpack.c.l.b16 %v2595
    %v2628 = vunpack.c.l.b16 %v2596
    %v2629 = vunpack.c.l.b16 %v2597
    %v2630 = vunpack.c.l.b16 %v2598
    %v2631 = vpack.c.b16 %v2616, %v2615
    %v2632 = vpack.c.b16 %v2618, %v2617
    %v2633 = vpack.c.b16 %v2620, %v2619
    %v2634 = vpack.c.b16 %v2622, %v2621
    %v2635 = vpack.c.b16 %v2624, %v2623
    %v2636 = vpack.c.b16 %v2626, %v2625
    %v2637 = vpack.c.b16 %v2628, %v2627
    %v2638 = vpack.c.b16 %v2630, %v2629
    %2647 = vmatprep.subr.bf16.mxu0 0
    %2648 = vmatpush1.bf16.msra.mxu0 %v2631
    %2649 = vmatprep.subr.bf16.mxu0 0
    %2650 = vmatpush1.bf16.msra.mxu0 %v2632
    %2651 = vmatprep.subr.bf16.mxu0 0
    %2652 = vmatpush1.bf16.msra.mxu0 %v2633
    %2653 = vmatprep.subr.bf16.mxu0 0
    %2654 = vmatpush1.bf16.msra.mxu0 %v2634
    %2655 = vmatprep.subr.bf16.mxu0 0
    %2656 = vmatpush1.bf16.msra.mxu0 %v2635
    %2657 = vmatprep.subr.bf16.mxu0 0
    %2658 = vmatpush1.bf16.msra.mxu0 %v2636
    %2659 = vmatprep.subr.bf16.mxu0 0
    %2660 = vmatpush1.bf16.msra.mxu0 %v2637
    %2661 = vmatprep.subr.bf16.mxu0 0
    %2662 = vmatpush1.bf16.msra.mxu0 %v2638
    %2663 = vmatprep.subr.bf16.mxu0 0
    %2664 = vmatpush1.bf16.msra.mxu0 0
    %2665 = vmatprep.subr.bf16.mxu0 0
    %2666 = vmatpush1.bf16.msra.mxu0 0
    %2667 = vmatprep.subr.bf16.mxu0 0
    %2668 = vmatpush1.bf16.msra.mxu0 0
    %2669 = vmatprep.subr.bf16.mxu0 0
    %2670 = vmatpush1.bf16.msra.mxu0 0
    %2671 = vmatprep.subr.bf16.mxu0 0
    %2672 = vmatpush1.bf16.msra.mxu0 0
    %2673 = vmatprep.subr.bf16.mxu0 0
    %2674 = vmatpush1.bf16.msra.mxu0 0
    %2675 = vmatprep.subr.bf16.mxu0 0
    %2676 = vmatpush1.bf16.msra.mxu0 0
    %2677 = vmatprep.subr.bf16.mxu0 0
    %2678 = vmatpush1.bf16.msra.mxu0 0
    %2679 = vmatprep.mubr.bf16.mxu0 0
    %2680 = vmatmul.mubr.bf16.gmra.mrb[0].mxu0 %v2576
    %v2681 = vpop.f32.mrb[0].mxu0
    %v2682 = vadd.f32 0.0, %v2681
    %v2683 = vpop.f32.mrb[0].mxu0
    %v2684 = vpop.f32.mrb[0].mxu0
    %v2685 = vadd.f32 0.0, %v2684
    %v2686 = vpop.f32.mrb[0].mxu0
    %2687 = vmatprep.mubr.bf16.mxu0 0
    %2688 = vmatmul.mubr.bf16.gmra.mrb[0].mxu0 %v2579
    %v2689 = vpop.f32.mrb[0].mxu0
    %v2690 = vadd.f32 0.0, %v2689
    %v2691 = vpop.f32.mrb[0].mxu0
    %v2692 = vpop.f32.mrb[0].mxu0
    %v2693 = vadd.f32 0.0, %v2692
    %v2694 = vpop.f32.mrb[0].mxu0
    %2695 = vdwg.mxu0
    %v2712 = vunpack.c.l.b16 %v2552
    %v2713 = vunpack.c.l.b16 %v2553
    %v2714 = vunpack.c.l.b16 %v2554
    %v2715 = vunpack.c.l.b16 %v2555
    %v2716 = vunpack.c.l.b16 %v2556
    %v2717 = vunpack.c.l.b16 %v2557
    %v2718 = vunpack.c.l.b16 %v2558
    %v2719 = vunpack.c.l.b16 %v2559
    %v2720 = vunpack.c.l.b16 %v2560
    %v2721 = vunpack.c.l.b16 %v2561
    %v2722 = vunpack.c.l.b16 %v2562
    %v2723 = vunpack.c.l.b16 %v2563
    %v2724 = vunpack.c.l.b16 %v2564
    %v2725 = vunpack.c.l.b16 %v2565
    %v2726 = vunpack.c.l.b16 %v2566
    %v2727 = vunpack.c.l.b16 %v2567
    %v2728 = vpack.c.b16 %v2713, %v2712
    %v2729 = vpack.c.b16 %v2715, %v2714
    %v2730 = vpack.c.b16 %v2717, %v2716
    %v2731 = vpack.c.b16 %v2719, %v2718
    %v2732 = vpack.c.b16 %v2721, %v2720
    %v2733 = vpack.c.b16 %v2723, %v2722
    %v2734 = vpack.c.b16 %v2725, %v2724
    %v2735 = vpack.c.b16 %v2727, %v2726
    %2744 = vmatprep.subr.bf16.mxu0 0
    %2745 = vmatpush1.bf16.msra.mxu0 %v2728
    %2746 = vmatprep.subr.bf16.mxu0 0
    %2747 = vmatpush1.bf16.msra.mxu0 %v2729
    %2748 = vmatprep.subr.bf16.mxu0 0
    %2749 = vmatpush1.bf16.msra.mxu0 %v2730
    %2750 = vmatprep.subr.bf16.mxu0 0
    %2751 = vmatpush1.bf16.msra.mxu0 %v2731
    %2752 = vmatprep.subr.bf16.mxu0 0
    %2753 = vmatpush1.bf16.msra.mxu0 %v2732
    %2754 = vmatprep.subr.bf16.mxu0 0
    %2755 = vmatpush1.bf16.msra.mxu0 %v2733
    %2756 = vmatprep.subr.bf16.mxu0 0
    %2757 = vmatpush1.bf16.msra.mxu0 %v2734
    %2758 = vmatprep.subr.bf16.mxu0 0
    %2759 = vmatpush1.bf16.msra.mxu0 %v2735
    %2760 = vmatprep.subr.bf16.mxu0 0
    %2761 = vmatpush1.bf16.msra.mxu0 0
    %2762 = vmatprep.subr.bf16.mxu0 0
    %2763 = vmatpush1.bf16.msra.mxu0 0
    %2764 = vmatprep.subr.bf16.mxu0 0
    %2765 = vmatpush1.bf16.msra.mxu0 0
    %2766 = vmatprep.subr.bf16.mxu0 0
    %2767 = vmatpush1.bf16.msra.mxu0 0
    %2768 = vmatprep.subr.bf16.mxu0 0
    %2769 = vmatpush1.bf16.msra.mxu0 0
    %2770 = vmatprep.subr.bf16.mxu0 0
    %2771 = vmatpush1.bf16.msra.mxu0 0
    %2772 = vmatprep.subr.bf16.mxu0 0
    %2773 = vmatpush1.bf16.msra.mxu0 0
    %2774 = vmatprep.subr.bf16.mxu0 0
    %2775 = vmatpush1.bf16.msra.mxu0 0
    %2776 = vmatprep.mubr.bf16.mxu0 0
    %2777 = vmatmul.mubr.bf16.gmra.mrb[0].mxu0 %v2532
    %v2778 = vpop.f32.mrb[0].mxu0
    %v2779 = vadd.f32 %v2682, %v2778
    %v2780 = vpop.f32.mrb[0].mxu0
    %v2781 = vpop.f32.mrb[0].mxu0
    %v2782 = vadd.f32 %v2685, %v2781
    %v2783 = vpop.f32.mrb[0].mxu0
    %2784 = vmatprep.mubr.bf16.mxu0 0
    %2785 = vmatmul.mubr.bf16.gmra.mrb[0].mxu0 %v2549
    %v2786 = vpop.f32.mrb[0].mxu0
    %v2787 = vadd.f32 %v2690, %v2786
    %v2788 = vpop.f32.mrb[0].mxu0
    %v2789 = vpop.f32.mrb[0].mxu0
    %v2790 = vadd.f32 %v2693, %v2789
    %v2791 = vpop.f32.mrb[0].mxu0
    %2792 = vdwg.mxu0
    %v2793 = vld [vmem:[#allocation2 + $0x8] sm:$0x1f]
    %v2794 = vld [vmem:[#allocation2 + $0x18] sm:$0x1f]
    %v2796 = vshrl.u32 %v2568, 16
    %v2798 = vrot.slane %v2796, 4
    %v2799 = vshll.u32 %v2568, 16
    %v2801 = vrot.slane %v2799, 5
    %v2802 = vor.u32 %v2798, %v2801
    %v2804 = vshrl.u32 %v2793, 16
    %v2806 = vrot.slane %v2804, 4
    %v2807 = vshll.u32 %v2793, 16
    %v2809 = vrot.slane %v2807, 5
    %v2810 = vor.u32 %v2806, %v2809
    %v2811 = vsel %vm1157, %v2802, %v2810
    %v2813 = vshrl.u32 %v2569, 16
    %v2815 = vrot.slane %v2813, 4
    %v2816 = vshll.u32 %v2569, 16
    %v2818 = vrot.slane %v2816, 5
    %v2819 = vor.u32 %v2815, %v2818
    %v2821 = vshrl.u32 %v2794, 16
    %v2823 = vrot.slane %v2821, 4
    %v2824 = vshll.u32 %v2794, 16
    %v2826 = vrot.slane %v2824, 5
    %v2827 = vor.u32 %v2823, %v2826
    %v2828 = vsel %vm1157, %v2819, %v2827
    %s2831 = scalar_lea.vmem [#allocation15], 128
    %v2832 = vld [vmem:[%s2831] sm:$0xf]
    %v2833 = vld [vmem:[%s2831 + $0x4] sm:$0xf]
    %v2834 = vld [vmem:[%s2831 + $0x8] sm:$0xf]
    %v2835 = vld [vmem:[%s2831 + $0xc] sm:$0xf]
    %v2836 = vld [vmem:[%s2831 + $0x10] sm:$0xf]
    %v2837 = vld [vmem:[%s2831 + $0x14] sm:$0xf]
    %v2838 = vld [vmem:[%s2831 + $0x18] sm:$0xf]
    %v2839 = vld [vmem:[%s2831 + $0x1c] sm:$0xf]
    %v2840 = vld [vmem:[%s2831 + $0x20] sm:$0xf]
    %v2841 = vld [vmem:[%s2831 + $0x24] sm:$0xf]
    %v2842 = vld [vmem:[%s2831 + $0x28] sm:$0xf]
    %v2843 = vld [vmem:[%s2831 + $0x2c] sm:$0xf]
    %v2844 = vld [vmem:[%s2831 + $0x30] sm:$0xf]
    %v2845 = vld [vmem:[%s2831 + $0x34] sm:$0xf]
    %v2846 = vld [vmem:[%s2831 + $0x38] sm:$0xf]
    %v2847 = vld [vmem:[%s2831 + $0x3c] sm:$0xf]
    %v2864 = vunpack.c.l.b16 %v2832
    %v2865 = vunpack.c.l.b16 %v2833
    %v2866 = vunpack.c.l.b16 %v2834
    %v2867 = vunpack.c.l.b16 %v2835
    %v2868 = vunpack.c.l.b16 %v2836
    %v2869 = vunpack.c.l.b16 %v2837
    %v2870 = vunpack.c.l.b16 %v2838
    %v2871 = vunpack.c.l.b16 %v2839
    %v2872 = vunpack.c.l.b16 %v2840
    %v2873 = vunpack.c.l.b16 %v2841
    %v2874 = vunpack.c.l.b16 %v2842
    %v2875 = vunpack.c.l.b16 %v2843
    %v2876 = vunpack.c.l.b16 %v2844
    %v2877 = vunpack.c.l.b16 %v2845
    %v2878 = vunpack.c.l.b16 %v2846
    %v2879 = vunpack.c.l.b16 %v2847
    %v2880 = vpack.c.b16 %v2865, %v2864
    %v2881 = vpack.c.b16 %v2867, %v2866
    %v2882 = vpack.c.b16 %v2869, %v2868
    %v2883 = vpack.c.b16 %v2871, %v2870
    %v2884 = vpack.c.b16 %v2873, %v2872
    %v2885 = vpack.c.b16 %v2875, %v2874
    %v2886 = vpack.c.b16 %v2877, %v2876
    %v2887 = vpack.c.b16 %v2879, %v2878
    %2896 = vmatprep.subr.bf16.mxu0 0
    %2897 = vmatpush1.bf16.msra.mxu0 %v2880
    %2898 = vmatprep.subr.bf16.mxu0 0
    %2899 = vmatpush1.bf16.msra.mxu0 %v2881
    %2900 = vmatprep.subr.bf16.mxu0 0
    %2901 = vmatpush1.bf16.msra.mxu0 %v2882
    %2902 = vmatprep.subr.bf16.mxu0 0
    %2903 = vmatpush1.bf16.msra.mxu0 %v2883
    %2904 = vmatprep.subr.bf16.mxu0 0
    %2905 = vmatpush1.bf16.msra.mxu0 %v2884
    %2906 = vmatprep.subr.bf16.mxu0 0
    %2907 = vmatpush1.bf16.msra.mxu0 %v2885
    %2908 = vmatprep.subr.bf16.mxu0 0
    %2909 = vmatpush1.bf16.msra.mxu0 %v2886
    %2910 = vmatprep.subr.bf16.mxu0 0
    %2911 = vmatpush1.bf16.msra.mxu0 %v2887
    %2912 = vmatprep.subr.bf16.mxu0 0
    %2913 = vmatpush1.bf16.msra.mxu0 0
    %2914 = vmatprep.subr.bf16.mxu0 0
    %2915 = vmatpush1.bf16.msra.mxu0 0
    %2916 = vmatprep.subr.bf16.mxu0 0
    %2917 = vmatpush1.bf16.msra.mxu0 0
    %2918 = vmatprep.subr.bf16.mxu0 0
    %2919 = vmatpush1.bf16.msra.mxu0 0
    %2920 = vmatprep.subr.bf16.mxu0 0
    %2921 = vmatpush1.bf16.msra.mxu0 0
    %2922 = vmatprep.subr.bf16.mxu0 0
    %2923 = vmatpush1.bf16.msra.mxu0 0
    %2924 = vmatprep.subr.bf16.mxu0 0
    %2925 = vmatpush1.bf16.msra.mxu0 0
    %2926 = vmatprep.subr.bf16.mxu0 0
    %2927 = vmatpush1.bf16.msra.mxu0 0
    %2928 = vmatprep.mubr.bf16.mxu0 0
    %2929 = vmatmul.mubr.bf16.gmra.mrb[0].mxu0 %v2811
    %v2930 = vpop.f32.mrb[0].mxu0
    %v2931 = vadd.f32 0.0, %v2930
    %v2932 = vpop.f32.mrb[0].mxu0
    %v2933 = vpop.f32.mrb[0].mxu0
    %v2934 = vadd.f32 0.0, %v2933
    %v2935 = vpop.f32.mrb[0].mxu0
    %2936 = vmatprep.mubr.bf16.mxu0 0
    %2937 = vmatmul.mubr.bf16.gmra.mrb[0].mxu0 %v2828
    %v2938 = vpop.f32.mrb[0].mxu0
    %v2939 = vadd.f32 0.0, %v2938
    %v2940 = vpop.f32.mrb[0].mxu0
    %v2941 = vpop.f32.mrb[0].mxu0
    %v2942 = vadd.f32 0.0, %v2941
    %v2943 = vpop.f32.mrb[0].mxu0
    %2944 = vdwg.mxu0
    %v2945 = vadd.f32 %v2779, %v2931
    %v2946 = vadd.f32 %v2782, %v2934
    %v2947 = vadd.f32 %v2787, %v2939
    %v2948 = vadd.f32 %v2790, %v2942
    %v2949 = vld [vmem:[#allocation17] sm:$0x1]
    %v2951 = vlaneseq
    %v2952 = vshrl.u32 %v2951, 7
    %v2953 = vsub.s32 0, %v2952
    %v2954 = vrot.slane %v2949, %v2953
    %v2956 = vmul.f32 %v2945, %v2954
    %v2957 = vmul.f32 %v2946, %v2954
    %v2958 = vmul.f32 %v2947, %v2954
    %v2959 = vmul.f32 %v2948, %v2954
    %v2960 = vld [vmem:[#allocation18] sm:$0x1]
    %v2962 = vlaneseq
    %v2963 = vshrl.u32 %v2962, 7
    %v2964 = vsub.s32 0, %v2963
    %v2965 = vrot.slane %v2960, %v2964
    %v2967 = vadd.f32 %v2956, %v2965
    %v2968 = vadd.f32 %v2957, %v2965
    %v2969 = vadd.f32 %v2958, %v2965
    %v2970 = vadd.f32 %v2959, %v2965
    %v2971 = vmax.f32 %v2967, 0.0
    %v2972 = vmax.f32 %v2968, 0.0
    %v2973 = vmax.f32 %v2969, 0.0
    %v2974 = vmax.f32 %v2970, 0.0
    %v2975 = vld [vmem:[#allocation20] sm:$0xf]
    %v2976 = vld [vmem:[#allocation20 + $0x4] sm:$0xf]
    %v2977 = vld [vmem:[#allocation20 + $0x8] sm:$0xf]
    %v2978 = vld [vmem:[#allocation20 + $0xc] sm:$0xf]
    %v2979 = vld [vmem:[#allocation20 + $0x10] sm:$0xf]
    %v2980 = vld [vmem:[#allocation20 + $0x14] sm:$0xf]
    %v2981 = vld [vmem:[#allocation20 + $0x18] sm:$0xf]
    %v2982 = vld [vmem:[#allocation20 + $0x1c] sm:$0xf]
    %v2983 = vld [vmem:[#allocation20 + $0x20] sm:$0xf]
    %v2984 = vld [vmem:[#allocation20 + $0x24] sm:$0xf]
    %v2985 = vld [vmem:[#allocation20 + $0x28] sm:$0xf]
    %v2986 = vld [vmem:[#allocation20 + $0x2c] sm:$0xf]
    %v2987 = vld [vmem:[#allocation20 + $0x30] sm:$0xf]
    %v2988 = vld [vmem:[#allocation20 + $0x34] sm:$0xf]
    %v2989 = vld [vmem:[#allocation20 + $0x38] sm:$0xf]
    %v2990 = vld [vmem:[#allocation20 + $0x3c] sm:$0xf]
    %v2991 = vpack.c.b16 %v567, %v566
    %v2992 = vpack.c.b16 %v569, %v568
    %v3011 = vunpack.c.l.b16 %v2975
    %v3012 = vunpack.c.l.b16 %v2976
    %v3013 = vunpack.c.l.b16 %v2977
    %v3014 = vunpack.c.l.b16 %v2978
    %v3015 = vunpack.c.l.b16 %v2979
    %v3016 = vunpack.c.l.b16 %v2980
    %v3017 = vunpack.c.l.b16 %v2981
    %v3018 = vunpack.c.l.b16 %v2982
    %v3019 = vunpack.c.l.b16 %v2983
    %v3020 = vunpack.c.l.b16 %v2984
    %v3021 = vunpack.c.l.b16 %v2985
    %v3022 = vunpack.c.l.b16 %v2986
    %v3023 = vunpack.c.l.b16 %v2987
    %v3024 = vunpack.c.l.b16 %v2988
    %v3025 = vunpack.c.l.b16 %v2989
    %v3026 = vunpack.c.l.b16 %v2990
    %v3027 = vpack.c.b16 %v3012, %v3011
    %v3028 = vpack.c.b16 %v3014, %v3013
    %v3029 = vpack.c.b16 %v3016, %v3015
    %v3030 = vpack.c.b16 %v3018, %v3017
    %v3031 = vpack.c.b16 %v3020, %v3019
    %v3032 = vpack.c.b16 %v3022, %v3021
    %v3033 = vpack.c.b16 %v3024, %v3023
    %v3034 = vpack.c.b16 %v3026, %v3025
    %3043 = vmatprep.subr.bf16.mxu0 0
    %3044 = vmatpush1.bf16.msra.mxu0 %v3027
    %3045 = vmatprep.subr.bf16.mxu0 0
    %3046 = vmatpush1.bf16.msra.mxu0 %v3028
    %3047 = vmatprep.subr.bf16.mxu0 0
    %3048 = vmatpush1.bf16.msra.mxu0 %v3029
    %3049 = vmatprep.subr.bf16.mxu0 0
    %3050 = vmatpush1.bf16.msra.mxu0 %v3030
    %3051 = vmatprep.subr.bf16.mxu0 0
    %3052 = vmatpush1.bf16.msra.mxu0 %v3031
    %3053 = vmatprep.subr.bf16.mxu0 0
    %3054 = vmatpush1.bf16.msra.mxu0 %v3032
    %3055 = vmatprep.subr.bf16.mxu0 0
    %3056 = vmatpush1.bf16.msra.mxu0 %v3033
    %3057 = vmatprep.subr.bf16.mxu0 0
    %3058 = vmatpush1.bf16.msra.mxu0 %v3034
    %3059 = vmatprep.subr.bf16.mxu0 0
    %3060 = vmatpush1.bf16.msra.mxu0 0
    %3061 = vmatprep.subr.bf16.mxu0 0
    %3062 = vmatpush1.bf16.msra.mxu0 0
    %3063 = vmatprep.subr.bf16.mxu0 0
    %3064 = vmatpush1.bf16.msra.mxu0 0
    %3065 = vmatprep.subr.bf16.mxu0 0
    %3066 = vmatpush1.bf16.msra.mxu0 0
    %3067 = vmatprep.subr.bf16.mxu0 0
    %3068 = vmatpush1.bf16.msra.mxu0 0
    %3069 = vmatprep.subr.bf16.mxu0 0
    %3070 = vmatpush1.bf16.msra.mxu0 0
    %3071 = vmatprep.subr.bf16.mxu0 0
    %3072 = vmatpush1.bf16.msra.mxu0 0
    %3073 = vmatprep.subr.bf16.mxu0 0
    %3074 = vmatpush1.bf16.msra.mxu0 0
    %3075 = vmatprep.mubr.bf16.mxu0 0
    %3076 = vmatmul.mubr.bf16.gmra.mrb[0].mxu0 %v2991
    %v3077 = vpop.f32.mrb[0].mxu0
    %v3078 = vadd.f32 0.0, %v3077
    %v3079 = vpop.f32.mrb[0].mxu0
    %v3080 = vpop.f32.mrb[0].mxu0
    %v3081 = vadd.f32 0.0, %v3080
    %v3082 = vpop.f32.mrb[0].mxu0
    %3083 = vmatprep.mubr.bf16.mxu0 0
    %3084 = vmatmul.mubr.bf16.gmra.mrb[0].mxu0 %v2992
    %v3085 = vpop.f32.mrb[0].mxu0
    %v3086 = vadd.f32 0.0, %v3085
    %v3087 = vpop.f32.mrb[0].mxu0
    %v3088 = vpop.f32.mrb[0].mxu0
    %v3089 = vadd.f32 0.0, %v3088
    %v3090 = vpop.f32.mrb[0].mxu0
    %3091 = vdwg.mxu0
    %v3092 = vld [vmem:[#allocation21] sm:$0x1]
    %v3094 = vlaneseq
    %v3095 = vshrl.u32 %v3094, 7
    %v3096 = vsub.s32 0, %v3095
    %v3097 = vrot.slane %v3092, %v3096
    %v3099 = vmul.f32 %v3078, %v3097
    %v3100 = vmul.f32 %v3081, %v3097
    %v3101 = vmul.f32 %v3086, %v3097
    %v3102 = vmul.f32 %v3089, %v3097
    %v3103 = vld [vmem:[#allocation23] sm:$0x1]
    %v3105 = vlaneseq
    %v3106 = vshrl.u32 %v3105, 7
    %v3107 = vsub.s32 0, %v3106
    %v3108 = vrot.slane %v3103, %v3107
    %v3110 = vadd.f32 %v3099, %v3108
    %v3111 = vadd.f32 %v3100, %v3108
    %v3112 = vadd.f32 %v3101, %v3108
    %v3113 = vadd.f32 %v3102, %v3108
    %v3114 = vadd.f32 %v2971, %v3110
    %v3115 = vadd.f32 %v2972, %v3111
    %v3116 = vadd.f32 %v2973, %v3112
    %v3117 = vadd.f32 %v2974, %v3113
    %v3118 = vpack.c.bf16 %v3115, %v3114
    %v3119 = vpack.c.bf16 %v3117, %v3116
    %v3122 = vrot.slane %v3118, 4
    %v3123 = vrot.slane %v3119, 4
    %3126 = vst [vmem:[#allocation2] sm:$0xf0] %v3122
    %3127 = vst [vmem:[#allocation2 + $0x8] sm:$0xf] %v3122
    %3128 = vst [vmem:[#allocation2 + $0x10] sm:$0xf0] %v3123
    %3129 = vst [vmem:[#allocation2 + $0x18] sm:$0xf] %v3123
    %v3130 = vld [vmem:[#allocation2] sm:$0xfc]
    %v3131 = vld [vmem:[#allocation2 + $0x8] sm:$0x7]
    %v3132 = vld [vmem:[#allocation2 + $0x10] sm:$0xfc]
    %v3133 = vld [vmem:[#allocation2 + $0x18] sm:$0x7]
    %v3135 = vshrl.u32 %v3130, 16
    %v3137 = vrot.slane %v3135, 2
    %v3138 = vshll.u32 %v3130, 16
    %v3140 = vrot.slane %v3138, 3
    %v3141 = vor.u32 %v3137, %v3140
    %v3143 = vshrl.u32 %v3131, 16
    %v3145 = vrot.slane %v3143, 2
    %v3146 = vshll.u32 %v3131, 16
    %v3148 = vrot.slane %v3146, 3
    %v3149 = vor.u32 %v3145, %v3148
    %v3150 = vsel %vm586, %v3141, %v3149
    %v3152 = vshrl.u32 %v3132, 16
    %v3154 = vrot.slane %v3152, 2
    %v3155 = vshll.u32 %v3132, 16
    %v3157 = vrot.slane %v3155, 3
    %v3158 = vor.u32 %v3154, %v3157
    %v3160 = vshrl.u32 %v3133, 16
    %v3162 = vrot.slane %v3160, 2
    %v3163 = vshll.u32 %v3133, 16
    %v3165 = vrot.slane %v3163, 3
    %v3166 = vor.u32 %v3162, %v3165
    %v3167 = vsel %vm586, %v3158, %v3166
    %v3170 = vld [vmem:[#allocation24] sm:$0xf]
    %v3171 = vld [vmem:[#allocation24 + $0x4] sm:$0xf]
    %v3172 = vld [vmem:[#allocation24 + $0x8] sm:$0xf]
    %v3173 = vld [vmem:[#allocation24 + $0xc] sm:$0xf]
    %v3174 = vld [vmem:[#allocation24 + $0x10] sm:$0xf]
    %v3175 = vld [vmem:[#allocation24 + $0x14] sm:$0xf]
    %v3176 = vld [vmem:[#allocation24 + $0x18] sm:$0xf]
    %v3177 = vld [vmem:[#allocation24 + $0x1c] sm:$0xf]
    %v3178 = vld [vmem:[#allocation24 + $0x20] sm:$0xf]
    %v3179 = vld [vmem:[#allocation24 + $0x24] sm:$0xf]
    %v3180 = vld [vmem:[#allocation24 + $0x28] sm:$0xf]
    %v3181 = vld [vmem:[#allocation24 + $0x2c] sm:$0xf]
    %v3182 = vld [vmem:[#allocation24 + $0x30] sm:$0xf]
    %v3183 = vld [vmem:[#allocation24 + $0x34] sm:$0xf]
    %v3184 = vld [vmem:[#allocation24 + $0x38] sm:$0xf]
    %v3185 = vld [vmem:[#allocation24 + $0x3c] sm:$0xf]
    %v3186 = vld [vmem:[#allocation2] sm:$0xf8]
    %v3187 = vld [vmem:[#allocation2 + $0x10] sm:$0xf8]
    %v3192 = vrot.slane %v3186, 3
    %v3193 = vrot.slane %v3131, 3
    %v3194 = vsel %vm645, %v3192, %v3193
    %v3195 = vrot.slane %v3187, 3
    %v3196 = vrot.slane %v3133, 3
    %v3197 = vsel %vm645, %v3195, %v3196
    %s3200 = scalar_lea.vmem [#allocation24], 64
    %v3201 = vld [vmem:[%s3200] sm:$0xf]
    %v3202 = vld [vmem:[%s3200 + $0x4] sm:$0xf]
    %v3203 = vld [vmem:[%s3200 + $0x8] sm:$0xf]
    %v3204 = vld [vmem:[%s3200 + $0xc] sm:$0xf]
    %v3205 = vld [vmem:[%s3200 + $0x10] sm:$0xf]
    %v3206 = vld [vmem:[%s3200 + $0x14] sm:$0xf]
    %v3207 = vld [vmem:[%s3200 + $0x18] sm:$0xf]
    %v3208 = vld [vmem:[%s3200 + $0x1c] sm:$0xf]
    %v3209 = vld [vmem:[%s3200 + $0x20] sm:$0xf]
    %v3210 = vld [vmem:[%s3200 + $0x24] sm:$0xf]
    %v3211 = vld [vmem:[%s3200 + $0x28] sm:$0xf]
    %v3212 = vld [vmem:[%s3200 + $0x2c] sm:$0xf]
    %v3213 = vld [vmem:[%s3200 + $0x30] sm:$0xf]
    %v3214 = vld [vmem:[%s3200 + $0x34] sm:$0xf]
    %v3215 = vld [vmem:[%s3200 + $0x38] sm:$0xf]
    %v3216 = vld [vmem:[%s3200 + $0x3c] sm:$0xf]
    %v3233 = vunpack.c.l.b16 %v3201
    %v3234 = vunpack.c.l.b16 %v3202
    %v3235 = vunpack.c.l.b16 %v3203
    %v3236 = vunpack.c.l.b16 %v3204
    %v3237 = vunpack.c.l.b16 %v3205
    %v3238 = vunpack.c.l.b16 %v3206
    %v3239 = vunpack.c.l.b16 %v3207
    %v3240 = vunpack.c.l.b16 %v3208
    %v3241 = vunpack.c.l.b16 %v3209
    %v3242 = vunpack.c.l.b16 %v3210
    %v3243 = vunpack.c.l.b16 %v3211
    %v3244 = vunpack.c.l.b16 %v3212
    %v3245 = vunpack.c.l.b16 %v3213
    %v3246 = vunpack.c.l.b16 %v3214
    %v3247 = vunpack.c.l.b16 %v3215
    %v3248 = vunpack.c.l.b16 %v3216
    %v3249 = vpack.c.b16 %v3234, %v3233
    %v3250 = vpack.c.b16 %v3236, %v3235
    %v3251 = vpack.c.b16 %v3238, %v3237
    %v3252 = vpack.c.b16 %v3240, %v3239
    %v3253 = vpack.c.b16 %v3242, %v3241
    %v3254 = vpack.c.b16 %v3244, %v3243
    %v3255 = vpack.c.b16 %v3246, %v3245
    %v3256 = vpack.c.b16 %v3248, %v3247
    %3265 = vmatprep.subr.bf16.mxu0 0
    %3266 = vmatpush1.bf16.msra.mxu0 %v3249
    %3267 = vmatprep.subr.bf16.mxu0 0
    %3268 = vmatpush1.bf16.msra.mxu0 %v3250
    %3269 = vmatprep.subr.bf16.mxu0 0
    %3270 = vmatpush1.bf16.msra.mxu0 %v3251
    %3271 = vmatprep.subr.bf16.mxu0 0
    %3272 = vmatpush1.bf16.msra.mxu0 %v3252
    %3273 = vmatprep.subr.bf16.mxu0 0
    %3274 = vmatpush1.bf16.msra.mxu0 %v3253
    %3275 = vmatprep.subr.bf16.mxu0 0
    %3276 = vmatpush1.bf16.msra.mxu0 %v3254
    %3277 = vmatprep.subr.bf16.mxu0 0
    %3278 = vmatpush1.bf16.msra.mxu0 %v3255
    %3279 = vmatprep.subr.bf16.mxu0 0
    %3280 = vmatpush1.bf16.msra.mxu0 %v3256
    %3281 = vmatprep.subr.bf16.mxu0 0
    %3282 = vmatpush1.bf16.msra.mxu0 0
    %3283 = vmatprep.subr.bf16.mxu0 0
    %3284 = vmatpush1.bf16.msra.mxu0 0
    %3285 = vmatprep.subr.bf16.mxu0 0
    %3286 = vmatpush1.bf16.msra.mxu0 0
    %3287 = vmatprep.subr.bf16.mxu0 0
    %3288 = vmatpush1.bf16.msra.mxu0 0
    %3289 = vmatprep.subr.bf16.mxu0 0
    %3290 = vmatpush1.bf16.msra.mxu0 0
    %3291 = vmatprep.subr.bf16.mxu0 0
    %3292 = vmatpush1.bf16.msra.mxu0 0
    %3293 = vmatprep.subr.bf16.mxu0 0
    %3294 = vmatpush1.bf16.msra.mxu0 0
    %3295 = vmatprep.subr.bf16.mxu0 0
    %3296 = vmatpush1.bf16.msra.mxu0 0
    %3297 = vmatprep.mubr.bf16.mxu0 0
    %3298 = vmatmul.mubr.bf16.gmra.mrb[0].mxu0 %v3194
    %v3299 = vpop.f32.mrb[0].mxu0
    %v3300 = vadd.f32 0.0, %v3299
    %v3301 = vpop.f32.mrb[0].mxu0
    %v3302 = vpop.f32.mrb[0].mxu0
    %v3303 = vadd.f32 0.0, %v3302
    %v3304 = vpop.f32.mrb[0].mxu0
    %3305 = vmatprep.mubr.bf16.mxu0 0
    %3306 = vmatmul.mubr.bf16.gmra.mrb[0].mxu0 %v3197
    %v3307 = vpop.f32.mrb[0].mxu0
    %v3308 = vadd.f32 0.0, %v3307
    %v3309 = vpop.f32.mrb[0].mxu0
    %v3310 = vpop.f32.mrb[0].mxu0
    %v3311 = vadd.f32 0.0, %v3310
    %v3312 = vpop.f32.mrb[0].mxu0
    %3313 = vdwg.mxu0
    %v3330 = vunpack.c.l.b16 %v3170
    %v3331 = vunpack.c.l.b16 %v3171
    %v3332 = vunpack.c.l.b16 %v3172
    %v3333 = vunpack.c.l.b16 %v3173
    %v3334 = vunpack.c.l.b16 %v3174
    %v3335 = vunpack.c.l.b16 %v3175
    %v3336 = vunpack.c.l.b16 %v3176
    %v3337 = vunpack.c.l.b16 %v3177
    %v3338 = vunpack.c.l.b16 %v3178
    %v3339 = vunpack.c.l.b16 %v3179
    %v3340 = vunpack.c.l.b16 %v3180
    %v3341 = vunpack.c.l.b16 %v3181
    %v3342 = vunpack.c.l.b16 %v3182
    %v3343 = vunpack.c.l.b16 %v3183
    %v3344 = vunpack.c.l.b16 %v3184
    %v3345 = vunpack.c.l.b16 %v3185
    %v3346 = vpack.c.b16 %v3331, %v3330
    %v3347 = vpack.c.b16 %v3333, %v3332
    %v3348 = vpack.c.b16 %v3335, %v3334
    %v3349 = vpack.c.b16 %v3337, %v3336
    %v3350 = vpack.c.b16 %v3339, %v3338
    %v3351 = vpack.c.b16 %v3341, %v3340
    %v3352 = vpack.c.b16 %v3343, %v3342
    %v3353 = vpack.c.b16 %v3345, %v3344
    %3362 = vmatprep.subr.bf16.mxu0 0
    %3363 = vmatpush1.bf16.msra.mxu0 %v3346
    %3364 = vmatprep.subr.bf16.mxu0 0
    %3365 = vmatpush1.bf16.msra.mxu0 %v3347
    %3366 = vmatprep.subr.bf16.mxu0 0
    %3367 = vmatpush1.bf16.msra.mxu0 %v3348
    %3368 = vmatprep.subr.bf16.mxu0 0
    %3369 = vmatpush1.bf16.msra.mxu0 %v3349
    %3370 = vmatprep.subr.bf16.mxu0 0
    %3371 = vmatpush1.bf16.msra.mxu0 %v3350
    %3372 = vmatprep.subr.bf16.mxu0 0
    %3373 = vmatpush1.bf16.msra.mxu0 %v3351
    %3374 = vmatprep.subr.bf16.mxu0 0
    %3375 = vmatpush1.bf16.msra.mxu0 %v3352
    %3376 = vmatprep.subr.bf16.mxu0 0
    %3377 = vmatpush1.bf16.msra.mxu0 %v3353
    %3378 = vmatprep.subr.bf16.mxu0 0
    %3379 = vmatpush1.bf16.msra.mxu0 0
    %3380 = vmatprep.subr.bf16.mxu0 0
    %3381 = vmatpush1.bf16.msra.mxu0 0
    %3382 = vmatprep.subr.bf16.mxu0 0
    %3383 = vmatpush1.bf16.msra.mxu0 0
    %3384 = vmatprep.subr.bf16.mxu0 0
    %3385 = vmatpush1.bf16.msra.mxu0 0
    %3386 = vmatprep.subr.bf16.mxu0 0
    %3387 = vmatpush1.bf16.msra.mxu0 0
    %3388 = vmatprep.subr.bf16.mxu0 0
    %3389 = vmatpush1.bf16.msra.mxu0 0
    %3390 = vmatprep.subr.bf16.mxu0 0
    %3391 = vmatpush1.bf16.msra.mxu0 0
    %3392 = vmatprep.subr.bf16.mxu0 0
    %3393 = vmatpush1.bf16.msra.mxu0 0
    %3394 = vmatprep.mubr.bf16.mxu0 0
    %3395 = vmatmul.mubr.bf16.gmra.mrb[0].mxu0 %v3150
    %v3396 = vpop.f32.mrb[0].mxu0
    %v3397 = vadd.f32 %v3300, %v3396
    %v3398 = vpop.f32.mrb[0].mxu0
    %v3399 = vpop.f32.mrb[0].mxu0
    %v3400 = vadd.f32 %v3303, %v3399
    %v3401 = vpop.f32.mrb[0].mxu0
    %3402 = vmatprep.mubr.bf16.mxu0 0
    %3403 = vmatmul.mubr.bf16.gmra.mrb[0].mxu0 %v3167
    %v3404 = vpop.f32.mrb[0].mxu0
    %v3405 = vadd.f32 %v3308, %v3404
    %v3406 = vpop.f32.mrb[0].mxu0
    %v3407 = vpop.f32.mrb[0].mxu0
    %v3408 = vadd.f32 %v3311, %v3407
    %v3409 = vpop.f32.mrb[0].mxu0
    %3410 = vdwg.mxu0
    %v3411 = vld [vmem:[#allocation2 + $0x8] sm:$0xf]
    %v3412 = vld [vmem:[#allocation2 + $0x18] sm:$0xf]
    %v3414 = vshrl.u32 %v3186, 16
    %v3416 = vrot.slane %v3414, 3
    %v3417 = vshll.u32 %v3186, 16
    %v3419 = vrot.slane %v3417, 4
    %v3420 = vor.u32 %v3416, %v3419
    %v3422 = vshrl.u32 %v3411, 16
    %v3424 = vrot.slane %v3422, 3
    %v3425 = vshll.u32 %v3411, 16
    %v3427 = vrot.slane %v3425, 4
    %v3428 = vor.u32 %v3424, %v3427
    %v3429 = vsel %vm867, %v3420, %v3428
    %v3431 = vshrl.u32 %v3187, 16
    %v3433 = vrot.slane %v3431, 3
    %v3434 = vshll.u32 %v3187, 16
    %v3436 = vrot.slane %v3434, 4
    %v3437 = vor.u32 %v3433, %v3436
    %v3439 = vshrl.u32 %v3412, 16
    %v3441 = vrot.slane %v3439, 3
    %v3442 = vshll.u32 %v3412, 16
    %v3444 = vrot.slane %v3442, 4
    %v3445 = vor.u32 %v3441, %v3444
    %v3446 = vsel %vm867, %v3437, %v3445
    %s3449 = scalar_lea.vmem [#allocation24], 128
    %v3450 = vld [vmem:[%s3449] sm:$0xf]
    %v3451 = vld [vmem:[%s3449 + $0x4] sm:$0xf]
    %v3452 = vld [vmem:[%s3449 + $0x8] sm:$0xf]
    %v3453 = vld [vmem:[%s3449 + $0xc] sm:$0xf]
    %v3454 = vld [vmem:[%s3449 + $0x10] sm:$0xf]
    %v3455 = vld [vmem:[%s3449 + $0x14] sm:$0xf]
    %v3456 = vld [vmem:[%s3449 + $0x18] sm:$0xf]
    %v3457 = vld [vmem:[%s3449 + $0x1c] sm:$0xf]
    %v3458 = vld [vmem:[%s3449 + $0x20] sm:$0xf]
    %v3459 = vld [vmem:[%s3449 + $0x24] sm:$0xf]
    %v3460 = vld [vmem:[%s3449 + $0x28] sm:$0xf]
    %v3461 = vld [vmem:[%s3449 + $0x2c] sm:$0xf]
    %v3462 = vld [vmem:[%s3449 + $0x30] sm:$0xf]
    %v3463 = vld [vmem:[%s3449 + $0x34] sm:$0xf]
    %v3464 = vld [vmem:[%s3449 + $0x38] sm:$0xf]
    %v3465 = vld [vmem:[%s3449 + $0x3c] sm:$0xf]
    %v3482 = vunpack.c.l.b16 %v3450
    %v3483 = vunpack.c.l.b16 %v3451
    %v3484 = vunpack.c.l.b16 %v3452
    %v3485 = vunpack.c.l.b16 %v3453
    %v3486 = vunpack.c.l.b16 %v3454
    %v3487 = vunpack.c.l.b16 %v3455
    %v3488 = vunpack.c.l.b16 %v3456
    %v3489 = vunpack.c.l.b16 %v3457
    %v3490 = vunpack.c.l.b16 %v3458
    %v3491 = vunpack.c.l.b16 %v3459
    %v3492 = vunpack.c.l.b16 %v3460
    %v3493 = vunpack.c.l.b16 %v3461
    %v3494 = vunpack.c.l.b16 %v3462
    %v3495 = vunpack.c.l.b16 %v3463
    %v3496 = vunpack.c.l.b16 %v3464
    %v3497 = vunpack.c.l.b16 %v3465
    %v3498 = vpack.c.b16 %v3483, %v3482
    %v3499 = vpack.c.b16 %v3485, %v3484
    %v3500 = vpack.c.b16 %v3487, %v3486
    %v3501 = vpack.c.b16 %v3489, %v3488
    %v3502 = vpack.c.b16 %v3491, %v3490
    %v3503 = vpack.c.b16 %v3493, %v3492
    %v3504 = vpack.c.b16 %v3495, %v3494
    %v3505 = vpack.c.b16 %v3497, %v3496
    %3514 = vmatprep.subr.bf16.mxu0 0
    %3515 = vmatpush1.bf16.msra.mxu0 %v3498
    %3516 = vmatprep.subr.bf16.mxu0 0
    %3517 = vmatpush1.bf16.msra.mxu0 %v3499
    %3518 = vmatprep.subr.bf16.mxu0 0
    %3519 = vmatpush1.bf16.msra.mxu0 %v3500
    %3520 = vmatprep.subr.bf16.mxu0 0
    %3521 = vmatpush1.bf16.msra.mxu0 %v3501
    %3522 = vmatprep.subr.bf16.mxu0 0
    %3523 = vmatpush1.bf16.msra.mxu0 %v3502
    %3524 = vmatprep.subr.bf16.mxu0 0
    %3525 = vmatpush1.bf16.msra.mxu0 %v3503
    %3526 = vmatprep.subr.bf16.mxu0 0
    %3527 = vmatpush1.bf16.msra.mxu0 %v3504
    %3528 = vmatprep.subr.bf16.mxu0 0
    %3529 = vmatpush1.bf16.msra.mxu0 %v3505
    %3530 = vmatprep.subr.bf16.mxu0 0
    %3531 = vmatpush1.bf16.msra.mxu0 0
    %3532 = vmatprep.subr.bf16.mxu0 0
    %3533 = vmatpush1.bf16.msra.mxu0 0
    %3534 = vmatprep.subr.bf16.mxu0 0
    %3535 = vmatpush1.bf16.msra.mxu0 0
    %3536 = vmatprep.subr.bf16.mxu0 0
    %3537 = vmatpush1.bf16.msra.mxu0 0
    %3538 = vmatprep.subr.bf16.mxu0 0
    %3539 = vmatpush1.bf16.msra.mxu0 0
    %3540 = vmatprep.subr.bf16.mxu0 0
    %3541 = vmatpush1.bf16.msra.mxu0 0
    %3542 = vmatprep.subr.bf16.mxu0 0
    %3543 = vmatpush1.bf16.msra.mxu0 0
    %3544 = vmatprep.subr.bf16.mxu0 0
    %3545 = vmatpush1.bf16.msra.mxu0 0
    %3546 = vmatprep.mubr.bf16.mxu0 0
    %3547 = vmatmul.mubr.bf16.gmra.mrb[0].mxu0 %v3429
    %v3548 = vpop.f32.mrb[0].mxu0
    %v3549 = vadd.f32 0.0, %v3548
    %v3550 = vpop.f32.mrb[0].mxu0
    %v3551 = vpop.f32.mrb[0].mxu0
    %v3552 = vadd.f32 0.0, %v3551
    %v3553 = vpop.f32.mrb[0].mxu0
    %3554 = vmatprep.mubr.bf16.mxu0 0
    %3555 = vmatmul.mubr.bf16.gmra.mrb[0].mxu0 %v3446
    %v3556 = vpop.f32.mrb[0].mxu0
    %v3557 = vadd.f32 0.0, %v3556
    %v3558 = vpop.f32.mrb[0].mxu0
    %v3559 = vpop.f32.mrb[0].mxu0
    %v3560 = vadd.f32 0.0, %v3559
    %v3561 = vpop.f32.mrb[0].mxu0
    %3562 = vdwg.mxu0
    %v3563 = vadd.f32 %v3397, %v3549
    %v3564 = vadd.f32 %v3400, %v3552
    %v3565 = vadd.f32 %v3405, %v3557
    %v3566 = vadd.f32 %v3408, %v3560
    %v3567 = vld [vmem:[#allocation2] sm:$0xf0]
    %v3568 = vld [vmem:[#allocation2 + $0x10] sm:$0xf0]
    %v3573 = vrot.slane %v3567, 4
    %v3574 = vrot.slane %v3411, 4
    %v3575 = vsel %vm1028, %v3573, %v3574
    %v3576 = vrot.slane %v3568, 4
    %v3577 = vrot.slane %v3412, 4
    %v3578 = vsel %vm1028, %v3576, %v3577
    %s3581 = scalar_lea.vmem [#allocation24], 192
    %v3582 = vld [vmem:[%s3581] sm:$0xf]
    %v3583 = vld [vmem:[%s3581 + $0x4] sm:$0xf]
    %v3584 = vld [vmem:[%s3581 + $0x8] sm:$0xf]
    %v3585 = vld [vmem:[%s3581 + $0xc] sm:$0xf]
    %v3586 = vld [vmem:[%s3581 + $0x10] sm:$0xf]
    %v3587 = vld [vmem:[%s3581 + $0x14] sm:$0xf]
    %v3588 = vld [vmem:[%s3581 + $0x18] sm:$0xf]
    %v3589 = vld [vmem:[%s3581 + $0x1c] sm:$0xf]
    %v3590 = vld [vmem:[%s3581 + $0x20] sm:$0xf]
    %v3591 = vld [vmem:[%s3581 + $0x24] sm:$0xf]
    %v3592 = vld [vmem:[%s3581 + $0x28] sm:$0xf]
    %v3593 = vld [vmem:[%s3581 + $0x2c] sm:$0xf]
    %v3594 = vld [vmem:[%s3581 + $0x30] sm:$0xf]
    %v3595 = vld [vmem:[%s3581 + $0x34] sm:$0xf]
    %v3596 = vld [vmem:[%s3581 + $0x38] sm:$0xf]
    %v3597 = vld [vmem:[%s3581 + $0x3c] sm:$0xf]
    %v3614 = vunpack.c.l.b16 %v3582
    %v3615 = vunpack.c.l.b16 %v3583
    %v3616 = vunpack.c.l.b16 %v3584
    %v3617 = vunpack.c.l.b16 %v3585
    %v3618 = vunpack.c.l.b16 %v3586
    %v3619 = vunpack.c.l.b16 %v3587
    %v3620 = vunpack.c.l.b16 %v3588
    %v3621 = vunpack.c.l.b16 %v3589
    %v3622 = vunpack.c.l.b16 %v3590
    %v3623 = vunpack.c.l.b16 %v3591
    %v3624 = vunpack.c.l.b16 %v3592
    %v3625 = vunpack.c.l.b16 %v3593
    %v3626 = vunpack.c.l.b16 %v3594
    %v3627 = vunpack.c.l.b16 %v3595
    %v3628 = vunpack.c.l.b16 %v3596
    %v3629 = vunpack.c.l.b16 %v3597
    %v3630 = vpack.c.b16 %v3615, %v3614
    %v3631 = vpack.c.b16 %v3617, %v3616
    %v3632 = vpack.c.b16 %v3619, %v3618
    %v3633 = vpack.c.b16 %v3621, %v3620
    %v3634 = vpack.c.b16 %v3623, %v3622
    %v3635 = vpack.c.b16 %v3625, %v3624
    %v3636 = vpack.c.b16 %v3627, %v3626
    %v3637 = vpack.c.b16 %v3629, %v3628
    %3646 = vmatprep.subr.bf16.mxu0 0
    %3647 = vmatpush1.bf16.msra.mxu0 %v3630
    %3648 = vmatprep.subr.bf16.mxu0 0
    %3649 = vmatpush1.bf16.msra.mxu0 %v3631
    %3650 = vmatprep.subr.bf16.mxu0 0
    %3651 = vmatpush1.bf16.msra.mxu0 %v3632
    %3652 = vmatprep.subr.bf16.mxu0 0
    %3653 = vmatpush1.bf16.msra.mxu0 %v3633
    %3654 = vmatprep.subr.bf16.mxu0 0
    %3655 = vmatpush1.bf16.msra.mxu0 %v3634
    %3656 = vmatprep.subr.bf16.mxu0 0
    %3657 = vmatpush1.bf16.msra.mxu0 %v3635
    %3658 = vmatprep.subr.bf16.mxu0 0
    %3659 = vmatpush1.bf16.msra.mxu0 %v3636
    %3660 = vmatprep.subr.bf16.mxu0 0
    %3661 = vmatpush1.bf16.msra.mxu0 %v3637
    %3662 = vmatprep.subr.bf16.mxu0 0
    %3663 = vmatpush1.bf16.msra.mxu0 0
    %3664 = vmatprep.subr.bf16.mxu0 0
    %3665 = vmatpush1.bf16.msra.mxu0 0
    %3666 = vmatprep.subr.bf16.mxu0 0
    %3667 = vmatpush1.bf16.msra.mxu0 0
    %3668 = vmatprep.subr.bf16.mxu0 0
    %3669 = vmatpush1.bf16.msra.mxu0 0
    %3670 = vmatprep.subr.bf16.mxu0 0
    %3671 = vmatpush1.bf16.msra.mxu0 0
    %3672 = vmatprep.subr.bf16.mxu0 0
    %3673 = vmatpush1.bf16.msra.mxu0 0
    %3674 = vmatprep.subr.bf16.mxu0 0
    %3675 = vmatpush1.bf16.msra.mxu0 0
    %3676 = vmatprep.subr.bf16.mxu0 0
    %3677 = vmatpush1.bf16.msra.mxu0 0
    %3678 = vmatprep.mubr.bf16.mxu0 0
    %3679 = vmatmul.mubr.bf16.gmra.mrb[0].mxu0 %v3575
    %v3680 = vpop.f32.mrb[0].mxu0
    %v3681 = vadd.f32 0.0, %v3680
    %v3682 = vpop.f32.mrb[0].mxu0
    %v3683 = vpop.f32.mrb[0].mxu0
    %v3684 = vadd.f32 0.0, %v3683
    %v3685 = vpop.f32.mrb[0].mxu0
    %3686 = vmatprep.mubr.bf16.mxu0 0
    %3687 = vmatmul.mubr.bf16.gmra.mrb[0].mxu0 %v3578
    %v3688 = vpop.f32.mrb[0].mxu0
    %v3689 = vadd.f32 0.0, %v3688
    %v3690 = vpop.f32.mrb[0].mxu0
    %v3691 = vpop.f32.mrb[0].mxu0
    %v3692 = vadd.f32 0.0, %v3691
    %v3693 = vpop.f32.mrb[0].mxu0
    %3694 = vdwg.mxu0
    %v3695 = vadd.f32 %v3563, %v3681
    %v3696 = vadd.f32 %v3564, %v3684
    %v3697 = vadd.f32 %v3565, %v3689
    %v3698 = vadd.f32 %v3566, %v3692
    %v3699 = vld [vmem:[#allocation2 + $0x8] sm:$0x1f]
    %v3700 = vld [vmem:[#allocation2 + $0x18] sm:$0x1f]
    %v3702 = vshrl.u32 %v3567, 16
    %v3704 = vrot.slane %v3702, 4
    %v3705 = vshll.u32 %v3567, 16
    %v3707 = vrot.slane %v3705, 5
    %v3708 = vor.u32 %v3704, %v3707
    %v3710 = vshrl.u32 %v3699, 16
    %v3712 = vrot.slane %v3710, 4
    %v3713 = vshll.u32 %v3699, 16
    %v3715 = vrot.slane %v3713, 5
    %v3716 = vor.u32 %v3712, %v3715
    %v3717 = vsel %vm1157, %v3708, %v3716
    %v3719 = vshrl.u32 %v3568, 16
    %v3721 = vrot.slane %v3719, 4
    %v3722 = vshll.u32 %v3568, 16
    %v3724 = vrot.slane %v3722, 5
    %v3725 = vor.u32 %v3721, %v3724
    %v3727 = vshrl.u32 %v3700, 16
    %v3729 = vrot.slane %v3727, 4
    %v3730 = vshll.u32 %v3700, 16
    %v3732 = vrot.slane %v3730, 5
    %v3733 = vor.u32 %v3729, %v3732
    %v3734 = vsel %vm1157, %v3725, %v3733
    %s3737 = scalar_lea.vmem [#allocation24], 256
    %v3738 = vld [vmem:[%s3737] sm:$0xf]
    %v3739 = vld [vmem:[%s3737 + $0x4] sm:$0xf]
    %v3740 = vld [vmem:[%s3737 + $0x8] sm:$0xf]
    %v3741 = vld [vmem:[%s3737 + $0xc] sm:$0xf]
    %v3742 = vld [vmem:[%s3737 + $0x10] sm:$0xf]
    %v3743 = vld [vmem:[%s3737 + $0x14] sm:$0xf]
    %v3744 = vld [vmem:[%s3737 + $0x18] sm:$0xf]
    %v3745 = vld [vmem:[%s3737 + $0x1c] sm:$0xf]
    %v3746 = vld [vmem:[%s3737 + $0x20] sm:$0xf]
    %v3747 = vld [vmem:[%s3737 + $0x24] sm:$0xf]
    %v3748 = vld [vmem:[%s3737 + $0x28] sm:$0xf]
    %v3749 = vld [vmem:[%s3737 + $0x2c] sm:$0xf]
    %v3750 = vld [vmem:[%s3737 + $0x30] sm:$0xf]
    %v3751 = vld [vmem:[%s3737 + $0x34] sm:$0xf]
    %v3752 = vld [vmem:[%s3737 + $0x38] sm:$0xf]
    %v3753 = vld [vmem:[%s3737 + $0x3c] sm:$0xf]
    %v3770 = vunpack.c.l.b16 %v3738
    %v3771 = vunpack.c.l.b16 %v3739
    %v3772 = vunpack.c.l.b16 %v3740
    %v3773 = vunpack.c.l.b16 %v3741
    %v3774 = vunpack.c.l.b16 %v3742
    %v3775 = vunpack.c.l.b16 %v3743
    %v3776 = vunpack.c.l.b16 %v3744
    %v3777 = vunpack.c.l.b16 %v3745
    %v3778 = vunpack.c.l.b16 %v3746
    %v3779 = vunpack.c.l.b16 %v3747
    %v3780 = vunpack.c.l.b16 %v3748
    %v3781 = vunpack.c.l.b16 %v3749
    %v3782 = vunpack.c.l.b16 %v3750
    %v3783 = vunpack.c.l.b16 %v3751
    %v3784 = vunpack.c.l.b16 %v3752
    %v3785 = vunpack.c.l.b16 %v3753
    %v3786 = vpack.c.b16 %v3771, %v3770
    %v3787 = vpack.c.b16 %v3773, %v3772
    %v3788 = vpack.c.b16 %v3775, %v3774
    %v3789 = vpack.c.b16 %v3777, %v3776
    %v3790 = vpack.c.b16 %v3779, %v3778
    %v3791 = vpack.c.b16 %v3781, %v3780
    %v3792 = vpack.c.b16 %v3783, %v3782
    %v3793 = vpack.c.b16 %v3785, %v3784
    %3802 = vmatprep.subr.bf16.mxu0 0
    %3803 = vmatpush1.bf16.msra.mxu0 %v3786
    %3804 = vmatprep.subr.bf16.mxu0 0
    %3805 = vmatpush1.bf16.msra.mxu0 %v3787
    %3806 = vmatprep.subr.bf16.mxu0 0
    %3807 = vmatpush1.bf16.msra.mxu0 %v3788
    %3808 = vmatprep.subr.bf16.mxu0 0
    %3809 = vmatpush1.bf16.msra.mxu0 %v3789
    %3810 = vmatprep.subr.bf16.mxu0 0
    %3811 = vmatpush1.bf16.msra.mxu0 %v3790
    %3812 = vmatprep.subr.bf16.mxu0 0
    %3813 = vmatpush1.bf16.msra.mxu0 %v3791
    %3814 = vmatprep.subr.bf16.mxu0 0
    %3815 = vmatpush1.bf16.msra.mxu0 %v3792
    %3816 = vmatprep.subr.bf16.mxu0 0
    %3817 = vmatpush1.bf16.msra.mxu0 %v3793
    %3818 = vmatprep.subr.bf16.mxu0 0
    %3819 = vmatpush1.bf16.msra.mxu0 0
    %3820 = vmatprep.subr.bf16.mxu0 0
    %3821 = vmatpush1.bf16.msra.mxu0 0
    %3822 = vmatprep.subr.bf16.mxu0 0
    %3823 = vmatpush1.bf16.msra.mxu0 0
    %3824 = vmatprep.subr.bf16.mxu0 0
    %3825 = vmatpush1.bf16.msra.mxu0 0
    %3826 = vmatprep.subr.bf16.mxu0 0
    %3827 = vmatpush1.bf16.msra.mxu0 0
    %3828 = vmatprep.subr.bf16.mxu0 0
    %3829 = vmatpush1.bf16.msra.mxu0 0
    %3830 = vmatprep.subr.bf16.mxu0 0
    %3831 = vmatpush1.bf16.msra.mxu0 0
    %3832 = vmatprep.subr.bf16.mxu0 0
    %3833 = vmatpush1.bf16.msra.mxu0 0
    %3834 = vmatprep.mubr.bf16.mxu0 0
    %3835 = vmatmul.mubr.bf16.gmra.mrb[0].mxu0 %v3717
    %v3836 = vpop.f32.mrb[0].mxu0
    %v3837 = vadd.f32 0.0, %v3836
    %v3838 = vpop.f32.mrb[0].mxu0
    %v3839 = vpop.f32.mrb[0].mxu0
    %v3840 = vadd.f32 0.0, %v3839
    %v3841 = vpop.f32.mrb[0].mxu0
    %3842 = vmatprep.mubr.bf16.mxu0 0
    %3843 = vmatmul.mubr.bf16.gmra.mrb[0].mxu0 %v3734
    %v3844 = vpop.f32.mrb[0].mxu0
    %v3845 = vadd.f32 0.0, %v3844
    %v3846 = vpop.f32.mrb[0].mxu0
    %v3847 = vpop.f32.mrb[0].mxu0
    %v3848 = vadd.f32 0.0, %v3847
    %v3849 = vpop.f32.mrb[0].mxu0
    %3850 = vdwg.mxu0
    %v3851 = vadd.f32 %v3695, %v3837
    %v3852 = vadd.f32 %v3696, %v3840
    %v3853 = vadd.f32 %v3697, %v3845
    %v3854 = vadd.f32 %v3698, %v3848
    %v3855 = vld [vmem:[#allocation2] sm:$0xe0]
    %v3856 = vld [vmem:[#allocation2 + $0x10] sm:$0xe0]
    %v3861 = vrot.slane %v3855, 5
    %v3862 = vrot.slane %v3699, 5
    %v3863 = vsel %vm1318, %v3861, %v3862
    %v3864 = vrot.slane %v3856, 5
    %v3865 = vrot.slane %v3700, 5
    %v3866 = vsel %vm1318, %v3864, %v3865
    %s3869 = scalar_lea.vmem [#allocation24], 320
    %v3870 = vld [vmem:[%s3869] sm:$0xf]
    %v3871 = vld [vmem:[%s3869 + $0x4] sm:$0xf]
    %v3872 = vld [vmem:[%s3869 + $0x8] sm:$0xf]
    %v3873 = vld [vmem:[%s3869 + $0xc] sm:$0xf]
    %v3874 = vld [vmem:[%s3869 + $0x10] sm:$0xf]
    %v3875 = vld [vmem:[%s3869 + $0x14] sm:$0xf]
    %v3876 = vld [vmem:[%s3869 + $0x18] sm:$0xf]
    %v3877 = vld [vmem:[%s3869 + $0x1c] sm:$0xf]
    %v3878 = vld [vmem:[%s3869 + $0x20] sm:$0xf]
    %v3879 = vld [vmem:[%s3869 + $0x24] sm:$0xf]
    %v3880 = vld [vmem:[%s3869 + $0x28] sm:$0xf]
    %v3881 = vld [vmem:[%s3869 + $0x2c] sm:$0xf]
    %v3882 = vld [vmem:[%s3869 + $0x30] sm:$0xf]
    %v3883 = vld [vmem:[%s3869 + $0x34] sm:$0xf]
    %v3884 = vld [vmem:[%s3869 + $0x38] sm:$0xf]
    %v3885 = vld [vmem:[%s3869 + $0x3c] sm:$0xf]
    %v3902 = vunpack.c.l.b16 %v3870
    %v3903 = vunpack.c.l.b16 %v3871
    %v3904 = vunpack.c.l.b16 %v3872
    %v3905 = vunpack.c.l.b16 %v3873
    %v3906 = vunpack.c.l.b16 %v3874
    %v3907 = vunpack.c.l.b16 %v3875
    %v3908 = vunpack.c.l.b16 %v3876
    %v3909 = vunpack.c.l.b16 %v3877
    %v3910 = vunpack.c.l.b16 %v3878
    %v3911 = vunpack.c.l.b16 %v3879
    %v3912 = vunpack.c.l.b16 %v3880
    %v3913 = vunpack.c.l.b16 %v3881
    %v3914 = vunpack.c.l.b16 %v3882
    %v3915 = vunpack.c.l.b16 %v3883
    %v3916 = vunpack.c.l.b16 %v3884
    %v3917 = vunpack.c.l.b16 %v3885
    %v3918 = vpack.c.b16 %v3903, %v3902
    %v3919 = vpack.c.b16 %v3905, %v3904
    %v3920 = vpack.c.b16 %v3907, %v3906
    %v3921 = vpack.c.b16 %v3909, %v3908
    %v3922 = vpack.c.b16 %v3911, %v3910
    %v3923 = vpack.c.b16 %v3913, %v3912
    %v3924 = vpack.c.b16 %v3915, %v3914
    %v3925 = vpack.c.b16 %v3917, %v3916
    %3934 = vmatprep.subr.bf16.mxu0 0
    %3935 = vmatpush1.bf16.msra.mxu0 %v3918
    %3936 = vmatprep.subr.bf16.mxu0 0
    %3937 = vmatpush1.bf16.msra.mxu0 %v3919
    %3938 = vmatprep.subr.bf16.mxu0 0
    %3939 = vmatpush1.bf16.msra.mxu0 %v3920
    %3940 = vmatprep.subr.bf16.mxu0 0
    %3941 = vmatpush1.bf16.msra.mxu0 %v3921
    %3942 = vmatprep.subr.bf16.mxu0 0
    %3943 = vmatpush1.bf16.msra.mxu0 %v3922
    %3944 = vmatprep.subr.bf16.mxu0 0
    %3945 = vmatpush1.bf16.msra.mxu0 %v3923
    %3946 = vmatprep.subr.bf16.mxu0 0
    %3947 = vmatpush1.bf16.msra.mxu0 %v3924
    %3948 = vmatprep.subr.bf16.mxu0 0
    %3949 = vmatpush1.bf16.msra.mxu0 %v3925
    %3950 = vmatprep.subr.bf16.mxu0 0
    %3951 = vmatpush1.bf16.msra.mxu0 0
    %3952 = vmatprep.subr.bf16.mxu0 0
    %3953 = vmatpush1.bf16.msra.mxu0 0
    %3954 = vmatprep.subr.bf16.mxu0 0
    %3955 = vmatpush1.bf16.msra.mxu0 0
    %3956 = vmatprep.subr.bf16.mxu0 0
    %3957 = vmatpush1.bf16.msra.mxu0 0
    %3958 = vmatprep.subr.bf16.mxu0 0
    %3959 = vmatpush1.bf16.msra.mxu0 0
    %3960 = vmatprep.subr.bf16.mxu0 0
    %3961 = vmatpush1.bf16.msra.mxu0 0
    %3962 = vmatprep.subr.bf16.mxu0 0
    %3963 = vmatpush1.bf16.msra.mxu0 0
    %3964 = vmatprep.subr.bf16.mxu0 0
    %3965 = vmatpush1.bf16.msra.mxu0 0
    %3966 = vmatprep.mubr.bf16.mxu0 0
    %3967 = vmatmul.mubr.bf16.gmra.mrb[0].mxu0 %v3863
    %v3968 = vpop.f32.mrb[0].mxu0
    %v3969 = vadd.f32 0.0, %v3968
    %v3970 = vpop.f32.mrb[0].mxu0
    %v3971 = vpop.f32.mrb[0].mxu0
    %v3972 = vadd.f32 0.0, %v3971
    %v3973 = vpop.f32.mrb[0].mxu0
    %3974 = vmatprep.mubr.bf16.mxu0 0
    %3975 = vmatmul.mubr.bf16.gmra.mrb[0].mxu0 %v3866
    %v3976 = vpop.f32.mrb[0].mxu0
    %v3977 = vadd.f32 0.0, %v3976
    %v3978 = vpop.f32.mrb[0].mxu0
    %v3979 = vpop.f32.mrb[0].mxu0
    %v3980 = vadd.f32 0.0, %v3979
    %v3981 = vpop.f32.mrb[0].mxu0
    %3982 = vdwg.mxu0
    %v3983 = vadd.f32 %v3851, %v3969
    %v3984 = vadd.f32 %v3852, %v3972
    %v3985 = vadd.f32 %v3853, %v3977
    %v3986 = vadd.f32 %v3854, %v3980
    %v3987 = vld [vmem:[#allocation2 + $0x8] sm:$0x3f]
    %v3988 = vld [vmem:[#allocation2 + $0x18] sm:$0x3f]
    %v3990 = vshrl.u32 %v3855, 16
    %v3992 = vrot.slane %v3990, 5
    %v3993 = vshll.u32 %v3855, 16
    %v3995 = vrot.slane %v3993, 6
    %v3996 = vor.u32 %v3992, %v3995
    %v3998 = vshrl.u32 %v3987, 16
    %v4000 = vrot.slane %v3998, 5
    %v4001 = vshll.u32 %v3987, 16
    %v4003 = vrot.slane %v4001, 6
    %v4004 = vor.u32 %v4000, %v4003
    %v4005 = vsel %vm1447, %v3996, %v4004
    %v4007 = vshrl.u32 %v3856, 16
    %v4009 = vrot.slane %v4007, 5
    %v4010 = vshll.u32 %v3856, 16
    %v4012 = vrot.slane %v4010, 6
    %v4013 = vor.u32 %v4009, %v4012
    %v4015 = vshrl.u32 %v3988, 16
    %v4017 = vrot.slane %v4015, 5
    %v4018 = vshll.u32 %v3988, 16
    %v4020 = vrot.slane %v4018, 6
    %v4021 = vor.u32 %v4017, %v4020
    %v4022 = vsel %vm1447, %v4013, %v4021
    %s4025 = scalar_lea.vmem [#allocation24], 384
    %v4026 = vld [vmem:[%s4025] sm:$0xf]
    %v4027 = vld [vmem:[%s4025 + $0x4] sm:$0xf]
    %v4028 = vld [vmem:[%s4025 + $0x8] sm:$0xf]
    %v4029 = vld [vmem:[%s4025 + $0xc] sm:$0xf]
    %v4030 = vld [vmem:[%s4025 + $0x10] sm:$0xf]
    %v4031 = vld [vmem:[%s4025 + $0x14] sm:$0xf]
    %v4032 = vld [vmem:[%s4025 + $0x18] sm:$0xf]
    %v4033 = vld [vmem:[%s4025 + $0x1c] sm:$0xf]
    %v4034 = vld [vmem:[%s4025 + $0x20] sm:$0xf]
    %v4035 = vld [vmem:[%s4025 + $0x24] sm:$0xf]
    %v4036 = vld [vmem:[%s4025 + $0x28] sm:$0xf]
    %v4037 = vld [vmem:[%s4025 + $0x2c] sm:$0xf]
    %v4038 = vld [vmem:[%s4025 + $0x30] sm:$0xf]
    %v4039 = vld [vmem:[%s4025 + $0x34] sm:$0xf]
    %v4040 = vld [vmem:[%s4025 + $0x38] sm:$0xf]
    %v4041 = vld [vmem:[%s4025 + $0x3c] sm:$0xf]
    %v4058 = vunpack.c.l.b16 %v4026
    %v4059 = vunpack.c.l.b16 %v4027
    %v4060 = vunpack.c.l.b16 %v4028
    %v4061 = vunpack.c.l.b16 %v4029
    %v4062 = vunpack.c.l.b16 %v4030
    %v4063 = vunpack.c.l.b16 %v4031
    %v4064 = vunpack.c.l.b16 %v4032
    %v4065 = vunpack.c.l.b16 %v4033
    %v4066 = vunpack.c.l.b16 %v4034
    %v4067 = vunpack.c.l.b16 %v4035
    %v4068 = vunpack.c.l.b16 %v4036
    %v4069 = vunpack.c.l.b16 %v4037
    %v4070 = vunpack.c.l.b16 %v4038
    %v4071 = vunpack.c.l.b16 %v4039
    %v4072 = vunpack.c.l.b16 %v4040
    %v4073 = vunpack.c.l.b16 %v4041
    %v4074 = vpack.c.b16 %v4059, %v4058
    %v4075 = vpack.c.b16 %v4061, %v4060
    %v4076 = vpack.c.b16 %v4063, %v4062
    %v4077 = vpack.c.b16 %v4065, %v4064
    %v4078 = vpack.c.b16 %v4067, %v4066
    %v4079 = vpack.c.b16 %v4069, %v4068
    %v4080 = vpack.c.b16 %v4071, %v4070
    %v4081 = vpack.c.b16 %v4073, %v4072
    %4090 = vmatprep.subr.bf16.mxu0 0
    %4091 = vmatpush1.bf16.msra.mxu0 %v4074
    %4092 = vmatprep.subr.bf16.mxu0 0
    %4093 = vmatpush1.bf16.msra.mxu0 %v4075
    %4094 = vmatprep.subr.bf16.mxu0 0
    %4095 = vmatpush1.bf16.msra.mxu0 %v4076
    %4096 = vmatprep.subr.bf16.mxu0 0
    %4097 = vmatpush1.bf16.msra.mxu0 %v4077
    %4098 = vmatprep.subr.bf16.mxu0 0
    %4099 = vmatpush1.bf16.msra.mxu0 %v4078
    %4100 = vmatprep.subr.bf16.mxu0 0
    %4101 = vmatpush1.bf16.msra.mxu0 %v4079
    %4102 = vmatprep.subr.bf16.mxu0 0
    %4103 = vmatpush1.bf16.msra.mxu0 %v4080
    %4104 = vmatprep.subr.bf16.mxu0 0
    %4105 = vmatpush1.bf16.msra.mxu0 %v4081
    %4106 = vmatprep.subr.bf16.mxu0 0
    %4107 = vmatpush1.bf16.msra.mxu0 0
    %4108 = vmatprep.subr.bf16.mxu0 0
    %4109 = vmatpush1.bf16.msra.mxu0 0
    %4110 = vmatprep.subr.bf16.mxu0 0
    %4111 = vmatpush1.bf16.msra.mxu0 0
    %4112 = vmatprep.subr.bf16.mxu0 0
    %4113 = vmatpush1.bf16.msra.mxu0 0
    %4114 = vmatprep.subr.bf16.mxu0 0
    %4115 = vmatpush1.bf16.msra.mxu0 0
    %4116 = vmatprep.subr.bf16.mxu0 0
    %4117 = vmatpush1.bf16.msra.mxu0 0
    %4118 = vmatprep.subr.bf16.mxu0 0
    %4119 = vmatpush1.bf16.msra.mxu0 0
    %4120 = vmatprep.subr.bf16.mxu0 0
    %4121 = vmatpush1.bf16.msra.mxu0 0
    %4122 = vmatprep.mubr.bf16.mxu0 0
    %4123 = vmatmul.mubr.bf16.gmra.mrb[0].mxu0 %v4005
    %v4124 = vpop.f32.mrb[0].mxu0
    %v4125 = vadd.f32 0.0, %v4124
    %v4126 = vpop.f32.mrb[0].mxu0
    %v4127 = vpop.f32.mrb[0].mxu0
    %v4128 = vadd.f32 0.0, %v4127
    %v4129 = vpop.f32.mrb[0].mxu0
    %4130 = vmatprep.mubr.bf16.mxu0 0
    %4131 = vmatmul.mubr.bf16.gmra.mrb[0].mxu0 %v4022
    %v4132 = vpop.f32.mrb[0].mxu0
    %v4133 = vadd.f32 0.0, %v4132
    %v4134 = vpop.f32.mrb[0].mxu0
    %v4135 = vpop.f32.mrb[0].mxu0
    %v4136 = vadd.f32 0.0, %v4135
    %v4137 = vpop.f32.mrb[0].mxu0
    %4138 = vdwg.mxu0
    %v4139 = vadd.f32 %v3983, %v4125
    %v4140 = vadd.f32 %v3984, %v4128
    %v4141 = vadd.f32 %v3985, %v4133
    %v4142 = vadd.f32 %v3986, %v4136
    %v4143 = vld [vmem:[#allocation2] sm:$0xc0]
    %v4144 = vld [vmem:[#allocation2 + $0x10] sm:$0xc0]
    %v4149 = vrot.slane %v4143, 6
    %v4150 = vrot.slane %v3987, 6
    %v4151 = vsel %vm1608, %v4149, %v4150
    %v4152 = vrot.slane %v4144, 6
    %v4153 = vrot.slane %v3988, 6
    %v4154 = vsel %vm1608, %v4152, %v4153
    %s4157 = scalar_lea.vmem [#allocation24], 448
    %v4158 = vld [vmem:[%s4157] sm:$0xf]
    %v4159 = vld [vmem:[%s4157 + $0x4] sm:$0xf]
    %v4160 = vld [vmem:[%s4157 + $0x8] sm:$0xf]
    %v4161 = vld [vmem:[%s4157 + $0xc] sm:$0xf]
    %v4162 = vld [vmem:[%s4157 + $0x10] sm:$0xf]
    %v4163 = vld [vmem:[%s4157 + $0x14] sm:$0xf]
    %v4164 = vld [vmem:[%s4157 + $0x18] sm:$0xf]
    %v4165 = vld [vmem:[%s4157 + $0x1c] sm:$0xf]
    %v4166 = vld [vmem:[%s4157 + $0x20] sm:$0xf]
    %v4167 = vld [vmem:[%s4157 + $0x24] sm:$0xf]
    %v4168 = vld [vmem:[%s4157 + $0x28] sm:$0xf]
    %v4169 = vld [vmem:[%s4157 + $0x2c] sm:$0xf]
    %v4170 = vld [vmem:[%s4157 + $0x30] sm:$0xf]
    %v4171 = vld [vmem:[%s4157 + $0x34] sm:$0xf]
    %v4172 = vld [vmem:[%s4157 + $0x38] sm:$0xf]
    %v4173 = vld [vmem:[%s4157 + $0x3c] sm:$0xf]
    %v4190 = vunpack.c.l.b16 %v4158
    %v4191 = vunpack.c.l.b16 %v4159
    %v4192 = vunpack.c.l.b16 %v4160
    %v4193 = vunpack.c.l.b16 %v4161
    %v4194 = vunpack.c.l.b16 %v4162
    %v4195 = vunpack.c.l.b16 %v4163
    %v4196 = vunpack.c.l.b16 %v4164
    %v4197 = vunpack.c.l.b16 %v4165
    %v4198 = vunpack.c.l.b16 %v4166
    %v4199 = vunpack.c.l.b16 %v4167
    %v4200 = vunpack.c.l.b16 %v4168
    %v4201 = vunpack.c.l.b16 %v4169
    %v4202 = vunpack.c.l.b16 %v4170
    %v4203 = vunpack.c.l.b16 %v4171
    %v4204 = vunpack.c.l.b16 %v4172
    %v4205 = vunpack.c.l.b16 %v4173
    %v4206 = vpack.c.b16 %v4191, %v4190
    %v4207 = vpack.c.b16 %v4193, %v4192
    %v4208 = vpack.c.b16 %v4195, %v4194
    %v4209 = vpack.c.b16 %v4197, %v4196
    %v4210 = vpack.c.b16 %v4199, %v4198
    %v4211 = vpack.c.b16 %v4201, %v4200
    %v4212 = vpack.c.b16 %v4203, %v4202
    %v4213 = vpack.c.b16 %v4205, %v4204
    %4222 = vmatprep.subr.bf16.mxu0 0
    %4223 = vmatpush1.bf16.msra.mxu0 %v4206
    %4224 = vmatprep.subr.bf16.mxu0 0
    %4225 = vmatpush1.bf16.msra.mxu0 %v4207
    %4226 = vmatprep.subr.bf16.mxu0 0
    %4227 = vmatpush1.bf16.msra.mxu0 %v4208
    %4228 = vmatprep.subr.bf16.mxu0 0
    %4229 = vmatpush1.bf16.msra.mxu0 %v4209
    %4230 = vmatprep.subr.bf16.mxu0 0
    %4231 = vmatpush1.bf16.msra.mxu0 %v4210
    %4232 = vmatprep.subr.bf16.mxu0 0
    %4233 = vmatpush1.bf16.msra.mxu0 %v4211
    %4234 = vmatprep.subr.bf16.mxu0 0
    %4235 = vmatpush1.bf16.msra.mxu0 %v4212
    %4236 = vmatprep.subr.bf16.mxu0 0
    %4237 = vmatpush1.bf16.msra.mxu0 %v4213
    %4238 = vmatprep.subr.bf16.mxu0 0
    %4239 = vmatpush1.bf16.msra.mxu0 0
    %4240 = vmatprep.subr.bf16.mxu0 0
    %4241 = vmatpush1.bf16.msra.mxu0 0
    %4242 = vmatprep.subr.bf16.mxu0 0
    %4243 = vmatpush1.bf16.msra.mxu0 0
    %4244 = vmatprep.subr.bf16.mxu0 0
    %4245 = vmatpush1.bf16.msra.mxu0 0
    %4246 = vmatprep.subr.bf16.mxu0 0
    %4247 = vmatpush1.bf16.msra.mxu0 0
    %4248 = vmatprep.subr.bf16.mxu0 0
    %4249 = vmatpush1.bf16.msra.mxu0 0
    %4250 = vmatprep.subr.bf16.mxu0 0
    %4251 = vmatpush1.bf16.msra.mxu0 0
    %4252 = vmatprep.subr.bf16.mxu0 0
    %4253 = vmatpush1.bf16.msra.mxu0 0
    %4254 = vmatprep.mubr.bf16.mxu0 0
    %4255 = vmatmul.mubr.bf16.gmra.mrb[0].mxu0 %v4151
    %v4256 = vpop.f32.mrb[0].mxu0
    %v4257 = vadd.f32 0.0, %v4256
    %v4258 = vpop.f32.mrb[0].mxu0
    %v4259 = vpop.f32.mrb[0].mxu0
    %v4260 = vadd.f32 0.0, %v4259
    %v4261 = vpop.f32.mrb[0].mxu0
    %4262 = vmatprep.mubr.bf16.mxu0 0
    %4263 = vmatmul.mubr.bf16.gmra.mrb[0].mxu0 %v4154
    %v4264 = vpop.f32.mrb[0].mxu0
    %v4265 = vadd.f32 0.0, %v4264
    %v4266 = vpop.f32.mrb[0].mxu0
    %v4267 = vpop.f32.mrb[0].mxu0
    %v4268 = vadd.f32 0.0, %v4267
    %v4269 = vpop.f32.mrb[0].mxu0
    %4270 = vdwg.mxu0
    %v4271 = vadd.f32 %v4139, %v4257
    %v4272 = vadd.f32 %v4140, %v4260
    %v4273 = vadd.f32 %v4141, %v4265
    %v4274 = vadd.f32 %v4142, %v4268
    %v4275 = vld [vmem:[#allocation26] sm:$0x1]
    %v4277 = vlaneseq
    %v4278 = vshrl.u32 %v4277, 7
    %v4279 = vsub.s32 0, %v4278
    %v4280 = vrot.slane %v4275, %v4279
    %v4282 = vmul.f32 %v4271, %v4280
    %v4283 = vmul.f32 %v4272, %v4280
    %v4284 = vmul.f32 %v4273, %v4280
    %v4285 = vmul.f32 %v4274, %v4280
    %v4286 = vld [vmem:[#allocation27] sm:$0x1]
    %v4288 = vlaneseq
    %v4289 = vshrl.u32 %v4288, 7
    %v4290 = vsub.s32 0, %v4289
    %v4291 = vrot.slane %v4286, %v4290
    %v4293 = vadd.f32 %v4282, %v4291
    %v4294 = vadd.f32 %v4283, %v4291
    %v4295 = vadd.f32 %v4284, %v4291
    %v4296 = vadd.f32 %v4285, %v4291
    %v4297 = vmax.f32 %v4293, 0.0
    %v4298 = vmax.f32 %v4294, 0.0
    %v4299 = vmax.f32 %v4295, 0.0
    %v4300 = vmax.f32 %v4296, 0.0
    %v4301 = vpack.c.bf16 %v4298, %v4297
    %v4302 = vpack.c.bf16 %v4300, %v4299
    %v4305 = vrot.slane %v4301, 4
    %v4306 = vrot.slane %v4302, 4
    %4309 = vst [vmem:[#allocation2] sm:$0xf0] %v4305
    %4310 = vst [vmem:[#allocation2 + $0x8] sm:$0xf] %v4305
    %4311 = vst [vmem:[#allocation2 + $0x10] sm:$0xf0] %v4306
    %4312 = vst [vmem:[#allocation2 + $0x18] sm:$0xf] %v4306
    %v4313 = vld [vmem:[#allocation2] sm:$0xf8]
    %v4314 = vld [vmem:[#allocation2 + $0x8] sm:$0x7]
    %v4315 = vld [vmem:[#allocation2 + $0x10] sm:$0xf8]
    %v4316 = vld [vmem:[#allocation2 + $0x18] sm:$0x7]
    %v4321 = vrot.slane %v4313, 3
    %v4322 = vrot.slane %v4314, 3
    %v4323 = vsel %vm645, %v4321, %v4322
    %v4324 = vrot.slane %v4315, 3
    %v4325 = vrot.slane %v4316, 3
    %v4326 = vsel %vm645, %v4324, %v4325
    %v4329 = vld [vmem:[#allocation29] sm:$0xf]
    %v4330 = vld [vmem:[#allocation29 + $0x4] sm:$0xf]
    %v4331 = vld [vmem:[#allocation29 + $0x8] sm:$0xf]
    %v4332 = vld [vmem:[#allocation29 + $0xc] sm:$0xf]
    %v4333 = vld [vmem:[#allocation29 + $0x10] sm:$0xf]
    %v4334 = vld [vmem:[#allocation29 + $0x14] sm:$0xf]
    %v4335 = vld [vmem:[#allocation29 + $0x18] sm:$0xf]
    %v4336 = vld [vmem:[#allocation29 + $0x1c] sm:$0xf]
    %v4337 = vld [vmem:[#allocation29 + $0x20] sm:$0xf]
    %v4338 = vld [vmem:[#allocation29 + $0x24] sm:$0xf]
    %v4339 = vld [vmem:[#allocation29 + $0x28] sm:$0xf]
    %v4340 = vld [vmem:[#allocation29 + $0x2c] sm:$0xf]
    %v4341 = vld [vmem:[#allocation29 + $0x30] sm:$0xf]
    %v4342 = vld [vmem:[#allocation29 + $0x34] sm:$0xf]
    %v4343 = vld [vmem:[#allocation29 + $0x38] sm:$0xf]
    %v4344 = vld [vmem:[#allocation29 + $0x3c] sm:$0xf]
    %v4345 = vld [vmem:[#allocation2 + $0x8] sm:$0xf]
    %v4346 = vld [vmem:[#allocation2 + $0x18] sm:$0xf]
    %v4348 = vshrl.u32 %v4313, 16
    %v4350 = vrot.slane %v4348, 3
    %v4351 = vshll.u32 %v4313, 16
    %v4353 = vrot.slane %v4351, 4
    %v4354 = vor.u32 %v4350, %v4353
    %v4356 = vshrl.u32 %v4345, 16
    %v4358 = vrot.slane %v4356, 3
    %v4359 = vshll.u32 %v4345, 16
    %v4361 = vrot.slane %v4359, 4
    %v4362 = vor.u32 %v4358, %v4361
    %v4363 = vsel %vm867, %v4354, %v4362
    %v4365 = vshrl.u32 %v4315, 16
    %v4367 = vrot.slane %v4365, 3
    %v4368 = vshll.u32 %v4315, 16
    %v4370 = vrot.slane %v4368, 4
    %v4371 = vor.u32 %v4367, %v4370
    %v4373 = vshrl.u32 %v4346, 16
    %v4375 = vrot.slane %v4373, 3
    %v4376 = vshll.u32 %v4346, 16
    %v4378 = vrot.slane %v4376, 4
    %v4379 = vor.u32 %v4375, %v4378
    %v4380 = vsel %vm867, %v4371, %v4379
    %s4383 = scalar_lea.vmem [#allocation29], 64
    %v4384 = vld [vmem:[%s4383] sm:$0xf]
    %v4385 = vld [vmem:[%s4383 + $0x4] sm:$0xf]
    %v4386 = vld [vmem:[%s4383 + $0x8] sm:$0xf]
    %v4387 = vld [vmem:[%s4383 + $0xc] sm:$0xf]
    %v4388 = vld [vmem:[%s4383 + $0x10] sm:$0xf]
    %v4389 = vld [vmem:[%s4383 + $0x14] sm:$0xf]
    %v4390 = vld [vmem:[%s4383 + $0x18] sm:$0xf]
    %v4391 = vld [vmem:[%s4383 + $0x1c] sm:$0xf]
    %v4392 = vld [vmem:[%s4383 + $0x20] sm:$0xf]
    %v4393 = vld [vmem:[%s4383 + $0x24] sm:$0xf]
    %v4394 = vld [vmem:[%s4383 + $0x28] sm:$0xf]
    %v4395 = vld [vmem:[%s4383 + $0x2c] sm:$0xf]
    %v4396 = vld [vmem:[%s4383 + $0x30] sm:$0xf]
    %v4397 = vld [vmem:[%s4383 + $0x34] sm:$0xf]
    %v4398 = vld [vmem:[%s4383 + $0x38] sm:$0xf]
    %v4399 = vld [vmem:[%s4383 + $0x3c] sm:$0xf]
    %v4416 = vunpack.c.l.b16 %v4384
    %v4417 = vunpack.c.l.b16 %v4385
    %v4418 = vunpack.c.l.b16 %v4386
    %v4419 = vunpack.c.l.b16 %v4387
    %v4420 = vunpack.c.l.b16 %v4388
    %v4421 = vunpack.c.l.b16 %v4389
    %v4422 = vunpack.c.l.b16 %v4390
    %v4423 = vunpack.c.l.b16 %v4391
    %v4424 = vunpack.c.l.b16 %v4392
    %v4425 = vunpack.c.l.b16 %v4393
    %v4426 = vunpack.c.l.b16 %v4394
    %v4427 = vunpack.c.l.b16 %v4395
    %v4428 = vunpack.c.l.b16 %v4396
    %v4429 = vunpack.c.l.b16 %v4397
    %v4430 = vunpack.c.l.b16 %v4398
    %v4431 = vunpack.c.l.b16 %v4399
    %v4432 = vpack.c.b16 %v4417, %v4416
    %v4433 = vpack.c.b16 %v4419, %v4418
    %v4434 = vpack.c.b16 %v4421, %v4420
    %v4435 = vpack.c.b16 %v4423, %v4422
    %v4436 = vpack.c.b16 %v4425, %v4424
    %v4437 = vpack.c.b16 %v4427, %v4426
    %v4438 = vpack.c.b16 %v4429, %v4428
    %v4439 = vpack.c.b16 %v4431, %v4430
    %4448 = vmatprep.subr.bf16.mxu0 0
    %4449 = vmatpush1.bf16.msra.mxu0 %v4432
    %4450 = vmatprep.subr.bf16.mxu0 0
    %4451 = vmatpush1.bf16.msra.mxu0 %v4433
    %4452 = vmatprep.subr.bf16.mxu0 0
    %4453 = vmatpush1.bf16.msra.mxu0 %v4434
    %4454 = vmatprep.subr.bf16.mxu0 0
    %4455 = vmatpush1.bf16.msra.mxu0 %v4435
    %4456 = vmatprep.subr.bf16.mxu0 0
    %4457 = vmatpush1.bf16.msra.mxu0 %v4436
    %4458 = vmatprep.subr.bf16.mxu0 0
    %4459 = vmatpush1.bf16.msra.mxu0 %v4437
    %4460 = vmatprep.subr.bf16.mxu0 0
    %4461 = vmatpush1.bf16.msra.mxu0 %v4438
    %4462 = vmatprep.subr.bf16.mxu0 0
    %4463 = vmatpush1.bf16.msra.mxu0 %v4439
    %4464 = vmatprep.subr.bf16.mxu0 0
    %4465 = vmatpush1.bf16.msra.mxu0 0
    %4466 = vmatprep.subr.bf16.mxu0 0
    %4467 = vmatpush1.bf16.msra.mxu0 0
    %4468 = vmatprep.subr.bf16.mxu0 0
    %4469 = vmatpush1.bf16.msra.mxu0 0
    %4470 = vmatprep.subr.bf16.mxu0 0
    %4471 = vmatpush1.bf16.msra.mxu0 0
    %4472 = vmatprep.subr.bf16.mxu0 0
    %4473 = vmatpush1.bf16.msra.mxu0 0
    %4474 = vmatprep.subr.bf16.mxu0 0
    %4475 = vmatpush1.bf16.msra.mxu0 0
    %4476 = vmatprep.subr.bf16.mxu0 0
    %4477 = vmatpush1.bf16.msra.mxu0 0
    %4478 = vmatprep.subr.bf16.mxu0 0
    %4479 = vmatpush1.bf16.msra.mxu0 0
    %4480 = vmatprep.mubr.bf16.mxu0 0
    %4481 = vmatmul.mubr.bf16.gmra.mrb[0].mxu0 %v4363
    %v4482 = vpop.f32.mrb[0].mxu0
    %v4483 = vadd.f32 0.0, %v4482
    %v4484 = vpop.f32.mrb[0].mxu0
    %v4485 = vpop.f32.mrb[0].mxu0
    %v4486 = vadd.f32 0.0, %v4485
    %v4487 = vpop.f32.mrb[0].mxu0
    %4488 = vmatprep.mubr.bf16.mxu0 0
    %4489 = vmatmul.mubr.bf16.gmra.mrb[0].mxu0 %v4380
    %v4490 = vpop.f32.mrb[0].mxu0
    %v4491 = vadd.f32 0.0, %v4490
    %v4492 = vpop.f32.mrb[0].mxu0
    %v4493 = vpop.f32.mrb[0].mxu0
    %v4494 = vadd.f32 0.0, %v4493
    %v4495 = vpop.f32.mrb[0].mxu0
    %4496 = vdwg.mxu0
    %v4513 = vunpack.c.l.b16 %v4329
    %v4514 = vunpack.c.l.b16 %v4330
    %v4515 = vunpack.c.l.b16 %v4331
    %v4516 = vunpack.c.l.b16 %v4332
    %v4517 = vunpack.c.l.b16 %v4333
    %v4518 = vunpack.c.l.b16 %v4334
    %v4519 = vunpack.c.l.b16 %v4335
    %v4520 = vunpack.c.l.b16 %v4336
    %v4521 = vunpack.c.l.b16 %v4337
    %v4522 = vunpack.c.l.b16 %v4338
    %v4523 = vunpack.c.l.b16 %v4339
    %v4524 = vunpack.c.l.b16 %v4340
    %v4525 = vunpack.c.l.b16 %v4341
    %v4526 = vunpack.c.l.b16 %v4342
    %v4527 = vunpack.c.l.b16 %v4343
    %v4528 = vunpack.c.l.b16 %v4344
    %v4529 = vpack.c.b16 %v4514, %v4513
    %v4530 = vpack.c.b16 %v4516, %v4515
    %v4531 = vpack.c.b16 %v4518, %v4517
    %v4532 = vpack.c.b16 %v4520, %v4519
    %v4533 = vpack.c.b16 %v4522, %v4521
    %v4534 = vpack.c.b16 %v4524, %v4523
    %v4535 = vpack.c.b16 %v4526, %v4525
    %v4536 = vpack.c.b16 %v4528, %v4527
    %4545 = vmatprep.subr.bf16.mxu0 0
    %4546 = vmatpush1.bf16.msra.mxu0 %v4529
    %4547 = vmatprep.subr.bf16.mxu0 0
    %4548 = vmatpush1.bf16.msra.mxu0 %v4530
    %4549 = vmatprep.subr.bf16.mxu0 0
    %4550 = vmatpush1.bf16.msra.mxu0 %v4531
    %4551 = vmatprep.subr.bf16.mxu0 0
    %4552 = vmatpush1.bf16.msra.mxu0 %v4532
    %4553 = vmatprep.subr.bf16.mxu0 0
    %4554 = vmatpush1.bf16.msra.mxu0 %v4533
    %4555 = vmatprep.subr.bf16.mxu0 0
    %4556 = vmatpush1.bf16.msra.mxu0 %v4534
    %4557 = vmatprep.subr.bf16.mxu0 0
    %4558 = vmatpush1.bf16.msra.mxu0 %v4535
    %4559 = vmatprep.subr.bf16.mxu0 0
    %4560 = vmatpush1.bf16.msra.mxu0 %v4536
    %4561 = vmatprep.subr.bf16.mxu0 0
    %4562 = vmatpush1.bf16.msra.mxu0 0
    %4563 = vmatprep.subr.bf16.mxu0 0
    %4564 = vmatpush1.bf16.msra.mxu0 0
    %4565 = vmatprep.subr.bf16.mxu0 0
    %4566 = vmatpush1.bf16.msra.mxu0 0
    %4567 = vmatprep.subr.bf16.mxu0 0
    %4568 = vmatpush1.bf16.msra.mxu0 0
    %4569 = vmatprep.subr.bf16.mxu0 0
    %4570 = vmatpush1.bf16.msra.mxu0 0
    %4571 = vmatprep.subr.bf16.mxu0 0
    %4572 = vmatpush1.bf16.msra.mxu0 0
    %4573 = vmatprep.subr.bf16.mxu0 0
    %4574 = vmatpush1.bf16.msra.mxu0 0
    %4575 = vmatprep.subr.bf16.mxu0 0
    %4576 = vmatpush1.bf16.msra.mxu0 0
    %4577 = vmatprep.mubr.bf16.mxu0 0
    %4578 = vmatmul.mubr.bf16.gmra.mrb[0].mxu0 %v4323
    %v4579 = vpop.f32.mrb[0].mxu0
    %v4580 = vadd.f32 %v4483, %v4579
    %v4581 = vpop.f32.mrb[0].mxu0
    %v4582 = vpop.f32.mrb[0].mxu0
    %v4583 = vadd.f32 %v4486, %v4582
    %v4584 = vpop.f32.mrb[0].mxu0
    %4585 = vmatprep.mubr.bf16.mxu0 0
    %4586 = vmatmul.mubr.bf16.gmra.mrb[0].mxu0 %v4326
    %v4587 = vpop.f32.mrb[0].mxu0
    %v4588 = vadd.f32 %v4491, %v4587
    %v4589 = vpop.f32.mrb[0].mxu0
    %v4590 = vpop.f32.mrb[0].mxu0
    %v4591 = vadd.f32 %v4494, %v4590
    %v4592 = vpop.f32.mrb[0].mxu0
    %4593 = vdwg.mxu0
    %v4594 = vld [vmem:[#allocation2] sm:$0xf0]
    %v4595 = vld [vmem:[#allocation2 + $0x10] sm:$0xf0]
    %v4600 = vrot.slane %v4594, 4
    %v4601 = vrot.slane %v4345, 4
    %v4602 = vsel %vm1028, %v4600, %v4601
    %v4603 = vrot.slane %v4595, 4
    %v4604 = vrot.slane %v4346, 4
    %v4605 = vsel %vm1028, %v4603, %v4604
    %s4608 = scalar_lea.vmem [#allocation29], 128
    %v4609 = vld [vmem:[%s4608] sm:$0xf]
    %v4610 = vld [vmem:[%s4608 + $0x4] sm:$0xf]
    %v4611 = vld [vmem:[%s4608 + $0x8] sm:$0xf]
    %v4612 = vld [vmem:[%s4608 + $0xc] sm:$0xf]
    %v4613 = vld [vmem:[%s4608 + $0x10] sm:$0xf]
    %v4614 = vld [vmem:[%s4608 + $0x14] sm:$0xf]
    %v4615 = vld [vmem:[%s4608 + $0x18] sm:$0xf]
    %v4616 = vld [vmem:[%s4608 + $0x1c] sm:$0xf]
    %v4617 = vld [vmem:[%s4608 + $0x20] sm:$0xf]
    %v4618 = vld [vmem:[%s4608 + $0x24] sm:$0xf]
    %v4619 = vld [vmem:[%s4608 + $0x28] sm:$0xf]
    %v4620 = vld [vmem:[%s4608 + $0x2c] sm:$0xf]
    %v4621 = vld [vmem:[%s4608 + $0x30] sm:$0xf]
    %v4622 = vld [vmem:[%s4608 + $0x34] sm:$0xf]
    %v4623 = vld [vmem:[%s4608 + $0x38] sm:$0xf]
    %v4624 = vld [vmem:[%s4608 + $0x3c] sm:$0xf]
    %v4641 = vunpack.c.l.b16 %v4609
    %v4642 = vunpack.c.l.b16 %v4610
    %v4643 = vunpack.c.l.b16 %v4611
    %v4644 = vunpack.c.l.b16 %v4612
    %v4645 = vunpack.c.l.b16 %v4613
    %v4646 = vunpack.c.l.b16 %v4614
    %v4647 = vunpack.c.l.b16 %v4615
    %v4648 = vunpack.c.l.b16 %v4616
    %v4649 = vunpack.c.l.b16 %v4617
    %v4650 = vunpack.c.l.b16 %v4618
    %v4651 = vunpack.c.l.b16 %v4619
    %v4652 = vunpack.c.l.b16 %v4620
    %v4653 = vunpack.c.l.b16 %v4621
    %v4654 = vunpack.c.l.b16 %v4622
    %v4655 = vunpack.c.l.b16 %v4623
    %v4656 = vunpack.c.l.b16 %v4624
    %v4657 = vpack.c.b16 %v4642, %v4641
    %v4658 = vpack.c.b16 %v4644, %v4643
    %v4659 = vpack.c.b16 %v4646, %v4645
    %v4660 = vpack.c.b16 %v4648, %v4647
    %v4661 = vpack.c.b16 %v4650, %v4649
    %v4662 = vpack.c.b16 %v4652, %v4651
    %v4663 = vpack.c.b16 %v4654, %v4653
    %v4664 = vpack.c.b16 %v4656, %v4655
    %4673 = vmatprep.subr.bf16.mxu0 0
    %4674 = vmatpush1.bf16.msra.mxu0 %v4657
    %4675 = vmatprep.subr.bf16.mxu0 0
    %4676 = vmatpush1.bf16.msra.mxu0 %v4658
    %4677 = vmatprep.subr.bf16.mxu0 0
    %4678 = vmatpush1.bf16.msra.mxu0 %v4659
    %4679 = vmatprep.subr.bf16.mxu0 0
    %4680 = vmatpush1.bf16.msra.mxu0 %v4660
    %4681 = vmatprep.subr.bf16.mxu0 0
    %4682 = vmatpush1.bf16.msra.mxu0 %v4661
    %4683 = vmatprep.subr.bf16.mxu0 0
    %4684 = vmatpush1.bf16.msra.mxu0 %v4662
    %4685 = vmatprep.subr.bf16.mxu0 0
    %4686 = vmatpush1.bf16.msra.mxu0 %v4663
    %4687 = vmatprep.subr.bf16.mxu0 0
    %4688 = vmatpush1.bf16.msra.mxu0 %v4664
    %4689 = vmatprep.subr.bf16.mxu0 0
    %4690 = vmatpush1.bf16.msra.mxu0 0
    %4691 = vmatprep.subr.bf16.mxu0 0
    %4692 = vmatpush1.bf16.msra.mxu0 0
    %4693 = vmatprep.subr.bf16.mxu0 0
    %4694 = vmatpush1.bf16.msra.mxu0 0
    %4695 = vmatprep.subr.bf16.mxu0 0
    %4696 = vmatpush1.bf16.msra.mxu0 0
    %4697 = vmatprep.subr.bf16.mxu0 0
    %4698 = vmatpush1.bf16.msra.mxu0 0
    %4699 = vmatprep.subr.bf16.mxu0 0
    %4700 = vmatpush1.bf16.msra.mxu0 0
    %4701 = vmatprep.subr.bf16.mxu0 0
    %4702 = vmatpush1.bf16.msra.mxu0 0
    %4703 = vmatprep.subr.bf16.mxu0 0
    %4704 = vmatpush1.bf16.msra.mxu0 0
    %4705 = vmatprep.mubr.bf16.mxu0 0
    %4706 = vmatmul.mubr.bf16.gmra.mrb[0].mxu0 %v4602
    %v4707 = vpop.f32.mrb[0].mxu0
    %v4708 = vadd.f32 0.0, %v4707
    %v4709 = vpop.f32.mrb[0].mxu0
    %v4710 = vpop.f32.mrb[0].mxu0
    %v4711 = vadd.f32 0.0, %v4710
    %v4712 = vpop.f32.mrb[0].mxu0
    %4713 = vmatprep.mubr.bf16.mxu0 0
    %4714 = vmatmul.mubr.bf16.gmra.mrb[0].mxu0 %v4605
    %v4715 = vpop.f32.mrb[0].mxu0
    %v4716 = vadd.f32 0.0, %v4715
    %v4717 = vpop.f32.mrb[0].mxu0
    %v4718 = vpop.f32.mrb[0].mxu0
    %v4719 = vadd.f32 0.0, %v4718
    %v4720 = vpop.f32.mrb[0].mxu0
    %4721 = vdwg.mxu0
    %v4722 = vadd.f32 %v4580, %v4708
    %v4723 = vadd.f32 %v4583, %v4711
    %v4724 = vadd.f32 %v4588, %v4716
    %v4725 = vadd.f32 %v4591, %v4719
    %v4726 = vld [vmem:[#allocation2 + $0x8] sm:$0x1f]
    %v4727 = vld [vmem:[#allocation2 + $0x18] sm:$0x1f]
    %v4729 = vshrl.u32 %v4594, 16
    %v4731 = vrot.slane %v4729, 4
    %v4732 = vshll.u32 %v4594, 16
    %v4734 = vrot.slane %v4732, 5
    %v4735 = vor.u32 %v4731, %v4734
    %v4737 = vshrl.u32 %v4726, 16
    %v4739 = vrot.slane %v4737, 4
    %v4740 = vshll.u32 %v4726, 16
    %v4742 = vrot.slane %v4740, 5
    %v4743 = vor.u32 %v4739, %v4742
    %v4744 = vsel %vm1157, %v4735, %v4743
    %v4746 = vshrl.u32 %v4595, 16
    %v4748 = vrot.slane %v4746, 4
    %v4749 = vshll.u32 %v4595, 16
    %v4751 = vrot.slane %v4749, 5
    %v4752 = vor.u32 %v4748, %v4751
    %v4754 = vshrl.u32 %v4727, 16
    %v4756 = vrot.slane %v4754, 4
    %v4757 = vshll.u32 %v4727, 16
    %v4759 = vrot.slane %v4757, 5
    %v4760 = vor.u32 %v4756, %v4759
    %v4761 = vsel %vm1157, %v4752, %v4760
    %s4764 = scalar_lea.vmem [#allocation29], 192
    %v4765 = vld [vmem:[%s4764] sm:$0xf]
    %v4766 = vld [vmem:[%s4764 + $0x4] sm:$0xf]
    %v4767 = vld [vmem:[%s4764 + $0x8] sm:$0xf]
    %v4768 = vld [vmem:[%s4764 + $0xc] sm:$0xf]
    %v4769 = vld [vmem:[%s4764 + $0x10] sm:$0xf]
    %v4770 = vld [vmem:[%s4764 + $0x14] sm:$0xf]
    %v4771 = vld [vmem:[%s4764 + $0x18] sm:$0xf]
    %v4772 = vld [vmem:[%s4764 + $0x1c] sm:$0xf]
    %v4773 = vld [vmem:[%s4764 + $0x20] sm:$0xf]
    %v4774 = vld [vmem:[%s4764 + $0x24] sm:$0xf]
    %v4775 = vld [vmem:[%s4764 + $0x28] sm:$0xf]
    %v4776 = vld [vmem:[%s4764 + $0x2c] sm:$0xf]
    %v4777 = vld [vmem:[%s4764 + $0x30] sm:$0xf]
    %v4778 = vld [vmem:[%s4764 + $0x34] sm:$0xf]
    %v4779 = vld [vmem:[%s4764 + $0x38] sm:$0xf]
    %v4780 = vld [vmem:[%s4764 + $0x3c] sm:$0xf]
    %v4797 = vunpack.c.l.b16 %v4765
    %v4798 = vunpack.c.l.b16 %v4766
    %v4799 = vunpack.c.l.b16 %v4767
    %v4800 = vunpack.c.l.b16 %v4768
    %v4801 = vunpack.c.l.b16 %v4769
    %v4802 = vunpack.c.l.b16 %v4770
    %v4803 = vunpack.c.l.b16 %v4771
    %v4804 = vunpack.c.l.b16 %v4772
    %v4805 = vunpack.c.l.b16 %v4773
    %v4806 = vunpack.c.l.b16 %v4774
    %v4807 = vunpack.c.l.b16 %v4775
    %v4808 = vunpack.c.l.b16 %v4776
    %v4809 = vunpack.c.l.b16 %v4777
    %v4810 = vunpack.c.l.b16 %v4778
    %v4811 = vunpack.c.l.b16 %v4779
    %v4812 = vunpack.c.l.b16 %v4780
    %v4813 = vpack.c.b16 %v4798, %v4797
    %v4814 = vpack.c.b16 %v4800, %v4799
    %v4815 = vpack.c.b16 %v4802, %v4801
    %v4816 = vpack.c.b16 %v4804, %v4803
    %v4817 = vpack.c.b16 %v4806, %v4805
    %v4818 = vpack.c.b16 %v4808, %v4807
    %v4819 = vpack.c.b16 %v4810, %v4809
    %v4820 = vpack.c.b16 %v4812, %v4811
    %4829 = vmatprep.subr.bf16.mxu0 0
    %4830 = vmatpush1.bf16.msra.mxu0 %v4813
    %4831 = vmatprep.subr.bf16.mxu0 0
    %4832 = vmatpush1.bf16.msra.mxu0 %v4814
    %4833 = vmatprep.subr.bf16.mxu0 0
    %4834 = vmatpush1.bf16.msra.mxu0 %v4815
    %4835 = vmatprep.subr.bf16.mxu0 0
    %4836 = vmatpush1.bf16.msra.mxu0 %v4816
    %4837 = vmatprep.subr.bf16.mxu0 0
    %4838 = vmatpush1.bf16.msra.mxu0 %v4817
    %4839 = vmatprep.subr.bf16.mxu0 0
    %4840 = vmatpush1.bf16.msra.mxu0 %v4818
    %4841 = vmatprep.subr.bf16.mxu0 0
    %4842 = vmatpush1.bf16.msra.mxu0 %v4819
    %4843 = vmatprep.subr.bf16.mxu0 0
    %4844 = vmatpush1.bf16.msra.mxu0 %v4820
    %4845 = vmatprep.subr.bf16.mxu0 0
    %4846 = vmatpush1.bf16.msra.mxu0 0
    %4847 = vmatprep.subr.bf16.mxu0 0
    %4848 = vmatpush1.bf16.msra.mxu0 0
    %4849 = vmatprep.subr.bf16.mxu0 0
    %4850 = vmatpush1.bf16.msra.mxu0 0
    %4851 = vmatprep.subr.bf16.mxu0 0
    %4852 = vmatpush1.bf16.msra.mxu0 0
    %4853 = vmatprep.subr.bf16.mxu0 0
    %4854 = vmatpush1.bf16.msra.mxu0 0
    %4855 = vmatprep.subr.bf16.mxu0 0
    %4856 = vmatpush1.bf16.msra.mxu0 0
    %4857 = vmatprep.subr.bf16.mxu0 0
    %4858 = vmatpush1.bf16.msra.mxu0 0
    %4859 = vmatprep.subr.bf16.mxu0 0
    %4860 = vmatpush1.bf16.msra.mxu0 0
    %4861 = vmatprep.mubr.bf16.mxu0 0
    %4862 = vmatmul.mubr.bf16.gmra.mrb[0].mxu0 %v4744
    %v4863 = vpop.f32.mrb[0].mxu0
    %v4864 = vadd.f32 0.0, %v4863
    %v4865 = vpop.f32.mrb[0].mxu0
    %v4866 = vpop.f32.mrb[0].mxu0
    %v4867 = vadd.f32 0.0, %v4866
    %v4868 = vpop.f32.mrb[0].mxu0
    %4869 = vmatprep.mubr.bf16.mxu0 0
    %4870 = vmatmul.mubr.bf16.gmra.mrb[0].mxu0 %v4761
    %v4871 = vpop.f32.mrb[0].mxu0
    %v4872 = vadd.f32 0.0, %v4871
    %v4873 = vpop.f32.mrb[0].mxu0
    %v4874 = vpop.f32.mrb[0].mxu0
    %v4875 = vadd.f32 0.0, %v4874
    %v4876 = vpop.f32.mrb[0].mxu0
    %4877 = vdwg.mxu0
    %v4878 = vadd.f32 %v4722, %v4864
    %v4879 = vadd.f32 %v4723, %v4867
    %v4880 = vadd.f32 %v4724, %v4872
    %v4881 = vadd.f32 %v4725, %v4875
    %v4882 = vld [vmem:[#allocation2] sm:$0xe0]
    %v4883 = vld [vmem:[#allocation2 + $0x10] sm:$0xe0]
    %v4888 = vrot.slane %v4882, 5
    %v4889 = vrot.slane %v4726, 5
    %v4890 = vsel %vm1318, %v4888, %v4889
    %v4891 = vrot.slane %v4883, 5
    %v4892 = vrot.slane %v4727, 5
    %v4893 = vsel %vm1318, %v4891, %v4892
    %s4896 = scalar_lea.vmem [#allocation29], 256
    %v4897 = vld [vmem:[%s4896] sm:$0xf]
    %v4898 = vld [vmem:[%s4896 + $0x4] sm:$0xf]
    %v4899 = vld [vmem:[%s4896 + $0x8] sm:$0xf]
    %v4900 = vld [vmem:[%s4896 + $0xc] sm:$0xf]
    %v4901 = vld [vmem:[%s4896 + $0x10] sm:$0xf]
    %v4902 = vld [vmem:[%s4896 + $0x14] sm:$0xf]
    %v4903 = vld [vmem:[%s4896 + $0x18] sm:$0xf]
    %v4904 = vld [vmem:[%s4896 + $0x1c] sm:$0xf]
    %v4905 = vld [vmem:[%s4896 + $0x20] sm:$0xf]
    %v4906 = vld [vmem:[%s4896 + $0x24] sm:$0xf]
    %v4907 = vld [vmem:[%s4896 + $0x28] sm:$0xf]
    %v4908 = vld [vmem:[%s4896 + $0x2c] sm:$0xf]
    %v4909 = vld [vmem:[%s4896 + $0x30] sm:$0xf]
    %v4910 = vld [vmem:[%s4896 + $0x34] sm:$0xf]
    %v4911 = vld [vmem:[%s4896 + $0x38] sm:$0xf]
    %v4912 = vld [vmem:[%s4896 + $0x3c] sm:$0xf]
    %v4929 = vunpack.c.l.b16 %v4897
    %v4930 = vunpack.c.l.b16 %v4898
    %v4931 = vunpack.c.l.b16 %v4899
    %v4932 = vunpack.c.l.b16 %v4900
    %v4933 = vunpack.c.l.b16 %v4901
    %v4934 = vunpack.c.l.b16 %v4902
    %v4935 = vunpack.c.l.b16 %v4903
    %v4936 = vunpack.c.l.b16 %v4904
    %v4937 = vunpack.c.l.b16 %v4905
    %v4938 = vunpack.c.l.b16 %v4906
    %v4939 = vunpack.c.l.b16 %v4907
    %v4940 = vunpack.c.l.b16 %v4908
    %v4941 = vunpack.c.l.b16 %v4909
    %v4942 = vunpack.c.l.b16 %v4910
    %v4943 = vunpack.c.l.b16 %v4911
    %v4944 = vunpack.c.l.b16 %v4912
    %v4945 = vpack.c.b16 %v4930, %v4929
    %v4946 = vpack.c.b16 %v4932, %v4931
    %v4947 = vpack.c.b16 %v4934, %v4933
    %v4948 = vpack.c.b16 %v4936, %v4935
    %v4949 = vpack.c.b16 %v4938, %v4937
    %v4950 = vpack.c.b16 %v4940, %v4939
    %v4951 = vpack.c.b16 %v4942, %v4941
    %v4952 = vpack.c.b16 %v4944, %v4943
    %4961 = vmatprep.subr.bf16.mxu0 0
    %4962 = vmatpush1.bf16.msra.mxu0 %v4945
    %4963 = vmatprep.subr.bf16.mxu0 0
    %4964 = vmatpush1.bf16.msra.mxu0 %v4946
    %4965 = vmatprep.subr.bf16.mxu0 0
    %4966 = vmatpush1.bf16.msra.mxu0 %v4947
    %4967 = vmatprep.subr.bf16.mxu0 0
    %4968 = vmatpush1.bf16.msra.mxu0 %v4948
    %4969 = vmatprep.subr.bf16.mxu0 0
    %4970 = vmatpush1.bf16.msra.mxu0 %v4949
    %4971 = vmatprep.subr.bf16.mxu0 0
    %4972 = vmatpush1.bf16.msra.mxu0 %v4950
    %4973 = vmatprep.subr.bf16.mxu0 0
    %4974 = vmatpush1.bf16.msra.mxu0 %v4951
    %4975 = vmatprep.subr.bf16.mxu0 0
    %4976 = vmatpush1.bf16.msra.mxu0 %v4952
    %4977 = vmatprep.subr.bf16.mxu0 0
    %4978 = vmatpush1.bf16.msra.mxu0 0
    %4979 = vmatprep.subr.bf16.mxu0 0
    %4980 = vmatpush1.bf16.msra.mxu0 0
    %4981 = vmatprep.subr.bf16.mxu0 0
    %4982 = vmatpush1.bf16.msra.mxu0 0
    %4983 = vmatprep.subr.bf16.mxu0 0
    %4984 = vmatpush1.bf16.msra.mxu0 0
    %4985 = vmatprep.subr.bf16.mxu0 0
    %4986 = vmatpush1.bf16.msra.mxu0 0
    %4987 = vmatprep.subr.bf16.mxu0 0
    %4988 = vmatpush1.bf16.msra.mxu0 0
    %4989 = vmatprep.subr.bf16.mxu0 0
    %4990 = vmatpush1.bf16.msra.mxu0 0
    %4991 = vmatprep.subr.bf16.mxu0 0
    %4992 = vmatpush1.bf16.msra.mxu0 0
    %4993 = vmatprep.mubr.bf16.mxu0 0
    %4994 = vmatmul.mubr.bf16.gmra.mrb[0].mxu0 %v4890
    %v4995 = vpop.f32.mrb[0].mxu0
    %v4996 = vadd.f32 0.0, %v4995
    %v4997 = vpop.f32.mrb[0].mxu0
    %v4998 = vpop.f32.mrb[0].mxu0
    %v4999 = vadd.f32 0.0, %v4998
    %v5000 = vpop.f32.mrb[0].mxu0
    %5001 = vmatprep.mubr.bf16.mxu0 0
    %5002 = vmatmul.mubr.bf16.gmra.mrb[0].mxu0 %v4893
    %v5003 = vpop.f32.mrb[0].mxu0
    %v5004 = vadd.f32 0.0, %v5003
    %v5005 = vpop.f32.mrb[0].mxu0
    %v5006 = vpop.f32.mrb[0].mxu0
    %v5007 = vadd.f32 0.0, %v5006
    %v5008 = vpop.f32.mrb[0].mxu0
    %5009 = vdwg.mxu0
    %v5010 = vadd.f32 %v4878, %v4996
    %v5011 = vadd.f32 %v4879, %v4999
    %v5012 = vadd.f32 %v4880, %v5004
    %v5013 = vadd.f32 %v4881, %v5007
    %v5014 = vld [vmem:[#allocation30] sm:$0x1]
    %v5016 = vlaneseq
    %v5017 = vshrl.u32 %v5016, 7
    %v5018 = vsub.s32 0, %v5017
    %v5019 = vrot.slane %v5014, %v5018
    %v5021 = vmul.f32 %v5010, %v5019
    %v5022 = vmul.f32 %v5011, %v5019
    %v5023 = vmul.f32 %v5012, %v5019
    %v5024 = vmul.f32 %v5013, %v5019
    %v5025 = vld [vmem:[#allocation32] sm:$0x1]
    %v5027 = vlaneseq
    %v5028 = vshrl.u32 %v5027, 7
    %v5029 = vsub.s32 0, %v5028
    %v5030 = vrot.slane %v5025, %v5029
    %v5032 = vadd.f32 %v5021, %v5030
    %v5033 = vadd.f32 %v5022, %v5030
    %v5034 = vadd.f32 %v5023, %v5030
    %v5035 = vadd.f32 %v5024, %v5030
    %v5036 = vmax.f32 %v5032, 0.0
    %v5037 = vmax.f32 %v5033, 0.0
    %v5038 = vmax.f32 %v5034, 0.0
    %v5039 = vmax.f32 %v5035, 0.0
    %v5040 = vpack.c.bf16 %v5037, %v5036
    %v5041 = vpack.c.bf16 %v5039, %v5038
    %v5044 = vrot.slane %v5040, 4
    %v5045 = vrot.slane %v5041, 4
    %5048 = vst [vmem:[#allocation2] sm:$0xf0] %v5044
    %5049 = vst [vmem:[#allocation2 + $0x8] sm:$0xf] %v5044
    %5050 = vst [vmem:[#allocation2 + $0x10] sm:$0xf0] %v5045
    %5051 = vst [vmem:[#allocation2 + $0x18] sm:$0xf] %v5045
    %v5052 = vld [vmem:[#allocation2] sm:$0xf8]
    %v5053 = vld [vmem:[#allocation2 + $0x8] sm:$0xf]
    %v5054 = vld [vmem:[#allocation2 + $0x10] sm:$0xf8]
    %v5055 = vld [vmem:[#allocation2 + $0x18] sm:$0xf]
    %v5057 = vshrl.u32 %v5052, 16
    %v5059 = vrot.slane %v5057, 3
    %v5060 = vshll.u32 %v5052, 16
    %v5062 = vrot.slane %v5060, 4
    %v5063 = vor.u32 %v5059, %v5062
    %v5065 = vshrl.u32 %v5053, 16
    %v5067 = vrot.slane %v5065, 3
    %v5068 = vshll.u32 %v5053, 16
    %v5070 = vrot.slane %v5068, 4
    %v5071 = vor.u32 %v5067, %v5070
    %v5072 = vsel %vm867, %v5063, %v5071
    %v5074 = vshrl.u32 %v5054, 16
    %v5076 = vrot.slane %v5074, 3
    %v5077 = vshll.u32 %v5054, 16
    %v5079 = vrot.slane %v5077, 4
    %v5080 = vor.u32 %v5076, %v5079
    %v5082 = vshrl.u32 %v5055, 16
    %v5084 = vrot.slane %v5082, 3
    %v5085 = vshll.u32 %v5055, 16
    %v5087 = vrot.slane %v5085, 4
    %v5088 = vor.u32 %v5084, %v5087
    %v5089 = vsel %vm867, %v5080, %v5088
    %v5092 = vld [vmem:[#allocation33] sm:$0xf]
    %v5093 = vld [vmem:[#allocation33 + $0x4] sm:$0xf]
    %v5094 = vld [vmem:[#allocation33 + $0x8] sm:$0xf]
    %v5095 = vld [vmem:[#allocation33 + $0xc] sm:$0xf]
    %v5096 = vld [vmem:[#allocation33 + $0x10] sm:$0xf]
    %v5097 = vld [vmem:[#allocation33 + $0x14] sm:$0xf]
    %v5098 = vld [vmem:[#allocation33 + $0x18] sm:$0xf]
    %v5099 = vld [vmem:[#allocation33 + $0x1c] sm:$0xf]
    %v5100 = vld [vmem:[#allocation33 + $0x20] sm:$0xf]
    %v5101 = vld [vmem:[#allocation33 + $0x24] sm:$0xf]
    %v5102 = vld [vmem:[#allocation33 + $0x28] sm:$0xf]
    %v5103 = vld [vmem:[#allocation33 + $0x2c] sm:$0xf]
    %v5104 = vld [vmem:[#allocation33 + $0x30] sm:$0xf]
    %v5105 = vld [vmem:[#allocation33 + $0x34] sm:$0xf]
    %v5106 = vld [vmem:[#allocation33 + $0x38] sm:$0xf]
    %v5107 = vld [vmem:[#allocation33 + $0x3c] sm:$0xf]
    %v5108 = vld [vmem:[#allocation2] sm:$0xf0]
    %v5109 = vld [vmem:[#allocation2 + $0x10] sm:$0xf0]
    %v5114 = vrot.slane %v5108, 4
    %v5115 = vrot.slane %v5053, 4
    %v5116 = vsel %vm1028, %v5114, %v5115
    %v5117 = vrot.slane %v5109, 4
    %v5118 = vrot.slane %v5055, 4
    %v5119 = vsel %vm1028, %v5117, %v5118
    %s5122 = scalar_lea.vmem [#allocation33], 64
    %v5123 = vld [vmem:[%s5122] sm:$0xf]
    %v5124 = vld [vmem:[%s5122 + $0x4] sm:$0xf]
    %v5125 = vld [vmem:[%s5122 + $0x8] sm:$0xf]
    %v5126 = vld [vmem:[%s5122 + $0xc] sm:$0xf]
    %v5127 = vld [vmem:[%s5122 + $0x10] sm:$0xf]
    %v5128 = vld [vmem:[%s5122 + $0x14] sm:$0xf]
    %v5129 = vld [vmem:[%s5122 + $0x18] sm:$0xf]
    %v5130 = vld [vmem:[%s5122 + $0x1c] sm:$0xf]
    %v5131 = vld [vmem:[%s5122 + $0x20] sm:$0xf]
    %v5132 = vld [vmem:[%s5122 + $0x24] sm:$0xf]
    %v5133 = vld [vmem:[%s5122 + $0x28] sm:$0xf]
    %v5134 = vld [vmem:[%s5122 + $0x2c] sm:$0xf]
    %v5135 = vld [vmem:[%s5122 + $0x30] sm:$0xf]
    %v5136 = vld [vmem:[%s5122 + $0x34] sm:$0xf]
    %v5137 = vld [vmem:[%s5122 + $0x38] sm:$0xf]
    %v5138 = vld [vmem:[%s5122 + $0x3c] sm:$0xf]
    %v5155 = vunpack.c.l.b16 %v5123
    %v5156 = vunpack.c.l.b16 %v5124
    %v5157 = vunpack.c.l.b16 %v5125
    %v5158 = vunpack.c.l.b16 %v5126
    %v5159 = vunpack.c.l.b16 %v5127
    %v5160 = vunpack.c.l.b16 %v5128
    %v5161 = vunpack.c.l.b16 %v5129
    %v5162 = vunpack.c.l.b16 %v5130
    %v5163 = vunpack.c.l.b16 %v5131
    %v5164 = vunpack.c.l.b16 %v5132
    %v5165 = vunpack.c.l.b16 %v5133
    %v5166 = vunpack.c.l.b16 %v5134
    %v5167 = vunpack.c.l.b16 %v5135
    %v5168 = vunpack.c.l.b16 %v5136
    %v5169 = vunpack.c.l.b16 %v5137
    %v5170 = vunpack.c.l.b16 %v5138
    %v5171 = vpack.c.b16 %v5156, %v5155
    %v5172 = vpack.c.b16 %v5158, %v5157
    %v5173 = vpack.c.b16 %v5160, %v5159
    %v5174 = vpack.c.b16 %v5162, %v5161
    %v5175 = vpack.c.b16 %v5164, %v5163
    %v5176 = vpack.c.b16 %v5166, %v5165
    %v5177 = vpack.c.b16 %v5168, %v5167
    %v5178 = vpack.c.b16 %v5170, %v5169
    %5187 = vmatprep.subr.bf16.mxu0 0
    %5188 = vmatpush1.bf16.msra.mxu0 %v5171
    %5189 = vmatprep.subr.bf16.mxu0 0
    %5190 = vmatpush1.bf16.msra.mxu0 %v5172
    %5191 = vmatprep.subr.bf16.mxu0 0
    %5192 = vmatpush1.bf16.msra.mxu0 %v5173
    %5193 = vmatprep.subr.bf16.mxu0 0
    %5194 = vmatpush1.bf16.msra.mxu0 %v5174
    %5195 = vmatprep.subr.bf16.mxu0 0
    %5196 = vmatpush1.bf16.msra.mxu0 %v5175
    %5197 = vmatprep.subr.bf16.mxu0 0
    %5198 = vmatpush1.bf16.msra.mxu0 %v5176
    %5199 = vmatprep.subr.bf16.mxu0 0
    %5200 = vmatpush1.bf16.msra.mxu0 %v5177
    %5201 = vmatprep.subr.bf16.mxu0 0
    %5202 = vmatpush1.bf16.msra.mxu0 %v5178
    %5203 = vmatprep.subr.bf16.mxu0 0
    %5204 = vmatpush1.bf16.msra.mxu0 0
    %5205 = vmatprep.subr.bf16.mxu0 0
    %5206 = vmatpush1.bf16.msra.mxu0 0
    %5207 = vmatprep.subr.bf16.mxu0 0
    %5208 = vmatpush1.bf16.msra.mxu0 0
    %5209 = vmatprep.subr.bf16.mxu0 0
    %5210 = vmatpush1.bf16.msra.mxu0 0
    %5211 = vmatprep.subr.bf16.mxu0 0
    %5212 = vmatpush1.bf16.msra.mxu0 0
    %5213 = vmatprep.subr.bf16.mxu0 0
    %5214 = vmatpush1.bf16.msra.mxu0 0
    %5215 = vmatprep.subr.bf16.mxu0 0
    %5216 = vmatpush1.bf16.msra.mxu0 0
    %5217 = vmatprep.subr.bf16.mxu0 0
    %5218 = vmatpush1.bf16.msra.mxu0 0
    %5219 = vmatprep.mubr.bf16.mxu0 0
    %5220 = vmatmul.mubr.bf16.gmra.mrb[0].mxu0 %v5116
    %v5221 = vpop.f32.mrb[0].mxu0
    %v5222 = vadd.f32 0.0, %v5221
    %v5223 = vpop.f32.mrb[0].mxu0
    %v5224 = vpop.f32.mrb[0].mxu0
    %v5225 = vadd.f32 0.0, %v5224
    %v5226 = vpop.f32.mrb[0].mxu0
    %5227 = vmatprep.mubr.bf16.mxu0 0
    %5228 = vmatmul.mubr.bf16.gmra.mrb[0].mxu0 %v5119
    %v5229 = vpop.f32.mrb[0].mxu0
    %v5230 = vadd.f32 0.0, %v5229
    %v5231 = vpop.f32.mrb[0].mxu0
    %v5232 = vpop.f32.mrb[0].mxu0
    %v5233 = vadd.f32 0.0, %v5232
    %v5234 = vpop.f32.mrb[0].mxu0
    %5235 = vdwg.mxu0
    %v5252 = vunpack.c.l.b16 %v5092
    %v5253 = vunpack.c.l.b16 %v5093
    %v5254 = vunpack.c.l.b16 %v5094
    %v5255 = vunpack.c.l.b16 %v5095
    %v5256 = vunpack.c.l.b16 %v5096
    %v5257 = vunpack.c.l.b16 %v5097
    %v5258 = vunpack.c.l.b16 %v5098
    %v5259 = vunpack.c.l.b16 %v5099
    %v5260 = vunpack.c.l.b16 %v5100
    %v5261 = vunpack.c.l.b16 %v5101
    %v5262 = vunpack.c.l.b16 %v5102
    %v5263 = vunpack.c.l.b16 %v5103
    %v5264 = vunpack.c.l.b16 %v5104
    %v5265 = vunpack.c.l.b16 %v5105
    %v5266 = vunpack.c.l.b16 %v5106
    %v5267 = vunpack.c.l.b16 %v5107
    %v5268 = vpack.c.b16 %v5253, %v5252
    %v5269 = vpack.c.b16 %v5255, %v5254
    %v5270 = vpack.c.b16 %v5257, %v5256
    %v5271 = vpack.c.b16 %v5259, %v5258
    %v5272 = vpack.c.b16 %v5261, %v5260
    %v5273 = vpack.c.b16 %v5263, %v5262
    %v5274 = vpack.c.b16 %v5265, %v5264
    %v5275 = vpack.c.b16 %v5267, %v5266
    %5284 = vmatprep.subr.bf16.mxu0 0
    %5285 = vmatpush1.bf16.msra.mxu0 %v5268
    %5286 = vmatprep.subr.bf16.mxu0 0
    %5287 = vmatpush1.bf16.msra.mxu0 %v5269
    %5288 = vmatprep.subr.bf16.mxu0 0
    %5289 = vmatpush1.bf16.msra.mxu0 %v5270
    %5290 = vmatprep.subr.bf16.mxu0 0
    %5291 = vmatpush1.bf16.msra.mxu0 %v5271
    %5292 = vmatprep.subr.bf16.mxu0 0
    %5293 = vmatpush1.bf16.msra.mxu0 %v5272
    %5294 = vmatprep.subr.bf16.mxu0 0
    %5295 = vmatpush1.bf16.msra.mxu0 %v5273
    %5296 = vmatprep.subr.bf16.mxu0 0
    %5297 = vmatpush1.bf16.msra.mxu0 %v5274
    %5298 = vmatprep.subr.bf16.mxu0 0
    %5299 = vmatpush1.bf16.msra.mxu0 %v5275
    %5300 = vmatprep.subr.bf16.mxu0 0
    %5301 = vmatpush1.bf16.msra.mxu0 0
    %5302 = vmatprep.subr.bf16.mxu0 0
    %5303 = vmatpush1.bf16.msra.mxu0 0
    %5304 = vmatprep.subr.bf16.mxu0 0
    %5305 = vmatpush1.bf16.msra.mxu0 0
    %5306 = vmatprep.subr.bf16.mxu0 0
    %5307 = vmatpush1.bf16.msra.mxu0 0
    %5308 = vmatprep.subr.bf16.mxu0 0
    %5309 = vmatpush1.bf16.msra.mxu0 0
    %5310 = vmatprep.subr.bf16.mxu0 0
    %5311 = vmatpush1.bf16.msra.mxu0 0
    %5312 = vmatprep.subr.bf16.mxu0 0
    %5313 = vmatpush1.bf16.msra.mxu0 0
    %5314 = vmatprep.subr.bf16.mxu0 0
    %5315 = vmatpush1.bf16.msra.mxu0 0
    %5316 = vmatprep.mubr.bf16.mxu0 0
    %5317 = vmatmul.mubr.bf16.gmra.mrb[0].mxu0 %v5072
    %v5318 = vpop.f32.mrb[0].mxu0
    %v5319 = vadd.f32 %v5222, %v5318
    %v5320 = vpop.f32.mrb[0].mxu0
    %v5321 = vpop.f32.mrb[0].mxu0
    %v5322 = vadd.f32 %v5225, %v5321
    %v5323 = vpop.f32.mrb[0].mxu0
    %5324 = vmatprep.mubr.bf16.mxu0 0
    %5325 = vmatmul.mubr.bf16.gmra.mrb[0].mxu0 %v5089
    %v5326 = vpop.f32.mrb[0].mxu0
    %v5327 = vadd.f32 %v5230, %v5326
    %v5328 = vpop.f32.mrb[0].mxu0
    %v5329 = vpop.f32.mrb[0].mxu0
    %v5330 = vadd.f32 %v5233, %v5329
    %v5331 = vpop.f32.mrb[0].mxu0
    %5332 = vdwg.mxu0
    %v5333 = vld [vmem:[#allocation2 + $0x8] sm:$0x1f]
    %v5334 = vld [vmem:[#allocation2 + $0x18] sm:$0x1f]
    %v5336 = vshrl.u32 %v5108, 16
    %v5338 = vrot.slane %v5336, 4
    %v5339 = vshll.u32 %v5108, 16
    %v5341 = vrot.slane %v5339, 5
    %v5342 = vor.u32 %v5338, %v5341
    %v5344 = vshrl.u32 %v5333, 16
    %v5346 = vrot.slane %v5344, 4
    %v5347 = vshll.u32 %v5333, 16
    %v5349 = vrot.slane %v5347, 5
    %v5350 = vor.u32 %v5346, %v5349
    %v5351 = vsel %vm1157, %v5342, %v5350
    %v5353 = vshrl.u32 %v5109, 16
    %v5355 = vrot.slane %v5353, 4
    %v5356 = vshll.u32 %v5109, 16
    %v5358 = vrot.slane %v5356, 5
    %v5359 = vor.u32 %v5355, %v5358
    %v5361 = vshrl.u32 %v5334, 16
    %v5363 = vrot.slane %v5361, 4
    %v5364 = vshll.u32 %v5334, 16
    %v5366 = vrot.slane %v5364, 5
    %v5367 = vor.u32 %v5363, %v5366
    %v5368 = vsel %vm1157, %v5359, %v5367
    %s5371 = scalar_lea.vmem [#allocation33], 128
    %v5372 = vld [vmem:[%s5371] sm:$0xf]
    %v5373 = vld [vmem:[%s5371 + $0x4] sm:$0xf]
    %v5374 = vld [vmem:[%s5371 + $0x8] sm:$0xf]
    %v5375 = vld [vmem:[%s5371 + $0xc] sm:$0xf]
    %v5376 = vld [vmem:[%s5371 + $0x10] sm:$0xf]
    %v5377 = vld [vmem:[%s5371 + $0x14] sm:$0xf]
    %v5378 = vld [vmem:[%s5371 + $0x18] sm:$0xf]
    %v5379 = vld [vmem:[%s5371 + $0x1c] sm:$0xf]
    %v5380 = vld [vmem:[%s5371 + $0x20] sm:$0xf]
    %v5381 = vld [vmem:[%s5371 + $0x24] sm:$0xf]
    %v5382 = vld [vmem:[%s5371 + $0x28] sm:$0xf]
    %v5383 = vld [vmem:[%s5371 + $0x2c] sm:$0xf]
    %v5384 = vld [vmem:[%s5371 + $0x30] sm:$0xf]
    %v5385 = vld [vmem:[%s5371 + $0x34] sm:$0xf]
    %v5386 = vld [vmem:[%s5371 + $0x38] sm:$0xf]
    %v5387 = vld [vmem:[%s5371 + $0x3c] sm:$0xf]
    %v5404 = vunpack.c.l.b16 %v5372
    %v5405 = vunpack.c.l.b16 %v5373
    %v5406 = vunpack.c.l.b16 %v5374
    %v5407 = vunpack.c.l.b16 %v5375
    %v5408 = vunpack.c.l.b16 %v5376
    %v5409 = vunpack.c.l.b16 %v5377
    %v5410 = vunpack.c.l.b16 %v5378
    %v5411 = vunpack.c.l.b16 %v5379
    %v5412 = vunpack.c.l.b16 %v5380
    %v5413 = vunpack.c.l.b16 %v5381
    %v5414 = vunpack.c.l.b16 %v5382
    %v5415 = vunpack.c.l.b16 %v5383
    %v5416 = vunpack.c.l.b16 %v5384
    %v5417 = vunpack.c.l.b16 %v5385
    %v5418 = vunpack.c.l.b16 %v5386
    %v5419 = vunpack.c.l.b16 %v5387
    %v5420 = vpack.c.b16 %v5405, %v5404
    %v5421 = vpack.c.b16 %v5407, %v5406
    %v5422 = vpack.c.b16 %v5409, %v5408
    %v5423 = vpack.c.b16 %v5411, %v5410
    %v5424 = vpack.c.b16 %v5413, %v5412
    %v5425 = vpack.c.b16 %v5415, %v5414
    %v5426 = vpack.c.b16 %v5417, %v5416
    %v5427 = vpack.c.b16 %v5419, %v5418
    %5436 = vmatprep.subr.bf16.mxu0 0
    %5437 = vmatpush1.bf16.msra.mxu0 %v5420
    %5438 = vmatprep.subr.bf16.mxu0 0
    %5439 = vmatpush1.bf16.msra.mxu0 %v5421
    %5440 = vmatprep.subr.bf16.mxu0 0
    %5441 = vmatpush1.bf16.msra.mxu0 %v5422
    %5442 = vmatprep.subr.bf16.mxu0 0
    %5443 = vmatpush1.bf16.msra.mxu0 %v5423
    %5444 = vmatprep.subr.bf16.mxu0 0
    %5445 = vmatpush1.bf16.msra.mxu0 %v5424
    %5446 = vmatprep.subr.bf16.mxu0 0
    %5447 = vmatpush1.bf16.msra.mxu0 %v5425
    %5448 = vmatprep.subr.bf16.mxu0 0
    %5449 = vmatpush1.bf16.msra.mxu0 %v5426
    %5450 = vmatprep.subr.bf16.mxu0 0
    %5451 = vmatpush1.bf16.msra.mxu0 %v5427
    %5452 = vmatprep.subr.bf16.mxu0 0
    %5453 = vmatpush1.bf16.msra.mxu0 0
    %5454 = vmatprep.subr.bf16.mxu0 0
    %5455 = vmatpush1.bf16.msra.mxu0 0
    %5456 = vmatprep.subr.bf16.mxu0 0
    %5457 = vmatpush1.bf16.msra.mxu0 0
    %5458 = vmatprep.subr.bf16.mxu0 0
    %5459 = vmatpush1.bf16.msra.mxu0 0
    %5460 = vmatprep.subr.bf16.mxu0 0
    %5461 = vmatpush1.bf16.msra.mxu0 0
    %5462 = vmatprep.subr.bf16.mxu0 0
    %5463 = vmatpush1.bf16.msra.mxu0 0
    %5464 = vmatprep.subr.bf16.mxu0 0
    %5465 = vmatpush1.bf16.msra.mxu0 0
    %5466 = vmatprep.subr.bf16.mxu0 0
    %5467 = vmatpush1.bf16.msra.mxu0 0
    %5468 = vmatprep.mubr.bf16.mxu0 0
    %5469 = vmatmul.mubr.bf16.gmra.mrb[0].mxu0 %v5351
    %v5470 = vpop.f32.mrb[0].mxu0
    %v5471 = vadd.f32 0.0, %v5470
    %v5472 = vpop.f32.mrb[0].mxu0
    %v5473 = vpop.f32.mrb[0].mxu0
    %v5474 = vadd.f32 0.0, %v5473
    %v5475 = vpop.f32.mrb[0].mxu0
    %5476 = vmatprep.mubr.bf16.mxu0 0
    %5477 = vmatmul.mubr.bf16.gmra.mrb[0].mxu0 %v5368
    %v5478 = vpop.f32.mrb[0].mxu0
    %v5479 = vadd.f32 0.0, %v5478
    %v5480 = vpop.f32.mrb[0].mxu0
    %v5481 = vpop.f32.mrb[0].mxu0
    %v5482 = vadd.f32 0.0, %v5481
    %v5483 = vpop.f32.mrb[0].mxu0
    %5484 = vdwg.mxu0
    %v5485 = vadd.f32 %v5319, %v5471
    %v5486 = vadd.f32 %v5322, %v5474
    %v5487 = vadd.f32 %v5327, %v5479
    %v5488 = vadd.f32 %v5330, %v5482
    %v5489 = vld [vmem:[#allocation35] sm:$0x1]
    %v5491 = vlaneseq
    %v5492 = vshrl.u32 %v5491, 7
    %v5493 = vsub.s32 0, %v5492
    %v5494 = vrot.slane %v5489, %v5493
    %v5496 = vmul.f32 %v5485, %v5494
    %v5497 = vmul.f32 %v5486, %v5494
    %v5498 = vmul.f32 %v5487, %v5494
    %v5499 = vmul.f32 %v5488, %v5494
    %v5500 = vld [vmem:[#allocation36] sm:$0x1]
    %v5502 = vlaneseq
    %v5503 = vshrl.u32 %v5502, 7
    %v5504 = vsub.s32 0, %v5503
    %v5505 = vrot.slane %v5500, %v5504
    %v5507 = vadd.f32 %v5496, %v5505
    %v5508 = vadd.f32 %v5497, %v5505
    %v5509 = vadd.f32 %v5498, %v5505
    %v5510 = vadd.f32 %v5499, %v5505
    %v5511 = vmax.f32 %v5507, 0.0
    %v5512 = vmax.f32 %v5508, 0.0
    %v5513 = vmax.f32 %v5509, 0.0
    %v5514 = vmax.f32 %v5510, 0.0
    %v5515 = vld [vmem:[%s45] sm:$0xf]
    %v5516 = vld [vmem:[%s45 + $0x4] sm:$0xf]
    %v5517 = vld [vmem:[%s45 + $0x8] sm:$0xf]
    %v5518 = vld [vmem:[%s45 + $0xc] sm:$0xf]
    %v5519 = vld [vmem:[%s45 + $0x10] sm:$0xf]
    %v5520 = vld [vmem:[%s45 + $0x14] sm:$0xf]
    %v5521 = vld [vmem:[%s45 + $0x18] sm:$0xf]
    %v5522 = vld [vmem:[%s45 + $0x1c] sm:$0xf]
    %v5523 = vld [vmem:[%s45 + $0x20] sm:$0xf]
    %v5524 = vld [vmem:[%s45 + $0x24] sm:$0xf]
    %v5525 = vld [vmem:[%s45 + $0x28] sm:$0xf]
    %v5526 = vld [vmem:[%s45 + $0x2c] sm:$0xf]
    %v5527 = vld [vmem:[%s45 + $0x30] sm:$0xf]
    %v5528 = vld [vmem:[%s45 + $0x34] sm:$0xf]
    %v5529 = vld [vmem:[%s45 + $0x38] sm:$0xf]
    %v5530 = vld [vmem:[%s45 + $0x3c] sm:$0xf]
    %v5547 = vunpack.c.l.b16 %v5515
    %v5548 = vunpack.c.l.b16 %v5516
    %v5549 = vunpack.c.l.b16 %v5517
    %v5550 = vunpack.c.l.b16 %v5518
    %v5551 = vunpack.c.l.b16 %v5519
    %v5552 = vunpack.c.l.b16 %v5520
    %v5553 = vunpack.c.l.b16 %v5521
    %v5554 = vunpack.c.l.b16 %v5522
    %v5555 = vunpack.c.l.b16 %v5523
    %v5556 = vunpack.c.l.b16 %v5524
    %v5557 = vunpack.c.l.b16 %v5525
    %v5558 = vunpack.c.l.b16 %v5526
    %v5559 = vunpack.c.l.b16 %v5527
    %v5560 = vunpack.c.l.b16 %v5528
    %v5561 = vunpack.c.l.b16 %v5529
    %v5562 = vunpack.c.l.b16 %v5530
    %v5563 = vpack.c.b16 %v5548, %v5547
    %v5564 = vpack.c.b16 %v5550, %v5549
    %v5565 = vpack.c.b16 %v5552, %v5551
    %v5566 = vpack.c.b16 %v5554, %v5553
    %v5567 = vpack.c.b16 %v5556, %v5555
    %v5568 = vpack.c.b16 %v5558, %v5557
    %v5569 = vpack.c.b16 %v5560, %v5559
    %v5570 = vpack.c.b16 %v5562, %v5561
    %5579 = vmatprep.subr.bf16.mxu0 0
    %5580 = vmatpush1.bf16.msra.mxu0 %v5563
    %5581 = vmatprep.subr.bf16.mxu0 0
    %5582 = vmatpush1.bf16.msra.mxu0 %v5564
    %5583 = vmatprep.subr.bf16.mxu0 0
    %5584 = vmatpush1.bf16.msra.mxu0 %v5565
    %5585 = vmatprep.subr.bf16.mxu0 0
    %5586 = vmatpush1.bf16.msra.mxu0 %v5566
    %5587 = vmatprep.subr.bf16.mxu0 0
    %5588 = vmatpush1.bf16.msra.mxu0 %v5567
    %5589 = vmatprep.subr.bf16.mxu0 0
    %5590 = vmatpush1.bf16.msra.mxu0 %v5568
    %5591 = vmatprep.subr.bf16.mxu0 0
    %5592 = vmatpush1.bf16.msra.mxu0 %v5569
    %5593 = vmatprep.subr.bf16.mxu0 0
    %5594 = vmatpush1.bf16.msra.mxu0 %v5570
    %5595 = vmatprep.subr.bf16.mxu0 0
    %5596 = vmatpush1.bf16.msra.mxu0 0
    %5597 = vmatprep.subr.bf16.mxu0 0
    %5598 = vmatpush1.bf16.msra.mxu0 0
    %5599 = vmatprep.subr.bf16.mxu0 0
    %5600 = vmatpush1.bf16.msra.mxu0 0
    %5601 = vmatprep.subr.bf16.mxu0 0
    %5602 = vmatpush1.bf16.msra.mxu0 0
    %5603 = vmatprep.subr.bf16.mxu0 0
    %5604 = vmatpush1.bf16.msra.mxu0 0
    %5605 = vmatprep.subr.bf16.mxu0 0
    %5606 = vmatpush1.bf16.msra.mxu0 0
    %5607 = vmatprep.subr.bf16.mxu0 0
    %5608 = vmatpush1.bf16.msra.mxu0 0
    %5609 = vmatprep.subr.bf16.mxu0 0
    %5610 = vmatpush1.bf16.msra.mxu0 0
    %5611 = vmatprep.mubr.bf16.mxu0 0
    %5612 = vmatmul.mubr.bf16.gmra.mrb[0].mxu0 %v3118
    %v5613 = vpop.f32.mrb[0].mxu0
    %v5614 = vadd.f32 0.0, %v5613
    %v5615 = vpop.f32.mrb[0].mxu0
    %v5616 = vpop.f32.mrb[0].mxu0
    %v5617 = vadd.f32 0.0, %v5616
    %v5618 = vpop.f32.mrb[0].mxu0
    %5619 = vmatprep.mubr.bf16.mxu0 0
    %5620 = vmatmul.mubr.bf16.gmra.mrb[0].mxu0 %v3119
    %v5621 = vpop.f32.mrb[0].mxu0
    %v5622 = vadd.f32 0.0, %v5621
    %v5623 = vpop.f32.mrb[0].mxu0
    %v5624 = vpop.f32.mrb[0].mxu0
    %v5625 = vadd.f32 0.0, %v5624
    %v5626 = vpop.f32.mrb[0].mxu0
    %5627 = vdwg.mxu0
    %v5628 = vld [vmem:[#allocation38] sm:$0x1]
    %v5630 = vlaneseq
    %v5631 = vshrl.u32 %v5630, 7
    %v5632 = vsub.s32 0, %v5631
    %v5633 = vrot.slane %v5628, %v5632
    %v5635 = vmul.f32 %v5614, %v5633
    %v5636 = vmul.f32 %v5617, %v5633
    %v5637 = vmul.f32 %v5622, %v5633
    %v5638 = vmul.f32 %v5625, %v5633
    %v5639 = vld [vmem:[#allocation39] sm:$0x1]
    %v5641 = vlaneseq
    %v5642 = vshrl.u32 %v5641, 7
    %v5643 = vsub.s32 0, %v5642
    %v5644 = vrot.slane %v5639, %v5643
    %v5646 = vadd.f32 %v5635, %v5644
    %v5647 = vadd.f32 %v5636, %v5644
    %v5648 = vadd.f32 %v5637, %v5644
    %v5649 = vadd.f32 %v5638, %v5644
    %v5650 = vadd.f32 %v5511, %v5646
    %v5651 = vadd.f32 %v5512, %v5647
    %v5652 = vadd.f32 %v5513, %v5648
    %v5653 = vadd.f32 %v5514, %v5649
    %v5654 = vpack.c.bf16 %v5651, %v5650
    %v5655 = vpack.c.bf16 %v5653, %v5652
    %v5658 = vrot.slane %v5654, 4
    %v5659 = vrot.slane %v5655, 4
    %5662 = vst [vmem:[#allocation2] sm:$0xf0] %v5658
    %5663 = vst [vmem:[#allocation2 + $0x8] sm:$0xf] %v5658
    %5664 = vst [vmem:[#allocation2 + $0x10] sm:$0xf0] %v5659
    %5665 = vst [vmem:[#allocation2 + $0x18] sm:$0xf] %v5659
    %v5666 = vld [vmem:[#allocation2] sm:$0xfc]
    %v5667 = vld [vmem:[#allocation2 + $0x8] sm:$0x7]
    %v5668 = vld [vmem:[#allocation2 + $0x10] sm:$0xfc]
    %v5669 = vld [vmem:[#allocation2 + $0x18] sm:$0x7]
    %v5671 = vshrl.u32 %v5666, 16
    %v5673 = vrot.slane %v5671, 2
    %v5674 = vshll.u32 %v5666, 16
    %v5676 = vrot.slane %v5674, 3
    %v5677 = vor.u32 %v5673, %v5676
    %v5679 = vshrl.u32 %v5667, 16
    %v5681 = vrot.slane %v5679, 2
    %v5682 = vshll.u32 %v5667, 16
    %v5684 = vrot.slane %v5682, 3
    %v5685 = vor.u32 %v5681, %v5684
    %v5686 = vsel %vm586, %v5677, %v5685
    %v5688 = vshrl.u32 %v5668, 16
    %v5690 = vrot.slane %v5688, 2
    %v5691 = vshll.u32 %v5668, 16
    %v5693 = vrot.slane %v5691, 3
    %v5694 = vor.u32 %v5690, %v5693
    %v5696 = vshrl.u32 %v5669, 16
    %v5698 = vrot.slane %v5696, 2
    %v5699 = vshll.u32 %v5669, 16
    %v5701 = vrot.slane %v5699, 3
    %v5702 = vor.u32 %v5698, %v5701
    %v5703 = vsel %vm586, %v5694, %v5702
    %v5706 = vld [vmem:[#allocation41] sm:$0xf]
    %v5707 = vld [vmem:[#allocation41 + $0x4] sm:$0xf]
    %v5708 = vld [vmem:[#allocation41 + $0x8] sm:$0xf]
    %v5709 = vld [vmem:[#allocation41 + $0xc] sm:$0xf]
    %v5710 = vld [vmem:[#allocation41 + $0x10] sm:$0xf]
    %v5711 = vld [vmem:[#allocation41 + $0x14] sm:$0xf]
    %v5712 = vld [vmem:[#allocation41 + $0x18] sm:$0xf]
    %v5713 = vld [vmem:[#allocation41 + $0x1c] sm:$0xf]
    %v5714 = vld [vmem:[#allocation41 + $0x20] sm:$0xf]
    %v5715 = vld [vmem:[#allocation41 + $0x24] sm:$0xf]
    %v5716 = vld [vmem:[#allocation41 + $0x28] sm:$0xf]
    %v5717 = vld [vmem:[#allocation41 + $0x2c] sm:$0xf]
    %v5718 = vld [vmem:[#allocation41 + $0x30] sm:$0xf]
    %v5719 = vld [vmem:[#allocation41 + $0x34] sm:$0xf]
    %v5720 = vld [vmem:[#allocation41 + $0x38] sm:$0xf]
    %v5721 = vld [vmem:[#allocation41 + $0x3c] sm:$0xf]
    %v5722 = vld [vmem:[#allocation2] sm:$0xf8]
    %v5723 = vld [vmem:[#allocation2 + $0x10] sm:$0xf8]
    %v5728 = vrot.slane %v5722, 3
    %v5729 = vrot.slane %v5667, 3
    %v5730 = vsel %vm645, %v5728, %v5729
    %v5731 = vrot.slane %v5723, 3
    %v5732 = vrot.slane %v5669, 3
    %v5733 = vsel %vm645, %v5731, %v5732
    %s5736 = scalar_lea.vmem [#allocation41], 64
    %v5737 = vld [vmem:[%s5736] sm:$0xf]
    %v5738 = vld [vmem:[%s5736 + $0x4] sm:$0xf]
    %v5739 = vld [vmem:[%s5736 + $0x8] sm:$0xf]
    %v5740 = vld [vmem:[%s5736 + $0xc] sm:$0xf]
    %v5741 = vld [vmem:[%s5736 + $0x10] sm:$0xf]
    %v5742 = vld [vmem:[%s5736 + $0x14] sm:$0xf]
    %v5743 = vld [vmem:[%s5736 + $0x18] sm:$0xf]
    %v5744 = vld [vmem:[%s5736 + $0x1c] sm:$0xf]
    %v5745 = vld [vmem:[%s5736 + $0x20] sm:$0xf]
    %v5746 = vld [vmem:[%s5736 + $0x24] sm:$0xf]
    %v5747 = vld [vmem:[%s5736 + $0x28] sm:$0xf]
    %v5748 = vld [vmem:[%s5736 + $0x2c] sm:$0xf]
    %v5749 = vld [vmem:[%s5736 + $0x30] sm:$0xf]
    %v5750 = vld [vmem:[%s5736 + $0x34] sm:$0xf]
    %v5751 = vld [vmem:[%s5736 + $0x38] sm:$0xf]
    %v5752 = vld [vmem:[%s5736 + $0x3c] sm:$0xf]
    %v5769 = vunpack.c.l.b16 %v5737
    %v5770 = vunpack.c.l.b16 %v5738
    %v5771 = vunpack.c.l.b16 %v5739
    %v5772 = vunpack.c.l.b16 %v5740
    %v5773 = vunpack.c.l.b16 %v5741
    %v5774 = vunpack.c.l.b16 %v5742
    %v5775 = vunpack.c.l.b16 %v5743
    %v5776 = vunpack.c.l.b16 %v5744
    %v5777 = vunpack.c.l.b16 %v5745
    %v5778 = vunpack.c.l.b16 %v5746
    %v5779 = vunpack.c.l.b16 %v5747
    %v5780 = vunpack.c.l.b16 %v5748
    %v5781 = vunpack.c.l.b16 %v5749
    %v5782 = vunpack.c.l.b16 %v5750
    %v5783 = vunpack.c.l.b16 %v5751
    %v5784 = vunpack.c.l.b16 %v5752
    %v5785 = vpack.c.b16 %v5770, %v5769
    %v5786 = vpack.c.b16 %v5772, %v5771
    %v5787 = vpack.c.b16 %v5774, %v5773
    %v5788 = vpack.c.b16 %v5776, %v5775
    %v5789 = vpack.c.b16 %v5778, %v5777
    %v5790 = vpack.c.b16 %v5780, %v5779
    %v5791 = vpack.c.b16 %v5782, %v5781
    %v5792 = vpack.c.b16 %v5784, %v5783
    %5801 = vmatprep.subr.bf16.mxu0 0
    %5802 = vmatpush1.bf16.msra.mxu0 %v5785
    %5803 = vmatprep.subr.bf16.mxu0 0
    %5804 = vmatpush1.bf16.msra.mxu0 %v5786
    %5805 = vmatprep.subr.bf16.mxu0 0
    %5806 = vmatpush1.bf16.msra.mxu0 %v5787
    %5807 = vmatprep.subr.bf16.mxu0 0
    %5808 = vmatpush1.bf16.msra.mxu0 %v5788
    %5809 = vmatprep.subr.bf16.mxu0 0
    %5810 = vmatpush1.bf16.msra.mxu0 %v5789
    %5811 = vmatprep.subr.bf16.mxu0 0
    %5812 = vmatpush1.bf16.msra.mxu0 %v5790
    %5813 = vmatprep.subr.bf16.mxu0 0
    %5814 = vmatpush1.bf16.msra.mxu0 %v5791
    %5815 = vmatprep.subr.bf16.mxu0 0
    %5816 = vmatpush1.bf16.msra.mxu0 %v5792
    %5817 = vmatprep.subr.bf16.mxu0 0
    %5818 = vmatpush1.bf16.msra.mxu0 0
    %5819 = vmatprep.subr.bf16.mxu0 0
    %5820 = vmatpush1.bf16.msra.mxu0 0
    %5821 = vmatprep.subr.bf16.mxu0 0
    %5822 = vmatpush1.bf16.msra.mxu0 0
    %5823 = vmatprep.subr.bf16.mxu0 0
    %5824 = vmatpush1.bf16.msra.mxu0 0
    %5825 = vmatprep.subr.bf16.mxu0 0
    %5826 = vmatpush1.bf16.msra.mxu0 0
    %5827 = vmatprep.subr.bf16.mxu0 0
    %5828 = vmatpush1.bf16.msra.mxu0 0
    %5829 = vmatprep.subr.bf16.mxu0 0
    %5830 = vmatpush1.bf16.msra.mxu0 0
    %5831 = vmatprep.subr.bf16.mxu0 0
    %5832 = vmatpush1.bf16.msra.mxu0 0
    %5833 = vmatprep.mubr.bf16.mxu0 0
    %5834 = vmatmul.mubr.bf16.gmra.mrb[0].mxu0 %v5730
    %v5835 = vpop.f32.mrb[0].mxu0
    %v5836 = vadd.f32 0.0, %v5835
    %v5837 = vpop.f32.mrb[0].mxu0
    %v5838 = vpop.f32.mrb[0].mxu0
    %v5839 = vadd.f32 0.0, %v5838
    %v5840 = vpop.f32.mrb[0].mxu0
    %5841 = vmatprep.mubr.bf16.mxu0 0
    %5842 = vmatmul.mubr.bf16.gmra.mrb[0].mxu0 %v5733
    %v5843 = vpop.f32.mrb[0].mxu0
    %v5844 = vadd.f32 0.0, %v5843
    %v5845 = vpop.f32.mrb[0].mxu0
    %v5846 = vpop.f32.mrb[0].mxu0
    %v5847 = vadd.f32 0.0, %v5846
    %v5848 = vpop.f32.mrb[0].mxu0
    %5849 = vdwg.mxu0
    %v5866 = vunpack.c.l.b16 %v5706
    %v5867 = vunpack.c.l.b16 %v5707
    %v5868 = vunpack.c.l.b16 %v5708
    %v5869 = vunpack.c.l.b16 %v5709
    %v5870 = vunpack.c.l.b16 %v5710
    %v5871 = vunpack.c.l.b16 %v5711
    %v5872 = vunpack.c.l.b16 %v5712
    %v5873 = vunpack.c.l.b16 %v5713
    %v5874 = vunpack.c.l.b16 %v5714
    %v5875 = vunpack.c.l.b16 %v5715
    %v5876 = vunpack.c.l.b16 %v5716
    %v5877 = vunpack.c.l.b16 %v5717
    %v5878 = vunpack.c.l.b16 %v5718
    %v5879 = vunpack.c.l.b16 %v5719
    %v5880 = vunpack.c.l.b16 %v5720
    %v5881 = vunpack.c.l.b16 %v5721
    %v5882 = vpack.c.b16 %v5867, %v5866
    %v5883 = vpack.c.b16 %v5869, %v5868
    %v5884 = vpack.c.b16 %v5871, %v5870
    %v5885 = vpack.c.b16 %v5873, %v5872
    %v5886 = vpack.c.b16 %v5875, %v5874
    %v5887 = vpack.c.b16 %v5877, %v5876
    %v5888 = vpack.c.b16 %v5879, %v5878
    %v5889 = vpack.c.b16 %v5881, %v5880
    %5898 = vmatprep.subr.bf16.mxu0 0
    %5899 = vmatpush1.bf16.msra.mxu0 %v5882
    %5900 = vmatprep.subr.bf16.mxu0 0
    %5901 = vmatpush1.bf16.msra.mxu0 %v5883
    %5902 = vmatprep.subr.bf16.mxu0 0
    %5903 = vmatpush1.bf16.msra.mxu0 %v5884
    %5904 = vmatprep.subr.bf16.mxu0 0
    %5905 = vmatpush1.bf16.msra.mxu0 %v5885
    %5906 = vmatprep.subr.bf16.mxu0 0
    %5907 = vmatpush1.bf16.msra.mxu0 %v5886
    %5908 = vmatprep.subr.bf16.mxu0 0
    %5909 = vmatpush1.bf16.msra.mxu0 %v5887
    %5910 = vmatprep.subr.bf16.mxu0 0
    %5911 = vmatpush1.bf16.msra.mxu0 %v5888
    %5912 = vmatprep.subr.bf16.mxu0 0
    %5913 = vmatpush1.bf16.msra.mxu0 %v5889
    %5914 = vmatprep.subr.bf16.mxu0 0
    %5915 = vmatpush1.bf16.msra.mxu0 0
    %5916 = vmatprep.subr.bf16.mxu0 0
    %5917 = vmatpush1.bf16.msra.mxu0 0
    %5918 = vmatprep.subr.bf16.mxu0 0
    %5919 = vmatpush1.bf16.msra.mxu0 0
    %5920 = vmatprep.subr.bf16.mxu0 0
    %5921 = vmatpush1.bf16.msra.mxu0 0
    %5922 = vmatprep.subr.bf16.mxu0 0
    %5923 = vmatpush1.bf16.msra.mxu0 0
    %5924 = vmatprep.subr.bf16.mxu0 0
    %5925 = vmatpush1.bf16.msra.mxu0 0
    %5926 = vmatprep.subr.bf16.mxu0 0
    %5927 = vmatpush1.bf16.msra.mxu0 0
    %5928 = vmatprep.subr.bf16.mxu0 0
    %5929 = vmatpush1.bf16.msra.mxu0 0
    %5930 = vmatprep.mubr.bf16.mxu0 0
    %5931 = vmatmul.mubr.bf16.gmra.mrb[0].mxu0 %v5686
    %v5932 = vpop.f32.mrb[0].mxu0
    %v5933 = vadd.f32 %v5836, %v5932
    %v5934 = vpop.f32.mrb[0].mxu0
    %v5935 = vpop.f32.mrb[0].mxu0
    %v5936 = vadd.f32 %v5839, %v5935
    %v5937 = vpop.f32.mrb[0].mxu0
    %5938 = vmatprep.mubr.bf16.mxu0 0
    %5939 = vmatmul.mubr.bf16.gmra.mrb[0].mxu0 %v5703
    %v5940 = vpop.f32.mrb[0].mxu0
    %v5941 = vadd.f32 %v5844, %v5940
    %v5942 = vpop.f32.mrb[0].mxu0
    %v5943 = vpop.f32.mrb[0].mxu0
    %v5944 = vadd.f32 %v5847, %v5943
    %v5945 = vpop.f32.mrb[0].mxu0
    %5946 = vdwg.mxu0
    %v5947 = vld [vmem:[#allocation2 + $0x8] sm:$0xf]
    %v5948 = vld [vmem:[#allocation2 + $0x18] sm:$0xf]
    %v5950 = vshrl.u32 %v5722, 16
    %v5952 = vrot.slane %v5950, 3
    %v5953 = vshll.u32 %v5722, 16
    %v5955 = vrot.slane %v5953, 4
    %v5956 = vor.u32 %v5952, %v5955
    %v5958 = vshrl.u32 %v5947, 16
    %v5960 = vrot.slane %v5958, 3
    %v5961 = vshll.u32 %v5947, 16
    %v5963 = vrot.slane %v5961, 4
    %v5964 = vor.u32 %v5960, %v5963
    %v5965 = vsel %vm867, %v5956, %v5964
    %v5967 = vshrl.u32 %v5723, 16
    %v5969 = vrot.slane %v5967, 3
    %v5970 = vshll.u32 %v5723, 16
    %v5972 = vrot.slane %v5970, 4
    %v5973 = vor.u32 %v5969, %v5972
    %v5975 = vshrl.u32 %v5948, 16
    %v5977 = vrot.slane %v5975, 3
    %v5978 = vshll.u32 %v5948, 16
    %v5980 = vrot.slane %v5978, 4
    %v5981 = vor.u32 %v5977, %v5980
    %v5982 = vsel %vm867, %v5973, %v5981
    %s5985 = scalar_lea.vmem [#allocation41], 128
    %v5986 = vld [vmem:[%s5985] sm:$0xf]
    %v5987 = vld [vmem:[%s5985 + $0x4] sm:$0xf]
    %v5988 = vld [vmem:[%s5985 + $0x8] sm:$0xf]
    %v5989 = vld [vmem:[%s5985 + $0xc] sm:$0xf]
    %v5990 = vld [vmem:[%s5985 + $0x10] sm:$0xf]
    %v5991 = vld [vmem:[%s5985 + $0x14] sm:$0xf]
    %v5992 = vld [vmem:[%s5985 + $0x18] sm:$0xf]
    %v5993 = vld [vmem:[%s5985 + $0x1c] sm:$0xf]
    %v5994 = vld [vmem:[%s5985 + $0x20] sm:$0xf]
    %v5995 = vld [vmem:[%s5985 + $0x24] sm:$0xf]
    %v5996 = vld [vmem:[%s5985 + $0x28] sm:$0xf]
    %v5997 = vld [vmem:[%s5985 + $0x2c] sm:$0xf]
    %v5998 = vld [vmem:[%s5985 + $0x30] sm:$0xf]
    %v5999 = vld [vmem:[%s5985 + $0x34] sm:$0xf]
    %v6000 = vld [vmem:[%s5985 + $0x38] sm:$0xf]
    %v6001 = vld [vmem:[%s5985 + $0x3c] sm:$0xf]
    %v6018 = vunpack.c.l.b16 %v5986
    %v6019 = vunpack.c.l.b16 %v5987
    %v6020 = vunpack.c.l.b16 %v5988
    %v6021 = vunpack.c.l.b16 %v5989
    %v6022 = vunpack.c.l.b16 %v5990
    %v6023 = vunpack.c.l.b16 %v5991
    %v6024 = vunpack.c.l.b16 %v5992
    %v6025 = vunpack.c.l.b16 %v5993
    %v6026 = vunpack.c.l.b16 %v5994
    %v6027 = vunpack.c.l.b16 %v5995
    %v6028 = vunpack.c.l.b16 %v5996
    %v6029 = vunpack.c.l.b16 %v5997
    %v6030 = vunpack.c.l.b16 %v5998
    %v6031 = vunpack.c.l.b16 %v5999
    %v6032 = vunpack.c.l.b16 %v6000
    %v6033 = vunpack.c.l.b16 %v6001
    %v6034 = vpack.c.b16 %v6019, %v6018
    %v6035 = vpack.c.b16 %v6021, %v6020
    %v6036 = vpack.c.b16 %v6023, %v6022
    %v6037 = vpack.c.b16 %v6025, %v6024
    %v6038 = vpack.c.b16 %v6027, %v6026
    %v6039 = vpack.c.b16 %v6029, %v6028
    %v6040 = vpack.c.b16 %v6031, %v6030
    %v6041 = vpack.c.b16 %v6033, %v6032
    %6050 = vmatprep.subr.bf16.mxu0 0
    %6051 = vmatpush1.bf16.msra.mxu0 %v6034
    %6052 = vmatprep.subr.bf16.mxu0 0
    %6053 = vmatpush1.bf16.msra.mxu0 %v6035
    %6054 = vmatprep.subr.bf16.mxu0 0
    %6055 = vmatpush1.bf16.msra.mxu0 %v6036
    %6056 = vmatprep.subr.bf16.mxu0 0
    %6057 = vmatpush1.bf16.msra.mxu0 %v6037
    %6058 = vmatprep.subr.bf16.mxu0 0
    %6059 = vmatpush1.bf16.msra.mxu0 %v6038
    %6060 = vmatprep.subr.bf16.mxu0 0
    %6061 = vmatpush1.bf16.msra.mxu0 %v6039
    %6062 = vmatprep.subr.bf16.mxu0 0
    %6063 = vmatpush1.bf16.msra.mxu0 %v6040
    %6064 = vmatprep.subr.bf16.mxu0 0
    %6065 = vmatpush1.bf16.msra.mxu0 %v6041
    %6066 = vmatprep.subr.bf16.mxu0 0
    %6067 = vmatpush1.bf16.msra.mxu0 0
    %6068 = vmatprep.subr.bf16.mxu0 0
    %6069 = vmatpush1.bf16.msra.mxu0 0
    %6070 = vmatprep.subr.bf16.mxu0 0
    %6071 = vmatpush1.bf16.msra.mxu0 0
    %6072 = vmatprep.subr.bf16.mxu0 0
    %6073 = vmatpush1.bf16.msra.mxu0 0
    %6074 = vmatprep.subr.bf16.mxu0 0
    %6075 = vmatpush1.bf16.msra.mxu0 0
    %6076 = vmatprep.subr.bf16.mxu0 0
    %6077 = vmatpush1.bf16.msra.mxu0 0
    %6078 = vmatprep.subr.bf16.mxu0 0
    %6079 = vmatpush1.bf16.msra.mxu0 0
    %6080 = vmatprep.subr.bf16.mxu0 0
    %6081 = vmatpush1.bf16.msra.mxu0 0
    %6082 = vmatprep.mubr.bf16.mxu0 0
    %6083 = vmatmul.mubr.bf16.gmra.mrb[0].mxu0 %v5965
    %v6084 = vpop.f32.mrb[0].mxu0
    %v6085 = vadd.f32 0.0, %v6084
    %v6086 = vpop.f32.mrb[0].mxu0
    %v6087 = vpop.f32.mrb[0].mxu0
    %v6088 = vadd.f32 0.0, %v6087
    %v6089 = vpop.f32.mrb[0].mxu0
    %6090 = vmatprep.mubr.bf16.mxu0 0
    %6091 = vmatmul.mubr.bf16.gmra.mrb[0].mxu0 %v5982
    %v6092 = vpop.f32.mrb[0].mxu0
    %v6093 = vadd.f32 0.0, %v6092
    %v6094 = vpop.f32.mrb[0].mxu0
    %v6095 = vpop.f32.mrb[0].mxu0
    %v6096 = vadd.f32 0.0, %v6095
    %v6097 = vpop.f32.mrb[0].mxu0
    %6098 = vdwg.mxu0
    %v6099 = vadd.f32 %v5933, %v6085
    %v6100 = vadd.f32 %v5936, %v6088
    %v6101 = vadd.f32 %v5941, %v6093
    %v6102 = vadd.f32 %v5944, %v6096
    %v6103 = vld [vmem:[#allocation2] sm:$0xf0]
    %v6104 = vld [vmem:[#allocation2 + $0x10] sm:$0xf0]
    %v6109 = vrot.slane %v6103, 4
    %v6110 = vrot.slane %v5947, 4
    %v6111 = vsel %vm1028, %v6109, %v6110
    %v6112 = vrot.slane %v6104, 4
    %v6113 = vrot.slane %v5948, 4
    %v6114 = vsel %vm1028, %v6112, %v6113
    %s6117 = scalar_lea.vmem [#allocation41], 192
    %v6118 = vld [vmem:[%s6117] sm:$0xf]
    %v6119 = vld [vmem:[%s6117 + $0x4] sm:$0xf]
    %v6120 = vld [vmem:[%s6117 + $0x8] sm:$0xf]
    %v6121 = vld [vmem:[%s6117 + $0xc] sm:$0xf]
    %v6122 = vld [vmem:[%s6117 + $0x10] sm:$0xf]
    %v6123 = vld [vmem:[%s6117 + $0x14] sm:$0xf]
    %v6124 = vld [vmem:[%s6117 + $0x18] sm:$0xf]
    %v6125 = vld [vmem:[%s6117 + $0x1c] sm:$0xf]
    %v6126 = vld [vmem:[%s6117 + $0x20] sm:$0xf]
    %v6127 = vld [vmem:[%s6117 + $0x24] sm:$0xf]
    %v6128 = vld [vmem:[%s6117 + $0x28] sm:$0xf]
    %v6129 = vld [vmem:[%s6117 + $0x2c] sm:$0xf]
    %v6130 = vld [vmem:[%s6117 + $0x30] sm:$0xf]
    %v6131 = vld [vmem:[%s6117 + $0x34] sm:$0xf]
    %v6132 = vld [vmem:[%s6117 + $0x38] sm:$0xf]
    %v6133 = vld [vmem:[%s6117 + $0x3c] sm:$0xf]
    %v6150 = vunpack.c.l.b16 %v6118
    %v6151 = vunpack.c.l.b16 %v6119
    %v6152 = vunpack.c.l.b16 %v6120
    %v6153 = vunpack.c.l.b16 %v6121
    %v6154 = vunpack.c.l.b16 %v6122
    %v6155 = vunpack.c.l.b16 %v6123
    %v6156 = vunpack.c.l.b16 %v6124
    %v6157 = vunpack.c.l.b16 %v6125
    %v6158 = vunpack.c.l.b16 %v6126
    %v6159 = vunpack.c.l.b16 %v6127
    %v6160 = vunpack.c.l.b16 %v6128
    %v6161 = vunpack.c.l.b16 %v6129
    %v6162 = vunpack.c.l.b16 %v6130
    %v6163 = vunpack.c.l.b16 %v6131
    %v6164 = vunpack.c.l.b16 %v6132
    %v6165 = vunpack.c.l.b16 %v6133
    %v6166 = vpack.c.b16 %v6151, %v6150
    %v6167 = vpack.c.b16 %v6153, %v6152
    %v6168 = vpack.c.b16 %v6155, %v6154
    %v6169 = vpack.c.b16 %v6157, %v6156
    %v6170 = vpack.c.b16 %v6159, %v6158
    %v6171 = vpack.c.b16 %v6161, %v6160
    %v6172 = vpack.c.b16 %v6163, %v6162
    %v6173 = vpack.c.b16 %v6165, %v6164
    %6182 = vmatprep.subr.bf16.mxu0 0
    %6183 = vmatpush1.bf16.msra.mxu0 %v6166
    %6184 = vmatprep.subr.bf16.mxu0 0
    %6185 = vmatpush1.bf16.msra.mxu0 %v6167
    %6186 = vmatprep.subr.bf16.mxu0 0
    %6187 = vmatpush1.bf16.msra.mxu0 %v6168
    %6188 = vmatprep.subr.bf16.mxu0 0
    %6189 = vmatpush1.bf16.msra.mxu0 %v6169
    %6190 = vmatprep.subr.bf16.mxu0 0
    %6191 = vmatpush1.bf16.msra.mxu0 %v6170
    %6192 = vmatprep.subr.bf16.mxu0 0
    %6193 = vmatpush1.bf16.msra.mxu0 %v6171
    %6194 = vmatprep.subr.bf16.mxu0 0
    %6195 = vmatpush1.bf16.msra.mxu0 %v6172
    %6196 = vmatprep.subr.bf16.mxu0 0
    %6197 = vmatpush1.bf16.msra.mxu0 %v6173
    %6198 = vmatprep.subr.bf16.mxu0 0
    %6199 = vmatpush1.bf16.msra.mxu0 0
    %6200 = vmatprep.subr.bf16.mxu0 0
    %6201 = vmatpush1.bf16.msra.mxu0 0
    %6202 = vmatprep.subr.bf16.mxu0 0
    %6203 = vmatpush1.bf16.msra.mxu0 0
    %6204 = vmatprep.subr.bf16.mxu0 0
    %6205 = vmatpush1.bf16.msra.mxu0 0
    %6206 = vmatprep.subr.bf16.mxu0 0
    %6207 = vmatpush1.bf16.msra.mxu0 0
    %6208 = vmatprep.subr.bf16.mxu0 0
    %6209 = vmatpush1.bf16.msra.mxu0 0
    %6210 = vmatprep.subr.bf16.mxu0 0
    %6211 = vmatpush1.bf16.msra.mxu0 0
    %6212 = vmatprep.subr.bf16.mxu0 0
    %6213 = vmatpush1.bf16.msra.mxu0 0
    %6214 = vmatprep.mubr.bf16.mxu0 0
    %6215 = vmatmul.mubr.bf16.gmra.mrb[0].mxu0 %v6111
    %v6216 = vpop.f32.mrb[0].mxu0
    %v6217 = vadd.f32 0.0, %v6216
    %v6218 = vpop.f32.mrb[0].mxu0
    %v6219 = vpop.f32.mrb[0].mxu0
    %v6220 = vadd.f32 0.0, %v6219
    %v6221 = vpop.f32.mrb[0].mxu0
    %6222 = vmatprep.mubr.bf16.mxu0 0
    %6223 = vmatmul.mubr.bf16.gmra.mrb[0].mxu0 %v6114
    %v6224 = vpop.f32.mrb[0].mxu0
    %v6225 = vadd.f32 0.0, %v6224
    %v6226 = vpop.f32.mrb[0].mxu0
    %v6227 = vpop.f32.mrb[0].mxu0
    %v6228 = vadd.f32 0.0, %v6227
    %v6229 = vpop.f32.mrb[0].mxu0
    %6230 = vdwg.mxu0
    %v6231 = vadd.f32 %v6099, %v6217
    %v6232 = vadd.f32 %v6100, %v6220
    %v6233 = vadd.f32 %v6101, %v6225
    %v6234 = vadd.f32 %v6102, %v6228
    %v6235 = vld [vmem:[#allocation2 + $0x8] sm:$0x1f]
    %v6236 = vld [vmem:[#allocation2 + $0x18] sm:$0x1f]
    %v6238 = vshrl.u32 %v6103, 16
    %v6240 = vrot.slane %v6238, 4
    %v6241 = vshll.u32 %v6103, 16
    %v6243 = vrot.slane %v6241, 5
    %v6244 = vor.u32 %v6240, %v6243
    %v6246 = vshrl.u32 %v6235, 16
    %v6248 = vrot.slane %v6246, 4
    %v6249 = vshll.u32 %v6235, 16
    %v6251 = vrot.slane %v6249, 5
    %v6252 = vor.u32 %v6248, %v6251
    %v6253 = vsel %vm1157, %v6244, %v6252
    %v6255 = vshrl.u32 %v6104, 16
    %v6257 = vrot.slane %v6255, 4
    %v6258 = vshll.u32 %v6104, 16
    %v6260 = vrot.slane %v6258, 5
    %v6261 = vor.u32 %v6257, %v6260
    %v6263 = vshrl.u32 %v6236, 16
    %v6265 = vrot.slane %v6263, 4
    %v6266 = vshll.u32 %v6236, 16
    %v6268 = vrot.slane %v6266, 5
    %v6269 = vor.u32 %v6265, %v6268
    %v6270 = vsel %vm1157, %v6261, %v6269
    %s6273 = scalar_lea.vmem [#allocation41], 256
    %v6274 = vld [vmem:[%s6273] sm:$0xf]
    %v6275 = vld [vmem:[%s6273 + $0x4] sm:$0xf]
    %v6276 = vld [vmem:[%s6273 + $0x8] sm:$0xf]
    %v6277 = vld [vmem:[%s6273 + $0xc] sm:$0xf]
    %v6278 = vld [vmem:[%s6273 + $0x10] sm:$0xf]
    %v6279 = vld [vmem:[%s6273 + $0x14] sm:$0xf]
    %v6280 = vld [vmem:[%s6273 + $0x18] sm:$0xf]
    %v6281 = vld [vmem:[%s6273 + $0x1c] sm:$0xf]
    %v6282 = vld [vmem:[%s6273 + $0x20] sm:$0xf]
    %v6283 = vld [vmem:[%s6273 + $0x24] sm:$0xf]
    %v6284 = vld [vmem:[%s6273 + $0x28] sm:$0xf]
    %v6285 = vld [vmem:[%s6273 + $0x2c] sm:$0xf]
    %v6286 = vld [vmem:[%s6273 + $0x30] sm:$0xf]
    %v6287 = vld [vmem:[%s6273 + $0x34] sm:$0xf]
    %v6288 = vld [vmem:[%s6273 + $0x38] sm:$0xf]
    %v6289 = vld [vmem:[%s6273 + $0x3c] sm:$0xf]
    %v6306 = vunpack.c.l.b16 %v6274
    %v6307 = vunpack.c.l.b16 %v6275
    %v6308 = vunpack.c.l.b16 %v6276
    %v6309 = vunpack.c.l.b16 %v6277
    %v6310 = vunpack.c.l.b16 %v6278
    %v6311 = vunpack.c.l.b16 %v6279
    %v6312 = vunpack.c.l.b16 %v6280
    %v6313 = vunpack.c.l.b16 %v6281
    %v6314 = vunpack.c.l.b16 %v6282
    %v6315 = vunpack.c.l.b16 %v6283
    %v6316 = vunpack.c.l.b16 %v6284
    %v6317 = vunpack.c.l.b16 %v6285
    %v6318 = vunpack.c.l.b16 %v6286
    %v6319 = vunpack.c.l.b16 %v6287
    %v6320 = vunpack.c.l.b16 %v6288
    %v6321 = vunpack.c.l.b16 %v6289
    %v6322 = vpack.c.b16 %v6307, %v6306
    %v6323 = vpack.c.b16 %v6309, %v6308
    %v6324 = vpack.c.b16 %v6311, %v6310
    %v6325 = vpack.c.b16 %v6313, %v6312
    %v6326 = vpack.c.b16 %v6315, %v6314
    %v6327 = vpack.c.b16 %v6317, %v6316
    %v6328 = vpack.c.b16 %v6319, %v6318
    %v6329 = vpack.c.b16 %v6321, %v6320
    %6338 = vmatprep.subr.bf16.mxu0 0
    %6339 = vmatpush1.bf16.msra.mxu0 %v6322
    %6340 = vmatprep.subr.bf16.mxu0 0
    %6341 = vmatpush1.bf16.msra.mxu0 %v6323
    %6342 = vmatprep.subr.bf16.mxu0 0
    %6343 = vmatpush1.bf16.msra.mxu0 %v6324
    %6344 = vmatprep.subr.bf16.mxu0 0
    %6345 = vmatpush1.bf16.msra.mxu0 %v6325
    %6346 = vmatprep.subr.bf16.mxu0 0
    %6347 = vmatpush1.bf16.msra.mxu0 %v6326
    %6348 = vmatprep.subr.bf16.mxu0 0
    %6349 = vmatpush1.bf16.msra.mxu0 %v6327
    %6350 = vmatprep.subr.bf16.mxu0 0
    %6351 = vmatpush1.bf16.msra.mxu0 %v6328
    %6352 = vmatprep.subr.bf16.mxu0 0
    %6353 = vmatpush1.bf16.msra.mxu0 %v6329
    %6354 = vmatprep.subr.bf16.mxu0 0
    %6355 = vmatpush1.bf16.msra.mxu0 0
    %6356 = vmatprep.subr.bf16.mxu0 0
    %6357 = vmatpush1.bf16.msra.mxu0 0
    %6358 = vmatprep.subr.bf16.mxu0 0
    %6359 = vmatpush1.bf16.msra.mxu0 0
    %6360 = vmatprep.subr.bf16.mxu0 0
    %6361 = vmatpush1.bf16.msra.mxu0 0
    %6362 = vmatprep.subr.bf16.mxu0 0
    %6363 = vmatpush1.bf16.msra.mxu0 0
    %6364 = vmatprep.subr.bf16.mxu0 0
    %6365 = vmatpush1.bf16.msra.mxu0 0
    %6366 = vmatprep.subr.bf16.mxu0 0
    %6367 = vmatpush1.bf16.msra.mxu0 0
    %6368 = vmatprep.subr.bf16.mxu0 0
    %6369 = vmatpush1.bf16.msra.mxu0 0
    %6370 = vmatprep.mubr.bf16.mxu0 0
    %6371 = vmatmul.mubr.bf16.gmra.mrb[0].mxu0 %v6253
    %v6372 = vpop.f32.mrb[0].mxu0
    %v6373 = vadd.f32 0.0, %v6372
    %v6374 = vpop.f32.mrb[0].mxu0
    %v6375 = vpop.f32.mrb[0].mxu0
    %v6376 = vadd.f32 0.0, %v6375
    %v6377 = vpop.f32.mrb[0].mxu0
    %6378 = vmatprep.mubr.bf16.mxu0 0
    %6379 = vmatmul.mubr.bf16.gmra.mrb[0].mxu0 %v6270
    %v6380 = vpop.f32.mrb[0].mxu0
    %v6381 = vadd.f32 0.0, %v6380
    %v6382 = vpop.f32.mrb[0].mxu0
    %v6383 = vpop.f32.mrb[0].mxu0
    %v6384 = vadd.f32 0.0, %v6383
    %v6385 = vpop.f32.mrb[0].mxu0
    %6386 = vdwg.mxu0
    %v6387 = vadd.f32 %v6231, %v6373
    %v6388 = vadd.f32 %v6232, %v6376
    %v6389 = vadd.f32 %v6233, %v6381
    %v6390 = vadd.f32 %v6234, %v6384
    %v6391 = vld [vmem:[#allocation2] sm:$0xe0]
    %v6392 = vld [vmem:[#allocation2 + $0x10] sm:$0xe0]
    %v6397 = vrot.slane %v6391, 5
    %v6398 = vrot.slane %v6235, 5
    %v6399 = vsel %vm1318, %v6397, %v6398
    %v6400 = vrot.slane %v6392, 5
    %v6401 = vrot.slane %v6236, 5
    %v6402 = vsel %vm1318, %v6400, %v6401
    %s6405 = scalar_lea.vmem [#allocation41], 320
    %v6406 = vld [vmem:[%s6405] sm:$0xf]
    %v6407 = vld [vmem:[%s6405 + $0x4] sm:$0xf]
    %v6408 = vld [vmem:[%s6405 + $0x8] sm:$0xf]
    %v6409 = vld [vmem:[%s6405 + $0xc] sm:$0xf]
    %v6410 = vld [vmem:[%s6405 + $0x10] sm:$0xf]
    %v6411 = vld [vmem:[%s6405 + $0x14] sm:$0xf]
    %v6412 = vld [vmem:[%s6405 + $0x18] sm:$0xf]
    %v6413 = vld [vmem:[%s6405 + $0x1c] sm:$0xf]
    %v6414 = vld [vmem:[%s6405 + $0x20] sm:$0xf]
    %v6415 = vld [vmem:[%s6405 + $0x24] sm:$0xf]
    %v6416 = vld [vmem:[%s6405 + $0x28] sm:$0xf]
    %v6417 = vld [vmem:[%s6405 + $0x2c] sm:$0xf]
    %v6418 = vld [vmem:[%s6405 + $0x30] sm:$0xf]
    %v6419 = vld [vmem:[%s6405 + $0x34] sm:$0xf]
    %v6420 = vld [vmem:[%s6405 + $0x38] sm:$0xf]
    %v6421 = vld [vmem:[%s6405 + $0x3c] sm:$0xf]
    %v6438 = vunpack.c.l.b16 %v6406
    %v6439 = vunpack.c.l.b16 %v6407
    %v6440 = vunpack.c.l.b16 %v6408
    %v6441 = vunpack.c.l.b16 %v6409
    %v6442 = vunpack.c.l.b16 %v6410
    %v6443 = vunpack.c.l.b16 %v6411
    %v6444 = vunpack.c.l.b16 %v6412
    %v6445 = vunpack.c.l.b16 %v6413
    %v6446 = vunpack.c.l.b16 %v6414
    %v6447 = vunpack.c.l.b16 %v6415
    %v6448 = vunpack.c.l.b16 %v6416
    %v6449 = vunpack.c.l.b16 %v6417
    %v6450 = vunpack.c.l.b16 %v6418
    %v6451 = vunpack.c.l.b16 %v6419
    %v6452 = vunpack.c.l.b16 %v6420
    %v6453 = vunpack.c.l.b16 %v6421
    %v6454 = vpack.c.b16 %v6439, %v6438
    %v6455 = vpack.c.b16 %v6441, %v6440
    %v6456 = vpack.c.b16 %v6443, %v6442
    %v6457 = vpack.c.b16 %v6445, %v6444
    %v6458 = vpack.c.b16 %v6447, %v6446
    %v6459 = vpack.c.b16 %v6449, %v6448
    %v6460 = vpack.c.b16 %v6451, %v6450
    %v6461 = vpack.c.b16 %v6453, %v6452
    %6470 = vmatprep.subr.bf16.mxu0 0
    %6471 = vmatpush1.bf16.msra.mxu0 %v6454
    %6472 = vmatprep.subr.bf16.mxu0 0
    %6473 = vmatpush1.bf16.msra.mxu0 %v6455
    %6474 = vmatprep.subr.bf16.mxu0 0
    %6475 = vmatpush1.bf16.msra.mxu0 %v6456
    %6476 = vmatprep.subr.bf16.mxu0 0
    %6477 = vmatpush1.bf16.msra.mxu0 %v6457
    %6478 = vmatprep.subr.bf16.mxu0 0
    %6479 = vmatpush1.bf16.msra.mxu0 %v6458
    %6480 = vmatprep.subr.bf16.mxu0 0
    %6481 = vmatpush1.bf16.msra.mxu0 %v6459
    %6482 = vmatprep.subr.bf16.mxu0 0
    %6483 = vmatpush1.bf16.msra.mxu0 %v6460
    %6484 = vmatprep.subr.bf16.mxu0 0
    %6485 = vmatpush1.bf16.msra.mxu0 %v6461
    %6486 = vmatprep.subr.bf16.mxu0 0
    %6487 = vmatpush1.bf16.msra.mxu0 0
    %6488 = vmatprep.subr.bf16.mxu0 0
    %6489 = vmatpush1.bf16.msra.mxu0 0
    %6490 = vmatprep.subr.bf16.mxu0 0
    %6491 = vmatpush1.bf16.msra.mxu0 0
    %6492 = vmatprep.subr.bf16.mxu0 0
    %6493 = vmatpush1.bf16.msra.mxu0 0
    %6494 = vmatprep.subr.bf16.mxu0 0
    %6495 = vmatpush1.bf16.msra.mxu0 0
    %6496 = vmatprep.subr.bf16.mxu0 0
    %6497 = vmatpush1.bf16.msra.mxu0 0
    %6498 = vmatprep.subr.bf16.mxu0 0
    %6499 = vmatpush1.bf16.msra.mxu0 0
    %6500 = vmatprep.subr.bf16.mxu0 0
    %6501 = vmatpush1.bf16.msra.mxu0 0
    %6502 = vmatprep.mubr.bf16.mxu0 0
    %6503 = vmatmul.mubr.bf16.gmra.mrb[0].mxu0 %v6399
    %v6504 = vpop.f32.mrb[0].mxu0
    %v6505 = vadd.f32 0.0, %v6504
    %v6506 = vpop.f32.mrb[0].mxu0
    %v6507 = vpop.f32.mrb[0].mxu0
    %v6508 = vadd.f32 0.0, %v6507
    %v6509 = vpop.f32.mrb[0].mxu0
    %6510 = vmatprep.mubr.bf16.mxu0 0
    %6511 = vmatmul.mubr.bf16.gmra.mrb[0].mxu0 %v6402
    %v6512 = vpop.f32.mrb[0].mxu0
    %v6513 = vadd.f32 0.0, %v6512
    %v6514 = vpop.f32.mrb[0].mxu0
    %v6515 = vpop.f32.mrb[0].mxu0
    %v6516 = vadd.f32 0.0, %v6515
    %v6517 = vpop.f32.mrb[0].mxu0
    %6518 = vdwg.mxu0
    %v6519 = vadd.f32 %v6387, %v6505
    %v6520 = vadd.f32 %v6388, %v6508
    %v6521 = vadd.f32 %v6389, %v6513
    %v6522 = vadd.f32 %v6390, %v6516
    %v6523 = vld [vmem:[#allocation2 + $0x8] sm:$0x3f]
    %v6524 = vld [vmem:[#allocation2 + $0x18] sm:$0x3f]
    %v6526 = vshrl.u32 %v6391, 16
    %v6528 = vrot.slane %v6526, 5
    %v6529 = vshll.u32 %v6391, 16
    %v6531 = vrot.slane %v6529, 6
    %v6532 = vor.u32 %v6528, %v6531
    %v6534 = vshrl.u32 %v6523, 16
    %v6536 = vrot.slane %v6534, 5
    %v6537 = vshll.u32 %v6523, 16
    %v6539 = vrot.slane %v6537, 6
    %v6540 = vor.u32 %v6536, %v6539
    %v6541 = vsel %vm1447, %v6532, %v6540
    %v6543 = vshrl.u32 %v6392, 16
    %v6545 = vrot.slane %v6543, 5
    %v6546 = vshll.u32 %v6392, 16
    %v6548 = vrot.slane %v6546, 6
    %v6549 = vor.u32 %v6545, %v6548
    %v6551 = vshrl.u32 %v6524, 16
    %v6553 = vrot.slane %v6551, 5
    %v6554 = vshll.u32 %v6524, 16
    %v6556 = vrot.slane %v6554, 6
    %v6557 = vor.u32 %v6553, %v6556
    %v6558 = vsel %vm1447, %v6549, %v6557
    %s6561 = scalar_lea.vmem [#allocation41], 384
    %v6562 = vld [vmem:[%s6561] sm:$0xf]
    %v6563 = vld [vmem:[%s6561 + $0x4] sm:$0xf]
    %v6564 = vld [vmem:[%s6561 + $0x8] sm:$0xf]
    %v6565 = vld [vmem:[%s6561 + $0xc] sm:$0xf]
    %v6566 = vld [vmem:[%s6561 + $0x10] sm:$0xf]
    %v6567 = vld [vmem:[%s6561 + $0x14] sm:$0xf]
    %v6568 = vld [vmem:[%s6561 + $0x18] sm:$0xf]
    %v6569 = vld [vmem:[%s6561 + $0x1c] sm:$0xf]
    %v6570 = vld [vmem:[%s6561 + $0x20] sm:$0xf]
    %v6571 = vld [vmem:[%s6561 + $0x24] sm:$0xf]
    %v6572 = vld [vmem:[%s6561 + $0x28] sm:$0xf]
    %v6573 = vld [vmem:[%s6561 + $0x2c] sm:$0xf]
    %v6574 = vld [vmem:[%s6561 + $0x30] sm:$0xf]
    %v6575 = vld [vmem:[%s6561 + $0x34] sm:$0xf]
    %v6576 = vld [vmem:[%s6561 + $0x38] sm:$0xf]
    %v6577 = vld [vmem:[%s6561 + $0x3c] sm:$0xf]
    %v6594 = vunpack.c.l.b16 %v6562
    %v6595 = vunpack.c.l.b16 %v6563
    %v6596 = vunpack.c.l.b16 %v6564
    %v6597 = vunpack.c.l.b16 %v6565
    %v6598 = vunpack.c.l.b16 %v6566
    %v6599 = vunpack.c.l.b16 %v6567
    %v6600 = vunpack.c.l.b16 %v6568
    %v6601 = vunpack.c.l.b16 %v6569
    %v6602 = vunpack.c.l.b16 %v6570
    %v6603 = vunpack.c.l.b16 %v6571
    %v6604 = vunpack.c.l.b16 %v6572
    %v6605 = vunpack.c.l.b16 %v6573
    %v6606 = vunpack.c.l.b16 %v6574
    %v6607 = vunpack.c.l.b16 %v6575
    %v6608 = vunpack.c.l.b16 %v6576
    %v6609 = vunpack.c.l.b16 %v6577
    %v6610 = vpack.c.b16 %v6595, %v6594
    %v6611 = vpack.c.b16 %v6597, %v6596
    %v6612 = vpack.c.b16 %v6599, %v6598
    %v6613 = vpack.c.b16 %v6601, %v6600
    %v6614 = vpack.c.b16 %v6603, %v6602
    %v6615 = vpack.c.b16 %v6605, %v6604
    %v6616 = vpack.c.b16 %v6607, %v6606
    %v6617 = vpack.c.b16 %v6609, %v6608
    %6626 = vmatprep.subr.bf16.mxu0 0
    %6627 = vmatpush1.bf16.msra.mxu0 %v6610
    %6628 = vmatprep.subr.bf16.mxu0 0
    %6629 = vmatpush1.bf16.msra.mxu0 %v6611
    %6630 = vmatprep.subr.bf16.mxu0 0
    %6631 = vmatpush1.bf16.msra.mxu0 %v6612
    %6632 = vmatprep.subr.bf16.mxu0 0
    %6633 = vmatpush1.bf16.msra.mxu0 %v6613
    %6634 = vmatprep.subr.bf16.mxu0 0
    %6635 = vmatpush1.bf16.msra.mxu0 %v6614
    %6636 = vmatprep.subr.bf16.mxu0 0
    %6637 = vmatpush1.bf16.msra.mxu0 %v6615
    %6638 = vmatprep.subr.bf16.mxu0 0
    %6639 = vmatpush1.bf16.msra.mxu0 %v6616
    %6640 = vmatprep.subr.bf16.mxu0 0
    %6641 = vmatpush1.bf16.msra.mxu0 %v6617
    %6642 = vmatprep.subr.bf16.mxu0 0
    %6643 = vmatpush1.bf16.msra.mxu0 0
    %6644 = vmatprep.subr.bf16.mxu0 0
    %6645 = vmatpush1.bf16.msra.mxu0 0
    %6646 = vmatprep.subr.bf16.mxu0 0
    %6647 = vmatpush1.bf16.msra.mxu0 0
    %6648 = vmatprep.subr.bf16.mxu0 0
    %6649 = vmatpush1.bf16.msra.mxu0 0
    %6650 = vmatprep.subr.bf16.mxu0 0
    %6651 = vmatpush1.bf16.msra.mxu0 0
    %6652 = vmatprep.subr.bf16.mxu0 0
    %6653 = vmatpush1.bf16.msra.mxu0 0
    %6654 = vmatprep.subr.bf16.mxu0 0
    %6655 = vmatpush1.bf16.msra.mxu0 0
    %6656 = vmatprep.subr.bf16.mxu0 0
    %6657 = vmatpush1.bf16.msra.mxu0 0
    %6658 = vmatprep.mubr.bf16.mxu0 0
    %6659 = vmatmul.mubr.bf16.gmra.mrb[0].mxu0 %v6541
    %v6660 = vpop.f32.mrb[0].mxu0
    %v6661 = vadd.f32 0.0, %v6660
    %v6662 = vpop.f32.mrb[0].mxu0
    %v6663 = vpop.f32.mrb[0].mxu0
    %v6664 = vadd.f32 0.0, %v6663
    %v6665 = vpop.f32.mrb[0].mxu0
    %6666 = vmatprep.mubr.bf16.mxu0 0
    %6667 = vmatmul.mubr.bf16.gmra.mrb[0].mxu0 %v6558
    %v6668 = vpop.f32.mrb[0].mxu0
    %v6669 = vadd.f32 0.0, %v6668
    %v6670 = vpop.f32.mrb[0].mxu0
    %v6671 = vpop.f32.mrb[0].mxu0
    %v6672 = vadd.f32 0.0, %v6671
    %v6673 = vpop.f32.mrb[0].mxu0
    %6674 = vdwg.mxu0
    %v6675 = vadd.f32 %v6519, %v6661
    %v6676 = vadd.f32 %v6520, %v6664
    %v6677 = vadd.f32 %v6521, %v6669
    %v6678 = vadd.f32 %v6522, %v6672
    %v6679 = vld [vmem:[#allocation2] sm:$0xc0]
    %v6680 = vld [vmem:[#allocation2 + $0x10] sm:$0xc0]
    %v6685 = vrot.slane %v6679, 6
    %v6686 = vrot.slane %v6523, 6
    %v6687 = vsel %vm1608, %v6685, %v6686
    %v6688 = vrot.slane %v6680, 6
    %v6689 = vrot.slane %v6524, 6
    %v6690 = vsel %vm1608, %v6688, %v6689
    %s6693 = scalar_lea.vmem [#allocation41], 448
    %v6694 = vld [vmem:[%s6693] sm:$0xf]
    %v6695 = vld [vmem:[%s6693 + $0x4] sm:$0xf]
    %v6696 = vld [vmem:[%s6693 + $0x8] sm:$0xf]
    %v6697 = vld [vmem:[%s6693 + $0xc] sm:$0xf]
    %v6698 = vld [vmem:[%s6693 + $0x10] sm:$0xf]
    %v6699 = vld [vmem:[%s6693 + $0x14] sm:$0xf]
    %v6700 = vld [vmem:[%s6693 + $0x18] sm:$0xf]
    %v6701 = vld [vmem:[%s6693 + $0x1c] sm:$0xf]
    %v6702 = vld [vmem:[%s6693 + $0x20] sm:$0xf]
    %v6703 = vld [vmem:[%s6693 + $0x24] sm:$0xf]
    %v6704 = vld [vmem:[%s6693 + $0x28] sm:$0xf]
    %v6705 = vld [vmem:[%s6693 + $0x2c] sm:$0xf]
    %v6706 = vld [vmem:[%s6693 + $0x30] sm:$0xf]
    %v6707 = vld [vmem:[%s6693 + $0x34] sm:$0xf]
    %v6708 = vld [vmem:[%s6693 + $0x38] sm:$0xf]
    %v6709 = vld [vmem:[%s6693 + $0x3c] sm:$0xf]
    %v6726 = vunpack.c.l.b16 %v6694
    %v6727 = vunpack.c.l.b16 %v6695
    %v6728 = vunpack.c.l.b16 %v6696
    %v6729 = vunpack.c.l.b16 %v6697
    %v6730 = vunpack.c.l.b16 %v6698
    %v6731 = vunpack.c.l.b16 %v6699
    %v6732 = vunpack.c.l.b16 %v6700
    %v6733 = vunpack.c.l.b16 %v6701
    %v6734 = vunpack.c.l.b16 %v6702
    %v6735 = vunpack.c.l.b16 %v6703
    %v6736 = vunpack.c.l.b16 %v6704
    %v6737 = vunpack.c.l.b16 %v6705
    %v6738 = vunpack.c.l.b16 %v6706
    %v6739 = vunpack.c.l.b16 %v6707
    %v6740 = vunpack.c.l.b16 %v6708
    %v6741 = vunpack.c.l.b16 %v6709
    %v6742 = vpack.c.b16 %v6727, %v6726
    %v6743 = vpack.c.b16 %v6729, %v6728
    %v6744 = vpack.c.b16 %v6731, %v6730
    %v6745 = vpack.c.b16 %v6733, %v6732
    %v6746 = vpack.c.b16 %v6735, %v6734
    %v6747 = vpack.c.b16 %v6737, %v6736
    %v6748 = vpack.c.b16 %v6739, %v6738
    %v6749 = vpack.c.b16 %v6741, %v6740
    %6758 = vmatprep.subr.bf16.mxu0 0
    %6759 = vmatpush1.bf16.msra.mxu0 %v6742
    %6760 = vmatprep.subr.bf16.mxu0 0
    %6761 = vmatpush1.bf16.msra.mxu0 %v6743
    %6762 = vmatprep.subr.bf16.mxu0 0
    %6763 = vmatpush1.bf16.msra.mxu0 %v6744
    %6764 = vmatprep.subr.bf16.mxu0 0
    %6765 = vmatpush1.bf16.msra.mxu0 %v6745
    %6766 = vmatprep.subr.bf16.mxu0 0
    %6767 = vmatpush1.bf16.msra.mxu0 %v6746
    %6768 = vmatprep.subr.bf16.mxu0 0
    %6769 = vmatpush1.bf16.msra.mxu0 %v6747
    %6770 = vmatprep.subr.bf16.mxu0 0
    %6771 = vmatpush1.bf16.msra.mxu0 %v6748
    %6772 = vmatprep.subr.bf16.mxu0 0
    %6773 = vmatpush1.bf16.msra.mxu0 %v6749
    %6774 = vmatprep.subr.bf16.mxu0 0
    %6775 = vmatpush1.bf16.msra.mxu0 0
    %6776 = vmatprep.subr.bf16.mxu0 0
    %6777 = vmatpush1.bf16.msra.mxu0 0
    %6778 = vmatprep.subr.bf16.mxu0 0
    %6779 = vmatpush1.bf16.msra.mxu0 0
    %6780 = vmatprep.subr.bf16.mxu0 0
    %6781 = vmatpush1.bf16.msra.mxu0 0
    %6782 = vmatprep.subr.bf16.mxu0 0
    %6783 = vmatpush1.bf16.msra.mxu0 0
    %6784 = vmatprep.subr.bf16.mxu0 0
    %6785 = vmatpush1.bf16.msra.mxu0 0
    %6786 = vmatprep.subr.bf16.mxu0 0
    %6787 = vmatpush1.bf16.msra.mxu0 0
    %6788 = vmatprep.subr.bf16.mxu0 0
    %6789 = vmatpush1.bf16.msra.mxu0 0
    %6790 = vmatprep.mubr.bf16.mxu0 0
    %6791 = vmatmul.mubr.bf16.gmra.mrb[0].mxu0 %v6687
    %v6792 = vpop.f32.mrb[0].mxu0
    %v6793 = vadd.f32 0.0, %v6792
    %v6794 = vpop.f32.mrb[0].mxu0
    %v6795 = vpop.f32.mrb[0].mxu0
    %v6796 = vadd.f32 0.0, %v6795
    %v6797 = vpop.f32.mrb[0].mxu0
    %6798 = vmatprep.mubr.bf16.mxu0 0
    %6799 = vmatmul.mubr.bf16.gmra.mrb[0].mxu0 %v6690
    %v6800 = vpop.f32.mrb[0].mxu0
    %v6801 = vadd.f32 0.0, %v6800
    %v6802 = vpop.f32.mrb[0].mxu0
    %v6803 = vpop.f32.mrb[0].mxu0
    %v6804 = vadd.f32 0.0, %v6803
    %v6805 = vpop.f32.mrb[0].mxu0
    %6806 = vdwg.mxu0
    %v6807 = vadd.f32 %v6675, %v6793
    %v6808 = vadd.f32 %v6676, %v6796
    %v6809 = vadd.f32 %v6677, %v6801
    %v6810 = vadd.f32 %v6678, %v6804
    %v6811 = vld [vmem:[#allocation42] sm:$0x1]
    %v6813 = vlaneseq
    %v6814 = vshrl.u32 %v6813, 7
    %v6815 = vsub.s32 0, %v6814
    %v6816 = vrot.slane %v6811, %v6815
    %v6818 = vmul.f32 %v6807, %v6816
    %v6819 = vmul.f32 %v6808, %v6816
    %v6820 = vmul.f32 %v6809, %v6816
    %v6821 = vmul.f32 %v6810, %v6816
    %v6822 = vld [vmem:[#allocation44] sm:$0x1]
    %v6824 = vlaneseq
    %v6825 = vshrl.u32 %v6824, 7
    %v6826 = vsub.s32 0, %v6825
    %v6827 = vrot.slane %v6822, %v6826
    %v6829 = vadd.f32 %v6818, %v6827
    %v6830 = vadd.f32 %v6819, %v6827
    %v6831 = vadd.f32 %v6820, %v6827
    %v6832 = vadd.f32 %v6821, %v6827
    %v6833 = vmax.f32 %v6829, 0.0
    %v6834 = vmax.f32 %v6830, 0.0
    %v6835 = vmax.f32 %v6831, 0.0
    %v6836 = vmax.f32 %v6832, 0.0
    %v6837 = vpack.c.bf16 %v6834, %v6833
    %v6838 = vpack.c.bf16 %v6836, %v6835
    %v6841 = vrot.slane %v6837, 4
    %v6842 = vrot.slane %v6838, 4
    %6845 = vst [vmem:[#allocation2] sm:$0xf0] %v6841
    %6846 = vst [vmem:[#allocation2 + $0x8] sm:$0xf] %v6841
    %6847 = vst [vmem:[#allocation2 + $0x10] sm:$0xf0] %v6842
    %6848 = vst [vmem:[#allocation2 + $0x18] sm:$0xf] %v6842
    %v6849 = vld [vmem:[#allocation2] sm:$0xf8]
    %v6850 = vld [vmem:[#allocation2 + $0x8] sm:$0x7]
    %v6851 = vld [vmem:[#allocation2 + $0x10] sm:$0xf8]
    %v6852 = vld [vmem:[#allocation2 + $0x18] sm:$0x7]
    %v6857 = vrot.slane %v6849, 3
    %v6858 = vrot.slane %v6850, 3
    %v6859 = vsel %vm645, %v6857, %v6858
    %v6860 = vrot.slane %v6851, 3
    %v6861 = vrot.slane %v6852, 3
    %v6862 = vsel %vm645, %v6860, %v6861
    %v6865 = vld [vmem:[#allocation45] sm:$0xf]
    %v6866 = vld [vmem:[#allocation45 + $0x4] sm:$0xf]
    %v6867 = vld [vmem:[#allocation45 + $0x8] sm:$0xf]
    %v6868 = vld [vmem:[#allocation45 + $0xc] sm:$0xf]
    %v6869 = vld [vmem:[#allocation45 + $0x10] sm:$0xf]
    %v6870 = vld [vmem:[#allocation45 + $0x14] sm:$0xf]
    %v6871 = vld [vmem:[#allocation45 + $0x18] sm:$0xf]
    %v6872 = vld [vmem:[#allocation45 + $0x1c] sm:$0xf]
    %v6873 = vld [vmem:[#allocation45 + $0x20] sm:$0xf]
    %v6874 = vld [vmem:[#allocation45 + $0x24] sm:$0xf]
    %v6875 = vld [vmem:[#allocation45 + $0x28] sm:$0xf]
    %v6876 = vld [vmem:[#allocation45 + $0x2c] sm:$0xf]
    %v6877 = vld [vmem:[#allocation45 + $0x30] sm:$0xf]
    %v6878 = vld [vmem:[#allocation45 + $0x34] sm:$0xf]
    %v6879 = vld [vmem:[#allocation45 + $0x38] sm:$0xf]
    %v6880 = vld [vmem:[#allocation45 + $0x3c] sm:$0xf]
    %v6881 = vld [vmem:[#allocation2 + $0x8] sm:$0xf]
    %v6882 = vld [vmem:[#allocation2 + $0x18] sm:$0xf]
    %v6884 = vshrl.u32 %v6849, 16
    %v6886 = vrot.slane %v6884, 3
    %v6887 = vshll.u32 %v6849, 16
    %v6889 = vrot.slane %v6887, 4
    %v6890 = vor.u32 %v6886, %v6889
    %v6892 = vshrl.u32 %v6881, 16
    %v6894 = vrot.slane %v6892, 3
    %v6895 = vshll.u32 %v6881, 16
    %v6897 = vrot.slane %v6895, 4
    %v6898 = vor.u32 %v6894, %v6897
    %v6899 = vsel %vm867, %v6890, %v6898
    %v6901 = vshrl.u32 %v6851, 16
    %v6903 = vrot.slane %v6901, 3
    %v6904 = vshll.u32 %v6851, 16
    %v6906 = vrot.slane %v6904, 4
    %v6907 = vor.u32 %v6903, %v6906
    %v6909 = vshrl.u32 %v6882, 16
    %v6911 = vrot.slane %v6909, 3
    %v6912 = vshll.u32 %v6882, 16
    %v6914 = vrot.slane %v6912, 4
    %v6915 = vor.u32 %v6911, %v6914
    %v6916 = vsel %vm867, %v6907, %v6915
    %s6919 = scalar_lea.vmem [#allocation45], 64
    %v6920 = vld [vmem:[%s6919] sm:$0xf]
    %v6921 = vld [vmem:[%s6919 + $0x4] sm:$0xf]
    %v6922 = vld [vmem:[%s6919 + $0x8] sm:$0xf]
    %v6923 = vld [vmem:[%s6919 + $0xc] sm:$0xf]
    %v6924 = vld [vmem:[%s6919 + $0x10] sm:$0xf]
    %v6925 = vld [vmem:[%s6919 + $0x14] sm:$0xf]
    %v6926 = vld [vmem:[%s6919 + $0x18] sm:$0xf]
    %v6927 = vld [vmem:[%s6919 + $0x1c] sm:$0xf]
    %v6928 = vld [vmem:[%s6919 + $0x20] sm:$0xf]
    %v6929 = vld [vmem:[%s6919 + $0x24] sm:$0xf]
    %v6930 = vld [vmem:[%s6919 + $0x28] sm:$0xf]
    %v6931 = vld [vmem:[%s6919 + $0x2c] sm:$0xf]
    %v6932 = vld [vmem:[%s6919 + $0x30] sm:$0xf]
    %v6933 = vld [vmem:[%s6919 + $0x34] sm:$0xf]
    %v6934 = vld [vmem:[%s6919 + $0x38] sm:$0xf]
    %v6935 = vld [vmem:[%s6919 + $0x3c] sm:$0xf]
    %v6952 = vunpack.c.l.b16 %v6920
    %v6953 = vunpack.c.l.b16 %v6921
    %v6954 = vunpack.c.l.b16 %v6922
    %v6955 = vunpack.c.l.b16 %v6923
    %v6956 = vunpack.c.l.b16 %v6924
    %v6957 = vunpack.c.l.b16 %v6925
    %v6958 = vunpack.c.l.b16 %v6926
    %v6959 = vunpack.c.l.b16 %v6927
    %v6960 = vunpack.c.l.b16 %v6928
    %v6961 = vunpack.c.l.b16 %v6929
    %v6962 = vunpack.c.l.b16 %v6930
    %v6963 = vunpack.c.l.b16 %v6931
    %v6964 = vunpack.c.l.b16 %v6932
    %v6965 = vunpack.c.l.b16 %v6933
    %v6966 = vunpack.c.l.b16 %v6934
    %v6967 = vunpack.c.l.b16 %v6935
    %v6968 = vpack.c.b16 %v6953, %v6952
    %v6969 = vpack.c.b16 %v6955, %v6954
    %v6970 = vpack.c.b16 %v6957, %v6956
    %v6971 = vpack.c.b16 %v6959, %v6958
    %v6972 = vpack.c.b16 %v6961, %v6960
    %v6973 = vpack.c.b16 %v6963, %v6962
    %v6974 = vpack.c.b16 %v6965, %v6964
    %v6975 = vpack.c.b16 %v6967, %v6966
    %6984 = vmatprep.subr.bf16.mxu0 0
    %6985 = vmatpush1.bf16.msra.mxu0 %v6968
    %6986 = vmatprep.subr.bf16.mxu0 0
    %6987 = vmatpush1.bf16.msra.mxu0 %v6969
    %6988 = vmatprep.subr.bf16.mxu0 0
    %6989 = vmatpush1.bf16.msra.mxu0 %v6970
    %6990 = vmatprep.subr.bf16.mxu0 0
    %6991 = vmatpush1.bf16.msra.mxu0 %v6971
    %6992 = vmatprep.subr.bf16.mxu0 0
    %6993 = vmatpush1.bf16.msra.mxu0 %v6972
    %6994 = vmatprep.subr.bf16.mxu0 0
    %6995 = vmatpush1.bf16.msra.mxu0 %v6973
    %6996 = vmatprep.subr.bf16.mxu0 0
    %6997 = vmatpush1.bf16.msra.mxu0 %v6974
    %6998 = vmatprep.subr.bf16.mxu0 0
    %6999 = vmatpush1.bf16.msra.mxu0 %v6975
    %7000 = vmatprep.subr.bf16.mxu0 0
    %7001 = vmatpush1.bf16.msra.mxu0 0
    %7002 = vmatprep.subr.bf16.mxu0 0
    %7003 = vmatpush1.bf16.msra.mxu0 0
    %7004 = vmatprep.subr.bf16.mxu0 0
    %7005 = vmatpush1.bf16.msra.mxu0 0
    %7006 = vmatprep.subr.bf16.mxu0 0
    %7007 = vmatpush1.bf16.msra.mxu0 0
    %7008 = vmatprep.subr.bf16.mxu0 0
    %7009 = vmatpush1.bf16.msra.mxu0 0
    %7010 = vmatprep.subr.bf16.mxu0 0
    %7011 = vmatpush1.bf16.msra.mxu0 0
    %7012 = vmatprep.subr.bf16.mxu0 0
    %7013 = vmatpush1.bf16.msra.mxu0 0
    %7014 = vmatprep.subr.bf16.mxu0 0
    %7015 = vmatpush1.bf16.msra.mxu0 0
    %7016 = vmatprep.mubr.bf16.mxu0 0
    %7017 = vmatmul.mubr.bf16.gmra.mrb[0].mxu0 %v6899
    %v7018 = vpop.f32.mrb[0].mxu0
    %v7019 = vadd.f32 0.0, %v7018
    %v7020 = vpop.f32.mrb[0].mxu0
    %v7021 = vpop.f32.mrb[0].mxu0
    %v7022 = vadd.f32 0.0, %v7021
    %v7023 = vpop.f32.mrb[0].mxu0
    %7024 = vmatprep.mubr.bf16.mxu0 0
    %7025 = vmatmul.mubr.bf16.gmra.mrb[0].mxu0 %v6916
    %v7026 = vpop.f32.mrb[0].mxu0
    %v7027 = vadd.f32 0.0, %v7026
    %v7028 = vpop.f32.mrb[0].mxu0
    %v7029 = vpop.f32.mrb[0].mxu0
    %v7030 = vadd.f32 0.0, %v7029
    %v7031 = vpop.f32.mrb[0].mxu0
    %7032 = vdwg.mxu0
    %v7049 = vunpack.c.l.b16 %v6865
    %v7050 = vunpack.c.l.b16 %v6866
    %v7051 = vunpack.c.l.b16 %v6867
    %v7052 = vunpack.c.l.b16 %v6868
    %v7053 = vunpack.c.l.b16 %v6869
    %v7054 = vunpack.c.l.b16 %v6870
    %v7055 = vunpack.c.l.b16 %v6871
    %v7056 = vunpack.c.l.b16 %v6872
    %v7057 = vunpack.c.l.b16 %v6873
    %v7058 = vunpack.c.l.b16 %v6874
    %v7059 = vunpack.c.l.b16 %v6875
    %v7060 = vunpack.c.l.b16 %v6876
    %v7061 = vunpack.c.l.b16 %v6877
    %v7062 = vunpack.c.l.b16 %v6878
    %v7063 = vunpack.c.l.b16 %v6879
    %v7064 = vunpack.c.l.b16 %v6880
    %v7065 = vpack.c.b16 %v7050, %v7049
    %v7066 = vpack.c.b16 %v7052, %v7051
    %v7067 = vpack.c.b16 %v7054, %v7053
    %v7068 = vpack.c.b16 %v7056, %v7055
    %v7069 = vpack.c.b16 %v7058, %v7057
    %v7070 = vpack.c.b16 %v7060, %v7059
    %v7071 = vpack.c.b16 %v7062, %v7061
    %v7072 = vpack.c.b16 %v7064, %v7063
    %7081 = vmatprep.subr.bf16.mxu0 0
    %7082 = vmatpush1.bf16.msra.mxu0 %v7065
    %7083 = vmatprep.subr.bf16.mxu0 0
    %7084 = vmatpush1.bf16.msra.mxu0 %v7066
    %7085 = vmatprep.subr.bf16.mxu0 0
    %7086 = vmatpush1.bf16.msra.mxu0 %v7067
    %7087 = vmatprep.subr.bf16.mxu0 0
    %7088 = vmatpush1.bf16.msra.mxu0 %v7068
    %7089 = vmatprep.subr.bf16.mxu0 0
    %7090 = vmatpush1.bf16.msra.mxu0 %v7069
    %7091 = vmatprep.subr.bf16.mxu0 0
    %7092 = vmatpush1.bf16.msra.mxu0 %v7070
    %7093 = vmatprep.subr.bf16.mxu0 0
    %7094 = vmatpush1.bf16.msra.mxu0 %v7071
    %7095 = vmatprep.subr.bf16.mxu0 0
    %7096 = vmatpush1.bf16.msra.mxu0 %v7072
    %7097 = vmatprep.subr.bf16.mxu0 0
    %7098 = vmatpush1.bf16.msra.mxu0 0
    %7099 = vmatprep.subr.bf16.mxu0 0
    %7100 = vmatpush1.bf16.msra.mxu0 0
    %7101 = vmatprep.subr.bf16.mxu0 0
    %7102 = vmatpush1.bf16.msra.mxu0 0
    %7103 = vmatprep.subr.bf16.mxu0 0
    %7104 = vmatpush1.bf16.msra.mxu0 0
    %7105 = vmatprep.subr.bf16.mxu0 0
    %7106 = vmatpush1.bf16.msra.mxu0 0
    %7107 = vmatprep.subr.bf16.mxu0 0
    %7108 = vmatpush1.bf16.msra.mxu0 0
    %7109 = vmatprep.subr.bf16.mxu0 0
    %7110 = vmatpush1.bf16.msra.mxu0 0
    %7111 = vmatprep.subr.bf16.mxu0 0
    %7112 = vmatpush1.bf16.msra.mxu0 0
    %7113 = vmatprep.mubr.bf16.mxu0 0
    %7114 = vmatmul.mubr.bf16.gmra.mrb[0].mxu0 %v6859
    %v7115 = vpop.f32.mrb[0].mxu0
    %v7116 = vadd.f32 %v7019, %v7115
    %v7117 = vpop.f32.mrb[0].mxu0
    %v7118 = vpop.f32.mrb[0].mxu0
    %v7119 = vadd.f32 %v7022, %v7118
    %v7120 = vpop.f32.mrb[0].mxu0
    %7121 = vmatprep.mubr.bf16.mxu0 0
    %7122 = vmatmul.mubr.bf16.gmra.mrb[0].mxu0 %v6862
    %v7123 = vpop.f32.mrb[0].mxu0
    %v7124 = vadd.f32 %v7027, %v7123
    %v7125 = vpop.f32.mrb[0].mxu0
    %v7126 = vpop.f32.mrb[0].mxu0
    %v7127 = vadd.f32 %v7030, %v7126
    %v7128 = vpop.f32.mrb[0].mxu0
    %7129 = vdwg.mxu0
    %v7130 = vld [vmem:[#allocation2] sm:$0xf0]
    %v7131 = vld [vmem:[#allocation2 + $0x10] sm:$0xf0]
    %v7136 = vrot.slane %v7130, 4
    %v7137 = vrot.slane %v6881, 4
    %v7138 = vsel %vm1028, %v7136, %v7137
    %v7139 = vrot.slane %v7131, 4
    %v7140 = vrot.slane %v6882, 4
    %v7141 = vsel %vm1028, %v7139, %v7140
    %s7144 = scalar_lea.vmem [#allocation45], 128
    %v7145 = vld [vmem:[%s7144] sm:$0xf]
    %v7146 = vld [vmem:[%s7144 + $0x4] sm:$0xf]
    %v7147 = vld [vmem:[%s7144 + $0x8] sm:$0xf]
    %v7148 = vld [vmem:[%s7144 + $0xc] sm:$0xf]
    %v7149 = vld [vmem:[%s7144 + $0x10] sm:$0xf]
    %v7150 = vld [vmem:[%s7144 + $0x14] sm:$0xf]
    %v7151 = vld [vmem:[%s7144 + $0x18] sm:$0xf]
    %v7152 = vld [vmem:[%s7144 + $0x1c] sm:$0xf]
    %v7153 = vld [vmem:[%s7144 + $0x20] sm:$0xf]
    %v7154 = vld [vmem:[%s7144 + $0x24] sm:$0xf]
    %v7155 = vld [vmem:[%s7144 + $0x28] sm:$0xf]
    %v7156 = vld [vmem:[%s7144 + $0x2c] sm:$0xf]
    %v7157 = vld [vmem:[%s7144 + $0x30] sm:$0xf]
    %v7158 = vld [vmem:[%s7144 + $0x34] sm:$0xf]
    %v7159 = vld [vmem:[%s7144 + $0x38] sm:$0xf]
    %v7160 = vld [vmem:[%s7144 + $0x3c] sm:$0xf]
    %v7177 = vunpack.c.l.b16 %v7145
    %v7178 = vunpack.c.l.b16 %v7146
    %v7179 = vunpack.c.l.b16 %v7147
    %v7180 = vunpack.c.l.b16 %v7148
    %v7181 = vunpack.c.l.b16 %v7149
    %v7182 = vunpack.c.l.b16 %v7150
    %v7183 = vunpack.c.l.b16 %v7151
    %v7184 = vunpack.c.l.b16 %v7152
    %v7185 = vunpack.c.l.b16 %v7153
    %v7186 = vunpack.c.l.b16 %v7154
    %v7187 = vunpack.c.l.b16 %v7155
    %v7188 = vunpack.c.l.b16 %v7156
    %v7189 = vunpack.c.l.b16 %v7157
    %v7190 = vunpack.c.l.b16 %v7158
    %v7191 = vunpack.c.l.b16 %v7159
    %v7192 = vunpack.c.l.b16 %v7160
    %v7193 = vpack.c.b16 %v7178, %v7177
    %v7194 = vpack.c.b16 %v7180, %v7179
    %v7195 = vpack.c.b16 %v7182, %v7181
    %v7196 = vpack.c.b16 %v7184, %v7183
    %v7197 = vpack.c.b16 %v7186, %v7185
    %v7198 = vpack.c.b16 %v7188, %v7187
    %v7199 = vpack.c.b16 %v7190, %v7189
    %v7200 = vpack.c.b16 %v7192, %v7191
    %7209 = vmatprep.subr.bf16.mxu0 0
    %7210 = vmatpush1.bf16.msra.mxu0 %v7193
    %7211 = vmatprep.subr.bf16.mxu0 0
    %7212 = vmatpush1.bf16.msra.mxu0 %v7194
    %7213 = vmatprep.subr.bf16.mxu0 0
    %7214 = vmatpush1.bf16.msra.mxu0 %v7195
    %7215 = vmatprep.subr.bf16.mxu0 0
    %7216 = vmatpush1.bf16.msra.mxu0 %v7196
    %7217 = vmatprep.subr.bf16.mxu0 0
    %7218 = vmatpush1.bf16.msra.mxu0 %v7197
    %7219 = vmatprep.subr.bf16.mxu0 0
    %7220 = vmatpush1.bf16.msra.mxu0 %v7198
    %7221 = vmatprep.subr.bf16.mxu0 0
    %7222 = vmatpush1.bf16.msra.mxu0 %v7199
    %7223 = vmatprep.subr.bf16.mxu0 0
    %7224 = vmatpush1.bf16.msra.mxu0 %v7200
    %7225 = vmatprep.subr.bf16.mxu0 0
    %7226 = vmatpush1.bf16.msra.mxu0 0
    %7227 = vmatprep.subr.bf16.mxu0 0
    %7228 = vmatpush1.bf16.msra.mxu0 0
    %7229 = vmatprep.subr.bf16.mxu0 0
    %7230 = vmatpush1.bf16.msra.mxu0 0
    %7231 = vmatprep.subr.bf16.mxu0 0
    %7232 = vmatpush1.bf16.msra.mxu0 0
    %7233 = vmatprep.subr.bf16.mxu0 0
    %7234 = vmatpush1.bf16.msra.mxu0 0
    %7235 = vmatprep.subr.bf16.mxu0 0
    %7236 = vmatpush1.bf16.msra.mxu0 0
    %7237 = vmatprep.subr.bf16.mxu0 0
    %7238 = vmatpush1.bf16.msra.mxu0 0
    %7239 = vmatprep.subr.bf16.mxu0 0
    %7240 = vmatpush1.bf16.msra.mxu0 0
    %7241 = vmatprep.mubr.bf16.mxu0 0
    %7242 = vmatmul.mubr.bf16.gmra.mrb[0].mxu0 %v7138
    %v7243 = vpop.f32.mrb[0].mxu0
    %v7244 = vadd.f32 0.0, %v7243
    %v7245 = vpop.f32.mrb[0].mxu0
    %v7246 = vpop.f32.mrb[0].mxu0
    %v7247 = vadd.f32 0.0, %v7246
    %v7248 = vpop.f32.mrb[0].mxu0
    %7249 = vmatprep.mubr.bf16.mxu0 0
    %7250 = vmatmul.mubr.bf16.gmra.mrb[0].mxu0 %v7141
    %v7251 = vpop.f32.mrb[0].mxu0
    %v7252 = vadd.f32 0.0, %v7251
    %v7253 = vpop.f32.mrb[0].mxu0
    %v7254 = vpop.f32.mrb[0].mxu0
    %v7255 = vadd.f32 0.0, %v7254
    %v7256 = vpop.f32.mrb[0].mxu0
    %7257 = vdwg.mxu0
    %v7258 = vadd.f32 %v7116, %v7244
    %v7259 = vadd.f32 %v7119, %v7247
    %v7260 = vadd.f32 %v7124, %v7252
    %v7261 = vadd.f32 %v7127, %v7255
    %v7262 = vld [vmem:[#allocation2 + $0x8] sm:$0x1f]
    %v7263 = vld [vmem:[#allocation2 + $0x18] sm:$0x1f]
    %v7265 = vshrl.u32 %v7130, 16
    %v7267 = vrot.slane %v7265, 4
    %v7268 = vshll.u32 %v7130, 16
    %v7270 = vrot.slane %v7268, 5
    %v7271 = vor.u32 %v7267, %v7270
    %v7273 = vshrl.u32 %v7262, 16
    %v7275 = vrot.slane %v7273, 4
    %v7276 = vshll.u32 %v7262, 16
    %v7278 = vrot.slane %v7276, 5
    %v7279 = vor.u32 %v7275, %v7278
    %v7280 = vsel %vm1157, %v7271, %v7279
    %v7282 = vshrl.u32 %v7131, 16
    %v7284 = vrot.slane %v7282, 4
    %v7285 = vshll.u32 %v7131, 16
    %v7287 = vrot.slane %v7285, 5
    %v7288 = vor.u32 %v7284, %v7287
    %v7290 = vshrl.u32 %v7263, 16
    %v7292 = vrot.slane %v7290, 4
    %v7293 = vshll.u32 %v7263, 16
    %v7295 = vrot.slane %v7293, 5
    %v7296 = vor.u32 %v7292, %v7295
    %v7297 = vsel %vm1157, %v7288, %v7296
    %s7300 = scalar_lea.vmem [#allocation45], 192
    %v7301 = vld [vmem:[%s7300] sm:$0xf]
    %v7302 = vld [vmem:[%s7300 + $0x4] sm:$0xf]
    %v7303 = vld [vmem:[%s7300 + $0x8] sm:$0xf]
    %v7304 = vld [vmem:[%s7300 + $0xc] sm:$0xf]
    %v7305 = vld [vmem:[%s7300 + $0x10] sm:$0xf]
    %v7306 = vld [vmem:[%s7300 + $0x14] sm:$0xf]
    %v7307 = vld [vmem:[%s7300 + $0x18] sm:$0xf]
    %v7308 = vld [vmem:[%s7300 + $0x1c] sm:$0xf]
    %v7309 = vld [vmem:[%s7300 + $0x20] sm:$0xf]
    %v7310 = vld [vmem:[%s7300 + $0x24] sm:$0xf]
    %v7311 = vld [vmem:[%s7300 + $0x28] sm:$0xf]
    %v7312 = vld [vmem:[%s7300 + $0x2c] sm:$0xf]
    %v7313 = vld [vmem:[%s7300 + $0x30] sm:$0xf]
    %v7314 = vld [vmem:[%s7300 + $0x34] sm:$0xf]
    %v7315 = vld [vmem:[%s7300 + $0x38] sm:$0xf]
    %v7316 = vld [vmem:[%s7300 + $0x3c] sm:$0xf]
    %v7333 = vunpack.c.l.b16 %v7301
    %v7334 = vunpack.c.l.b16 %v7302
    %v7335 = vunpack.c.l.b16 %v7303
    %v7336 = vunpack.c.l.b16 %v7304
    %v7337 = vunpack.c.l.b16 %v7305
    %v7338 = vunpack.c.l.b16 %v7306
    %v7339 = vunpack.c.l.b16 %v7307
    %v7340 = vunpack.c.l.b16 %v7308
    %v7341 = vunpack.c.l.b16 %v7309
    %v7342 = vunpack.c.l.b16 %v7310
    %v7343 = vunpack.c.l.b16 %v7311
    %v7344 = vunpack.c.l.b16 %v7312
    %v7345 = vunpack.c.l.b16 %v7313
    %v7346 = vunpack.c.l.b16 %v7314
    %v7347 = vunpack.c.l.b16 %v7315
    %v7348 = vunpack.c.l.b16 %v7316
    %v7349 = vpack.c.b16 %v7334, %v7333
    %v7350 = vpack.c.b16 %v7336, %v7335
    %v7351 = vpack.c.b16 %v7338, %v7337
    %v7352 = vpack.c.b16 %v7340, %v7339
    %v7353 = vpack.c.b16 %v7342, %v7341
    %v7354 = vpack.c.b16 %v7344, %v7343
    %v7355 = vpack.c.b16 %v7346, %v7345
    %v7356 = vpack.c.b16 %v7348, %v7347
    %7365 = vmatprep.subr.bf16.mxu0 0
    %7366 = vmatpush1.bf16.msra.mxu0 %v7349
    %7367 = vmatprep.subr.bf16.mxu0 0
    %7368 = vmatpush1.bf16.msra.mxu0 %v7350
    %7369 = vmatprep.subr.bf16.mxu0 0
    %7370 = vmatpush1.bf16.msra.mxu0 %v7351
    %7371 = vmatprep.subr.bf16.mxu0 0
    %7372 = vmatpush1.bf16.msra.mxu0 %v7352
    %7373 = vmatprep.subr.bf16.mxu0 0
    %7374 = vmatpush1.bf16.msra.mxu0 %v7353
    %7375 = vmatprep.subr.bf16.mxu0 0
    %7376 = vmatpush1.bf16.msra.mxu0 %v7354
    %7377 = vmatprep.subr.bf16.mxu0 0
    %7378 = vmatpush1.bf16.msra.mxu0 %v7355
    %7379 = vmatprep.subr.bf16.mxu0 0
    %7380 = vmatpush1.bf16.msra.mxu0 %v7356
    %7381 = vmatprep.subr.bf16.mxu0 0
    %7382 = vmatpush1.bf16.msra.mxu0 0
    %7383 = vmatprep.subr.bf16.mxu0 0
    %7384 = vmatpush1.bf16.msra.mxu0 0
    %7385 = vmatprep.subr.bf16.mxu0 0
    %7386 = vmatpush1.bf16.msra.mxu0 0
    %7387 = vmatprep.subr.bf16.mxu0 0
    %7388 = vmatpush1.bf16.msra.mxu0 0
    %7389 = vmatprep.subr.bf16.mxu0 0
    %7390 = vmatpush1.bf16.msra.mxu0 0
    %7391 = vmatprep.subr.bf16.mxu0 0
    %7392 = vmatpush1.bf16.msra.mxu0 0
    %7393 = vmatprep.subr.bf16.mxu0 0
    %7394 = vmatpush1.bf16.msra.mxu0 0
    %7395 = vmatprep.subr.bf16.mxu0 0
    %7396 = vmatpush1.bf16.msra.mxu0 0
    %7397 = vmatprep.mubr.bf16.mxu0 0
    %7398 = vmatmul.mubr.bf16.gmra.mrb[0].mxu0 %v7280
    %v7399 = vpop.f32.mrb[0].mxu0
    %v7400 = vadd.f32 0.0, %v7399
    %v7401 = vpop.f32.mrb[0].mxu0
    %v7402 = vpop.f32.mrb[0].mxu0
    %v7403 = vadd.f32 0.0, %v7402
    %v7404 = vpop.f32.mrb[0].mxu0
    %7405 = vmatprep.mubr.bf16.mxu0 0
    %7406 = vmatmul.mubr.bf16.gmra.mrb[0].mxu0 %v7297
    %v7407 = vpop.f32.mrb[0].mxu0
    %v7408 = vadd.f32 0.0, %v7407
    %v7409 = vpop.f32.mrb[0].mxu0
    %v7410 = vpop.f32.mrb[0].mxu0
    %v7411 = vadd.f32 0.0, %v7410
    %v7412 = vpop.f32.mrb[0].mxu0
    %7413 = vdwg.mxu0
    %v7414 = vadd.f32 %v7258, %v7400
    %v7415 = vadd.f32 %v7259, %v7403
    %v7416 = vadd.f32 %v7260, %v7408
    %v7417 = vadd.f32 %v7261, %v7411
    %v7418 = vld [vmem:[#allocation2] sm:$0xe0]
    %v7419 = vld [vmem:[#allocation2 + $0x10] sm:$0xe0]
    %v7424 = vrot.slane %v7418, 5
    %v7425 = vrot.slane %v7262, 5
    %v7426 = vsel %vm1318, %v7424, %v7425
    %v7427 = vrot.slane %v7419, 5
    %v7428 = vrot.slane %v7263, 5
    %v7429 = vsel %vm1318, %v7427, %v7428
    %s7432 = scalar_lea.vmem [#allocation45], 256
    %v7433 = vld [vmem:[%s7432] sm:$0xf]
    %v7434 = vld [vmem:[%s7432 + $0x4] sm:$0xf]
    %v7435 = vld [vmem:[%s7432 + $0x8] sm:$0xf]
    %v7436 = vld [vmem:[%s7432 + $0xc] sm:$0xf]
    %v7437 = vld [vmem:[%s7432 + $0x10] sm:$0xf]
    %v7438 = vld [vmem:[%s7432 + $0x14] sm:$0xf]
    %v7439 = vld [vmem:[%s7432 + $0x18] sm:$0xf]
    %v7440 = vld [vmem:[%s7432 + $0x1c] sm:$0xf]
    %v7441 = vld [vmem:[%s7432 + $0x20] sm:$0xf]
    %v7442 = vld [vmem:[%s7432 + $0x24] sm:$0xf]
    %v7443 = vld [vmem:[%s7432 + $0x28] sm:$0xf]
    %v7444 = vld [vmem:[%s7432 + $0x2c] sm:$0xf]
    %v7445 = vld [vmem:[%s7432 + $0x30] sm:$0xf]
    %v7446 = vld [vmem:[%s7432 + $0x34] sm:$0xf]
    %v7447 = vld [vmem:[%s7432 + $0x38] sm:$0xf]
    %v7448 = vld [vmem:[%s7432 + $0x3c] sm:$0xf]
    %v7465 = vunpack.c.l.b16 %v7433
    %v7466 = vunpack.c.l.b16 %v7434
    %v7467 = vunpack.c.l.b16 %v7435
    %v7468 = vunpack.c.l.b16 %v7436
    %v7469 = vunpack.c.l.b16 %v7437
    %v7470 = vunpack.c.l.b16 %v7438
    %v7471 = vunpack.c.l.b16 %v7439
    %v7472 = vunpack.c.l.b16 %v7440
    %v7473 = vunpack.c.l.b16 %v7441
    %v7474 = vunpack.c.l.b16 %v7442
    %v7475 = vunpack.c.l.b16 %v7443
    %v7476 = vunpack.c.l.b16 %v7444
    %v7477 = vunpack.c.l.b16 %v7445
    %v7478 = vunpack.c.l.b16 %v7446
    %v7479 = vunpack.c.l.b16 %v7447
    %v7480 = vunpack.c.l.b16 %v7448
    %v7481 = vpack.c.b16 %v7466, %v7465
    %v7482 = vpack.c.b16 %v7468, %v7467
    %v7483 = vpack.c.b16 %v7470, %v7469
    %v7484 = vpack.c.b16 %v7472, %v7471
    %v7485 = vpack.c.b16 %v7474, %v7473
    %v7486 = vpack.c.b16 %v7476, %v7475
    %v7487 = vpack.c.b16 %v7478, %v7477
    %v7488 = vpack.c.b16 %v7480, %v7479
    %7497 = vmatprep.subr.bf16.mxu0 0
    %7498 = vmatpush1.bf16.msra.mxu0 %v7481
    %7499 = vmatprep.subr.bf16.mxu0 0
    %7500 = vmatpush1.bf16.msra.mxu0 %v7482
    %7501 = vmatprep.subr.bf16.mxu0 0
    %7502 = vmatpush1.bf16.msra.mxu0 %v7483
    %7503 = vmatprep.subr.bf16.mxu0 0
    %7504 = vmatpush1.bf16.msra.mxu0 %v7484
    %7505 = vmatprep.subr.bf16.mxu0 0
    %7506 = vmatpush1.bf16.msra.mxu0 %v7485
    %7507 = vmatprep.subr.bf16.mxu0 0
    %7508 = vmatpush1.bf16.msra.mxu0 %v7486
    %7509 = vmatprep.subr.bf16.mxu0 0
    %7510 = vmatpush1.bf16.msra.mxu0 %v7487
    %7511 = vmatprep.subr.bf16.mxu0 0
    %7512 = vmatpush1.bf16.msra.mxu0 %v7488
    %7513 = vmatprep.subr.bf16.mxu0 0
    %7514 = vmatpush1.bf16.msra.mxu0 0
    %7515 = vmatprep.subr.bf16.mxu0 0
    %7516 = vmatpush1.bf16.msra.mxu0 0
    %7517 = vmatprep.subr.bf16.mxu0 0
    %7518 = vmatpush1.bf16.msra.mxu0 0
    %7519 = vmatprep.subr.bf16.mxu0 0
    %7520 = vmatpush1.bf16.msra.mxu0 0
    %7521 = vmatprep.subr.bf16.mxu0 0
    %7522 = vmatpush1.bf16.msra.mxu0 0
    %7523 = vmatprep.subr.bf16.mxu0 0
    %7524 = vmatpush1.bf16.msra.mxu0 0
    %7525 = vmatprep.subr.bf16.mxu0 0
    %7526 = vmatpush1.bf16.msra.mxu0 0
    %7527 = vmatprep.subr.bf16.mxu0 0
    %7528 = vmatpush1.bf16.msra.mxu0 0
    %7529 = vmatprep.mubr.bf16.mxu0 0
    %7530 = vmatmul.mubr.bf16.gmra.mrb[0].mxu0 %v7426
    %v7531 = vpop.f32.mrb[0].mxu0
    %v7532 = vadd.f32 0.0, %v7531
    %v7533 = vpop.f32.mrb[0].mxu0
    %v7534 = vpop.f32.mrb[0].mxu0
    %v7535 = vadd.f32 0.0, %v7534
    %v7536 = vpop.f32.mrb[0].mxu0
    %7537 = vmatprep.mubr.bf16.mxu0 0
    %7538 = vmatmul.mubr.bf16.gmra.mrb[0].mxu0 %v7429
    %v7539 = vpop.f32.mrb[0].mxu0
    %v7540 = vadd.f32 0.0, %v7539
    %v7541 = vpop.f32.mrb[0].mxu0
    %v7542 = vpop.f32.mrb[0].mxu0
    %v7543 = vadd.f32 0.0, %v7542
    %v7544 = vpop.f32.mrb[0].mxu0
    %7545 = vdwg.mxu0
    %v7546 = vadd.f32 %v7414, %v7532
    %v7547 = vadd.f32 %v7415, %v7535
    %v7548 = vadd.f32 %v7416, %v7540
    %v7549 = vadd.f32 %v7417, %v7543
    %v7550 = vld [vmem:[#allocation47] sm:$0x1]
    %v7552 = vlaneseq
    %v7553 = vshrl.u32 %v7552, 7
    %v7554 = vsub.s32 0, %v7553
    %v7555 = vrot.slane %v7550, %v7554
    %v7557 = vmul.f32 %v7546, %v7555
    %v7558 = vmul.f32 %v7547, %v7555
    %v7559 = vmul.f32 %v7548, %v7555
    %v7560 = vmul.f32 %v7549, %v7555
    %v7561 = vld [vmem:[#allocation48] sm:$0x1]
    %v7563 = vlaneseq
    %v7564 = vshrl.u32 %v7563, 7
    %v7565 = vsub.s32 0, %v7564
    %v7566 = vrot.slane %v7561, %v7565
    %v7568 = vadd.f32 %v7557, %v7566
    %v7569 = vadd.f32 %v7558, %v7566
    %v7570 = vadd.f32 %v7559, %v7566
    %v7571 = vadd.f32 %v7560, %v7566
    %v7572 = vmax.f32 %v7568, 0.0
    %v7573 = vmax.f32 %v7569, 0.0
    %v7574 = vmax.f32 %v7570, 0.0
    %v7575 = vmax.f32 %v7571, 0.0
    %v7576 = vpack.c.bf16 %v7573, %v7572
    %v7577 = vpack.c.bf16 %v7575, %v7574
    %v7580 = vrot.slane %v7576, 4
    %v7581 = vrot.slane %v7577, 4
    %7584 = vst [vmem:[#allocation2] sm:$0xf0] %v7580
    %7585 = vst [vmem:[#allocation2 + $0x8] sm:$0xf] %v7580
    %7586 = vst [vmem:[#allocation2 + $0x10] sm:$0xf0] %v7581
    %7587 = vst [vmem:[#allocation2 + $0x18] sm:$0xf] %v7581
    %v7588 = vld [vmem:[#allocation2] sm:$0xf8]
    %v7589 = vld [vmem:[#allocation2 + $0x8] sm:$0xf]
    %v7590 = vld [vmem:[#allocation2 + $0x10] sm:$0xf8]
    %v7591 = vld [vmem:[#allocation2 + $0x18] sm:$0xf]
    %v7593 = vshrl.u32 %v7588, 16
    %v7595 = vrot.slane %v7593, 3
    %v7596 = vshll.u32 %v7588, 16
    %v7598 = vrot.slane %v7596, 4
    %v7599 = vor.u32 %v7595, %v7598
    %v7601 = vshrl.u32 %v7589, 16
    %v7603 = vrot.slane %v7601, 3
    %v7604 = vshll.u32 %v7589, 16
    %v7606 = vrot.slane %v7604, 4
    %v7607 = vor.u32 %v7603, %v7606
    %v7608 = vsel %vm867, %v7599, %v7607
    %v7610 = vshrl.u32 %v7590, 16
    %v7612 = vrot.slane %v7610, 3
    %v7613 = vshll.u32 %v7590, 16
    %v7615 = vrot.slane %v7613, 4
    %v7616 = vor.u32 %v7612, %v7615
    %v7618 = vshrl.u32 %v7591, 16
    %v7620 = vrot.slane %v7618, 3
    %v7621 = vshll.u32 %v7591, 16
    %v7623 = vrot.slane %v7621, 4
    %v7624 = vor.u32 %v7620, %v7623
    %v7625 = vsel %vm867, %v7616, %v7624
    %v7628 = vld [vmem:[#allocation50] sm:$0xf]
    %v7629 = vld [vmem:[#allocation50 + $0x4] sm:$0xf]
    %v7630 = vld [vmem:[#allocation50 + $0x8] sm:$0xf]
    %v7631 = vld [vmem:[#allocation50 + $0xc] sm:$0xf]
    %v7632 = vld [vmem:[#allocation50 + $0x10] sm:$0xf]
    %v7633 = vld [vmem:[#allocation50 + $0x14] sm:$0xf]
    %v7634 = vld [vmem:[#allocation50 + $0x18] sm:$0xf]
    %v7635 = vld [vmem:[#allocation50 + $0x1c] sm:$0xf]
    %v7636 = vld [vmem:[#allocation50 + $0x20] sm:$0xf]
    %v7637 = vld [vmem:[#allocation50 + $0x24] sm:$0xf]
    %v7638 = vld [vmem:[#allocation50 + $0x28] sm:$0xf]
    %v7639 = vld [vmem:[#allocation50 + $0x2c] sm:$0xf]
    %v7640 = vld [vmem:[#allocation50 + $0x30] sm:$0xf]
    %v7641 = vld [vmem:[#allocation50 + $0x34] sm:$0xf]
    %v7642 = vld [vmem:[#allocation50 + $0x38] sm:$0xf]
    %v7643 = vld [vmem:[#allocation50 + $0x3c] sm:$0xf]
    %v7644 = vld [vmem:[#allocation2] sm:$0xf0]
    %v7645 = vld [vmem:[#allocation2 + $0x10] sm:$0xf0]
    %v7650 = vrot.slane %v7644, 4
    %v7651 = vrot.slane %v7589, 4
    %v7652 = vsel %vm1028, %v7650, %v7651
    %v7653 = vrot.slane %v7645, 4
    %v7654 = vrot.slane %v7591, 4
    %v7655 = vsel %vm1028, %v7653, %v7654
    %s7658 = scalar_lea.vmem [#allocation50], 64
    %v7659 = vld [vmem:[%s7658] sm:$0xf]
    %v7660 = vld [vmem:[%s7658 + $0x4] sm:$0xf]
    %v7661 = vld [vmem:[%s7658 + $0x8] sm:$0xf]
    %v7662 = vld [vmem:[%s7658 + $0xc] sm:$0xf]
    %v7663 = vld [vmem:[%s7658 + $0x10] sm:$0xf]
    %v7664 = vld [vmem:[%s7658 + $0x14] sm:$0xf]
    %v7665 = vld [vmem:[%s7658 + $0x18] sm:$0xf]
    %v7666 = vld [vmem:[%s7658 + $0x1c] sm:$0xf]
    %v7667 = vld [vmem:[%s7658 + $0x20] sm:$0xf]
    %v7668 = vld [vmem:[%s7658 + $0x24] sm:$0xf]
    %v7669 = vld [vmem:[%s7658 + $0x28] sm:$0xf]
    %v7670 = vld [vmem:[%s7658 + $0x2c] sm:$0xf]
    %v7671 = vld [vmem:[%s7658 + $0x30] sm:$0xf]
    %v7672 = vld [vmem:[%s7658 + $0x34] sm:$0xf]
    %v7673 = vld [vmem:[%s7658 + $0x38] sm:$0xf]
    %v7674 = vld [vmem:[%s7658 + $0x3c] sm:$0xf]
    %v7691 = vunpack.c.l.b16 %v7659
    %v7692 = vunpack.c.l.b16 %v7660
    %v7693 = vunpack.c.l.b16 %v7661
    %v7694 = vunpack.c.l.b16 %v7662
    %v7695 = vunpack.c.l.b16 %v7663
    %v7696 = vunpack.c.l.b16 %v7664
    %v7697 = vunpack.c.l.b16 %v7665
    %v7698 = vunpack.c.l.b16 %v7666
    %v7699 = vunpack.c.l.b16 %v7667
    %v7700 = vunpack.c.l.b16 %v7668
    %v7701 = vunpack.c.l.b16 %v7669
    %v7702 = vunpack.c.l.b16 %v7670
    %v7703 = vunpack.c.l.b16 %v7671
    %v7704 = vunpack.c.l.b16 %v7672
    %v7705 = vunpack.c.l.b16 %v7673
    %v7706 = vunpack.c.l.b16 %v7674
    %v7707 = vpack.c.b16 %v7692, %v7691
    %v7708 = vpack.c.b16 %v7694, %v7693
    %v7709 = vpack.c.b16 %v7696, %v7695
    %v7710 = vpack.c.b16 %v7698, %v7697
    %v7711 = vpack.c.b16 %v7700, %v7699
    %v7712 = vpack.c.b16 %v7702, %v7701
    %v7713 = vpack.c.b16 %v7704, %v7703
    %v7714 = vpack.c.b16 %v7706, %v7705
    %7723 = vmatprep.subr.bf16.mxu0 0
    %7724 = vmatpush1.bf16.msra.mxu0 %v7707
    %7725 = vmatprep.subr.bf16.mxu0 0
    %7726 = vmatpush1.bf16.msra.mxu0 %v7708
    %7727 = vmatprep.subr.bf16.mxu0 0
    %7728 = vmatpush1.bf16.msra.mxu0 %v7709
    %7729 = vmatprep.subr.bf16.mxu0 0
    %7730 = vmatpush1.bf16.msra.mxu0 %v7710
    %7731 = vmatprep.subr.bf16.mxu0 0
    %7732 = vmatpush1.bf16.msra.mxu0 %v7711
    %7733 = vmatprep.subr.bf16.mxu0 0
    %7734 = vmatpush1.bf16.msra.mxu0 %v7712
    %7735 = vmatprep.subr.bf16.mxu0 0
    %7736 = vmatpush1.bf16.msra.mxu0 %v7713
    %7737 = vmatprep.subr.bf16.mxu0 0
    %7738 = vmatpush1.bf16.msra.mxu0 %v7714
    %7739 = vmatprep.subr.bf16.mxu0 0
    %7740 = vmatpush1.bf16.msra.mxu0 0
    %7741 = vmatprep.subr.bf16.mxu0 0
    %7742 = vmatpush1.bf16.msra.mxu0 0
    %7743 = vmatprep.subr.bf16.mxu0 0
    %7744 = vmatpush1.bf16.msra.mxu0 0
    %7745 = vmatprep.subr.bf16.mxu0 0
    %7746 = vmatpush1.bf16.msra.mxu0 0
    %7747 = vmatprep.subr.bf16.mxu0 0
    %7748 = vmatpush1.bf16.msra.mxu0 0
    %7749 = vmatprep.subr.bf16.mxu0 0
    %7750 = vmatpush1.bf16.msra.mxu0 0
    %7751 = vmatprep.subr.bf16.mxu0 0
    %7752 = vmatpush1.bf16.msra.mxu0 0
    %7753 = vmatprep.subr.bf16.mxu0 0
    %7754 = vmatpush1.bf16.msra.mxu0 0
    %7755 = vmatprep.mubr.bf16.mxu0 0
    %7756 = vmatmul.mubr.bf16.gmra.mrb[0].mxu0 %v7652
    %v7757 = vpop.f32.mrb[0].mxu0
    %v7758 = vadd.f32 0.0, %v7757
    %v7759 = vpop.f32.mrb[0].mxu0
    %v7760 = vpop.f32.mrb[0].mxu0
    %v7761 = vadd.f32 0.0, %v7760
    %v7762 = vpop.f32.mrb[0].mxu0
    %7763 = vmatprep.mubr.bf16.mxu0 0
    %7764 = vmatmul.mubr.bf16.gmra.mrb[0].mxu0 %v7655
    %v7765 = vpop.f32.mrb[0].mxu0
    %v7766 = vadd.f32 0.0, %v7765
    %v7767 = vpop.f32.mrb[0].mxu0
    %v7768 = vpop.f32.mrb[0].mxu0
    %v7769 = vadd.f32 0.0, %v7768
    %v7770 = vpop.f32.mrb[0].mxu0
    %7771 = vdwg.mxu0
    %v7788 = vunpack.c.l.b16 %v7628
    %v7789 = vunpack.c.l.b16 %v7629
    %v7790 = vunpack.c.l.b16 %v7630
    %v7791 = vunpack.c.l.b16 %v7631
    %v7792 = vunpack.c.l.b16 %v7632
    %v7793 = vunpack.c.l.b16 %v7633
    %v7794 = vunpack.c.l.b16 %v7634
    %v7795 = vunpack.c.l.b16 %v7635
    %v7796 = vunpack.c.l.b16 %v7636
    %v7797 = vunpack.c.l.b16 %v7637
    %v7798 = vunpack.c.l.b16 %v7638
    %v7799 = vunpack.c.l.b16 %v7639
    %v7800 = vunpack.c.l.b16 %v7640
    %v7801 = vunpack.c.l.b16 %v7641
    %v7802 = vunpack.c.l.b16 %v7642
    %v7803 = vunpack.c.l.b16 %v7643
    %v7804 = vpack.c.b16 %v7789, %v7788
    %v7805 = vpack.c.b16 %v7791, %v7790
    %v7806 = vpack.c.b16 %v7793, %v7792
    %v7807 = vpack.c.b16 %v7795, %v7794
    %v7808 = vpack.c.b16 %v7797, %v7796
    %v7809 = vpack.c.b16 %v7799, %v7798
    %v7810 = vpack.c.b16 %v7801, %v7800
    %v7811 = vpack.c.b16 %v7803, %v7802
    %7820 = vmatprep.subr.bf16.mxu0 0
    %7821 = vmatpush1.bf16.msra.mxu0 %v7804
    %7822 = vmatprep.subr.bf16.mxu0 0
    %7823 = vmatpush1.bf16.msra.mxu0 %v7805
    %7824 = vmatprep.subr.bf16.mxu0 0
    %7825 = vmatpush1.bf16.msra.mxu0 %v7806
    %7826 = vmatprep.subr.bf16.mxu0 0
    %7827 = vmatpush1.bf16.msra.mxu0 %v7807
    %7828 = vmatprep.subr.bf16.mxu0 0
    %7829 = vmatpush1.bf16.msra.mxu0 %v7808
    %7830 = vmatprep.subr.bf16.mxu0 0
    %7831 = vmatpush1.bf16.msra.mxu0 %v7809
    %7832 = vmatprep.subr.bf16.mxu0 0
    %7833 = vmatpush1.bf16.msra.mxu0 %v7810
    %7834 = vmatprep.subr.bf16.mxu0 0
    %7835 = vmatpush1.bf16.msra.mxu0 %v7811
    %7836 = vmatprep.subr.bf16.mxu0 0
    %7837 = vmatpush1.bf16.msra.mxu0 0
    %7838 = vmatprep.subr.bf16.mxu0 0
    %7839 = vmatpush1.bf16.msra.mxu0 0
    %7840 = vmatprep.subr.bf16.mxu0 0
    %7841 = vmatpush1.bf16.msra.mxu0 0
    %7842 = vmatprep.subr.bf16.mxu0 0
    %7843 = vmatpush1.bf16.msra.mxu0 0
    %7844 = vmatprep.subr.bf16.mxu0 0
    %7845 = vmatpush1.bf16.msra.mxu0 0
    %7846 = vmatprep.subr.bf16.mxu0 0
    %7847 = vmatpush1.bf16.msra.mxu0 0
    %7848 = vmatprep.subr.bf16.mxu0 0
    %7849 = vmatpush1.bf16.msra.mxu0 0
    %7850 = vmatprep.subr.bf16.mxu0 0
    %7851 = vmatpush1.bf16.msra.mxu0 0
    %7852 = vmatprep.mubr.bf16.mxu0 0
    %7853 = vmatmul.mubr.bf16.gmra.mrb[0].mxu0 %v7608
    %v7854 = vpop.f32.mrb[0].mxu0
    %v7855 = vadd.f32 %v7758, %v7854
    %v7856 = vpop.f32.mrb[0].mxu0
    %v7857 = vpop.f32.mrb[0].mxu0
    %v7858 = vadd.f32 %v7761, %v7857
    %v7859 = vpop.f32.mrb[0].mxu0
    %7860 = vmatprep.mubr.bf16.mxu0 0
    %7861 = vmatmul.mubr.bf16.gmra.mrb[0].mxu0 %v7625
    %v7862 = vpop.f32.mrb[0].mxu0
    %v7863 = vadd.f32 %v7766, %v7862
    %v7864 = vpop.f32.mrb[0].mxu0
    %v7865 = vpop.f32.mrb[0].mxu0
    %v7866 = vadd.f32 %v7769, %v7865
    %v7867 = vpop.f32.mrb[0].mxu0
    %7868 = vdwg.mxu0
    %v7869 = vld [vmem:[#allocation2 + $0x8] sm:$0x1f]
    %v7870 = vld [vmem:[#allocation2 + $0x18] sm:$0x1f]
    %v7872 = vshrl.u32 %v7644, 16
    %v7874 = vrot.slane %v7872, 4
    %v7875 = vshll.u32 %v7644, 16
    %v7877 = vrot.slane %v7875, 5
    %v7878 = vor.u32 %v7874, %v7877
    %v7880 = vshrl.u32 %v7869, 16
    %v7882 = vrot.slane %v7880, 4
    %v7883 = vshll.u32 %v7869, 16
    %v7885 = vrot.slane %v7883, 5
    %v7886 = vor.u32 %v7882, %v7885
    %v7887 = vsel %vm1157, %v7878, %v7886
    %v7889 = vshrl.u32 %v7645, 16
    %v7891 = vrot.slane %v7889, 4
    %v7892 = vshll.u32 %v7645, 16
    %v7894 = vrot.slane %v7892, 5
    %v7895 = vor.u32 %v7891, %v7894
    %v7897 = vshrl.u32 %v7870, 16
    %v7899 = vrot.slane %v7897, 4
    %v7900 = vshll.u32 %v7870, 16
    %v7902 = vrot.slane %v7900, 5
    %v7903 = vor.u32 %v7899, %v7902
    %v7904 = vsel %vm1157, %v7895, %v7903
    %s7907 = scalar_lea.vmem [#allocation50], 128
    %v7908 = vld [vmem:[%s7907] sm:$0xf]
    %v7909 = vld [vmem:[%s7907 + $0x4] sm:$0xf]
    %v7910 = vld [vmem:[%s7907 + $0x8] sm:$0xf]
    %v7911 = vld [vmem:[%s7907 + $0xc] sm:$0xf]
    %v7912 = vld [vmem:[%s7907 + $0x10] sm:$0xf]
    %v7913 = vld [vmem:[%s7907 + $0x14] sm:$0xf]
    %v7914 = vld [vmem:[%s7907 + $0x18] sm:$0xf]
    %v7915 = vld [vmem:[%s7907 + $0x1c] sm:$0xf]
    %v7916 = vld [vmem:[%s7907 + $0x20] sm:$0xf]
    %v7917 = vld [vmem:[%s7907 + $0x24] sm:$0xf]
    %v7918 = vld [vmem:[%s7907 + $0x28] sm:$0xf]
    %v7919 = vld [vmem:[%s7907 + $0x2c] sm:$0xf]
    %v7920 = vld [vmem:[%s7907 + $0x30] sm:$0xf]
    %v7921 = vld [vmem:[%s7907 + $0x34] sm:$0xf]
    %v7922 = vld [vmem:[%s7907 + $0x38] sm:$0xf]
    %v7923 = vld [vmem:[%s7907 + $0x3c] sm:$0xf]
    %v7940 = vunpack.c.l.b16 %v7908
    %v7941 = vunpack.c.l.b16 %v7909
    %v7942 = vunpack.c.l.b16 %v7910
    %v7943 = vunpack.c.l.b16 %v7911
    %v7944 = vunpack.c.l.b16 %v7912
    %v7945 = vunpack.c.l.b16 %v7913
    %v7946 = vunpack.c.l.b16 %v7914
    %v7947 = vunpack.c.l.b16 %v7915
    %v7948 = vunpack.c.l.b16 %v7916
    %v7949 = vunpack.c.l.b16 %v7917
    %v7950 = vunpack.c.l.b16 %v7918
    %v7951 = vunpack.c.l.b16 %v7919
    %v7952 = vunpack.c.l.b16 %v7920
    %v7953 = vunpack.c.l.b16 %v7921
    %v7954 = vunpack.c.l.b16 %v7922
    %v7955 = vunpack.c.l.b16 %v7923
    %v7956 = vpack.c.b16 %v7941, %v7940
    %v7957 = vpack.c.b16 %v7943, %v7942
    %v7958 = vpack.c.b16 %v7945, %v7944
    %v7959 = vpack.c.b16 %v7947, %v7946
    %v7960 = vpack.c.b16 %v7949, %v7948
    %v7961 = vpack.c.b16 %v7951, %v7950
    %v7962 = vpack.c.b16 %v7953, %v7952
    %v7963 = vpack.c.b16 %v7955, %v7954
    %7972 = vmatprep.subr.bf16.mxu0 0
    %7973 = vmatpush1.bf16.msra.mxu0 %v7956
    %7974 = vmatprep.subr.bf16.mxu0 0
    %7975 = vmatpush1.bf16.msra.mxu0 %v7957
    %7976 = vmatprep.subr.bf16.mxu0 0
    %7977 = vmatpush1.bf16.msra.mxu0 %v7958
    %7978 = vmatprep.subr.bf16.mxu0 0
    %7979 = vmatpush1.bf16.msra.mxu0 %v7959
    %7980 = vmatprep.subr.bf16.mxu0 0
    %7981 = vmatpush1.bf16.msra.mxu0 %v7960
    %7982 = vmatprep.subr.bf16.mxu0 0
    %7983 = vmatpush1.bf16.msra.mxu0 %v7961
    %7984 = vmatprep.subr.bf16.mxu0 0
    %7985 = vmatpush1.bf16.msra.mxu0 %v7962
    %7986 = vmatprep.subr.bf16.mxu0 0
    %7987 = vmatpush1.bf16.msra.mxu0 %v7963
    %7988 = vmatprep.subr.bf16.mxu0 0
    %7989 = vmatpush1.bf16.msra.mxu0 0
    %7990 = vmatprep.subr.bf16.mxu0 0
    %7991 = vmatpush1.bf16.msra.mxu0 0
    %7992 = vmatprep.subr.bf16.mxu0 0
    %7993 = vmatpush1.bf16.msra.mxu0 0
    %7994 = vmatprep.subr.bf16.mxu0 0
    %7995 = vmatpush1.bf16.msra.mxu0 0
    %7996 = vmatprep.subr.bf16.mxu0 0
    %7997 = vmatpush1.bf16.msra.mxu0 0
    %7998 = vmatprep.subr.bf16.mxu0 0
    %7999 = vmatpush1.bf16.msra.mxu0 0
    %8000 = vmatprep.subr.bf16.mxu0 0
    %8001 = vmatpush1.bf16.msra.mxu0 0
    %8002 = vmatprep.subr.bf16.mxu0 0
    %8003 = vmatpush1.bf16.msra.mxu0 0
    %8004 = vmatprep.mubr.bf16.mxu0 0
    %8005 = vmatmul.mubr.bf16.gmra.mrb[0].mxu0 %v7887
    %v8006 = vpop.f32.mrb[0].mxu0
    %v8007 = vadd.f32 0.0, %v8006
    %v8008 = vpop.f32.mrb[0].mxu0
    %v8009 = vpop.f32.mrb[0].mxu0
    %v8010 = vadd.f32 0.0, %v8009
    %v8011 = vpop.f32.mrb[0].mxu0
    %8012 = vmatprep.mubr.bf16.mxu0 0
    %8013 = vmatmul.mubr.bf16.gmra.mrb[0].mxu0 %v7904
    %v8014 = vpop.f32.mrb[0].mxu0
    %v8015 = vadd.f32 0.0, %v8014
    %v8016 = vpop.f32.mrb[0].mxu0
    %v8017 = vpop.f32.mrb[0].mxu0
    %v8018 = vadd.f32 0.0, %v8017
    %v8019 = vpop.f32.mrb[0].mxu0
    %8020 = vdwg.mxu0
    %v8021 = vadd.f32 %v7855, %v8007
    %v8022 = vadd.f32 %v7858, %v8010
    %v8023 = vadd.f32 %v7863, %v8015
    %v8024 = vadd.f32 %v7866, %v8018
    %v8025 = vld [vmem:[#allocation51] sm:$0x1]
    %v8027 = vlaneseq
    %v8028 = vshrl.u32 %v8027, 7
    %v8029 = vsub.s32 0, %v8028
    %v8030 = vrot.slane %v8025, %v8029
    %v8032 = vmul.f32 %v8021, %v8030
    %v8033 = vmul.f32 %v8022, %v8030
    %v8034 = vmul.f32 %v8023, %v8030
    %v8035 = vmul.f32 %v8024, %v8030
    %v8036 = vld [vmem:[#allocation53] sm:$0x1]
    %v8038 = vlaneseq
    %v8039 = vshrl.u32 %v8038, 7
    %v8040 = vsub.s32 0, %v8039
    %v8041 = vrot.slane %v8036, %v8040
    %v8043 = vadd.f32 %v8032, %v8041
    %v8044 = vadd.f32 %v8033, %v8041
    %v8045 = vadd.f32 %v8034, %v8041
    %v8046 = vadd.f32 %v8035, %v8041
    %v8047 = vmax.f32 %v8043, 0.0
    %v8048 = vmax.f32 %v8044, 0.0
    %v8049 = vmax.f32 %v8045, 0.0
    %v8050 = vmax.f32 %v8046, 0.0
    %v8051 = vadd.f32 %v8047, %v8048
    %v8052 = vrot.slane %v8051, 4
    %v8053 = vadd.f32 %v8051, %v8052
    %v8054 = vrot.slane %v8053, 2
    %v8055 = vadd.f32 %v8053, %v8054
    %v8056 = vrot.slane %v8055, 1
    %v8057 = vadd.f32 %v8055, %v8056
    %v8058 = vadd.f32 %v8049, %v8050
    %v8059 = vrot.slane %v8058, 4
    %v8060 = vadd.f32 %v8058, %v8059
    %v8061 = vrot.slane %v8060, 2
    %v8062 = vadd.f32 %v8060, %v8061
    %v8063 = vrot.slane %v8062, 1
    %v8064 = vadd.f32 %v8062, %v8063
    %v8065 = vmul.f32 %v8057, 0.0625
    %v8066 = vmul.f32 %v8064, 0.0625
    %v8067 = vpack.c.bf16 %v8065, %v8065
    %v8068 = vpack.c.bf16 %v8066, %v8066
    %v8069 = vld [vmem:[%s69] sm:$0xf]
    %v8070 = vld [vmem:[%s69 + $0x4] sm:$0xf]
    %v8071 = vld [vmem:[%s69 + $0x8] sm:$0xf]
    %v8072 = vld [vmem:[%s69 + $0xc] sm:$0xf]
    %v8073 = vld [vmem:[%s69 + $0x10] sm:$0xf]
    %v8074 = vld [vmem:[%s69 + $0x14] sm:$0xf]
    %v8075 = vld [vmem:[%s69 + $0x18] sm:$0xf]
    %v8076 = vld [vmem:[%s69 + $0x1c] sm:$0xf]
    %v8077 = vld [vmem:[%s69 + $0x20] sm:$0xf]
    %v8078 = vld [vmem:[%s69 + $0x24] sm:$0xf]
    %v8079 = vld [vmem:[%s69 + $0x28] sm:$0xf]
    %v8080 = vld [vmem:[%s69 + $0x2c] sm:$0xf]
    %v8081 = vld [vmem:[%s69 + $0x30] sm:$0xf]
    %v8082 = vld [vmem:[%s69 + $0x34] sm:$0xf]
    %v8083 = vld [vmem:[%s69 + $0x38] sm:$0xf]
    %v8084 = vld [vmem:[%s69 + $0x3c] sm:$0xf]
    %v8085 = vld [vmem:[%s71] sm:$0x1]
    %v8087 = vlaneseq
    %v8088 = vshrl.u32 %v8087, 7
    %v8089 = vsub.s32 0, %v8088
    %v8090 = vrot.slane %v8085, %v8089
    %v8094 = vunpack.c.l.b16 %v8067
    %v8095 = vunpack.c.l.b16 %v8068
    %vm8096 = vcmask 1041409
    %v8097 = vsel %vm8096, %v8095, %v8094
    %v8098 = vpack.c.b16 %v8097, %v8097
    %v8116 = vunpack.c.l.b16 %v8069
    %v8117 = vunpack.c.l.b16 %v8070
    %v8118 = vunpack.c.l.b16 %v8071
    %v8119 = vunpack.c.l.b16 %v8072
    %v8120 = vunpack.c.l.b16 %v8073
    %v8121 = vunpack.c.l.b16 %v8074
    %v8122 = vunpack.c.l.b16 %v8075
    %v8123 = vunpack.c.l.b16 %v8076
    %v8124 = vunpack.c.l.b16 %v8077
    %v8125 = vunpack.c.l.b16 %v8078
    %v8126 = vunpack.c.l.b16 %v8079
    %v8127 = vunpack.c.l.b16 %v8080
    %v8128 = vunpack.c.l.b16 %v8081
    %v8129 = vunpack.c.l.b16 %v8082
    %v8130 = vunpack.c.l.b16 %v8083
    %v8131 = vunpack.c.l.b16 %v8084
    %v8132 = vpack.c.b16 %v8117, %v8116
    %v8133 = vpack.c.b16 %v8119, %v8118
    %v8134 = vpack.c.b16 %v8121, %v8120
    %v8135 = vpack.c.b16 %v8123, %v8122
    %v8136 = vpack.c.b16 %v8125, %v8124
    %v8137 = vpack.c.b16 %v8127, %v8126
    %v8138 = vpack.c.b16 %v8129, %v8128
    %v8139 = vpack.c.b16 %v8131, %v8130
    %8148 = vmatprep.subr.bf16.mxu0 0
    %8149 = vmatpush1.bf16.msra.mxu0 %v8132
    %8150 = vmatprep.subr.bf16.mxu0 0
    %8151 = vmatpush1.bf16.msra.mxu0 %v8133
    %8152 = vmatprep.subr.bf16.mxu0 0
    %8153 = vmatpush1.bf16.msra.mxu0 %v8134
    %8154 = vmatprep.subr.bf16.mxu0 0
    %8155 = vmatpush1.bf16.msra.mxu0 %v8135
    %8156 = vmatprep.subr.bf16.mxu0 0
    %8157 = vmatpush1.bf16.msra.mxu0 %v8136
    %8158 = vmatprep.subr.bf16.mxu0 0
    %8159 = vmatpush1.bf16.msra.mxu0 %v8137
    %8160 = vmatprep.subr.bf16.mxu0 0
    %8161 = vmatpush1.bf16.msra.mxu0 %v8138
    %8162 = vmatprep.subr.bf16.mxu0 0
    %8163 = vmatpush1.bf16.msra.mxu0 %v8139
    %8164 = vmatprep.subr.bf16.mxu0 0
    %8165 = vmatpush1.bf16.msra.mxu0 0
    %8166 = vmatprep.subr.bf16.mxu0 0
    %8167 = vmatpush1.bf16.msra.mxu0 0
    %8168 = vmatprep.subr.bf16.mxu0 0
    %8169 = vmatpush1.bf16.msra.mxu0 0
    %8170 = vmatprep.subr.bf16.mxu0 0
    %8171 = vmatpush1.bf16.msra.mxu0 0
    %8172 = vmatprep.subr.bf16.mxu0 0
    %8173 = vmatpush1.bf16.msra.mxu0 0
    %8174 = vmatprep.subr.bf16.mxu0 0
    %8175 = vmatpush1.bf16.msra.mxu0 0
    %8176 = vmatprep.subr.bf16.mxu0 0
    %8177 = vmatpush1.bf16.msra.mxu0 0
    %8178 = vmatprep.subr.bf16.mxu0 0
    %8179 = vmatpush1.bf16.msra.mxu0 0
    %8180 = vmatprep.mubr.bf16.mxu0 0
    %8181 = vmatmul.mubr.bf16.gmra.mrb[0].mxu0 %v8098
    %v8182 = vpop.f32.mrb[0].mxu0
    %v8183 = vadd.f32 %v8090, %v8182
    %v8184 = vpop.f32.mrb[0].mxu0
    %v8185 = vpop.f32.mrb[0].mxu0
    %v8186 = vpop.f32.mrb[0].mxu0
    %8187 = vdwg.mxu0
    %8188 = vst [vmem:[#allocation54] sm:$0x3] %v8183
    // Predicated region
    $region278: #{tpu_custom_call.1} parent=1 // pred_check
      _
    $region279: #{tpu_custom_call.1} parent=1 // pred_check_branch
      %8190 = sbr.rel (0) target = $region281
    $region280: #{tpu_custom_call.1} parent=1 // pred_region
      %s8192 = ssub.s32 32, 32
      %8193 = vsyncadd [#allocation5], %s8192
      %s8195 = sshll.u32 [#allocation54], 4
      %s8196 = int_to_ptr.vmem [resolvable:$true] %s8195
      %8198 = dma.vmem_to_hbm [thread:$0]  %s8196, 32, %s73, [#allocation5]
    $region281: #{tpu_custom_call.1} parent=1 // pred_fallthru
      _
    // Predicated region
    $region282: #{tpu_custom_call.1} parent=1 // pred_check
      _
    $region283: #{tpu_custom_call.1} parent=1 // pred_check_branch
      %8200 = sbr.rel (0) target = $region285
    $region284: #{tpu_custom_call.1} parent=1 // pred_region
      %8201 = dma.done [#allocation5], 32
    $region285: #{tpu_custom_call.1} parent=1 // pred_fallthru
      _
    %8202 = vsyncpa [#allocation4], 1
    %8203 = vsyncpa [#allocation7], 1
    %8204 = vsyncpa [#allocation10], 1
    %8205 = vsyncpa [#allocation13], 1
    %8206 = vsyncpa [#allocation16], 1
    %8207 = vsyncpa [#allocation19], 1
    %8208 = vsyncpa [#allocation22], 1
    %8209 = vsyncpa [#allocation25], 1
    %8210 = vsyncpa [#allocation28], 1
    %8211 = vsyncpa [#allocation31], 1
    %8212 = vsyncpa [#allocation34], 1
    %8213 = vsyncpa [#allocation37], 1
    %8214 = vsyncpa [#allocation40], 1
    %8215 = vsyncpa [#allocation43], 1
    %8216 = vsyncpa [#allocation46], 1
    %8217 = vsyncpa [#allocation49], 1
    %8218 = vsyncpa [#allocation52], 1
    %8219 = vsyncpa [#allocation5], 1

</llo_original>
